<compile_context>
chip_gen: v5e
topology: v5e:2x2
jax: 0.10.0
libtpu: 0.0.40
codegen_flags: <defaults>
</compile_context>

<pallas_src>
import math

import jax
import jax.numpy as jnp
from jax.experimental import pallas as pl

H = 8  # heads hard-coded inside DecoderLayer.forward


# ------------------------------ fused kernel ------------------------------

def _decoder_layer_kernel(
        x_ref, f_ref, tb_ref, sb_ref,
        w_saqkv, b_saqkv, wo_sa, b_sao, g1, be1,
        w_caq, b_caq, w_cakv, b_cakv, wo_ca, b_cao, g2, be2,
        g3, be3, w_ff1, b_ff1, w_ff2, b_ff2,
        o_ref, at_ref):
    # x_ref:  (B*T, D)  tokens, batch-flattened
    # f_ref:  (B*S, D)  encoder features, batch-flattened
    # tb_ref: (B, T, T) additive self-attn mask bias (0 / -65500)
    # sb_ref: (B, 1, S) additive cross-attn mask bias
    # o_ref:  (B*T, D)  new x;  at_ref: (B, H, T, S) cross-attn probabilities
    b_sz, t = tb_ref.shape[0], tb_ref.shape[1]
    s = sb_ref.shape[2]
    d = x_ref.shape[-1]
    dk = d // H

    x = x_ref[...]                      # (B*T, D) f32
    feat = f_ref[...]                   # (B*S, D) f32

    def proj(a, w_r, b_r):
        # bf16 MXU operands (weights already bf16), f32 accumulation.
        return jnp.dot(a.astype(jnp.bfloat16), w_r[...],
                       preferred_element_type=jnp.float32) + b_r[...]

    def layer_norm(y, g, b):
        # one-pass variance: mean(y*y) - mu*mu ; rsqrt on the EUP slot.
        mu = jnp.mean(y, axis=-1, keepdims=True)
        var = jnp.mean(y * y, axis=-1, keepdims=True) - mu * mu
        return (y - mu) * jax.lax.rsqrt(var + 1e-5) * g[...] + b[...]

    def to_heads(a, rows):
        # (rows, D) -> (H, rows, dk): the single heads-on-sublanes relayout.
        return jnp.swapaxes(a.reshape(rows, H, dk), 0, 1)

    def attend(q3, k3, v3, bias, exact_probs):
        # q3: (H,T,dk); k3/v3: (H,S_,dk); bias broadcastable to (H,T,S_).
        sc = jnp.einsum('htd,hsd->hts',
                        q3.astype(jnp.bfloat16), k3.astype(jnp.bfloat16),
                        preferred_element_type=jnp.float32)
        sc = sc + bias                              # additive mask, one VPU add
        e = jnp.exp(sc - jnp.max(sc, axis=-1, keepdims=True))
        den = jnp.sum(e, axis=-1, keepdims=True)
        if exact_probs:                             # probs returned to caller
            p = e / den
        else:                                       # approx recip -> EUP slot
            p = e * pl.reciprocal(den, approx=True)
        o3 = jnp.einsum('hts,hsd->htd',
                        p.astype(jnp.bfloat16), v3.astype(jnp.bfloat16),
                        preferred_element_type=jnp.float32)
        return o3, p

    def out_proj(o3, wo_r):
        # fold W_o per head: (H,T,dk) x (H,dk,D) -> (H,T,D) -> sum over heads;
        # no relayout back, no lane concatenation.
        oh = jnp.einsum('htd,hdn->htn',
                        o3.astype(jnp.bfloat16), wo_r[...],
                        preferred_element_type=jnp.float32)
        return jnp.sum(oh, axis=0)

    # ---- self-attention sublayer: x = x + LN1(Wo @ attn(QKV(x))) ----
    qkv = proj(x, w_saqkv, b_saqkv)                 # (B*T, 3D); Q pre-scaled
    sa_rows = []
    for b in range(b_sz):                           # static loop, B tiny
        qkv_b = qkv[b * t:(b + 1) * t, :]           # sublane-aligned row slice
        q3 = to_heads(qkv_b[:, :d], t)
        k3 = to_heads(qkv_b[:, d:2 * d], t)
        v3 = to_heads(qkv_b[:, 2 * d:], t)
        o3, _ = attend(q3, k3, v3, tb_ref[b], exact_probs=False)
        sa_rows.append(out_proj(o3, wo_sa))
    att = jnp.concatenate(sa_rows, axis=0) + b_sao[...]     # (B*T, D)
    x = x + layer_norm(att, g1, be1)

    # ---- cross-attention sublayer: x = x + LN2(Wo @ attn(Q(x), KV(feat))) ----
    qc = proj(x, w_caq, b_caq)                      # (B*T, D); scale folded in
    kv = proj(feat, w_cakv, b_cakv)                 # (B*S, 2D)
    ca_rows = []
    for b in range(b_sz):
        q3 = to_heads(qc[b * t:(b + 1) * t, :], t)
        kv_b = kv[b * s:(b + 1) * s, :]
        k3 = to_heads(kv_b[:, :d], s)
        v3 = to_heads(kv_b[:, d:], s)
        o3, p = attend(q3, k3, v3, sb_ref[b], exact_probs=True)
        at_ref[b] = p                               # (H,T,S), final layout
        ca_rows.append(out_proj(o3, wo_ca))
    src = jnp.concatenate(ca_rows, axis=0) + b_cao[...]
    x = x + layer_norm(src, g2, be2)

    # ---- feed-forward sublayer: x = x + W2 @ relu(W1 @ LN3(x)) ----
    xn = layer_norm(x, g3, be3)
    hdn = jnp.maximum(proj(xn, w_ff1, b_ff1), 0.0)
    x = x + proj(hdn, w_ff2, b_ff2)

    o_ref[...] = x


# --------------------------- parameter preparation ---------------------------

def prepare_params(params):
    """One-time parameter relayout (done at load time in a real model).

    * fuse Q/K/V (self) and K/V (cross) projections into wide matmuls
    * fold 1/sqrt(d_k) into the Q projection weights/bias
    * reshape the output projections to (H, dk, D) for the per-head fold
    * cast all MXU weight operands to bf16 (biases / LN params stay f32)
    """
    d = params["sa_q"][0].shape[0]
    dk = d // H
    scale = 1.0 / math.sqrt(dk)
    bf = jnp.bfloat16

    w_sa_qkv = jnp.concatenate([params["sa_q"][0] * scale,
                                params["sa_k"][0], params["sa_v"][0]], axis=1)
    b_sa_qkv = jnp.concatenate([params["sa_q"][1] * scale,
                                params["sa_k"][1], params["sa_v"][1]], axis=1)
    w_ca_kv = jnp.concatenate([params["ca_k"][0], params["ca_v"][0]], axis=1)
    b_ca_kv = jnp.concatenate([params["ca_k"][1], params["ca_v"][1]], axis=1)

    return dict(
        w_sa_qkv=w_sa_qkv.astype(bf), b_sa_qkv=b_sa_qkv,
        wo_sa=params["sa_o"][0].reshape(H, dk, d).astype(bf),
        b_sao=params["sa_o"][1],
        g1=params["norm1"][0], be1=params["norm1"][1],
        w_ca_q=(params["ca_q"][0] * scale).astype(bf),
        b_ca_q=params["ca_q"][1] * scale,
        w_ca_kv=w_ca_kv.astype(bf), b_ca_kv=b_ca_kv,
        wo_ca=params["ca_o"][0].reshape(H, dk, d).astype(bf),
        b_cao=params["ca_o"][1],
        g2=params["norm2"][0], be2=params["norm2"][1],
        g3=params["norm3"][0], be3=params["norm3"][1],
        w_ff1=params["ff"][0].astype(bf), b_ff1=params["ff"][1],
        w_ff2=params["ff"][2].astype(bf), b_ff2=params["ff"][3],
    )


# ------------------------------ decoder layer ------------------------------

def decoder_layer_forward(params, x, feature, src_mask, tgt_mask,
                          pos=None, query_pos=None, query_sine_embed=None):
    # pos / query_pos / query_sine_embed are accepted but unused, exactly like
    # the PyTorch forward.
    del pos, query_pos, query_sine_embed
    b, t, d = x.shape
    s = feature.shape[1]
    p = prepare_params(params)

    # masks -> additive f32 biases (compare+select moved out of the kernel);
    # exp() underflows the -65500 entries to exactly 0, matching masked_fill.
    tbias = jnp.where(jnp.broadcast_to(tgt_mask, (b, 1, t, t)) == 0,
                      -65500.0, 0.0).astype(jnp.float32).reshape(b, t, t)
    sbias = jnp.where(jnp.broadcast_to(src_mask, (b, 1, 1, s)) == 0,
                      -65500.0, 0.0).astype(jnp.float32).reshape(b, 1, s)

    out_shape = (
        jax.ShapeDtypeStruct((b * t, d), jnp.float32),   # new x (flattened)
        jax.ShapeDtypeStruct((b, H, t, s), jnp.float32), # cross-attn probs
    )

    # Single invocation (grid=()): at ~2 MFLOP total, per-grid-step pipeline
    # overhead would dominate, so all batches are fused into one kernel call
    # and every array lives whole in VMEM (default BlockSpecs).
    x_out, src_at = pl.pallas_call(
        _decoder_layer_kernel,
        out_shape=out_shape,
    )(x.reshape(b * t, d), feature.reshape(b * s, d), tbias, sbias,
      p["w_sa_qkv"], p["b_sa_qkv"], p["wo_sa"], p["b_sao"], p["g1"], p["be1"],
      p["w_ca_q"], p["b_ca_q"], p["w_ca_kv"], p["b_ca_kv"],
      p["wo_ca"], p["b_cao"], p["g2"], p["be2"],
      p["g3"], p["be3"],
      p["w_ff1"], p["b_ff1"], p["w_ff2"], p["b_ff2"])

    return x_out.reshape(b, t, d), src_at


# --------------------------- pure-JAX reference ---------------------------

def reference_forward(params, x, feature, src_mask, tgt_mask):
    b, t, d = x.shape
    h, dk = 8, d // 8

    def lin(seq, wb):
        w, bias = wb
        return seq @ w + bias[0]

    def ln(seq, gb):
        g, bta = gb
        mu = jnp.mean(seq, -1, keepdims=True)
        var = jnp.mean((seq - mu) ** 2, -1, keepdims=True)
        return (seq - mu) / jnp.sqrt(var + 1e-5) * g[0] + bta[0]

    def heads(seq):
        return seq.reshape(b, -1, h, dk).transpose(0, 2, 1, 3)

    def attn(q, k, v, mask):
        sc = jnp.einsum('bhtd,bhsd->bhts', q, k) / math.sqrt(dk)
        sc = jnp.where(mask == 0, -65500.0, sc)
        p = jax.nn.softmax(sc, -1)
        o = jnp.einsum('bhts,bhsd->bhtd', p, v)
        return o.transpose(0, 2, 1, 3).reshape(b, -1, d), p

    a, _ = attn(heads(lin(x, params["sa_q"])), heads(lin(x, params["sa_k"])),
                heads(lin(x, params["sa_v"])), tgt_mask)
    x = x + ln(lin(a, params["sa_o"]), params["norm1"])
    a, src_at = attn(heads(lin(x, params["ca_q"])),
                     heads(lin(feature, params["ca_k"])),
                     heads(lin(feature, params["ca_v"])), src_mask)
    x = x + ln(lin(a, params["ca_o"]), params["norm2"])
    xn = ln(x, params["norm3"])
    w1, b1, w2, b2 = params["ff"]
    x = x + (jnp.maximum(xn @ w1 + b1[0], 0.0) @ w2 + b2[0])
    return x, src_at


# ---------------------------------- main ----------------------------------

def _init_linear(key, d_in, d_out):
    k1, k2 = jax.random.split(key)
    bound = 1.0 / math.sqrt(d_in)
    w = jax.random.uniform(k1, (d_in, d_out), jnp.float32, -bound, bound)
    b = jax.random.uniform(k2, (1, d_out), jnp.float32, -bound, bound)
    return w, b


def _init_norm(key, d):
    k1, k2 = jax.random.split(key)
    g = 1.0 + 0.02 * jax.random.normal(k1, (1, d), jnp.float32)
    bta = 0.02 * jax.random.normal(k2, (1, d), jnp.float32)
    return g, bta


if __name__ == "__main__":
    B, T, S, D, D_FF = 2, 8, 16, 64, 128   # d_model=64, 8 heads -> d_k=8

    root = jax.random.PRNGKey(0)
    keys = jax.random.split(root, 20)

    params = {
        "sa_q": _init_linear(keys[0], D, D),
        "sa_k": _init_linear(keys[1], D, D),
        "sa_v": _init_linear(keys[2], D, D),
        "sa_o": _init_linear(keys[3], D, D),      # self_attn.linear
        "ca_q": _init_linear(keys[4], D, D),
        "ca_k": _init_linear(keys[5], D, D),
        "ca_v": _init_linear(keys[6], D, D),
        "ca_o": _init_linear(keys[7], D, D),      # src_attn.linear
        "norm1": _init_norm(keys[8], D),
        "norm2": _init_norm(keys[9], D),
        "norm3": _init_norm(keys[10], D),         # sublayer[2].norm
        "ff": _init_linear(keys[11], D, D_FF) + _init_linear(keys[12], D_FF, D),
    }

    x = jax.random.normal(keys[13], (B, T, D), jnp.float32)
    feature = jax.random.normal(keys[14], (B, S, D), jnp.float32)

    # causal target mask (B,1,T,T) and padding source mask (B,1,1,S)
    tgt_mask = jnp.broadcast_to(jnp.tril(jnp.ones((T, T), jnp.float32)),
                                (B, 1, T, T))
    src_mask = jnp.ones((B, 1, 1, S), jnp.float32).at[1, :, :, S - 4:].set(0.0)

    # unused positional embeddings (match PyTorch forward signature)
    pos = jnp.zeros((B, S, D), jnp.float32)
    query_pos = jnp.zeros((B, T, D), jnp.float32)
    query_sine_embed = jnp.zeros((B, T, D), jnp.float32)

    out, src_at = decoder_layer_forward(params, x, feature, src_mask, tgt_mask,
                                        pos, query_pos, query_sine_embed)
    out = jax.block_until_ready(out)
    src_at = jax.block_until_ready(src_at)

    ref_out, ref_at = reference_forward(params, x, feature, src_mask, tgt_mask)

    assert out.shape == (B, T, D) and src_at.shape == (B, 8, T, S)
    # Tolerances cover bf16 MXU operands through three residual sublayers plus
    # the approx EUP reciprocal in the (non-returned) self-attn softmax; the
    # returned cross-attn probabilities are exactly normalized f32.
    assert jnp.allclose(out, ref_out, rtol=5e-2, atol=5e-2)
    assert jnp.allclose(src_at, ref_at, rtol=1e-2, atol=1e-2)
    print("KERNEL_OK")
</pallas_src>

<mosaic_0001>
module attributes {stable_mosaic.version = 11 : i64} {
  func.func @_decoder_layer_kernel(%arg0: memref<16x64xf32, #tpu.memory_space<vmem>>, %arg1: memref<32x64xf32, #tpu.memory_space<vmem>>, %arg2: memref<2x8x8xf32, #tpu.memory_space<vmem>>, %arg3: memref<2x1x16xf32, #tpu.memory_space<vmem>>, %arg4: memref<64x192xbf16, #tpu.memory_space<vmem>>, %arg5: memref<1x192xf32, #tpu.memory_space<vmem>>, %arg6: memref<8x8x64xbf16, #tpu.memory_space<vmem>>, %arg7: memref<1x64xf32, #tpu.memory_space<vmem>>, %arg8: memref<1x64xf32, #tpu.memory_space<vmem>>, %arg9: memref<1x64xf32, #tpu.memory_space<vmem>>, %arg10: memref<64x64xbf16, #tpu.memory_space<vmem>>, %arg11: memref<1x64xf32, #tpu.memory_space<vmem>>, %arg12: memref<64x128xbf16, #tpu.memory_space<vmem>>, %arg13: memref<1x128xf32, #tpu.memory_space<vmem>>, %arg14: memref<8x8x64xbf16, #tpu.memory_space<vmem>>, %arg15: memref<1x64xf32, #tpu.memory_space<vmem>>, %arg16: memref<1x64xf32, #tpu.memory_space<vmem>>, %arg17: memref<1x64xf32, #tpu.memory_space<vmem>>, %arg18: memref<1x64xf32, #tpu.memory_space<vmem>>, %arg19: memref<1x64xf32, #tpu.memory_space<vmem>>, %arg20: memref<64x128xbf16, #tpu.memory_space<vmem>>, %arg21: memref<1x128xf32, #tpu.memory_space<vmem>>, %arg22: memref<128x64xbf16, #tpu.memory_space<vmem>>, %arg23: memref<1x64xf32, #tpu.memory_space<vmem>>, %arg24: memref<16x64xf32, #tpu.memory_space<vmem>>, %arg25: memref<2x8x8x16xf32, #tpu.memory_space<vmem>>) attributes {dimension_semantics = [], scalar_prefetch = 0 : i64, scratch_operands = 0 : i64, tpu.core_type = #tpu.core_type<tc>} {
    %c0 = arith.constant 0 : index
    %c0_0 = arith.constant 0 : index
    %0 = vector.load %arg0[%c0, %c0_0] : memref<16x64xf32, #tpu.memory_space<vmem>>, vector<16x64xf32>
    %c0_1 = arith.constant 0 : index
    %c0_2 = arith.constant 0 : index
    %1 = vector.load %arg1[%c0_1, %c0_2] : memref<32x64xf32, #tpu.memory_space<vmem>>, vector<32x64xf32>
    %2 = arith.truncf %0 : vector<16x64xf32> to vector<16x64xbf16>
    %c0_3 = arith.constant 0 : index
    %c0_4 = arith.constant 0 : index
    %3 = vector.load %arg4[%c0_3, %c0_4] : memref<64x192xbf16, #tpu.memory_space<vmem>>, vector<64x192xbf16>
    %cst = arith.constant dense<0.000000e+00> : vector<16x192xf32>
    %4 = tpu.matmul %2, %3, %cst {dimension_numbers = #tpu.dot_dimension_numbers<[1], [0], [0], [1], [0, 0, 1, 1], [], []>} : vector<16x64xbf16>, vector<64x192xbf16>, vector<16x192xf32> -> vector<16x192xf32>
    %c0_5 = arith.constant 0 : index
    %c0_6 = arith.constant 0 : index
    %5 = vector.load %arg5[%c0_5, %c0_6] : memref<1x192xf32, #tpu.memory_space<vmem>>, vector<1x192xf32>
    %6 = vector.broadcast %5 : vector<1x192xf32> to vector<16x192xf32>
    %7 = arith.addf %4, %6 : vector<16x192xf32>
    %8 = vector.extract_strided_slice %7 {offsets = [0, 0], sizes = [8, 192], strides = [1, 1]} : vector<16x192xf32> to vector<8x192xf32>
    %9 = vector.extract_strided_slice %8 {offsets = [0, 0], sizes = [8, 64], strides = [1, 1]} : vector<8x192xf32> to vector<8x64xf32>
    %10 = vector.shape_cast %9 : vector<8x64xf32> to vector<8x8x8xf32>
    %11 = tpu.transpose %10, [1, 0, 2] : vector<8x8x8xf32> -> vector<8x8x8xf32>
    %12 = vector.extract_strided_slice %8 {offsets = [0, 64], sizes = [8, 64], strides = [1, 1]} : vector<8x192xf32> to vector<8x64xf32>
    %13 = vector.shape_cast %12 : vector<8x64xf32> to vector<8x8x8xf32>
    %14 = tpu.transpose %13, [1, 0, 2] : vector<8x8x8xf32> -> vector<8x8x8xf32>
    %15 = vector.extract_strided_slice %8 {offsets = [0, 128], sizes = [8, 64], strides = [1, 1]} : vector<8x192xf32> to vector<8x64xf32>
    %16 = vector.shape_cast %15 : vector<8x64xf32> to vector<8x8x8xf32>
    %17 = tpu.transpose %16, [1, 0, 2] : vector<8x8x8xf32> -> vector<8x8x8xf32>
    %c0_7 = arith.constant 0 : index
    %c0_8 = arith.constant 0 : index
    %c0_9 = arith.constant 0 : index
    %18 = vector.load %arg2[%c0_7, %c0_8, %c0_9] : memref<2x8x8xf32, #tpu.memory_space<vmem>>, vector<1x8x8xf32>
    %19 = vector.shape_cast %18 : vector<1x8x8xf32> to vector<8x8xf32>
    %20 = arith.truncf %11 : vector<8x8x8xf32> to vector<8x8x8xbf16>
    %21 = arith.truncf %14 : vector<8x8x8xf32> to vector<8x8x8xbf16>
    "tpu.trace_start"() <{level = 10 : i32, message = "htd,hsd->hts"}> : () -> ()
    %cst_10 = arith.constant dense<0.000000e+00> : vector<8x8x8xf32>
    %22 = tpu.matmul %20, %21, %cst_10 {dimension_numbers = #tpu.dot_dimension_numbers<[2], [2], [1], [1], [0, 0, 0, 1, 1, 1], [0], [0]>} : vector<8x8x8xbf16>, vector<8x8x8xbf16>, vector<8x8x8xf32> -> vector<8x8x8xf32>
    "tpu.trace_stop"() : () -> ()
    %23 = vector.shape_cast %19 : vector<8x8xf32> to vector<1x8x8xf32>
    %24 = vector.broadcast %23 : vector<1x8x8xf32> to vector<8x8x8xf32>
    %25 = arith.addf %22, %24 : vector<8x8x8xf32>
    %cst_11 = arith.constant dense<0xFF800000> : vector<8x8xf32>
    %26 = vector.multi_reduction <maximumf>, %25, %cst_11 [2] : vector<8x8x8xf32> to vector<8x8xf32>
    %27 = vector.shape_cast %26 : vector<8x8xf32> to vector<8x8x1xf32>
    %28 = vector.broadcast %27 : vector<8x8x1xf32> to vector<8x8x8xf32>
    %29 = arith.subf %25, %28 : vector<8x8x8xf32>
    %30 = math.exp %29 : vector<8x8x8xf32>
    %cst_12 = arith.constant dense<0.000000e+00> : vector<8x8xf32>
    %31 = vector.multi_reduction <add>, %30, %cst_12 [2] : vector<8x8x8xf32> to vector<8x8xf32>
    %32 = vector.shape_cast %31 : vector<8x8xf32> to vector<8x8x1xf32>
    %33 = tpu.reciprocal %32 {approx = true} : vector<8x8x1xf32> -> vector<8x8x1xf32>
    %34 = vector.broadcast %33 : vector<8x8x1xf32> to vector<8x8x8xf32>
    %35 = arith.mulf %30, %34 : vector<8x8x8xf32>
    %36 = arith.truncf %35 : vector<8x8x8xf32> to vector<8x8x8xbf16>
    %37 = arith.truncf %17 : vector<8x8x8xf32> to vector<8x8x8xbf16>
    "tpu.trace_start"() <{level = 10 : i32, message = "hts,hsd->htd"}> : () -> ()
    %cst_13 = arith.constant dense<0.000000e+00> : vector<8x8x8xf32>
    %38 = tpu.matmul %36, %37, %cst_13 {dimension_numbers = #tpu.dot_dimension_numbers<[2], [1], [1], [2], [0, 0, 0, 1, 1, 2], [0], [0]>} : vector<8x8x8xbf16>, vector<8x8x8xbf16>, vector<8x8x8xf32> -> vector<8x8x8xf32>
    "tpu.trace_stop"() : () -> ()
    %39 = arith.truncf %38 : vector<8x8x8xf32> to vector<8x8x8xbf16>
    %c0_14 = arith.constant 0 : index
    %c0_15 = arith.constant 0 : index
    %c0_16 = arith.constant 0 : index
    %40 = vector.load %arg6[%c0_14, %c0_15, %c0_16] : memref<8x8x64xbf16, #tpu.memory_space<vmem>>, vector<8x8x64xbf16>
    "tpu.trace_start"() <{level = 10 : i32, message = "htd,hdn->htn"}> : () -> ()
    %cst_17 = arith.constant dense<0.000000e+00> : vector<8x8x64xf32>
    %41 = tpu.matmul %39, %40, %cst_17 {dimension_numbers = #tpu.dot_dimension_numbers<[2], [1], [1], [2], [0, 0, 0, 1, 1, 2], [0], [0]>} : vector<8x8x8xbf16>, vector<8x8x64xbf16>, vector<8x8x64xf32> -> vector<8x8x64xf32>
    "tpu.trace_stop"() : () -> ()
    %cst_18 = arith.constant dense<0.000000e+00> : vector<8x64xf32>
    %42 = vector.multi_reduction <add>, %41, %cst_18 [0] : vector<8x8x64xf32> to vector<8x64xf32>
    %43 = vector.extract_strided_slice %7 {offsets = [8, 0], sizes = [8, 192], strides = [1, 1]} : vector<16x192xf32> to vector<8x192xf32>
    %44 = vector.extract_strided_slice %43 {offsets = [0, 0], sizes = [8, 64], strides = [1, 1]} : vector<8x192xf32> to vector<8x64xf32>
    %45 = vector.shape_cast %44 : vector<8x64xf32> to vector<8x8x8xf32>
    %46 = tpu.transpose %45, [1, 0, 2] : vector<8x8x8xf32> -> vector<8x8x8xf32>
    %47 = vector.extract_strided_slice %43 {offsets = [0, 64], sizes = [8, 64], strides = [1, 1]} : vector<8x192xf32> to vector<8x64xf32>
    %48 = vector.shape_cast %47 : vector<8x64xf32> to vector<8x8x8xf32>
    %49 = tpu.transpose %48, [1, 0, 2] : vector<8x8x8xf32> -> vector<8x8x8xf32>
    %50 = vector.extract_strided_slice %43 {offsets = [0, 128], sizes = [8, 64], strides = [1, 1]} : vector<8x192xf32> to vector<8x64xf32>
    %51 = vector.shape_cast %50 : vector<8x64xf32> to vector<8x8x8xf32>
    %52 = tpu.transpose %51, [1, 0, 2] : vector<8x8x8xf32> -> vector<8x8x8xf32>
    %c1 = arith.constant 1 : index
    %c0_19 = arith.constant 0 : index
    %c0_20 = arith.constant 0 : index
    %53 = vector.load %arg2[%c1, %c0_19, %c0_20] : memref<2x8x8xf32, #tpu.memory_space<vmem>>, vector<1x8x8xf32>
    %54 = vector.shape_cast %53 : vector<1x8x8xf32> to vector<8x8xf32>
    %55 = arith.truncf %46 : vector<8x8x8xf32> to vector<8x8x8xbf16>
    %56 = arith.truncf %49 : vector<8x8x8xf32> to vector<8x8x8xbf16>
    "tpu.trace_start"() <{level = 10 : i32, message = "htd,hsd->hts"}> : () -> ()
    %cst_21 = arith.constant dense<0.000000e+00> : vector<8x8x8xf32>
    %57 = tpu.matmul %55, %56, %cst_21 {dimension_numbers = #tpu.dot_dimension_numbers<[2], [2], [1], [1], [0, 0, 0, 1, 1, 1], [0], [0]>} : vector<8x8x8xbf16>, vector<8x8x8xbf16>, vector<8x8x8xf32> -> vector<8x8x8xf32>
    "tpu.trace_stop"() : () -> ()
    %58 = vector.shape_cast %54 : vector<8x8xf32> to vector<1x8x8xf32>
    %59 = vector.broadcast %58 : vector<1x8x8xf32> to vector<8x8x8xf32>
    %60 = arith.addf %57, %59 : vector<8x8x8xf32>
    %cst_22 = arith.constant dense<0xFF800000> : vector<8x8xf32>
    %61 = vector.multi_reduction <maximumf>, %60, %cst_22 [2] : vector<8x8x8xf32> to vector<8x8xf32>
    %62 = vector.shape_cast %61 : vector<8x8xf32> to vector<8x8x1xf32>
    %63 = vector.broadcast %62 : vector<8x8x1xf32> to vector<8x8x8xf32>
    %64 = arith.subf %60, %63 : vector<8x8x8xf32>
    %65 = math.exp %64 : vector<8x8x8xf32>
    %cst_23 = arith.constant dense<0.000000e+00> : vector<8x8xf32>
    %66 = vector.multi_reduction <add>, %65, %cst_23 [2] : vector<8x8x8xf32> to vector<8x8xf32>
    %67 = vector.shape_cast %66 : vector<8x8xf32> to vector<8x8x1xf32>
    %68 = tpu.reciprocal %67 {approx = true} : vector<8x8x1xf32> -> vector<8x8x1xf32>
    %69 = vector.broadcast %68 : vector<8x8x1xf32> to vector<8x8x8xf32>
    %70 = arith.mulf %65, %69 : vector<8x8x8xf32>
    %71 = arith.truncf %70 : vector<8x8x8xf32> to vector<8x8x8xbf16>
    %72 = arith.truncf %52 : vector<8x8x8xf32> to vector<8x8x8xbf16>
    "tpu.trace_start"() <{level = 10 : i32, message = "hts,hsd->htd"}> : () -> ()
    %cst_24 = arith.constant dense<0.000000e+00> : vector<8x8x8xf32>
    %73 = tpu.matmul %71, %72, %cst_24 {dimension_numbers = #tpu.dot_dimension_numbers<[2], [1], [1], [2], [0, 0, 0, 1, 1, 2], [0], [0]>} : vector<8x8x8xbf16>, vector<8x8x8xbf16>, vector<8x8x8xf32> -> vector<8x8x8xf32>
    "tpu.trace_stop"() : () -> ()
    %74 = arith.truncf %73 : vector<8x8x8xf32> to vector<8x8x8xbf16>
    %c0_25 = arith.constant 0 : index
    %c0_26 = arith.constant 0 : index
    %c0_27 = arith.constant 0 : index
    %75 = vector.load %arg6[%c0_25, %c0_26, %c0_27] : memref<8x8x64xbf16, #tpu.memory_space<vmem>>, vector<8x8x64xbf16>
    "tpu.trace_start"() <{level = 10 : i32, message = "htd,hdn->htn"}> : () -> ()
    %cst_28 = arith.constant dense<0.000000e+00> : vector<8x8x64xf32>
    %76 = tpu.matmul %74, %75, %cst_28 {dimension_numbers = #tpu.dot_dimension_numbers<[2], [1], [1], [2], [0, 0, 0, 1, 1, 2], [0], [0]>} : vector<8x8x8xbf16>, vector<8x8x64xbf16>, vector<8x8x64xf32> -> vector<8x8x64xf32>
    "tpu.trace_stop"() : () -> ()
    %cst_29 = arith.constant dense<0.000000e+00> : vector<8x64xf32>
    %77 = vector.multi_reduction <add>, %76, %cst_29 [0] : vector<8x8x64xf32> to vector<8x64xf32>
    %78 = tpu.concatenate %42, %77 in 0 : vector<8x64xf32>, vector<8x64xf32> -> vector<16x64xf32>
    %c0_30 = arith.constant 0 : index
    %c0_31 = arith.constant 0 : index
    %79 = vector.load %arg7[%c0_30, %c0_31] : memref<1x64xf32, #tpu.memory_space<vmem>>, vector<1x64xf32>
    %80 = vector.broadcast %79 : vector<1x64xf32> to vector<16x64xf32>
    %81 = arith.addf %78, %80 : vector<16x64xf32>
    %cst_32 = arith.constant dense<0.000000e+00> : vector<16xf32>
    %82 = vector.multi_reduction <add>, %81, %cst_32 [1] : vector<16x64xf32> to vector<16xf32>
    %83 = vector.shape_cast %82 : vector<16xf32> to vector<16x1xf32>
    %cst_33 = arith.constant 6.400000e+01 : f32
    %84 = vector.broadcast %cst_33 : f32 to vector<16x1xf32>
    %85 = arith.divf %83, %84 : vector<16x1xf32>
    %86 = arith.mulf %81, %81 : vector<16x64xf32>
    %cst_34 = arith.constant dense<0.000000e+00> : vector<16xf32>
    %87 = vector.multi_reduction <add>, %86, %cst_34 [1] : vector<16x64xf32> to vector<16xf32>
    %88 = vector.shape_cast %87 : vector<16xf32> to vector<16x1xf32>
    %cst_35 = arith.constant 6.400000e+01 : f32
    %89 = vector.broadcast %cst_35 : f32 to vector<16x1xf32>
    %90 = arith.divf %88, %89 : vector<16x1xf32>
    %91 = arith.mulf %85, %85 : vector<16x1xf32>
    %92 = arith.subf %90, %91 : vector<16x1xf32>
    %93 = vector.broadcast %85 : vector<16x1xf32> to vector<16x64xf32>
    %94 = arith.subf %81, %93 : vector<16x64xf32>
    %cst_36 = arith.constant 9.99999974E-6 : f32
    %95 = vector.broadcast %cst_36 : f32 to vector<16x1xf32>
    %96 = arith.addf %92, %95 : vector<16x1xf32>
    %97 = math.rsqrt %96 : vector<16x1xf32>
    %98 = vector.broadcast %97 : vector<16x1xf32> to vector<16x64xf32>
    %99 = arith.mulf %94, %98 : vector<16x64xf32>
    %c0_37 = arith.constant 0 : index
    %c0_38 = arith.constant 0 : index
    %100 = vector.load %arg8[%c0_37, %c0_38] : memref<1x64xf32, #tpu.memory_space<vmem>>, vector<1x64xf32>
    %101 = vector.broadcast %100 : vector<1x64xf32> to vector<16x64xf32>
    %102 = arith.mulf %99, %101 : vector<16x64xf32>
    %c0_39 = arith.constant 0 : index
    %c0_40 = arith.constant 0 : index
    %103 = vector.load %arg9[%c0_39, %c0_40] : memref<1x64xf32, #tpu.memory_space<vmem>>, vector<1x64xf32>
    %104 = vector.broadcast %103 : vector<1x64xf32> to vector<16x64xf32>
    %105 = arith.addf %102, %104 : vector<16x64xf32>
    %106 = arith.addf %0, %105 : vector<16x64xf32>
    %107 = arith.truncf %106 : vector<16x64xf32> to vector<16x64xbf16>
    %c0_41 = arith.constant 0 : index
    %c0_42 = arith.constant 0 : index
    %108 = vector.load %arg10[%c0_41, %c0_42] : memref<64x64xbf16, #tpu.memory_space<vmem>>, vector<64x64xbf16>
    %cst_43 = arith.constant dense<0.000000e+00> : vector<16x64xf32>
    %109 = tpu.matmul %107, %108, %cst_43 {dimension_numbers = #tpu.dot_dimension_numbers<[1], [0], [0], [1], [0, 0, 1, 1], [], []>} : vector<16x64xbf16>, vector<64x64xbf16>, vector<16x64xf32> -> vector<16x64xf32>
    %c0_44 = arith.constant 0 : index
    %c0_45 = arith.constant 0 : index
    %110 = vector.load %arg11[%c0_44, %c0_45] : memref<1x64xf32, #tpu.memory_space<vmem>>, vector<1x64xf32>
    %111 = vector.broadcast %110 : vector<1x64xf32> to vector<16x64xf32>
    %112 = arith.addf %109, %111 : vector<16x64xf32>
    %113 = arith.truncf %1 : vector<32x64xf32> to vector<32x64xbf16>
    %c0_46 = arith.constant 0 : index
    %c0_47 = arith.constant 0 : index
    %114 = vector.load %arg12[%c0_46, %c0_47] : memref<64x128xbf16, #tpu.memory_space<vmem>>, vector<64x128xbf16>
    %cst_48 = arith.constant dense<0.000000e+00> : vector<32x128xf32>
    %115 = tpu.matmul %113, %114, %cst_48 {dimension_numbers = #tpu.dot_dimension_numbers<[1], [0], [0], [1], [0, 0, 1, 1], [], []>} : vector<32x64xbf16>, vector<64x128xbf16>, vector<32x128xf32> -> vector<32x128xf32>
    %c0_49 = arith.constant 0 : index
    %c0_50 = arith.constant 0 : index
    %116 = vector.load %arg13[%c0_49, %c0_50] : memref<1x128xf32, #tpu.memory_space<vmem>>, vector<1x128xf32>
    %117 = vector.broadcast %116 : vector<1x128xf32> to vector<32x128xf32>
    %118 = arith.addf %115, %117 : vector<32x128xf32>
    %119 = vector.extract_strided_slice %112 {offsets = [0, 0], sizes = [8, 64], strides = [1, 1]} : vector<16x64xf32> to vector<8x64xf32>
    %120 = vector.shape_cast %119 : vector<8x64xf32> to vector<8x8x8xf32>
    %121 = tpu.transpose %120, [1, 0, 2] : vector<8x8x8xf32> -> vector<8x8x8xf32>
    %122 = vector.extract_strided_slice %118 {offsets = [0, 0], sizes = [16, 128], strides = [1, 1]} : vector<32x128xf32> to vector<16x128xf32>
    %123 = vector.extract_strided_slice %122 {offsets = [0, 0], sizes = [16, 64], strides = [1, 1]} : vector<16x128xf32> to vector<16x64xf32>
    %124 = vector.shape_cast %123 : vector<16x64xf32> to vector<16x8x8xf32>
    %125 = tpu.transpose %124, [1, 0, 2] : vector<16x8x8xf32> -> vector<8x16x8xf32>
    %126 = vector.extract_strided_slice %122 {offsets = [0, 64], sizes = [16, 64], strides = [1, 1]} : vector<16x128xf32> to vector<16x64xf32>
    %127 = vector.shape_cast %126 : vector<16x64xf32> to vector<16x8x8xf32>
    %128 = tpu.transpose %127, [1, 0, 2] : vector<16x8x8xf32> -> vector<8x16x8xf32>
    %c0_51 = arith.constant 0 : index
    %c0_52 = arith.constant 0 : index
    %c0_53 = arith.constant 0 : index
    %129 = vector.load %arg3[%c0_51, %c0_52, %c0_53] : memref<2x1x16xf32, #tpu.memory_space<vmem>>, vector<1x1x16xf32>
    %130 = vector.shape_cast %129 : vector<1x1x16xf32> to vector<1x16xf32>
    %131 = arith.truncf %121 : vector<8x8x8xf32> to vector<8x8x8xbf16>
    %132 = arith.truncf %125 : vector<8x16x8xf32> to vector<8x16x8xbf16>
    "tpu.trace_start"() <{level = 10 : i32, message = "htd,hsd->hts"}> : () -> ()
    %cst_54 = arith.constant dense<0.000000e+00> : vector<8x8x16xf32>
    %133 = tpu.matmul %131, %132, %cst_54 {dimension_numbers = #tpu.dot_dimension_numbers<[2], [2], [1], [1], [0, 0, 0, 1, 1, 1], [0], [0]>} : vector<8x8x8xbf16>, vector<8x16x8xbf16>, vector<8x8x16xf32> -> vector<8x8x16xf32>
    "tpu.trace_stop"() : () -> ()
    %134 = vector.shape_cast %130 : vector<1x16xf32> to vector<1x1x16xf32>
    %135 = vector.broadcast %134 : vector<1x1x16xf32> to vector<8x8x16xf32>
    %136 = arith.addf %133, %135 : vector<8x8x16xf32>
    %cst_55 = arith.constant dense<0xFF800000> : vector<8x8xf32>
    %137 = vector.multi_reduction <maximumf>, %136, %cst_55 [2] : vector<8x8x16xf32> to vector<8x8xf32>
    %138 = vector.shape_cast %137 : vector<8x8xf32> to vector<8x8x1xf32>
    %139 = vector.broadcast %138 : vector<8x8x1xf32> to vector<8x8x16xf32>
    %140 = arith.subf %136, %139 : vector<8x8x16xf32>
    %141 = math.exp %140 : vector<8x8x16xf32>
    %cst_56 = arith.constant dense<0.000000e+00> : vector<8x8xf32>
    %142 = vector.multi_reduction <add>, %141, %cst_56 [2] : vector<8x8x16xf32> to vector<8x8xf32>
    %143 = vector.shape_cast %142 : vector<8x8xf32> to vector<8x8x1xf32>
    %144 = vector.broadcast %143 : vector<8x8x1xf32> to vector<8x8x16xf32>
    %145 = arith.divf %141, %144 : vector<8x8x16xf32>
    %146 = arith.truncf %145 : vector<8x8x16xf32> to vector<8x8x16xbf16>
    %147 = arith.truncf %128 : vector<8x16x8xf32> to vector<8x16x8xbf16>
    "tpu.trace_start"() <{level = 10 : i32, message = "hts,hsd->htd"}> : () -> ()
    %cst_57 = arith.constant dense<0.000000e+00> : vector<8x8x8xf32>
    %148 = tpu.matmul %146, %147, %cst_57 {dimension_numbers = #tpu.dot_dimension_numbers<[2], [1], [1], [2], [0, 0, 0, 1, 1, 2], [0], [0]>} : vector<8x8x16xbf16>, vector<8x16x8xbf16>, vector<8x8x8xf32> -> vector<8x8x8xf32>
    "tpu.trace_stop"() : () -> ()
    %c0_58 = arith.constant 0 : index
    %c0_59 = arith.constant 0 : index
    %c0_60 = arith.constant 0 : index
    %c0_61 = arith.constant 0 : index
    %149 = vector.load %arg25[%c0_58, %c0_59, %c0_60, %c0_61] : memref<2x8x8x16xf32, #tpu.memory_space<vmem>>, vector<1x8x8x16xf32>
    %150 = vector.shape_cast %149 : vector<1x8x8x16xf32> to vector<8x8x16xf32>
    %151 = vector.shape_cast %145 : vector<8x8x16xf32> to vector<1x8x8x16xf32>
    tpu.vector_store %arg25[%c0_58, %c0_59, %c0_60, %c0_61], %151 {strides = array<i32>} : memref<2x8x8x16xf32, #tpu.memory_space<vmem>>, vector<1x8x8x16xf32>,
    %152 = arith.truncf %148 : vector<8x8x8xf32> to vector<8x8x8xbf16>
    %c0_62 = arith.constant 0 : index
    %c0_63 = arith.constant 0 : index
    %c0_64 = arith.constant 0 : index
    %153 = vector.load %arg14[%c0_62, %c0_63, %c0_64] : memref<8x8x64xbf16, #tpu.memory_space<vmem>>, vector<8x8x64xbf16>
    "tpu.trace_start"() <{level = 10 : i32, message = "htd,hdn->htn"}> : () -> ()
    %cst_65 = arith.constant dense<0.000000e+00> : vector<8x8x64xf32>
    %154 = tpu.matmul %152, %153, %cst_65 {dimension_numbers = #tpu.dot_dimension_numbers<[2], [1], [1], [2], [0, 0, 0, 1, 1, 2], [0], [0]>} : vector<8x8x8xbf16>, vector<8x8x64xbf16>, vector<8x8x64xf32> -> vector<8x8x64xf32>
    "tpu.trace_stop"() : () -> ()
    %cst_66 = arith.constant dense<0.000000e+00> : vector<8x64xf32>
    %155 = vector.multi_reduction <add>, %154, %cst_66 [0] : vector<8x8x64xf32> to vector<8x64xf32>
    %156 = vector.extract_strided_slice %112 {offsets = [8, 0], sizes = [8, 64], strides = [1, 1]} : vector<16x64xf32> to vector<8x64xf32>
    %157 = vector.shape_cast %156 : vector<8x64xf32> to vector<8x8x8xf32>
    %158 = tpu.transpose %157, [1, 0, 2] : vector<8x8x8xf32> -> vector<8x8x8xf32>
    %159 = vector.extract_strided_slice %118 {offsets = [16, 0], sizes = [16, 128], strides = [1, 1]} : vector<32x128xf32> to vector<16x128xf32>
    %160 = vector.extract_strided_slice %159 {offsets = [0, 0], sizes = [16, 64], strides = [1, 1]} : vector<16x128xf32> to vector<16x64xf32>
    %161 = vector.shape_cast %160 : vector<16x64xf32> to vector<16x8x8xf32>
    %162 = tpu.transpose %161, [1, 0, 2] : vector<16x8x8xf32> -> vector<8x16x8xf32>
    %163 = vector.extract_strided_slice %159 {offsets = [0, 64], sizes = [16, 64], strides = [1, 1]} : vector<16x128xf32> to vector<16x64xf32>
    %164 = vector.shape_cast %163 : vector<16x64xf32> to vector<16x8x8xf32>
    %165 = tpu.transpose %164, [1, 0, 2] : vector<16x8x8xf32> -> vector<8x16x8xf32>
    %c1_67 = arith.constant 1 : index
    %c0_68 = arith.constant 0 : index
    %c0_69 = arith.constant 0 : index
    %166 = vector.load %arg3[%c1_67, %c0_68, %c0_69] : memref<2x1x16xf32, #tpu.memory_space<vmem>>, vector<1x1x16xf32>
    %167 = vector.shape_cast %166 : vector<1x1x16xf32> to vector<1x16xf32>
    %168 = arith.truncf %158 : vector<8x8x8xf32> to vector<8x8x8xbf16>
    %169 = arith.truncf %162 : vector<8x16x8xf32> to vector<8x16x8xbf16>
    "tpu.trace_start"() <{level = 10 : i32, message = "htd,hsd->hts"}> : () -> ()
    %cst_70 = arith.constant dense<0.000000e+00> : vector<8x8x16xf32>
    %170 = tpu.matmul %168, %169, %cst_70 {dimension_numbers = #tpu.dot_dimension_numbers<[2], [2], [1], [1], [0, 0, 0, 1, 1, 1], [0], [0]>} : vector<8x8x8xbf16>, vector<8x16x8xbf16>, vector<8x8x16xf32> -> vector<8x8x16xf32>
    "tpu.trace_stop"() : () -> ()
    %171 = vector.shape_cast %167 : vector<1x16xf32> to vector<1x1x16xf32>
    %172 = vector.broadcast %171 : vector<1x1x16xf32> to vector<8x8x16xf32>
    %173 = arith.addf %170, %172 : vector<8x8x16xf32>
    %cst_71 = arith.constant dense<0xFF800000> : vector<8x8xf32>
    %174 = vector.multi_reduction <maximumf>, %173, %cst_71 [2] : vector<8x8x16xf32> to vector<8x8xf32>
    %175 = vector.shape_cast %174 : vector<8x8xf32> to vector<8x8x1xf32>
    %176 = vector.broadcast %175 : vector<8x8x1xf32> to vector<8x8x16xf32>
    %177 = arith.subf %173, %176 : vector<8x8x16xf32>
    %178 = math.exp %177 : vector<8x8x16xf32>
    %cst_72 = arith.constant dense<0.000000e+00> : vector<8x8xf32>
    %179 = vector.multi_reduction <add>, %178, %cst_72 [2] : vector<8x8x16xf32> to vector<8x8xf32>
    %180 = vector.shape_cast %179 : vector<8x8xf32> to vector<8x8x1xf32>
    %181 = vector.broadcast %180 : vector<8x8x1xf32> to vector<8x8x16xf32>
    %182 = arith.divf %178, %181 : vector<8x8x16xf32>
    %183 = arith.truncf %182 : vector<8x8x16xf32> to vector<8x8x16xbf16>
    %184 = arith.truncf %165 : vector<8x16x8xf32> to vector<8x16x8xbf16>
    "tpu.trace_start"() <{level = 10 : i32, message = "hts,hsd->htd"}> : () -> ()
    %cst_73 = arith.constant dense<0.000000e+00> : vector<8x8x8xf32>
    %185 = tpu.matmul %183, %184, %cst_73 {dimension_numbers = #tpu.dot_dimension_numbers<[2], [1], [1], [2], [0, 0, 0, 1, 1, 2], [0], [0]>} : vector<8x8x16xbf16>, vector<8x16x8xbf16>, vector<8x8x8xf32> -> vector<8x8x8xf32>
    "tpu.trace_stop"() : () -> ()
    %c1_74 = arith.constant 1 : index
    %c0_75 = arith.constant 0 : index
    %c0_76 = arith.constant 0 : index
    %c0_77 = arith.constant 0 : index
    %186 = vector.load %arg25[%c1_74, %c0_75, %c0_76, %c0_77] : memref<2x8x8x16xf32, #tpu.memory_space<vmem>>, vector<1x8x8x16xf32>
    %187 = vector.shape_cast %186 : vector<1x8x8x16xf32> to vector<8x8x16xf32>
    %188 = vector.shape_cast %182 : vector<8x8x16xf32> to vector<1x8x8x16xf32>
    tpu.vector_store %arg25[%c1_74, %c0_75, %c0_76, %c0_77], %188 {strides = array<i32>} : memref<2x8x8x16xf32, #tpu.memory_space<vmem>>, vector<1x8x8x16xf32>,
    %189 = arith.truncf %185 : vector<8x8x8xf32> to vector<8x8x8xbf16>
    %c0_78 = arith.constant 0 : index
    %c0_79 = arith.constant 0 : index
    %c0_80 = arith.constant 0 : index
    %190 = vector.load %arg14[%c0_78, %c0_79, %c0_80] : memref<8x8x64xbf16, #tpu.memory_space<vmem>>, vector<8x8x64xbf16>
    "tpu.trace_start"() <{level = 10 : i32, message = "htd,hdn->htn"}> : () -> ()
    %cst_81 = arith.constant dense<0.000000e+00> : vector<8x8x64xf32>
    %191 = tpu.matmul %189, %190, %cst_81 {dimension_numbers = #tpu.dot_dimension_numbers<[2], [1], [1], [2], [0, 0, 0, 1, 1, 2], [0], [0]>} : vector<8x8x8xbf16>, vector<8x8x64xbf16>, vector<8x8x64xf32> -> vector<8x8x64xf32>
    "tpu.trace_stop"() : () -> ()
    %cst_82 = arith.constant dense<0.000000e+00> : vector<8x64xf32>
    %192 = vector.multi_reduction <add>, %191, %cst_82 [0] : vector<8x8x64xf32> to vector<8x64xf32>
    %193 = tpu.concatenate %155, %192 in 0 : vector<8x64xf32>, vector<8x64xf32> -> vector<16x64xf32>
    %c0_83 = arith.constant 0 : index
    %c0_84 = arith.constant 0 : index
    %194 = vector.load %arg15[%c0_83, %c0_84] : memref<1x64xf32, #tpu.memory_space<vmem>>, vector<1x64xf32>
    %195 = vector.broadcast %194 : vector<1x64xf32> to vector<16x64xf32>
    %196 = arith.addf %193, %195 : vector<16x64xf32>
    %cst_85 = arith.constant dense<0.000000e+00> : vector<16xf32>
    %197 = vector.multi_reduction <add>, %196, %cst_85 [1] : vector<16x64xf32> to vector<16xf32>
    %198 = vector.shape_cast %197 : vector<16xf32> to vector<16x1xf32>
    %cst_86 = arith.constant 6.400000e+01 : f32
    %199 = vector.broadcast %cst_86 : f32 to vector<16x1xf32>
    %200 = arith.divf %198, %199 : vector<16x1xf32>
    %201 = arith.mulf %196, %196 : vector<16x64xf32>
    %cst_87 = arith.constant dense<0.000000e+00> : vector<16xf32>
    %202 = vector.multi_reduction <add>, %201, %cst_87 [1] : vector<16x64xf32> to vector<16xf32>
    %203 = vector.shape_cast %202 : vector<16xf32> to vector<16x1xf32>
    %cst_88 = arith.constant 6.400000e+01 : f32
    %204 = vector.broadcast %cst_88 : f32 to vector<16x1xf32>
    %205 = arith.divf %203, %204 : vector<16x1xf32>
    %206 = arith.mulf %200, %200 : vector<16x1xf32>
    %207 = arith.subf %205, %206 : vector<16x1xf32>
    %208 = vector.broadcast %200 : vector<16x1xf32> to vector<16x64xf32>
    %209 = arith.subf %196, %208 : vector<16x64xf32>
    %cst_89 = arith.constant 9.99999974E-6 : f32
    %210 = vector.broadcast %cst_89 : f32 to vector<16x1xf32>
    %211 = arith.addf %207, %210 : vector<16x1xf32>
    %212 = math.rsqrt %211 : vector<16x1xf32>
    %213 = vector.broadcast %212 : vector<16x1xf32> to vector<16x64xf32>
    %214 = arith.mulf %209, %213 : vector<16x64xf32>
    %c0_90 = arith.constant 0 : index
    %c0_91 = arith.constant 0 : index
    %215 = vector.load %arg16[%c0_90, %c0_91] : memref<1x64xf32, #tpu.memory_space<vmem>>, vector<1x64xf32>
    %216 = vector.broadcast %215 : vector<1x64xf32> to vector<16x64xf32>
    %217 = arith.mulf %214, %216 : vector<16x64xf32>
    %c0_92 = arith.constant 0 : index
    %c0_93 = arith.constant 0 : index
    %218 = vector.load %arg17[%c0_92, %c0_93] : memref<1x64xf32, #tpu.memory_space<vmem>>, vector<1x64xf32>
    %219 = vector.broadcast %218 : vector<1x64xf32> to vector<16x64xf32>
    %220 = arith.addf %217, %219 : vector<16x64xf32>
    %221 = arith.addf %106, %220 : vector<16x64xf32>
    %cst_94 = arith.constant dense<0.000000e+00> : vector<16xf32>
    %222 = vector.multi_reduction <add>, %221, %cst_94 [1] : vector<16x64xf32> to vector<16xf32>
    %223 = vector.shape_cast %222 : vector<16xf32> to vector<16x1xf32>
    %cst_95 = arith.constant 6.400000e+01 : f32
    %224 = vector.broadcast %cst_95 : f32 to vector<16x1xf32>
    %225 = arith.divf %223, %224 : vector<16x1xf32>
    %226 = arith.mulf %221, %221 : vector<16x64xf32>
    %cst_96 = arith.constant dense<0.000000e+00> : vector<16xf32>
    %227 = vector.multi_reduction <add>, %226, %cst_96 [1] : vector<16x64xf32> to vector<16xf32>
    %228 = vector.shape_cast %227 : vector<16xf32> to vector<16x1xf32>
    %cst_97 = arith.constant 6.400000e+01 : f32
    %229 = vector.broadcast %cst_97 : f32 to vector<16x1xf32>
    %230 = arith.divf %228, %229 : vector<16x1xf32>
    %231 = arith.mulf %225, %225 : vector<16x1xf32>
    %232 = arith.subf %230, %231 : vector<16x1xf32>
    %233 = vector.broadcast %225 : vector<16x1xf32> to vector<16x64xf32>
    %234 = arith.subf %221, %233 : vector<16x64xf32>
    %cst_98 = arith.constant 9.99999974E-6 : f32
    %235 = vector.broadcast %cst_98 : f32 to vector<16x1xf32>
    %236 = arith.addf %232, %235 : vector<16x1xf32>
    %237 = math.rsqrt %236 : vector<16x1xf32>
    %238 = vector.broadcast %237 : vector<16x1xf32> to vector<16x64xf32>
    %239 = arith.mulf %234, %238 : vector<16x64xf32>
    %c0_99 = arith.constant 0 : index
    %c0_100 = arith.constant 0 : index
    %240 = vector.load %arg18[%c0_99, %c0_100] : memref<1x64xf32, #tpu.memory_space<vmem>>, vector<1x64xf32>
    %241 = vector.broadcast %240 : vector<1x64xf32> to vector<16x64xf32>
    %242 = arith.mulf %239, %241 : vector<16x64xf32>
    %c0_101 = arith.constant 0 : index
    %c0_102 = arith.constant 0 : index
    %243 = vector.load %arg19[%c0_101, %c0_102] : memref<1x64xf32, #tpu.memory_space<vmem>>, vector<1x64xf32>
    %244 = vector.broadcast %243 : vector<1x64xf32> to vector<16x64xf32>
    %245 = arith.addf %242, %244 : vector<16x64xf32>
    %246 = arith.truncf %245 : vector<16x64xf32> to vector<16x64xbf16>
    %c0_103 = arith.constant 0 : index
    %c0_104 = arith.constant 0 : index
    %247 = vector.load %arg20[%c0_103, %c0_104] : memref<64x128xbf16, #tpu.memory_space<vmem>>, vector<64x128xbf16>
    %cst_105 = arith.constant dense<0.000000e+00> : vector<16x128xf32>
    %248 = tpu.matmul %246, %247, %cst_105 {dimension_numbers = #tpu.dot_dimension_numbers<[1], [0], [0], [1], [0, 0, 1, 1], [], []>} : vector<16x64xbf16>, vector<64x128xbf16>, vector<16x128xf32> -> vector<16x128xf32>
    %c0_106 = arith.constant 0 : index
    %c0_107 = arith.constant 0 : index
    %249 = vector.load %arg21[%c0_106, %c0_107] : memref<1x128xf32, #tpu.memory_space<vmem>>, vector<1x128xf32>
    %250 = vector.broadcast %249 : vector<1x128xf32> to vector<16x128xf32>
    %251 = arith.addf %248, %250 : vector<16x128xf32>
    %cst_108 = arith.constant 0.000000e+00 : f32
    %252 = vector.broadcast %cst_108 : f32 to vector<16x128xf32>
    %253 = arith.maximumf %251, %252 : vector<16x128xf32>
    %254 = arith.truncf %253 : vector<16x128xf32> to vector<16x128xbf16>
    %c0_109 = arith.constant 0 : index
    %c0_110 = arith.constant 0 : index
    %255 = vector.load %arg22[%c0_109, %c0_110] : memref<128x64xbf16, #tpu.memory_space<vmem>>, vector<128x64xbf16>
    %cst_111 = arith.constant dense<0.000000e+00> : vector<16x64xf32>
    %256 = tpu.matmul %254, %255, %cst_111 {dimension_numbers = #tpu.dot_dimension_numbers<[1], [0], [0], [1], [0, 0, 1, 1], [], []>} : vector<16x128xbf16>, vector<128x64xbf16>, vector<16x64xf32> -> vector<16x64xf32>
    %c0_112 = arith.constant 0 : index
    %c0_113 = arith.constant 0 : index
    %257 = vector.load %arg23[%c0_112, %c0_113] : memref<1x64xf32, #tpu.memory_space<vmem>>, vector<1x64xf32>
    %258 = vector.broadcast %257 : vector<1x64xf32> to vector<16x64xf32>
    %259 = arith.addf %256, %258 : vector<16x64xf32>
    %260 = arith.addf %221, %259 : vector<16x64xf32>
    %c0_114 = arith.constant 0 : index
    %c0_115 = arith.constant 0 : index
    %261 = vector.load %arg24[%c0_114, %c0_115] : memref<16x64xf32, #tpu.memory_space<vmem>>, vector<16x64xf32>
    tpu.vector_store %arg24[%c0_114, %c0_115], %260 {strides = array<i32>} : memref<16x64xf32, #tpu.memory_space<vmem>>, vector<16x64xf32>,
    return
  }
}

</mosaic_0001>

<llo_original>
// kernel: tpu_custom_call.1
$region0: #{tpu_custom_call.1}
  #allocation0 [shape = 'u32[]', space=smem, size = 0x4, offset = 0x4, fixed_abs, tag = 'smem constant byte address 0x4 - core index']
  #allocation1 [shape = 'u32[72,128]{1,0:T(1,128)}', space=vmem, size = 0x9000, scoped, tag = 'internal scratch']
  %s0 = inlined_call_operand.hbm [shape: f32[16,64], index: 0, kind: input, shape index: {}]
  %s1 = inlined_call_operand.vmem [shape: f32[32,64], index: 1, kind: input, shape index: {}]
  %s2 = inlined_call_operand.hbm [shape: f32[2,8,8], index: 2, kind: input, shape index: {}]
  %s3 = inlined_call_operand.vmem [shape: f32[2,1,16], index: 3, kind: input, shape index: {}]
  %s4 = inlined_call_operand.vmem [shape: bf16[64,192], index: 4, kind: input, shape index: {}]
  %s5 = inlined_call_operand.hbm [shape: f32[1,192], index: 5, kind: input, shape index: {}]
  %s6 = inlined_call_operand.hbm [shape: bf16[8,8,64], index: 6, kind: input, shape index: {}]
  %s7 = inlined_call_operand.vmem [shape: f32[1,64], index: 7, kind: input, shape index: {}]
  %s8 = inlined_call_operand.vmem [shape: f32[1,64], index: 8, kind: input, shape index: {}]
  %s9 = inlined_call_operand.vmem [shape: f32[1,64], index: 9, kind: input, shape index: {}]
  %s10 = inlined_call_operand.hbm [shape: bf16[64,64], index: 10, kind: input, shape index: {}]
  %s11 = inlined_call_operand.vmem [shape: f32[1,64], index: 11, kind: input, shape index: {}]
  %s12 = inlined_call_operand.hbm [shape: bf16[64,128], index: 12, kind: input, shape index: {}]
  %s13 = inlined_call_operand.vmem [shape: f32[1,128], index: 13, kind: input, shape index: {}]
  %s14 = inlined_call_operand.hbm [shape: bf16[8,8,64], index: 14, kind: input, shape index: {}]
  %s15 = inlined_call_operand.vmem [shape: f32[1,64], index: 15, kind: input, shape index: {}]
  %s16 = inlined_call_operand.vmem [shape: f32[1,64], index: 16, kind: input, shape index: {}]
  %s17 = inlined_call_operand.vmem [shape: f32[1,64], index: 17, kind: input, shape index: {}]
  %s18 = inlined_call_operand.vmem [shape: f32[1,64], index: 18, kind: input, shape index: {}]
  %s19 = inlined_call_operand.vmem [shape: f32[1,64], index: 19, kind: input, shape index: {}]
  %s20 = inlined_call_operand.hbm [shape: bf16[64,128], index: 20, kind: input, shape index: {}]
  %s21 = inlined_call_operand.vmem [shape: f32[1,128], index: 21, kind: input, shape index: {}]
  %s22 = inlined_call_operand.vmem [shape: bf16[128,64], index: 22, kind: input, shape index: {}]
  %s23 = inlined_call_operand.vmem [shape: f32[1,64], index: 23, kind: input, shape index: {}]
  %s24 = inlined_call_operand.hbm [shape: f32[16,64], index: 24, kind: output, shape index: {0}]
  %s25 = inlined_call_operand.hbm [shape: f32[2,8,8,16], index: 25, kind: output, shape index: {1}]
  %26 = xla_tuple %s24, %s25
  %s27 = sld [smem:[#allocation0]]
  $region146: #{tpu_custom_call.1} parent=0
    _
  %s29 = ssub.s32 1, %s27
  %s30 = scalar_select 0, %s29, %s27
  $region1: #{tpu_custom_call.1} parent=0
    #allocation2 [shape = 'u8[8192]{0}', space=vmem, size = 0x2000, scoped, tag = 'input window, operand 0, single buffered']
    #allocation3 [shape = 's32[1]{0}', space=sflag, size = 0x4, scoped, tag = 'scoped memory for tpu_custom_call.1']
    #allocation4 [shape = 's32[1]{0}', space=sflag, size = 0x4, scoped, tag = 'scoped memory for tpu_custom_call.1']
    #allocation5 [shape = 'u8[8192]{0}', space=vmem, size = 0x2000, scoped, tag = 'input window, operand 2, single buffered']
    #allocation6 [shape = 's32[1]{0}', space=sflag, size = 0x4, scoped, tag = 'scoped memory for tpu_custom_call.1']
    #allocation7 [shape = 'u8[1024]{0}', space=vmem, size = 0x400, scoped, tag = 'input window, operand 5, single buffered']
    #allocation8 [shape = 'u8[16384]{0}', space=vmem, size = 0x4000, scoped, tag = 'input window, operand 6, single buffered']
    #allocation9 [shape = 's32[1]{0}', space=sflag, size = 0x4, scoped, tag = 'scoped memory for tpu_custom_call.1']
    #allocation10 [shape = 'u8[16384]{0}', space=vmem, size = 0x4000, scoped, tag = 'input window, operand 10, single buffered']
    #allocation11 [shape = 'u8[16384]{0}', space=vmem, size = 0x4000, scoped, tag = 'input window, operand 12, single buffered']
    #allocation12 [shape = 's32[1]{0}', space=sflag, size = 0x4, scoped, tag = 'scoped memory for tpu_custom_call.1']
    #allocation13 [shape = 'u8[16384]{0}', space=vmem, size = 0x4000, scoped, tag = 'input window, operand 14, single buffered']
    #allocation14 [shape = 'u8[16384]{0}', space=vmem, size = 0x4000, scoped, tag = 'input window, operand 20, single buffered']
    #allocation15 [shape = 's32[1]{0}', space=sflag, size = 0x4, scoped, tag = 'scoped memory for tpu_custom_call.1']
    #allocation16 [shape = 'u8[8192]{0}', space=vmem, size = 0x2000, scoped, tag = 'output window, operand 0, single buffered']
    #allocation17 [shape = 'u8[65536]{0}', space=vmem, size = 0x10000, scoped, tag = 'output window, operand 1, single buffered']
    #allocation18 [shape = 's32[1]{0}', space=sflag, size = 0x4, scoped, tag = 'scoped memory for tpu_custom_call.1']
    %31 = vsyncpa [#allocation3], 0
    %32 = vsyncpa [#allocation6], 0
    %33 = vsyncpa [#allocation9], 0
    %34 = vsyncpa [#allocation12], 0
    %35 = vsyncpa [#allocation15], 0
    %36 = vsyncpa [#allocation4], 0
    %37 = vsyncpa [#allocation18], 0
    // Predicated region
    $region2: #{tpu_custom_call.1} parent=1 // pred_check
      _
    $region3: #{tpu_custom_call.1} parent=1 // pred_check_branch
      %39 = sbr.rel (0) target = $region5
    $region4: #{tpu_custom_call.1} parent=1 // pred_region
      %41 = vsyncadd [#allocation3], 0
      %s42 = sshll.u32 %s0, 4
      %s43 = int_to_ptr.hbm [resolvable:$true] %s42
      %s44 = sshll.u32 [#allocation2], 4
      %s45 = int_to_ptr.vmem [resolvable:$true] %s44
      %50 = dma.hbm_to_vmem [thread:$0]  %s43, 256, %s45, [#allocation3], 128, 128, 8
    $region5: #{tpu_custom_call.1} parent=1 // pred_fallthru
      _
    // Predicated region
    $region6: #{tpu_custom_call.1} parent=1 // pred_check
      _
    $region7: #{tpu_custom_call.1} parent=1 // pred_check_branch
      %52 = sbr.rel (0) target = $region9
    $region8: #{tpu_custom_call.1} parent=1 // pred_region
      _
    $region9: #{tpu_custom_call.1} parent=1 // pred_fallthru
      _
    // Predicated region
    $region10: #{tpu_custom_call.1} parent=1 // pred_check
      _
    $region11: #{tpu_custom_call.1} parent=1 // pred_check_branch
      %54 = sbr.rel (0) target = $region13
    $region12: #{tpu_custom_call.1} parent=1 // pred_region
      %56 = vsyncadd [#allocation6], 0
      %s57 = sshll.u32 %s2, 4
      %s58 = int_to_ptr.hbm [resolvable:$true] %s57
      %s59 = sshll.u32 [#allocation5], 4
      %s60 = int_to_ptr.vmem [resolvable:$true] %s59
      %65 = dma.hbm_to_vmem [thread:$0]  %s58, 256, %s60, [#allocation6], 128, 128, 8
    $region13: #{tpu_custom_call.1} parent=1 // pred_fallthru
      _
    // Predicated region
    $region14: #{tpu_custom_call.1} parent=1 // pred_check
      _
    $region15: #{tpu_custom_call.1} parent=1 // pred_check_branch
      %67 = sbr.rel (0) target = $region17
    $region16: #{tpu_custom_call.1} parent=1 // pred_region
      _
    $region17: #{tpu_custom_call.1} parent=1 // pred_fallthru
      _
    // Predicated region
    $region18: #{tpu_custom_call.1} parent=1 // pred_check
      _
    $region19: #{tpu_custom_call.1} parent=1 // pred_check_branch
      %69 = sbr.rel (0) target = $region21
    $region20: #{tpu_custom_call.1} parent=1 // pred_region
      _
    $region21: #{tpu_custom_call.1} parent=1 // pred_fallthru
      _
    // Predicated region
    $region22: #{tpu_custom_call.1} parent=1 // pred_check
      _
    $region23: #{tpu_custom_call.1} parent=1 // pred_check_branch
      %71 = sbr.rel (0) target = $region25
    $region24: #{tpu_custom_call.1} parent=1 // pred_region
      %73 = vsyncadd [#allocation6], 0
      %s75 = sshll.u32 %s5, 4
      %s76 = int_to_ptr.hbm [resolvable:$true] %s75
      %s77 = sshll.u32 [#allocation7], 4
      %s78 = int_to_ptr.vmem [resolvable:$true] %s77
      %80 = dma.hbm_to_vmem [thread:$0]  %s76, 32, %s78, [#allocation6]
    $region25: #{tpu_custom_call.1} parent=1 // pred_fallthru
      _
    // Predicated region
    $region26: #{tpu_custom_call.1} parent=1 // pred_check
      _
    $region27: #{tpu_custom_call.1} parent=1 // pred_check_branch
      %82 = sbr.rel (0) target = $region29
    $region28: #{tpu_custom_call.1} parent=1 // pred_region
      %84 = vsyncadd [#allocation9], 0
      %s85 = sshll.u32 %s6, 4
      %s86 = int_to_ptr.hbm [resolvable:$true] %s85
      %s87 = sshll.u32 [#allocation8], 4
      %s88 = int_to_ptr.vmem [resolvable:$true] %s87
      %93 = dma.hbm_to_vmem [thread:$0]  %s86, 512, %s88, [#allocation9], 64, 64, 4
    $region29: #{tpu_custom_call.1} parent=1 // pred_fallthru
      _
    // Predicated region
    $region30: #{tpu_custom_call.1} parent=1 // pred_check
      _
    $region31: #{tpu_custom_call.1} parent=1 // pred_check_branch
      %95 = sbr.rel (0) target = $region33
    $region32: #{tpu_custom_call.1} parent=1 // pred_region
      _
    $region33: #{tpu_custom_call.1} parent=1 // pred_fallthru
      _
    // Predicated region
    $region34: #{tpu_custom_call.1} parent=1 // pred_check
      _
    $region35: #{tpu_custom_call.1} parent=1 // pred_check_branch
      %97 = sbr.rel (0) target = $region37
    $region36: #{tpu_custom_call.1} parent=1 // pred_region
      _
    $region37: #{tpu_custom_call.1} parent=1 // pred_fallthru
      _
    // Predicated region
    $region38: #{tpu_custom_call.1} parent=1 // pred_check
      _
    $region39: #{tpu_custom_call.1} parent=1 // pred_check_branch
      %99 = sbr.rel (0) target = $region41
    $region40: #{tpu_custom_call.1} parent=1 // pred_region
      _
    $region41: #{tpu_custom_call.1} parent=1 // pred_fallthru
      _
    // Predicated region
    $region42: #{tpu_custom_call.1} parent=1 // pred_check
      _
    $region43: #{tpu_custom_call.1} parent=1 // pred_check_branch
      %101 = sbr.rel (0) target = $region45
    $region44: #{tpu_custom_call.1} parent=1 // pred_region
      %103 = vsyncadd [#allocation9], 0
      %s104 = sshll.u32 %s10, 4
      %s105 = int_to_ptr.hbm [resolvable:$true] %s104
      %s106 = sshll.u32 [#allocation10], 4
      %s107 = int_to_ptr.vmem [resolvable:$true] %s106
      %112 = dma.hbm_to_vmem [thread:$0]  %s105, 512, %s107, [#allocation9], 64, 64, 4
    $region45: #{tpu_custom_call.1} parent=1 // pred_fallthru
      _
    // Predicated region
    $region46: #{tpu_custom_call.1} parent=1 // pred_check
      _
    $region47: #{tpu_custom_call.1} parent=1 // pred_check_branch
      %114 = sbr.rel (0) target = $region49
    $region48: #{tpu_custom_call.1} parent=1 // pred_region
      _
    $region49: #{tpu_custom_call.1} parent=1 // pred_fallthru
      _
    // Predicated region
    $region50: #{tpu_custom_call.1} parent=1 // pred_check
      _
    $region51: #{tpu_custom_call.1} parent=1 // pred_check_branch
      %116 = sbr.rel (0) target = $region53
    $region52: #{tpu_custom_call.1} parent=1 // pred_region
      %118 = vsyncadd [#allocation12], 0
      %s119 = sshll.u32 %s12, 4
      %s120 = int_to_ptr.hbm [resolvable:$true] %s119
      %s121 = sshll.u32 [#allocation11], 4
      %s122 = int_to_ptr.vmem [resolvable:$true] %s121
      %127 = dma.hbm_to_vmem [thread:$0]  %s120, 512, %s122, [#allocation12], 64, 64, 4
    $region53: #{tpu_custom_call.1} parent=1 // pred_fallthru
      _
    // Predicated region
    $region54: #{tpu_custom_call.1} parent=1 // pred_check
      _
    $region55: #{tpu_custom_call.1} parent=1 // pred_check_branch
      %129 = sbr.rel (0) target = $region57
    $region56: #{tpu_custom_call.1} parent=1 // pred_region
      _
    $region57: #{tpu_custom_call.1} parent=1 // pred_fallthru
      _
    // Predicated region
    $region58: #{tpu_custom_call.1} parent=1 // pred_check
      _
    $region59: #{tpu_custom_call.1} parent=1 // pred_check_branch
      %131 = sbr.rel (0) target = $region61
    $region60: #{tpu_custom_call.1} parent=1 // pred_region
      %133 = vsyncadd [#allocation12], 0
      %s134 = sshll.u32 %s14, 4
      %s135 = int_to_ptr.hbm [resolvable:$true] %s134
      %s136 = sshll.u32 [#allocation13], 4
      %s137 = int_to_ptr.vmem [resolvable:$true] %s136
      %142 = dma.hbm_to_vmem [thread:$0]  %s135, 512, %s137, [#allocation12], 64, 64, 4
    $region61: #{tpu_custom_call.1} parent=1 // pred_fallthru
      _
    // Predicated region
    $region62: #{tpu_custom_call.1} parent=1 // pred_check
      _
    $region63: #{tpu_custom_call.1} parent=1 // pred_check_branch
      %144 = sbr.rel (0) target = $region65
    $region64: #{tpu_custom_call.1} parent=1 // pred_region
      _
    $region65: #{tpu_custom_call.1} parent=1 // pred_fallthru
      _
    // Predicated region
    $region66: #{tpu_custom_call.1} parent=1 // pred_check
      _
    $region67: #{tpu_custom_call.1} parent=1 // pred_check_branch
      %146 = sbr.rel (0) target = $region69
    $region68: #{tpu_custom_call.1} parent=1 // pred_region
      _
    $region69: #{tpu_custom_call.1} parent=1 // pred_fallthru
      _
    // Predicated region
    $region70: #{tpu_custom_call.1} parent=1 // pred_check
      _
    $region71: #{tpu_custom_call.1} parent=1 // pred_check_branch
      %148 = sbr.rel (0) target = $region73
    $region72: #{tpu_custom_call.1} parent=1 // pred_region
      _
    $region73: #{tpu_custom_call.1} parent=1 // pred_fallthru
      _
    // Predicated region
    $region74: #{tpu_custom_call.1} parent=1 // pred_check
      _
    $region75: #{tpu_custom_call.1} parent=1 // pred_check_branch
      %150 = sbr.rel (0) target = $region77
    $region76: #{tpu_custom_call.1} parent=1 // pred_region
      _
    $region77: #{tpu_custom_call.1} parent=1 // pred_fallthru
      _
    // Predicated region
    $region78: #{tpu_custom_call.1} parent=1 // pred_check
      _
    $region79: #{tpu_custom_call.1} parent=1 // pred_check_branch
      %152 = sbr.rel (0) target = $region81
    $region80: #{tpu_custom_call.1} parent=1 // pred_region
      _
    $region81: #{tpu_custom_call.1} parent=1 // pred_fallthru
      _
    // Predicated region
    $region82: #{tpu_custom_call.1} parent=1 // pred_check
      _
    $region83: #{tpu_custom_call.1} parent=1 // pred_check_branch
      %154 = sbr.rel (0) target = $region85
    $region84: #{tpu_custom_call.1} parent=1 // pred_region
      %156 = vsyncadd [#allocation15], 0
      %s157 = sshll.u32 %s20, 4
      %s158 = int_to_ptr.hbm [resolvable:$true] %s157
      %s159 = sshll.u32 [#allocation14], 4
      %s160 = int_to_ptr.vmem [resolvable:$true] %s159
      %165 = dma.hbm_to_vmem [thread:$0]  %s158, 512, %s160, [#allocation15], 64, 64, 4
    $region85: #{tpu_custom_call.1} parent=1 // pred_fallthru
      _
    // Predicated region
    $region86: #{tpu_custom_call.1} parent=1 // pred_check
      _
    $region87: #{tpu_custom_call.1} parent=1 // pred_check_branch
      %167 = sbr.rel (0) target = $region89
    $region88: #{tpu_custom_call.1} parent=1 // pred_region
      _
    $region89: #{tpu_custom_call.1} parent=1 // pred_fallthru
      _
    // Predicated region
    $region90: #{tpu_custom_call.1} parent=1 // pred_check
      _
    $region91: #{tpu_custom_call.1} parent=1 // pred_check_branch
      %169 = sbr.rel (0) target = $region93
    $region92: #{tpu_custom_call.1} parent=1 // pred_region
      _
    $region93: #{tpu_custom_call.1} parent=1 // pred_fallthru
      _
    // Predicated region
    $region94: #{tpu_custom_call.1} parent=1 // pred_check
      _
    $region95: #{tpu_custom_call.1} parent=1 // pred_check_branch
      %171 = sbr.rel (0) target = $region97
    $region96: #{tpu_custom_call.1} parent=1 // pred_region
      _
    $region97: #{tpu_custom_call.1} parent=1 // pred_fallthru
      _
    // Predicated region
    $region98: #{tpu_custom_call.1} parent=1 // pred_check
      _
    $region99: #{tpu_custom_call.1} parent=1 // pred_check_branch
      %173 = sbr.rel (0) target = $region101
    $region100: #{tpu_custom_call.1} parent=1 // pred_region
      %175 = dma.done [#allocation3], 256
    $region101: #{tpu_custom_call.1} parent=1 // pred_fallthru
      _
    // Predicated region
    $region102: #{tpu_custom_call.1} parent=1 // pred_check
      _
    $region103: #{tpu_custom_call.1} parent=1 // pred_check_branch
      %177 = sbr.rel (0) target = $region105
    $region104: #{tpu_custom_call.1} parent=1 // pred_region
      %179 = dma.done [#allocation6], 256
    $region105: #{tpu_custom_call.1} parent=1 // pred_fallthru
      _
    // Predicated region
    $region106: #{tpu_custom_call.1} parent=1 // pred_check
      _
    $region107: #{tpu_custom_call.1} parent=1 // pred_check_branch
      %181 = sbr.rel (0) target = $region109
    $region108: #{tpu_custom_call.1} parent=1 // pred_region
      %183 = dma.done [#allocation6], 32
    $region109: #{tpu_custom_call.1} parent=1 // pred_fallthru
      _
    // Predicated region
    $region110: #{tpu_custom_call.1} parent=1 // pred_check
      _
    $region111: #{tpu_custom_call.1} parent=1 // pred_check_branch
      %185 = sbr.rel (0) target = $region113
    $region112: #{tpu_custom_call.1} parent=1 // pred_region
      %187 = dma.done [#allocation9], 512
    $region113: #{tpu_custom_call.1} parent=1 // pred_fallthru
      _
    // Predicated region
    $region114: #{tpu_custom_call.1} parent=1 // pred_check
      _
    $region115: #{tpu_custom_call.1} parent=1 // pred_check_branch
      %189 = sbr.rel (0) target = $region117
    $region116: #{tpu_custom_call.1} parent=1 // pred_region
      %191 = dma.done [#allocation9], 512
    $region117: #{tpu_custom_call.1} parent=1 // pred_fallthru
      _
    // Predicated region
    $region118: #{tpu_custom_call.1} parent=1 // pred_check
      _
    $region119: #{tpu_custom_call.1} parent=1 // pred_check_branch
      %193 = sbr.rel (0) target = $region121
    $region120: #{tpu_custom_call.1} parent=1 // pred_region
      %195 = dma.done [#allocation12], 512
    $region121: #{tpu_custom_call.1} parent=1 // pred_fallthru
      _
    // Predicated region
    $region122: #{tpu_custom_call.1} parent=1 // pred_check
      _
    $region123: #{tpu_custom_call.1} parent=1 // pred_check_branch
      %197 = sbr.rel (0) target = $region125
    $region124: #{tpu_custom_call.1} parent=1 // pred_region
      %199 = dma.done [#allocation12], 512
    $region125: #{tpu_custom_call.1} parent=1 // pred_fallthru
      _
    // Predicated region
    $region126: #{tpu_custom_call.1} parent=1 // pred_check
      _
    $region127: #{tpu_custom_call.1} parent=1 // pred_check_branch
      %201 = sbr.rel (0) target = $region129
    $region128: #{tpu_custom_call.1} parent=1 // pred_region
      %203 = dma.done [#allocation15], 512
    $region129: #{tpu_custom_call.1} parent=1 // pred_fallthru
      _
    %v205 = vld [vmem:[#allocation2] sm:$0xff]
    %v206 = vld [vmem:[#allocation2 + $0x8] sm:$0xff]
    %v207 = vld [vmem:[%s1] sm:$0xff]
    %v208 = vld [vmem:[%s1 + $0x8] sm:$0xff]
    %v209 = vld [vmem:[%s1 + $0x10] sm:$0xff]
    %v210 = vld [vmem:[%s1 + $0x18] sm:$0xff]
    %v211 = vpack.c.bf16 %v206, %v205
    %v212 = vld [vmem:[%s4] sm:$0xff]
    %v213 = vld [vmem:[%s4 + $0x8] sm:$0xff]
    %v214 = vld [vmem:[%s4 + $0x10] sm:$0xff]
    %v215 = vld [vmem:[%s4 + $0x18] sm:$0xff]
    %v216 = vld [vmem:[%s4 + $0x20] sm:$0xff]
    %v217 = vld [vmem:[%s4 + $0x28] sm:$0xff]
    %v218 = vld [vmem:[%s4 + $0x30] sm:$0xff]
    %v219 = vld [vmem:[%s4 + $0x38] sm:$0xff]
    %v220 = vld [vmem:[#allocation7] sm:$0x3]
    %v222 = vperm.slane %v220, 0
    %v223 = vperm.slane %v220, 1
    %v234 = vunpack.c.l.b16 %v212
    %v235 = vunpack.c.h.b16 %v212
    %v236 = vunpack.c.l.b16 %v213
    %v237 = vunpack.c.h.b16 %v213
    %v238 = vunpack.c.l.b16 %v214
    %v239 = vunpack.c.h.b16 %v214
    %v240 = vunpack.c.l.b16 %v215
    %v241 = vunpack.c.h.b16 %v215
    %v242 = vunpack.c.l.b16 %v216
    %v243 = vunpack.c.h.b16 %v216
    %v244 = vunpack.c.l.b16 %v217
    %v245 = vunpack.c.h.b16 %v217
    %v246 = vunpack.c.l.b16 %v218
    %v247 = vunpack.c.h.b16 %v218
    %v248 = vunpack.c.l.b16 %v219
    %v249 = vunpack.c.h.b16 %v219
    %v250 = vpack.c.b16 %v236, %v234
    %v251 = vpack.c.b16 %v237, %v235
    %v252 = vpack.c.b16 %v240, %v238
    %v253 = vpack.c.b16 %v241, %v239
    %v254 = vpack.c.b16 %v244, %v242
    %v255 = vpack.c.b16 %v245, %v243
    %v256 = vpack.c.b16 %v248, %v246
    %v257 = vpack.c.b16 %v249, %v247
    %vm266 = vcmask 523264
    %v268 = vsel %vm266, %v211, 0
    %270 = vmatpush.bf16.msra.mxu0 0
    %271 = vmatpush.bf16.msra.mxu0 0
    %272 = vmatpush.bf16.msra.mxu0 0
    %273 = vmatpush.bf16.msra.mxu0 0
    %274 = vmatpush.bf16.msra.mxu0 %v256
    %275 = vmatpush.bf16.msra.mxu0 %v254
    %276 = vmatpush.bf16.msra.mxu0 %v252
    %277 = vmatpush.bf16.msra.mxu0 %v250
    %278 = vmatmul.bf16.gmra.mxu0 %v268
    %v279 = vpop.f32.mrf.mxu0
    %v280 = vadd.f32 %v222, %v279
    %v281 = vpop.f32.mrf.mxu0
    %v282 = vadd.f32 %v222, %v281
    %283 = vdwg.mxu0
    %284 = vmatpush.bf16.msra.mxu0 0
    %285 = vmatpush.bf16.msra.mxu0 0
    %286 = vmatpush.bf16.msra.mxu0 0
    %287 = vmatpush.bf16.msra.mxu0 0
    %288 = vmatpush.bf16.msra.mxu0 %v257
    %289 = vmatpush.bf16.msra.mxu0 %v255
    %290 = vmatpush.bf16.msra.mxu0 %v253
    %291 = vmatpush.bf16.msra.mxu0 %v251
    %292 = vmatmul.bf16.gmra.mxu0 %v268
    %v293 = vpop.f32.mrf.mxu0
    %v294 = vadd.f32 %v223, %v293
    %v295 = vpop.f32.mrf.mxu0
    %v296 = vadd.f32 %v223, %v295
    %297 = vdwg.mxu0
    %299 = vrot.lane.b32.xlu0 %v280, 120
    %v300 = vpop.permute.xlu0 %299
    %302 = vrot.lane.b32.xlu0 %v280, 112
    %v303 = vpop.permute.xlu0 %302
    %305 = vrot.lane.b32.xlu0 %v280, 104
    %v306 = vpop.permute.xlu0 %305
    %308 = vrot.lane.b32.xlu0 %v280, 96
    %v309 = vpop.permute.xlu0 %308
    %311 = vrot.lane.b32.xlu0 %v280, 88
    %v312 = vpop.permute.xlu0 %311
    %314 = vrot.lane.b32.xlu0 %v280, 80
    %v315 = vpop.permute.xlu0 %314
    %317 = vrot.lane.b32.xlu0 %v280, 72
    %v318 = vpop.permute.xlu0 %317
    %v320 = vrot.slane %v303, 4
    %vm321 = vcmask 1047556
    %v322 = vsel %vm321, %v320, %v280
    %v323 = vrot.slane %v280, 4
    %v324 = vsel %vm321, %v303, %v323
    %v326 = vunpack.c.l.s4 1983009808
    %v327 = vunpack.c.0.s8 %v326
    %v328 = vperm.slane %v322, %v327
    %v330 = vunpack.c.l.s4 1983009808
    %v331 = vunpack.c.0.s8 %v330
    %v332 = vperm.slane %v324, %v331
    %v333 = vrot.slane %v306, 4
    %v334 = vsel %vm321, %v333, %v300
    %v335 = vrot.slane %v300, 4
    %v336 = vsel %vm321, %v306, %v335
    %v338 = vunpack.c.l.s4 1983009808
    %v339 = vunpack.c.0.s8 %v338
    %v340 = vperm.slane %v334, %v339
    %v342 = vunpack.c.l.s4 1983009808
    %v343 = vunpack.c.0.s8 %v342
    %v344 = vperm.slane %v336, %v343
    %v345 = vrot.slane %v315, 4
    %v346 = vsel %vm321, %v345, %v309
    %v347 = vrot.slane %v309, 4
    %v348 = vsel %vm321, %v315, %v347
    %v350 = vunpack.c.l.s4 1983009808
    %v351 = vunpack.c.0.s8 %v350
    %v352 = vperm.slane %v346, %v351
    %v354 = vunpack.c.l.s4 1983009808
    %v355 = vunpack.c.0.s8 %v354
    %v356 = vperm.slane %v348, %v355
    %v357 = vrot.slane %v318, 4
    %v358 = vsel %vm321, %v357, %v312
    %v359 = vrot.slane %v312, 4
    %v360 = vsel %vm321, %v318, %v359
    %v362 = vunpack.c.l.s4 1983009808
    %v363 = vunpack.c.0.s8 %v362
    %v364 = vperm.slane %v358, %v363
    %v366 = vunpack.c.l.s4 1983009808
    %v367 = vunpack.c.0.s8 %v366
    %v368 = vperm.slane %v360, %v367
    %v369 = vrot.slane %v340, 4
    %v370 = vsel %vm321, %v369, %v328
    %v371 = vrot.slane %v328, 4
    %v372 = vsel %vm321, %v340, %v371
    %v374 = vunpack.c.l.s4 1934713408
    %v375 = vunpack.c.0.s8 %v374
    %v376 = vperm.slane %v370, %v375
    %v378 = vunpack.c.l.s4 1934713408
    %v379 = vunpack.c.0.s8 %v378
    %v380 = vperm.slane %v372, %v379
    %v381 = vrot.slane %v344, 4
    %v382 = vsel %vm321, %v381, %v332
    %v383 = vrot.slane %v332, 4
    %v384 = vsel %vm321, %v344, %v383
    %v386 = vunpack.c.l.s4 1934713408
    %v387 = vunpack.c.0.s8 %v386
    %v388 = vperm.slane %v382, %v387
    %v390 = vunpack.c.l.s4 1934713408
    %v391 = vunpack.c.0.s8 %v390
    %v392 = vperm.slane %v384, %v391
    %v393 = vrot.slane %v364, 4
    %v394 = vsel %vm321, %v393, %v352
    %v395 = vrot.slane %v352, 4
    %v396 = vsel %vm321, %v364, %v395
    %v398 = vunpack.c.l.s4 1934713408
    %v399 = vunpack.c.0.s8 %v398
    %v400 = vperm.slane %v394, %v399
    %v402 = vunpack.c.l.s4 1934713408
    %v403 = vunpack.c.0.s8 %v402
    %v404 = vperm.slane %v396, %v403
    %v405 = vrot.slane %v368, 4
    %v406 = vsel %vm321, %v405, %v356
    %v407 = vrot.slane %v356, 4
    %v408 = vsel %vm321, %v368, %v407
    %v410 = vunpack.c.l.s4 1934713408
    %v411 = vunpack.c.0.s8 %v410
    %v412 = vperm.slane %v406, %v411
    %v414 = vunpack.c.l.s4 1934713408
    %v415 = vunpack.c.0.s8 %v414
    %v416 = vperm.slane %v408, %v415
    %v417 = vrot.slane %v400, 4
    %v418 = vsel %vm321, %v417, %v376
    %v419 = vrot.slane %v376, 4
    %v420 = vsel %vm321, %v400, %v419
    %v421 = vrot.slane %v404, 4
    %v422 = vsel %vm321, %v421, %v380
    %v423 = vrot.slane %v380, 4
    %v424 = vsel %vm321, %v404, %v423
    %v425 = vrot.slane %v412, 4
    %v426 = vsel %vm321, %v425, %v388
    %v427 = vrot.slane %v388, 4
    %v428 = vsel %vm321, %v412, %v427
    %v429 = vrot.slane %v416, 4
    %v430 = vsel %vm321, %v429, %v392
    %v431 = vrot.slane %v392, 4
    %v432 = vsel %vm321, %v416, %v431
    %v433 = vrot.slane %v422, 4
    %v434 = vsel %vm321, %v433, %v418
    %v435 = vrot.slane %v418, 4
    %v436 = vsel %vm321, %v422, %v435
    %v438 = vunpack.c.l.s4 1983009808
    %v439 = vunpack.c.0.s8 %v438
    %v440 = vperm.slane %v434, %v439
    %v442 = vunpack.c.l.s4 1983009808
    %v443 = vunpack.c.0.s8 %v442
    %v444 = vperm.slane %v436, %v443
    %v445 = vrot.slane %v424, 4
    %v446 = vsel %vm321, %v445, %v420
    %v447 = vrot.slane %v420, 4
    %v448 = vsel %vm321, %v424, %v447
    %v450 = vunpack.c.l.s4 1983009808
    %v451 = vunpack.c.0.s8 %v450
    %v452 = vperm.slane %v446, %v451
    %v454 = vunpack.c.l.s4 1983009808
    %v455 = vunpack.c.0.s8 %v454
    %v456 = vperm.slane %v448, %v455
    %v457 = vrot.slane %v430, 4
    %v458 = vsel %vm321, %v457, %v426
    %v459 = vrot.slane %v426, 4
    %v460 = vsel %vm321, %v430, %v459
    %v462 = vunpack.c.l.s4 1983009808
    %v463 = vunpack.c.0.s8 %v462
    %v464 = vperm.slane %v458, %v463
    %v466 = vunpack.c.l.s4 1983009808
    %v467 = vunpack.c.0.s8 %v466
    %v468 = vperm.slane %v460, %v467
    %v469 = vrot.slane %v432, 4
    %v470 = vsel %vm321, %v469, %v428
    %v471 = vrot.slane %v428, 4
    %v472 = vsel %vm321, %v432, %v471
    %v474 = vunpack.c.l.s4 1983009808
    %v475 = vunpack.c.0.s8 %v474
    %v476 = vperm.slane %v470, %v475
    %v478 = vunpack.c.l.s4 1983009808
    %v479 = vunpack.c.0.s8 %v478
    %v480 = vperm.slane %v472, %v479
    %v481 = vrot.slane %v452, 4
    %v482 = vsel %vm321, %v481, %v440
    %v483 = vrot.slane %v440, 4
    %v484 = vsel %vm321, %v452, %v483
    %v486 = vunpack.c.l.s4 1934713408
    %v487 = vunpack.c.0.s8 %v486
    %v488 = vperm.slane %v482, %v487
    %v490 = vunpack.c.l.s4 1934713408
    %v491 = vunpack.c.0.s8 %v490
    %v492 = vperm.slane %v484, %v491
    %v493 = vrot.slane %v456, 4
    %v494 = vsel %vm321, %v493, %v444
    %v495 = vrot.slane %v444, 4
    %v496 = vsel %vm321, %v456, %v495
    %v498 = vunpack.c.l.s4 1934713408
    %v499 = vunpack.c.0.s8 %v498
    %v500 = vperm.slane %v494, %v499
    %v502 = vunpack.c.l.s4 1934713408
    %v503 = vunpack.c.0.s8 %v502
    %v504 = vperm.slane %v496, %v503
    %v505 = vrot.slane %v476, 4
    %v506 = vsel %vm321, %v505, %v464
    %v507 = vrot.slane %v464, 4
    %v508 = vsel %vm321, %v476, %v507
    %v510 = vunpack.c.l.s4 1934713408
    %v511 = vunpack.c.0.s8 %v510
    %v512 = vperm.slane %v506, %v511
    %v514 = vunpack.c.l.s4 1934713408
    %v515 = vunpack.c.0.s8 %v514
    %v516 = vperm.slane %v508, %v515
    %v517 = vrot.slane %v480, 4
    %v518 = vsel %vm321, %v517, %v468
    %v519 = vrot.slane %v468, 4
    %v520 = vsel %vm321, %v480, %v519
    %v522 = vunpack.c.l.s4 1934713408
    %v523 = vunpack.c.0.s8 %v522
    %v524 = vperm.slane %v518, %v523
    %v526 = vunpack.c.l.s4 1934713408
    %v527 = vunpack.c.0.s8 %v526
    %v528 = vperm.slane %v520, %v527
    %v529 = vrot.slane %v512, 4
    %v530 = vsel %vm321, %v529, %v488
    %v531 = vrot.slane %v488, 4
    %v532 = vsel %vm321, %v512, %v531
    %v533 = vrot.slane %v516, 4
    %v534 = vsel %vm321, %v533, %v492
    %v535 = vrot.slane %v492, 4
    %v536 = vsel %vm321, %v516, %v535
    %v537 = vrot.slane %v524, 4
    %v538 = vsel %vm321, %v537, %v500
    %v539 = vrot.slane %v500, 4
    %v540 = vsel %vm321, %v524, %v539
    %v541 = vrot.slane %v528, 4
    %v542 = vsel %vm321, %v541, %v504
    %v543 = vrot.slane %v504, 4
    %v544 = vsel %vm321, %v528, %v543
    %545 = vrot.lane.b32.xlu0 %v280, 64
    %v546 = vpop.permute.xlu0 %545
    %547 = vrot.lane.b32.xlu0 %v300, 64
    %v548 = vpop.permute.xlu0 %547
    %549 = vrot.lane.b32.xlu0 %v303, 64
    %v550 = vpop.permute.xlu0 %549
    %551 = vrot.lane.b32.xlu0 %v306, 64
    %v552 = vpop.permute.xlu0 %551
    %553 = vrot.lane.b32.xlu0 %v309, 64
    %v554 = vpop.permute.xlu0 %553
    %555 = vrot.lane.b32.xlu0 %v312, 64
    %v556 = vpop.permute.xlu0 %555
    %557 = vrot.lane.b32.xlu0 %v315, 64
    %v558 = vpop.permute.xlu0 %557
    %559 = vrot.lane.b32.xlu0 %v318, 64
    %v560 = vpop.permute.xlu0 %559
    %v569 = vrot.slane %v550, 4
    %v570 = vsel %vm321, %v569, %v546
    %v571 = vrot.slane %v546, 4
    %v572 = vsel %vm321, %v550, %v571
    %v574 = vunpack.c.l.s4 1983009808
    %v575 = vunpack.c.0.s8 %v574
    %v576 = vperm.slane %v570, %v575
    %v578 = vunpack.c.l.s4 1983009808
    %v579 = vunpack.c.0.s8 %v578
    %v580 = vperm.slane %v572, %v579
    %v581 = vrot.slane %v552, 4
    %v582 = vsel %vm321, %v581, %v548
    %v583 = vrot.slane %v548, 4
    %v584 = vsel %vm321, %v552, %v583
    %v586 = vunpack.c.l.s4 1983009808
    %v587 = vunpack.c.0.s8 %v586
    %v588 = vperm.slane %v582, %v587
    %v590 = vunpack.c.l.s4 1983009808
    %v591 = vunpack.c.0.s8 %v590
    %v592 = vperm.slane %v584, %v591
    %v593 = vrot.slane %v558, 4
    %v594 = vsel %vm321, %v593, %v554
    %v595 = vrot.slane %v554, 4
    %v596 = vsel %vm321, %v558, %v595
    %v598 = vunpack.c.l.s4 1983009808
    %v599 = vunpack.c.0.s8 %v598
    %v600 = vperm.slane %v594, %v599
    %v602 = vunpack.c.l.s4 1983009808
    %v603 = vunpack.c.0.s8 %v602
    %v604 = vperm.slane %v596, %v603
    %v605 = vrot.slane %v560, 4
    %v606 = vsel %vm321, %v605, %v556
    %v607 = vrot.slane %v556, 4
    %v608 = vsel %vm321, %v560, %v607
    %v610 = vunpack.c.l.s4 1983009808
    %v611 = vunpack.c.0.s8 %v610
    %v612 = vperm.slane %v606, %v611
    %v614 = vunpack.c.l.s4 1983009808
    %v615 = vunpack.c.0.s8 %v614
    %v616 = vperm.slane %v608, %v615
    %v617 = vrot.slane %v588, 4
    %v618 = vsel %vm321, %v617, %v576
    %v619 = vrot.slane %v576, 4
    %v620 = vsel %vm321, %v588, %v619
    %v622 = vunpack.c.l.s4 1934713408
    %v623 = vunpack.c.0.s8 %v622
    %v624 = vperm.slane %v618, %v623
    %v626 = vunpack.c.l.s4 1934713408
    %v627 = vunpack.c.0.s8 %v626
    %v628 = vperm.slane %v620, %v627
    %v629 = vrot.slane %v592, 4
    %v630 = vsel %vm321, %v629, %v580
    %v631 = vrot.slane %v580, 4
    %v632 = vsel %vm321, %v592, %v631
    %v634 = vunpack.c.l.s4 1934713408
    %v635 = vunpack.c.0.s8 %v634
    %v636 = vperm.slane %v630, %v635
    %v638 = vunpack.c.l.s4 1934713408
    %v639 = vunpack.c.0.s8 %v638
    %v640 = vperm.slane %v632, %v639
    %v641 = vrot.slane %v612, 4
    %v642 = vsel %vm321, %v641, %v600
    %v643 = vrot.slane %v600, 4
    %v644 = vsel %vm321, %v612, %v643
    %v646 = vunpack.c.l.s4 1934713408
    %v647 = vunpack.c.0.s8 %v646
    %v648 = vperm.slane %v642, %v647
    %v650 = vunpack.c.l.s4 1934713408
    %v651 = vunpack.c.0.s8 %v650
    %v652 = vperm.slane %v644, %v651
    %v653 = vrot.slane %v616, 4
    %v654 = vsel %vm321, %v653, %v604
    %v655 = vrot.slane %v604, 4
    %v656 = vsel %vm321, %v616, %v655
    %v658 = vunpack.c.l.s4 1934713408
    %v659 = vunpack.c.0.s8 %v658
    %v660 = vperm.slane %v654, %v659
    %v662 = vunpack.c.l.s4 1934713408
    %v663 = vunpack.c.0.s8 %v662
    %v664 = vperm.slane %v656, %v663
    %v665 = vrot.slane %v648, 4
    %v666 = vsel %vm321, %v665, %v624
    %v667 = vrot.slane %v624, 4
    %v668 = vsel %vm321, %v648, %v667
    %v669 = vrot.slane %v652, 4
    %v670 = vsel %vm321, %v669, %v628
    %v671 = vrot.slane %v628, 4
    %v672 = vsel %vm321, %v652, %v671
    %v673 = vrot.slane %v660, 4
    %v674 = vsel %vm321, %v673, %v636
    %v675 = vrot.slane %v636, 4
    %v676 = vsel %vm321, %v660, %v675
    %v677 = vrot.slane %v664, 4
    %v678 = vsel %vm321, %v677, %v640
    %v679 = vrot.slane %v640, 4
    %v680 = vsel %vm321, %v664, %v679
    %v681 = vrot.slane %v670, 4
    %v682 = vsel %vm321, %v681, %v666
    %v683 = vrot.slane %v666, 4
    %v684 = vsel %vm321, %v670, %v683
    %v686 = vunpack.c.l.s4 1983009808
    %v687 = vunpack.c.0.s8 %v686
    %v688 = vperm.slane %v682, %v687
    %v690 = vunpack.c.l.s4 1983009808
    %v691 = vunpack.c.0.s8 %v690
    %v692 = vperm.slane %v684, %v691
    %v693 = vrot.slane %v672, 4
    %v694 = vsel %vm321, %v693, %v668
    %v695 = vrot.slane %v668, 4
    %v696 = vsel %vm321, %v672, %v695
    %v698 = vunpack.c.l.s4 1983009808
    %v699 = vunpack.c.0.s8 %v698
    %v700 = vperm.slane %v694, %v699
    %v702 = vunpack.c.l.s4 1983009808
    %v703 = vunpack.c.0.s8 %v702
    %v704 = vperm.slane %v696, %v703
    %v705 = vrot.slane %v678, 4
    %v706 = vsel %vm321, %v705, %v674
    %v707 = vrot.slane %v674, 4
    %v708 = vsel %vm321, %v678, %v707
    %v710 = vunpack.c.l.s4 1983009808
    %v711 = vunpack.c.0.s8 %v710
    %v712 = vperm.slane %v706, %v711
    %v714 = vunpack.c.l.s4 1983009808
    %v715 = vunpack.c.0.s8 %v714
    %v716 = vperm.slane %v708, %v715
    %v717 = vrot.slane %v680, 4
    %v718 = vsel %vm321, %v717, %v676
    %v719 = vrot.slane %v676, 4
    %v720 = vsel %vm321, %v680, %v719
    %v722 = vunpack.c.l.s4 1983009808
    %v723 = vunpack.c.0.s8 %v722
    %v724 = vperm.slane %v718, %v723
    %v726 = vunpack.c.l.s4 1983009808
    %v727 = vunpack.c.0.s8 %v726
    %v728 = vperm.slane %v720, %v727
    %v729 = vrot.slane %v700, 4
    %v730 = vsel %vm321, %v729, %v688
    %v731 = vrot.slane %v688, 4
    %v732 = vsel %vm321, %v700, %v731
    %v734 = vunpack.c.l.s4 1934713408
    %v735 = vunpack.c.0.s8 %v734
    %v736 = vperm.slane %v730, %v735
    %v738 = vunpack.c.l.s4 1934713408
    %v739 = vunpack.c.0.s8 %v738
    %v740 = vperm.slane %v732, %v739
    %v741 = vrot.slane %v704, 4
    %v742 = vsel %vm321, %v741, %v692
    %v743 = vrot.slane %v692, 4
    %v744 = vsel %vm321, %v704, %v743
    %v746 = vunpack.c.l.s4 1934713408
    %v747 = vunpack.c.0.s8 %v746
    %v748 = vperm.slane %v742, %v747
    %v750 = vunpack.c.l.s4 1934713408
    %v751 = vunpack.c.0.s8 %v750
    %v752 = vperm.slane %v744, %v751
    %v753 = vrot.slane %v724, 4
    %v754 = vsel %vm321, %v753, %v712
    %v755 = vrot.slane %v712, 4
    %v756 = vsel %vm321, %v724, %v755
    %v758 = vunpack.c.l.s4 1934713408
    %v759 = vunpack.c.0.s8 %v758
    %v760 = vperm.slane %v754, %v759
    %v762 = vunpack.c.l.s4 1934713408
    %v763 = vunpack.c.0.s8 %v762
    %v764 = vperm.slane %v756, %v763
    %v765 = vrot.slane %v728, 4
    %v766 = vsel %vm321, %v765, %v716
    %v767 = vrot.slane %v716, 4
    %v768 = vsel %vm321, %v728, %v767
    %v770 = vunpack.c.l.s4 1934713408
    %v771 = vunpack.c.0.s8 %v770
    %v772 = vperm.slane %v766, %v771
    %v774 = vunpack.c.l.s4 1934713408
    %v775 = vunpack.c.0.s8 %v774
    %v776 = vperm.slane %v768, %v775
    %v777 = vrot.slane %v760, 4
    %v778 = vsel %vm321, %v777, %v736
    %v779 = vrot.slane %v736, 4
    %v780 = vsel %vm321, %v760, %v779
    %v781 = vrot.slane %v764, 4
    %v782 = vsel %vm321, %v781, %v740
    %v783 = vrot.slane %v740, 4
    %v784 = vsel %vm321, %v764, %v783
    %v785 = vrot.slane %v772, 4
    %v786 = vsel %vm321, %v785, %v748
    %v787 = vrot.slane %v748, 4
    %v788 = vsel %vm321, %v772, %v787
    %v789 = vrot.slane %v776, 4
    %v790 = vsel %vm321, %v789, %v752
    %v791 = vrot.slane %v752, 4
    %v792 = vsel %vm321, %v776, %v791
    %794 = vrot.lane.b32.xlu0 %v294, 120
    %v795 = vpop.permute.xlu0 %794
    %797 = vrot.lane.b32.xlu0 %v294, 112
    %v798 = vpop.permute.xlu0 %797
    %800 = vrot.lane.b32.xlu0 %v294, 104
    %v801 = vpop.permute.xlu0 %800
    %803 = vrot.lane.b32.xlu0 %v294, 96
    %v804 = vpop.permute.xlu0 %803
    %806 = vrot.lane.b32.xlu0 %v294, 88
    %v807 = vpop.permute.xlu0 %806
    %809 = vrot.lane.b32.xlu0 %v294, 80
    %v810 = vpop.permute.xlu0 %809
    %812 = vrot.lane.b32.xlu0 %v294, 72
    %v813 = vpop.permute.xlu0 %812
    %v815 = vrot.slane %v798, 4
    %v816 = vsel %vm321, %v815, %v294
    %v817 = vrot.slane %v294, 4
    %v818 = vsel %vm321, %v798, %v817
    %v820 = vunpack.c.l.s4 1983009808
    %v821 = vunpack.c.0.s8 %v820
    %v822 = vperm.slane %v816, %v821
    %v824 = vunpack.c.l.s4 1983009808
    %v825 = vunpack.c.0.s8 %v824
    %v826 = vperm.slane %v818, %v825
    %v827 = vrot.slane %v801, 4
    %v828 = vsel %vm321, %v827, %v795
    %v829 = vrot.slane %v795, 4
    %v830 = vsel %vm321, %v801, %v829
    %v832 = vunpack.c.l.s4 1983009808
    %v833 = vunpack.c.0.s8 %v832
    %v834 = vperm.slane %v828, %v833
    %v836 = vunpack.c.l.s4 1983009808
    %v837 = vunpack.c.0.s8 %v836
    %v838 = vperm.slane %v830, %v837
    %v839 = vrot.slane %v810, 4
    %v840 = vsel %vm321, %v839, %v804
    %v841 = vrot.slane %v804, 4
    %v842 = vsel %vm321, %v810, %v841
    %v844 = vunpack.c.l.s4 1983009808
    %v845 = vunpack.c.0.s8 %v844
    %v846 = vperm.slane %v840, %v845
    %v848 = vunpack.c.l.s4 1983009808
    %v849 = vunpack.c.0.s8 %v848
    %v850 = vperm.slane %v842, %v849
    %v851 = vrot.slane %v813, 4
    %v852 = vsel %vm321, %v851, %v807
    %v853 = vrot.slane %v807, 4
    %v854 = vsel %vm321, %v813, %v853
    %v856 = vunpack.c.l.s4 1983009808
    %v857 = vunpack.c.0.s8 %v856
    %v858 = vperm.slane %v852, %v857
    %v860 = vunpack.c.l.s4 1983009808
    %v861 = vunpack.c.0.s8 %v860
    %v862 = vperm.slane %v854, %v861
    %v863 = vrot.slane %v834, 4
    %v864 = vsel %vm321, %v863, %v822
    %v865 = vrot.slane %v822, 4
    %v866 = vsel %vm321, %v834, %v865
    %v868 = vunpack.c.l.s4 1934713408
    %v869 = vunpack.c.0.s8 %v868
    %v870 = vperm.slane %v864, %v869
    %v872 = vunpack.c.l.s4 1934713408
    %v873 = vunpack.c.0.s8 %v872
    %v874 = vperm.slane %v866, %v873
    %v875 = vrot.slane %v838, 4
    %v876 = vsel %vm321, %v875, %v826
    %v877 = vrot.slane %v826, 4
    %v878 = vsel %vm321, %v838, %v877
    %v880 = vunpack.c.l.s4 1934713408
    %v881 = vunpack.c.0.s8 %v880
    %v882 = vperm.slane %v876, %v881
    %v884 = vunpack.c.l.s4 1934713408
    %v885 = vunpack.c.0.s8 %v884
    %v886 = vperm.slane %v878, %v885
    %v887 = vrot.slane %v858, 4
    %v888 = vsel %vm321, %v887, %v846
    %v889 = vrot.slane %v846, 4
    %v890 = vsel %vm321, %v858, %v889
    %v892 = vunpack.c.l.s4 1934713408
    %v893 = vunpack.c.0.s8 %v892
    %v894 = vperm.slane %v888, %v893
    %v896 = vunpack.c.l.s4 1934713408
    %v897 = vunpack.c.0.s8 %v896
    %v898 = vperm.slane %v890, %v897
    %v899 = vrot.slane %v862, 4
    %v900 = vsel %vm321, %v899, %v850
    %v901 = vrot.slane %v850, 4
    %v902 = vsel %vm321, %v862, %v901
    %v904 = vunpack.c.l.s4 1934713408
    %v905 = vunpack.c.0.s8 %v904
    %v906 = vperm.slane %v900, %v905
    %v908 = vunpack.c.l.s4 1934713408
    %v909 = vunpack.c.0.s8 %v908
    %v910 = vperm.slane %v902, %v909
    %v911 = vrot.slane %v894, 4
    %v912 = vsel %vm321, %v911, %v870
    %v913 = vrot.slane %v870, 4
    %v914 = vsel %vm321, %v894, %v913
    %v915 = vrot.slane %v898, 4
    %v916 = vsel %vm321, %v915, %v874
    %v917 = vrot.slane %v874, 4
    %v918 = vsel %vm321, %v898, %v917
    %v919 = vrot.slane %v906, 4
    %v920 = vsel %vm321, %v919, %v882
    %v921 = vrot.slane %v882, 4
    %v922 = vsel %vm321, %v906, %v921
    %v923 = vrot.slane %v910, 4
    %v924 = vsel %vm321, %v923, %v886
    %v925 = vrot.slane %v886, 4
    %v926 = vsel %vm321, %v910, %v925
    %v927 = vrot.slane %v916, 4
    %v928 = vsel %vm321, %v927, %v912
    %v929 = vrot.slane %v912, 4
    %v930 = vsel %vm321, %v916, %v929
    %v932 = vunpack.c.l.s4 1983009808
    %v933 = vunpack.c.0.s8 %v932
    %v934 = vperm.slane %v928, %v933
    %v936 = vunpack.c.l.s4 1983009808
    %v937 = vunpack.c.0.s8 %v936
    %v938 = vperm.slane %v930, %v937
    %v939 = vrot.slane %v918, 4
    %v940 = vsel %vm321, %v939, %v914
    %v941 = vrot.slane %v914, 4
    %v942 = vsel %vm321, %v918, %v941
    %v944 = vunpack.c.l.s4 1983009808
    %v945 = vunpack.c.0.s8 %v944
    %v946 = vperm.slane %v940, %v945
    %v948 = vunpack.c.l.s4 1983009808
    %v949 = vunpack.c.0.s8 %v948
    %v950 = vperm.slane %v942, %v949
    %v951 = vrot.slane %v924, 4
    %v952 = vsel %vm321, %v951, %v920
    %v953 = vrot.slane %v920, 4
    %v954 = vsel %vm321, %v924, %v953
    %v956 = vunpack.c.l.s4 1983009808
    %v957 = vunpack.c.0.s8 %v956
    %v958 = vperm.slane %v952, %v957
    %v960 = vunpack.c.l.s4 1983009808
    %v961 = vunpack.c.0.s8 %v960
    %v962 = vperm.slane %v954, %v961
    %v963 = vrot.slane %v926, 4
    %v964 = vsel %vm321, %v963, %v922
    %v965 = vrot.slane %v922, 4
    %v966 = vsel %vm321, %v926, %v965
    %v968 = vunpack.c.l.s4 1983009808
    %v969 = vunpack.c.0.s8 %v968
    %v970 = vperm.slane %v964, %v969
    %v972 = vunpack.c.l.s4 1983009808
    %v973 = vunpack.c.0.s8 %v972
    %v974 = vperm.slane %v966, %v973
    %v975 = vrot.slane %v946, 4
    %v976 = vsel %vm321, %v975, %v934
    %v977 = vrot.slane %v934, 4
    %v978 = vsel %vm321, %v946, %v977
    %v980 = vunpack.c.l.s4 1934713408
    %v981 = vunpack.c.0.s8 %v980
    %v982 = vperm.slane %v976, %v981
    %v984 = vunpack.c.l.s4 1934713408
    %v985 = vunpack.c.0.s8 %v984
    %v986 = vperm.slane %v978, %v985
    %v987 = vrot.slane %v950, 4
    %v988 = vsel %vm321, %v987, %v938
    %v989 = vrot.slane %v938, 4
    %v990 = vsel %vm321, %v950, %v989
    %v992 = vunpack.c.l.s4 1934713408
    %v993 = vunpack.c.0.s8 %v992
    %v994 = vperm.slane %v988, %v993
    %v996 = vunpack.c.l.s4 1934713408
    %v997 = vunpack.c.0.s8 %v996
    %v998 = vperm.slane %v990, %v997
    %v999 = vrot.slane %v970, 4
    %v1000 = vsel %vm321, %v999, %v958
    %v1001 = vrot.slane %v958, 4
    %v1002 = vsel %vm321, %v970, %v1001
    %v1004 = vunpack.c.l.s4 1934713408
    %v1005 = vunpack.c.0.s8 %v1004
    %v1006 = vperm.slane %v1000, %v1005
    %v1008 = vunpack.c.l.s4 1934713408
    %v1009 = vunpack.c.0.s8 %v1008
    %v1010 = vperm.slane %v1002, %v1009
    %v1011 = vrot.slane %v974, 4
    %v1012 = vsel %vm321, %v1011, %v962
    %v1013 = vrot.slane %v962, 4
    %v1014 = vsel %vm321, %v974, %v1013
    %v1016 = vunpack.c.l.s4 1934713408
    %v1017 = vunpack.c.0.s8 %v1016
    %v1018 = vperm.slane %v1012, %v1017
    %v1020 = vunpack.c.l.s4 1934713408
    %v1021 = vunpack.c.0.s8 %v1020
    %v1022 = vperm.slane %v1014, %v1021
    %v1023 = vrot.slane %v1006, 4
    %v1024 = vsel %vm321, %v1023, %v982
    %v1025 = vrot.slane %v982, 4
    %v1026 = vsel %vm321, %v1006, %v1025
    %v1027 = vrot.slane %v1010, 4
    %v1028 = vsel %vm321, %v1027, %v986
    %v1029 = vrot.slane %v986, 4
    %v1030 = vsel %vm321, %v1010, %v1029
    %v1031 = vrot.slane %v1018, 4
    %v1032 = vsel %vm321, %v1031, %v994
    %v1033 = vrot.slane %v994, 4
    %v1034 = vsel %vm321, %v1018, %v1033
    %v1035 = vrot.slane %v1022, 4
    %v1036 = vsel %vm321, %v1035, %v998
    %v1037 = vrot.slane %v998, 4
    %v1038 = vsel %vm321, %v1022, %v1037
    %v1039 = vld [vmem:[#allocation5] sm:$0xff]
    %v1040 = vpack.c.bf16 %v530, %v530
    %v1041 = vpack.c.bf16 %v532, %v532
    %v1042 = vpack.c.bf16 %v534, %v534
    %v1043 = vpack.c.bf16 %v536, %v536
    %v1044 = vpack.c.bf16 %v538, %v538
    %v1045 = vpack.c.bf16 %v540, %v540
    %v1046 = vpack.c.bf16 %v542, %v542
    %v1047 = vpack.c.bf16 %v544, %v544
    %v1048 = vpack.c.bf16 %v778, %v778
    %v1049 = vpack.c.bf16 %v780, %v780
    %v1050 = vpack.c.bf16 %v782, %v782
    %v1051 = vpack.c.bf16 %v784, %v784
    %v1052 = vpack.c.bf16 %v786, %v786
    %v1053 = vpack.c.bf16 %v788, %v788
    %v1054 = vpack.c.bf16 %v790, %v790
    %v1055 = vpack.c.bf16 %v792, %v792
    %vm1056 = vcmask 64512
    %v1058 = vsel %vm1056, %v1040, 0
    %v1061 = vsel %vm1056, %v1048, 0
    %1063 = vmatpush.bf16.xpose.msra.mxu0 0
    %1064 = vmatpush.bf16.xpose.msra.mxu0 0
    %1065 = vmatpush.bf16.xpose.msra.mxu0 0
    %1066 = vmatpush.bf16.xpose.msra.mxu0 0
    %1067 = vmatpush.bf16.xpose.msra.mxu0 0
    %1068 = vmatpush.bf16.xpose.msra.mxu0 0
    %1069 = vmatpush.bf16.xpose.msra.mxu0 0
    %1070 = vmatpush.bf16.xpose.msra.mxu0 %v1061
    %1071 = vmatmul.bf16.gmra.mxu0 %v1058
    %v1072 = vpop.f32.mrf.mxu0
    %v1073 = vadd.f32 %v1039, %v1072
    %v1074 = vpop.f32.mrf.mxu0
    %1075 = vdwg.mxu0
    %v1077 = vsel %vm1056, %v1041, 0
    %v1080 = vsel %vm1056, %v1049, 0
    %1082 = vmatpush.bf16.xpose.msra.mxu0 0
    %1083 = vmatpush.bf16.xpose.msra.mxu0 0
    %1084 = vmatpush.bf16.xpose.msra.mxu0 0
    %1085 = vmatpush.bf16.xpose.msra.mxu0 0
    %1086 = vmatpush.bf16.xpose.msra.mxu0 0
    %1087 = vmatpush.bf16.xpose.msra.mxu0 0
    %1088 = vmatpush.bf16.xpose.msra.mxu0 0
    %1089 = vmatpush.bf16.xpose.msra.mxu0 %v1080
    %1090 = vmatmul.bf16.gmra.mxu0 %v1077
    %v1091 = vpop.f32.mrf.mxu0
    %v1092 = vadd.f32 %v1039, %v1091
    %v1093 = vpop.f32.mrf.mxu0
    %1094 = vdwg.mxu0
    %v1096 = vsel %vm1056, %v1042, 0
    %v1099 = vsel %vm1056, %v1050, 0
    %1101 = vmatpush.bf16.xpose.msra.mxu0 0
    %1102 = vmatpush.bf16.xpose.msra.mxu0 0
    %1103 = vmatpush.bf16.xpose.msra.mxu0 0
    %1104 = vmatpush.bf16.xpose.msra.mxu0 0
    %1105 = vmatpush.bf16.xpose.msra.mxu0 0
    %1106 = vmatpush.bf16.xpose.msra.mxu0 0
    %1107 = vmatpush.bf16.xpose.msra.mxu0 0
    %1108 = vmatpush.bf16.xpose.msra.mxu0 %v1099
    %1109 = vmatmul.bf16.gmra.mxu0 %v1096
    %v1110 = vpop.f32.mrf.mxu0
    %v1111 = vadd.f32 %v1039, %v1110
    %v1112 = vpop.f32.mrf.mxu0
    %1113 = vdwg.mxu0
    %v1115 = vsel %vm1056, %v1043, 0
    %v1118 = vsel %vm1056, %v1051, 0
    %1120 = vmatpush.bf16.xpose.msra.mxu0 0
    %1121 = vmatpush.bf16.xpose.msra.mxu0 0
    %1122 = vmatpush.bf16.xpose.msra.mxu0 0
    %1123 = vmatpush.bf16.xpose.msra.mxu0 0
    %1124 = vmatpush.bf16.xpose.msra.mxu0 0
    %1125 = vmatpush.bf16.xpose.msra.mxu0 0
    %1126 = vmatpush.bf16.xpose.msra.mxu0 0
    %1127 = vmatpush.bf16.xpose.msra.mxu0 %v1118
    %1128 = vmatmul.bf16.gmra.mxu0 %v1115
    %v1129 = vpop.f32.mrf.mxu0
    %v1130 = vadd.f32 %v1039, %v1129
    %v1131 = vpop.f32.mrf.mxu0
    %1132 = vdwg.mxu0
    %v1134 = vsel %vm1056, %v1044, 0
    %v1137 = vsel %vm1056, %v1052, 0
    %1139 = vmatpush.bf16.xpose.msra.mxu0 0
    %1140 = vmatpush.bf16.xpose.msra.mxu0 0
    %1141 = vmatpush.bf16.xpose.msra.mxu0 0
    %1142 = vmatpush.bf16.xpose.msra.mxu0 0
    %1143 = vmatpush.bf16.xpose.msra.mxu0 0
    %1144 = vmatpush.bf16.xpose.msra.mxu0 0
    %1145 = vmatpush.bf16.xpose.msra.mxu0 0
    %1146 = vmatpush.bf16.xpose.msra.mxu0 %v1137
    %1147 = vmatmul.bf16.gmra.mxu0 %v1134
    %v1148 = vpop.f32.mrf.mxu0
    %v1149 = vadd.f32 %v1039, %v1148
    %v1150 = vpop.f32.mrf.mxu0
    %1151 = vdwg.mxu0
    %v1153 = vsel %vm1056, %v1045, 0
    %v1156 = vsel %vm1056, %v1053, 0
    %1158 = vmatpush.bf16.xpose.msra.mxu0 0
    %1159 = vmatpush.bf16.xpose.msra.mxu0 0
    %1160 = vmatpush.bf16.xpose.msra.mxu0 0
    %1161 = vmatpush.bf16.xpose.msra.mxu0 0
    %1162 = vmatpush.bf16.xpose.msra.mxu0 0
    %1163 = vmatpush.bf16.xpose.msra.mxu0 0
    %1164 = vmatpush.bf16.xpose.msra.mxu0 0
    %1165 = vmatpush.bf16.xpose.msra.mxu0 %v1156
    %1166 = vmatmul.bf16.gmra.mxu0 %v1153
    %v1167 = vpop.f32.mrf.mxu0
    %v1168 = vadd.f32 %v1039, %v1167
    %v1169 = vpop.f32.mrf.mxu0
    %1170 = vdwg.mxu0
    %v1172 = vsel %vm1056, %v1046, 0
    %v1175 = vsel %vm1056, %v1054, 0
    %1177 = vmatpush.bf16.xpose.msra.mxu0 0
    %1178 = vmatpush.bf16.xpose.msra.mxu0 0
    %1179 = vmatpush.bf16.xpose.msra.mxu0 0
    %1180 = vmatpush.bf16.xpose.msra.mxu0 0
    %1181 = vmatpush.bf16.xpose.msra.mxu0 0
    %1182 = vmatpush.bf16.xpose.msra.mxu0 0
    %1183 = vmatpush.bf16.xpose.msra.mxu0 0
    %1184 = vmatpush.bf16.xpose.msra.mxu0 %v1175
    %1185 = vmatmul.bf16.gmra.mxu0 %v1172
    %v1186 = vpop.f32.mrf.mxu0
    %v1187 = vadd.f32 %v1039, %v1186
    %v1188 = vpop.f32.mrf.mxu0
    %1189 = vdwg.mxu0
    %v1191 = vsel %vm1056, %v1047, 0
    %v1194 = vsel %vm1056, %v1055, 0
    %1196 = vmatpush.bf16.xpose.msra.mxu0 0
    %1197 = vmatpush.bf16.xpose.msra.mxu0 0
    %1198 = vmatpush.bf16.xpose.msra.mxu0 0
    %1199 = vmatpush.bf16.xpose.msra.mxu0 0
    %1200 = vmatpush.bf16.xpose.msra.mxu0 0
    %1201 = vmatpush.bf16.xpose.msra.mxu0 0
    %1202 = vmatpush.bf16.xpose.msra.mxu0 0
    %1203 = vmatpush.bf16.xpose.msra.mxu0 %v1194
    %1204 = vmatmul.bf16.gmra.mxu0 %v1191
    %v1205 = vpop.f32.mrf.mxu0
    %v1206 = vadd.f32 %v1039, %v1205
    %v1207 = vpop.f32.mrf.mxu0
    %1208 = vdwg.mxu0
    %v1209 = vsel %vm1056, %v1073, -inf
    %1210 = vmax.xlane.f32.xlu0 %v1209
    %v1211 = vpop.xlane.xlu0 %1210
    %v1212 = vsel %vm1056, %v1092, -inf
    %1213 = vmax.xlane.f32.xlu0 %v1212
    %v1214 = vpop.xlane.xlu0 %1213
    %v1215 = vsel %vm1056, %v1111, -inf
    %1216 = vmax.xlane.f32.xlu0 %v1215
    %v1217 = vpop.xlane.xlu0 %1216
    %v1218 = vsel %vm1056, %v1130, -inf
    %1219 = vmax.xlane.f32.xlu0 %v1218
    %v1220 = vpop.xlane.xlu0 %1219
    %v1221 = vsel %vm1056, %v1149, -inf
    %1222 = vmax.xlane.f32.xlu0 %v1221
    %v1223 = vpop.xlane.xlu0 %1222
    %v1224 = vsel %vm1056, %v1168, -inf
    %1225 = vmax.xlane.f32.xlu0 %v1224
    %v1226 = vpop.xlane.xlu0 %1225
    %v1227 = vsel %vm1056, %v1187, -inf
    %1228 = vmax.xlane.f32.xlu0 %v1227
    %v1229 = vpop.xlane.xlu0 %1228
    %v1230 = vsel %vm1056, %v1206, -inf
    %1231 = vmax.xlane.f32.xlu0 %v1230
    %v1232 = vpop.xlane.xlu0 %1231
    %v1233 = vsub.f32 %v1073, %v1211
    %v1234 = vsub.f32 %v1092, %v1214
    %v1235 = vsub.f32 %v1111, %v1217
    %v1236 = vsub.f32 %v1130, %v1220
    %v1237 = vsub.f32 %v1149, %v1223
    %v1238 = vsub.f32 %v1168, %v1226
    %v1239 = vsub.f32 %v1187, %v1229
    %v1240 = vsub.f32 %v1206, %v1232
    %v1241 = vmul.f32 %v1233, 1.442695
    %v1242 = vpow.pop %v1241
    %v1243 = vmul.f32 %v1234, 1.442695
    %v1244 = vpow.pop %v1243
    %v1245 = vmul.f32 %v1235, 1.442695
    %v1246 = vpow.pop %v1245
    %v1247 = vmul.f32 %v1236, 1.442695
    %v1248 = vpow.pop %v1247
    %v1249 = vmul.f32 %v1237, 1.442695
    %v1250 = vpow.pop %v1249
    %v1251 = vmul.f32 %v1238, 1.442695
    %v1252 = vpow.pop %v1251
    %v1253 = vmul.f32 %v1239, 1.442695
    %v1254 = vpow.pop %v1253
    %v1255 = vmul.f32 %v1240, 1.442695
    %v1256 = vpow.pop %v1255
    %v1257 = vsel %vm1056, %v1242, 0.0
    %1258 = vadd.xlane.f32.xlu0 %v1257
    %v1259 = vpop.xlane.xlu0 %1258
    %v1260 = vsel %vm1056, %v1244, 0.0
    %1261 = vadd.xlane.f32.xlu0 %v1260
    %v1262 = vpop.xlane.xlu0 %1261
    %v1263 = vsel %vm1056, %v1246, 0.0
    %1264 = vadd.xlane.f32.xlu0 %v1263
    %v1265 = vpop.xlane.xlu0 %1264
    %v1266 = vsel %vm1056, %v1248, 0.0
    %1267 = vadd.xlane.f32.xlu0 %v1266
    %v1268 = vpop.xlane.xlu0 %1267
    %v1269 = vsel %vm1056, %v1250, 0.0
    %1270 = vadd.xlane.f32.xlu0 %v1269
    %v1271 = vpop.xlane.xlu0 %1270
    %v1272 = vsel %vm1056, %v1252, 0.0
    %1273 = vadd.xlane.f32.xlu0 %v1272
    %v1274 = vpop.xlane.xlu0 %1273
    %v1275 = vsel %vm1056, %v1254, 0.0
    %1276 = vadd.xlane.f32.xlu0 %v1275
    %v1277 = vpop.xlane.xlu0 %1276
    %v1278 = vsel %vm1056, %v1256, 0.0
    %1279 = vadd.xlane.f32.xlu0 %v1278
    %v1280 = vpop.xlane.xlu0 %1279
    %v1281 = vrcp.pop %v1259
    %v1282 = vrcp.pop %v1262
    %v1283 = vrcp.pop %v1265
    %v1284 = vrcp.pop %v1268
    %v1285 = vrcp.pop %v1271
    %v1286 = vrcp.pop %v1274
    %v1287 = vrcp.pop %v1277
    %v1288 = vrcp.pop %v1280
    %v1289 = vmul.f32 %v1242, %v1281
    %v1290 = vmul.f32 %v1244, %v1282
    %v1291 = vmul.f32 %v1246, %v1283
    %v1292 = vmul.f32 %v1248, %v1284
    %v1293 = vmul.f32 %v1250, %v1285
    %v1294 = vmul.f32 %v1252, %v1286
    %v1295 = vmul.f32 %v1254, %v1287
    %v1296 = vmul.f32 %v1256, %v1288
    %v1297 = vpack.c.bf16 %v1289, %v1289
    %v1298 = vpack.c.bf16 %v1290, %v1290
    %v1299 = vpack.c.bf16 %v1291, %v1291
    %v1300 = vpack.c.bf16 %v1292, %v1292
    %v1301 = vpack.c.bf16 %v1293, %v1293
    %v1302 = vpack.c.bf16 %v1294, %v1294
    %v1303 = vpack.c.bf16 %v1295, %v1295
    %v1304 = vpack.c.bf16 %v1296, %v1296
    %v1305 = vpack.c.bf16 %v1024, %v1024
    %v1306 = vpack.c.bf16 %v1026, %v1026
    %v1307 = vpack.c.bf16 %v1028, %v1028
    %v1308 = vpack.c.bf16 %v1030, %v1030
    %v1309 = vpack.c.bf16 %v1032, %v1032
    %v1310 = vpack.c.bf16 %v1034, %v1034
    %v1311 = vpack.c.bf16 %v1036, %v1036
    %v1312 = vpack.c.bf16 %v1038, %v1038
    %v1314 = vsel %vm1056, %v1297, 0
    %vm1316 = vcmask 1043456
    %v1318 = vsel %vm1316, %v1305, 0
    %1320 = vmatpush.bf16.msra.mxu0 0
    %1321 = vmatpush.bf16.msra.mxu0 0
    %1322 = vmatpush.bf16.msra.mxu0 0
    %1323 = vmatpush.bf16.msra.mxu0 0
    %1324 = vmatpush.bf16.msra.mxu0 0
    %1325 = vmatpush.bf16.msra.mxu0 0
    %1326 = vmatpush.bf16.msra.mxu0 0
    %1327 = vmatpush.bf16.msra.mxu0 %v1318
    %1328 = vmatmul.bf16.gmra.mxu0 %v1314
    %v1329 = vpop.f32.mrf.mxu0
    %v1330 = vadd.f32 0.0, %v1329
    %v1331 = vpop.f32.mrf.mxu0
    %1332 = vdwg.mxu0
    %v1334 = vsel %vm1056, %v1298, 0
    %v1337 = vsel %vm1316, %v1306, 0
    %1339 = vmatpush.bf16.msra.mxu0 0
    %1340 = vmatpush.bf16.msra.mxu0 0
    %1341 = vmatpush.bf16.msra.mxu0 0
    %1342 = vmatpush.bf16.msra.mxu0 0
    %1343 = vmatpush.bf16.msra.mxu0 0
    %1344 = vmatpush.bf16.msra.mxu0 0
    %1345 = vmatpush.bf16.msra.mxu0 0
    %1346 = vmatpush.bf16.msra.mxu0 %v1337
    %1347 = vmatmul.bf16.gmra.mxu0 %v1334
    %v1348 = vpop.f32.mrf.mxu0
    %v1349 = vadd.f32 0.0, %v1348
    %v1350 = vpop.f32.mrf.mxu0
    %1351 = vdwg.mxu0
    %v1353 = vsel %vm1056, %v1299, 0
    %v1356 = vsel %vm1316, %v1307, 0
    %1358 = vmatpush.bf16.msra.mxu0 0
    %1359 = vmatpush.bf16.msra.mxu0 0
    %1360 = vmatpush.bf16.msra.mxu0 0
    %1361 = vmatpush.bf16.msra.mxu0 0
    %1362 = vmatpush.bf16.msra.mxu0 0
    %1363 = vmatpush.bf16.msra.mxu0 0
    %1364 = vmatpush.bf16.msra.mxu0 0
    %1365 = vmatpush.bf16.msra.mxu0 %v1356
    %1366 = vmatmul.bf16.gmra.mxu0 %v1353
    %v1367 = vpop.f32.mrf.mxu0
    %v1368 = vadd.f32 0.0, %v1367
    %v1369 = vpop.f32.mrf.mxu0
    %1370 = vdwg.mxu0
    %v1372 = vsel %vm1056, %v1300, 0
    %v1375 = vsel %vm1316, %v1308, 0
    %1377 = vmatpush.bf16.msra.mxu0 0
    %1378 = vmatpush.bf16.msra.mxu0 0
    %1379 = vmatpush.bf16.msra.mxu0 0
    %1380 = vmatpush.bf16.msra.mxu0 0
    %1381 = vmatpush.bf16.msra.mxu0 0
    %1382 = vmatpush.bf16.msra.mxu0 0
    %1383 = vmatpush.bf16.msra.mxu0 0
    %1384 = vmatpush.bf16.msra.mxu0 %v1375
    %1385 = vmatmul.bf16.gmra.mxu0 %v1372
    %v1386 = vpop.f32.mrf.mxu0
    %v1387 = vadd.f32 0.0, %v1386
    %v1388 = vpop.f32.mrf.mxu0
    %1389 = vdwg.mxu0
    %v1391 = vsel %vm1056, %v1301, 0
    %v1394 = vsel %vm1316, %v1309, 0
    %1396 = vmatpush.bf16.msra.mxu0 0
    %1397 = vmatpush.bf16.msra.mxu0 0
    %1398 = vmatpush.bf16.msra.mxu0 0
    %1399 = vmatpush.bf16.msra.mxu0 0
    %1400 = vmatpush.bf16.msra.mxu0 0
    %1401 = vmatpush.bf16.msra.mxu0 0
    %1402 = vmatpush.bf16.msra.mxu0 0
    %1403 = vmatpush.bf16.msra.mxu0 %v1394
    %1404 = vmatmul.bf16.gmra.mxu0 %v1391
    %v1405 = vpop.f32.mrf.mxu0
    %v1406 = vadd.f32 0.0, %v1405
    %v1407 = vpop.f32.mrf.mxu0
    %1408 = vdwg.mxu0
    %v1410 = vsel %vm1056, %v1302, 0
    %v1413 = vsel %vm1316, %v1310, 0
    %1415 = vmatpush.bf16.msra.mxu0 0
    %1416 = vmatpush.bf16.msra.mxu0 0
    %1417 = vmatpush.bf16.msra.mxu0 0
    %1418 = vmatpush.bf16.msra.mxu0 0
    %1419 = vmatpush.bf16.msra.mxu0 0
    %1420 = vmatpush.bf16.msra.mxu0 0
    %1421 = vmatpush.bf16.msra.mxu0 0
    %1422 = vmatpush.bf16.msra.mxu0 %v1413
    %1423 = vmatmul.bf16.gmra.mxu0 %v1410
    %v1424 = vpop.f32.mrf.mxu0
    %v1425 = vadd.f32 0.0, %v1424
    %v1426 = vpop.f32.mrf.mxu0
    %1427 = vdwg.mxu0
    %v1429 = vsel %vm1056, %v1303, 0
    %v1432 = vsel %vm1316, %v1311, 0
    %1434 = vmatpush.bf16.msra.mxu0 0
    %1435 = vmatpush.bf16.msra.mxu0 0
    %1436 = vmatpush.bf16.msra.mxu0 0
    %1437 = vmatpush.bf16.msra.mxu0 0
    %1438 = vmatpush.bf16.msra.mxu0 0
    %1439 = vmatpush.bf16.msra.mxu0 0
    %1440 = vmatpush.bf16.msra.mxu0 0
    %1441 = vmatpush.bf16.msra.mxu0 %v1432
    %1442 = vmatmul.bf16.gmra.mxu0 %v1429
    %v1443 = vpop.f32.mrf.mxu0
    %v1444 = vadd.f32 0.0, %v1443
    %v1445 = vpop.f32.mrf.mxu0
    %1446 = vdwg.mxu0
    %v1448 = vsel %vm1056, %v1304, 0
    %v1451 = vsel %vm1316, %v1312, 0
    %1453 = vmatpush.bf16.msra.mxu0 0
    %1454 = vmatpush.bf16.msra.mxu0 0
    %1455 = vmatpush.bf16.msra.mxu0 0
    %1456 = vmatpush.bf16.msra.mxu0 0
    %1457 = vmatpush.bf16.msra.mxu0 0
    %1458 = vmatpush.bf16.msra.mxu0 0
    %1459 = vmatpush.bf16.msra.mxu0 0
    %1460 = vmatpush.bf16.msra.mxu0 %v1451
    %1461 = vmatmul.bf16.gmra.mxu0 %v1448
    %v1462 = vpop.f32.mrf.mxu0
    %v1463 = vadd.f32 0.0, %v1462
    %v1464 = vpop.f32.mrf.mxu0
    %1465 = vdwg.mxu0
    %v1466 = vpack.c.bf16 %v1330, %v1330
    %v1467 = vpack.c.bf16 %v1349, %v1349
    %v1468 = vpack.c.bf16 %v1368, %v1368
    %v1469 = vpack.c.bf16 %v1387, %v1387
    %v1470 = vpack.c.bf16 %v1406, %v1406
    %v1471 = vpack.c.bf16 %v1425, %v1425
    %v1472 = vpack.c.bf16 %v1444, %v1444
    %v1473 = vpack.c.bf16 %v1463, %v1463
    %v1474 = vld [vmem:[#allocation8] sm:$0xf]
    %v1475 = vld [vmem:[#allocation8 + $0x4] sm:$0xf]
    %v1476 = vld [vmem:[#allocation8 + $0x8] sm:$0xf]
    %v1477 = vld [vmem:[#allocation8 + $0xc] sm:$0xf]
    %v1478 = vld [vmem:[#allocation8 + $0x10] sm:$0xf]
    %v1479 = vld [vmem:[#allocation8 + $0x14] sm:$0xf]
    %v1480 = vld [vmem:[#allocation8 + $0x18] sm:$0xf]
    %v1481 = vld [vmem:[#allocation8 + $0x1c] sm:$0xf]
    %v1483 = vsel %vm1056, %v1466, 0
    %v1486 = vsel %vm1316, %v1474, 0
    %1488 = vmatpush.bf16.msra.mxu0 0
    %1489 = vmatpush.bf16.msra.mxu0 0
    %1490 = vmatpush.bf16.msra.mxu0 0
    %1491 = vmatpush.bf16.msra.mxu0 0
    %1492 = vmatpush.bf16.msra.mxu0 0
    %1493 = vmatpush.bf16.msra.mxu0 0
    %1494 = vmatpush.bf16.msra.mxu0 0
    %1495 = vmatpush.bf16.msra.mxu0 %v1486
    %1496 = vmatmul.bf16.gmra.mxu0 %v1483
    %v1497 = vpop.f32.mrf.mxu0
    %v1498 = vadd.f32 0.0, %v1497
    %v1499 = vpop.f32.mrf.mxu0
    %1500 = vdwg.mxu0
    %v1502 = vsel %vm1056, %v1467, 0
    %v1505 = vsel %vm1316, %v1475, 0
    %1507 = vmatpush.bf16.msra.mxu0 0
    %1508 = vmatpush.bf16.msra.mxu0 0
    %1509 = vmatpush.bf16.msra.mxu0 0
    %1510 = vmatpush.bf16.msra.mxu0 0
    %1511 = vmatpush.bf16.msra.mxu0 0
    %1512 = vmatpush.bf16.msra.mxu0 0
    %1513 = vmatpush.bf16.msra.mxu0 0
    %1514 = vmatpush.bf16.msra.mxu0 %v1505
    %1515 = vmatmul.bf16.gmra.mxu0 %v1502
    %v1516 = vpop.f32.mrf.mxu0
    %v1517 = vadd.f32 0.0, %v1516
    %v1518 = vpop.f32.mrf.mxu0
    %1519 = vdwg.mxu0
    %v1521 = vsel %vm1056, %v1468, 0
    %v1524 = vsel %vm1316, %v1476, 0
    %1526 = vmatpush.bf16.msra.mxu0 0
    %1527 = vmatpush.bf16.msra.mxu0 0
    %1528 = vmatpush.bf16.msra.mxu0 0
    %1529 = vmatpush.bf16.msra.mxu0 0
    %1530 = vmatpush.bf16.msra.mxu0 0
    %1531 = vmatpush.bf16.msra.mxu0 0
    %1532 = vmatpush.bf16.msra.mxu0 0
    %1533 = vmatpush.bf16.msra.mxu0 %v1524
    %1534 = vmatmul.bf16.gmra.mxu0 %v1521
    %v1535 = vpop.f32.mrf.mxu0
    %v1536 = vadd.f32 0.0, %v1535
    %v1537 = vpop.f32.mrf.mxu0
    %1538 = vdwg.mxu0
    %v1540 = vsel %vm1056, %v1469, 0
    %v1543 = vsel %vm1316, %v1477, 0
    %1545 = vmatpush.bf16.msra.mxu0 0
    %1546 = vmatpush.bf16.msra.mxu0 0
    %1547 = vmatpush.bf16.msra.mxu0 0
    %1548 = vmatpush.bf16.msra.mxu0 0
    %1549 = vmatpush.bf16.msra.mxu0 0
    %1550 = vmatpush.bf16.msra.mxu0 0
    %1551 = vmatpush.bf16.msra.mxu0 0
    %1552 = vmatpush.bf16.msra.mxu0 %v1543
    %1553 = vmatmul.bf16.gmra.mxu0 %v1540
    %v1554 = vpop.f32.mrf.mxu0
    %v1555 = vadd.f32 0.0, %v1554
    %v1556 = vpop.f32.mrf.mxu0
    %1557 = vdwg.mxu0
    %v1559 = vsel %vm1056, %v1470, 0
    %v1562 = vsel %vm1316, %v1478, 0
    %1564 = vmatpush.bf16.msra.mxu0 0
    %1565 = vmatpush.bf16.msra.mxu0 0
    %1566 = vmatpush.bf16.msra.mxu0 0
    %1567 = vmatpush.bf16.msra.mxu0 0
    %1568 = vmatpush.bf16.msra.mxu0 0
    %1569 = vmatpush.bf16.msra.mxu0 0
    %1570 = vmatpush.bf16.msra.mxu0 0
    %1571 = vmatpush.bf16.msra.mxu0 %v1562
    %1572 = vmatmul.bf16.gmra.mxu0 %v1559
    %v1573 = vpop.f32.mrf.mxu0
    %v1574 = vadd.f32 0.0, %v1573
    %v1575 = vpop.f32.mrf.mxu0
    %1576 = vdwg.mxu0
    %v1578 = vsel %vm1056, %v1471, 0
    %v1581 = vsel %vm1316, %v1479, 0
    %1583 = vmatpush.bf16.msra.mxu0 0
    %1584 = vmatpush.bf16.msra.mxu0 0
    %1585 = vmatpush.bf16.msra.mxu0 0
    %1586 = vmatpush.bf16.msra.mxu0 0
    %1587 = vmatpush.bf16.msra.mxu0 0
    %1588 = vmatpush.bf16.msra.mxu0 0
    %1589 = vmatpush.bf16.msra.mxu0 0
    %1590 = vmatpush.bf16.msra.mxu0 %v1581
    %1591 = vmatmul.bf16.gmra.mxu0 %v1578
    %v1592 = vpop.f32.mrf.mxu0
    %v1593 = vadd.f32 0.0, %v1592
    %v1594 = vpop.f32.mrf.mxu0
    %1595 = vdwg.mxu0
    %v1597 = vsel %vm1056, %v1472, 0
    %v1600 = vsel %vm1316, %v1480, 0
    %1602 = vmatpush.bf16.msra.mxu0 0
    %1603 = vmatpush.bf16.msra.mxu0 0
    %1604 = vmatpush.bf16.msra.mxu0 0
    %1605 = vmatpush.bf16.msra.mxu0 0
    %1606 = vmatpush.bf16.msra.mxu0 0
    %1607 = vmatpush.bf16.msra.mxu0 0
    %1608 = vmatpush.bf16.msra.mxu0 0
    %1609 = vmatpush.bf16.msra.mxu0 %v1600
    %1610 = vmatmul.bf16.gmra.mxu0 %v1597
    %v1611 = vpop.f32.mrf.mxu0
    %v1612 = vadd.f32 0.0, %v1611
    %v1613 = vpop.f32.mrf.mxu0
    %1614 = vdwg.mxu0
    %v1616 = vsel %vm1056, %v1473, 0
    %v1619 = vsel %vm1316, %v1481, 0
    %1621 = vmatpush.bf16.msra.mxu0 0
    %1622 = vmatpush.bf16.msra.mxu0 0
    %1623 = vmatpush.bf16.msra.mxu0 0
    %1624 = vmatpush.bf16.msra.mxu0 0
    %1625 = vmatpush.bf16.msra.mxu0 0
    %1626 = vmatpush.bf16.msra.mxu0 0
    %1627 = vmatpush.bf16.msra.mxu0 0
    %1628 = vmatpush.bf16.msra.mxu0 %v1619
    %1629 = vmatmul.bf16.gmra.mxu0 %v1616
    %v1630 = vpop.f32.mrf.mxu0
    %v1631 = vadd.f32 0.0, %v1630
    %v1632 = vpop.f32.mrf.mxu0
    %1633 = vdwg.mxu0
    %v1634 = vsel %vm266, %v1498, 0.0
    %v1635 = vsel %vm266, %v1517, 0.0
    %v1636 = vadd.f32 %v1634, %v1635
    %v1637 = vsel %vm266, %v1536, 0.0
    %v1638 = vadd.f32 %v1636, %v1637
    %v1639 = vsel %vm266, %v1555, 0.0
    %v1640 = vadd.f32 %v1638, %v1639
    %v1641 = vsel %vm266, %v1574, 0.0
    %v1642 = vadd.f32 %v1640, %v1641
    %v1643 = vsel %vm266, %v1593, 0.0
    %v1644 = vadd.f32 %v1642, %v1643
    %v1645 = vsel %vm266, %v1612, 0.0
    %v1646 = vadd.f32 %v1644, %v1645
    %v1647 = vsel %vm266, %v1631, 0.0
    %v1648 = vadd.f32 %v1646, %v1647
    %1650 = vrot.lane.b32.xlu0 %v282, 120
    %v1651 = vpop.permute.xlu0 %1650
    %1653 = vrot.lane.b32.xlu0 %v282, 112
    %v1654 = vpop.permute.xlu0 %1653
    %1656 = vrot.lane.b32.xlu0 %v282, 104
    %v1657 = vpop.permute.xlu0 %1656
    %1659 = vrot.lane.b32.xlu0 %v282, 96
    %v1660 = vpop.permute.xlu0 %1659
    %1662 = vrot.lane.b32.xlu0 %v282, 88
    %v1663 = vpop.permute.xlu0 %1662
    %1665 = vrot.lane.b32.xlu0 %v282, 80
    %v1666 = vpop.permute.xlu0 %1665
    %1668 = vrot.lane.b32.xlu0 %v282, 72
    %v1669 = vpop.permute.xlu0 %1668
    %v1671 = vrot.slane %v1654, 4
    %v1672 = vsel %vm321, %v1671, %v282
    %v1673 = vrot.slane %v282, 4
    %v1674 = vsel %vm321, %v1654, %v1673
    %v1676 = vunpack.c.l.s4 1983009808
    %v1677 = vunpack.c.0.s8 %v1676
    %v1678 = vperm.slane %v1672, %v1677
    %v1680 = vunpack.c.l.s4 1983009808
    %v1681 = vunpack.c.0.s8 %v1680
    %v1682 = vperm.slane %v1674, %v1681
    %v1683 = vrot.slane %v1657, 4
    %v1684 = vsel %vm321, %v1683, %v1651
    %v1685 = vrot.slane %v1651, 4
    %v1686 = vsel %vm321, %v1657, %v1685
    %v1688 = vunpack.c.l.s4 1983009808
    %v1689 = vunpack.c.0.s8 %v1688
    %v1690 = vperm.slane %v1684, %v1689
    %v1692 = vunpack.c.l.s4 1983009808
    %v1693 = vunpack.c.0.s8 %v1692
    %v1694 = vperm.slane %v1686, %v1693
    %v1695 = vrot.slane %v1666, 4
    %v1696 = vsel %vm321, %v1695, %v1660
    %v1697 = vrot.slane %v1660, 4
    %v1698 = vsel %vm321, %v1666, %v1697
    %v1700 = vunpack.c.l.s4 1983009808
    %v1701 = vunpack.c.0.s8 %v1700
    %v1702 = vperm.slane %v1696, %v1701
    %v1704 = vunpack.c.l.s4 1983009808
    %v1705 = vunpack.c.0.s8 %v1704
    %v1706 = vperm.slane %v1698, %v1705
    %v1707 = vrot.slane %v1669, 4
    %v1708 = vsel %vm321, %v1707, %v1663
    %v1709 = vrot.slane %v1663, 4
    %v1710 = vsel %vm321, %v1669, %v1709
    %v1712 = vunpack.c.l.s4 1983009808
    %v1713 = vunpack.c.0.s8 %v1712
    %v1714 = vperm.slane %v1708, %v1713
    %v1716 = vunpack.c.l.s4 1983009808
    %v1717 = vunpack.c.0.s8 %v1716
    %v1718 = vperm.slane %v1710, %v1717
    %v1719 = vrot.slane %v1690, 4
    %v1720 = vsel %vm321, %v1719, %v1678
    %v1721 = vrot.slane %v1678, 4
    %v1722 = vsel %vm321, %v1690, %v1721
    %v1724 = vunpack.c.l.s4 1934713408
    %v1725 = vunpack.c.0.s8 %v1724
    %v1726 = vperm.slane %v1720, %v1725
    %v1728 = vunpack.c.l.s4 1934713408
    %v1729 = vunpack.c.0.s8 %v1728
    %v1730 = vperm.slane %v1722, %v1729
    %v1731 = vrot.slane %v1694, 4
    %v1732 = vsel %vm321, %v1731, %v1682
    %v1733 = vrot.slane %v1682, 4
    %v1734 = vsel %vm321, %v1694, %v1733
    %v1736 = vunpack.c.l.s4 1934713408
    %v1737 = vunpack.c.0.s8 %v1736
    %v1738 = vperm.slane %v1732, %v1737
    %v1740 = vunpack.c.l.s4 1934713408
    %v1741 = vunpack.c.0.s8 %v1740
    %v1742 = vperm.slane %v1734, %v1741
    %v1743 = vrot.slane %v1714, 4
    %v1744 = vsel %vm321, %v1743, %v1702
    %v1745 = vrot.slane %v1702, 4
    %v1746 = vsel %vm321, %v1714, %v1745
    %v1748 = vunpack.c.l.s4 1934713408
    %v1749 = vunpack.c.0.s8 %v1748
    %v1750 = vperm.slane %v1744, %v1749
    %v1752 = vunpack.c.l.s4 1934713408
    %v1753 = vunpack.c.0.s8 %v1752
    %v1754 = vperm.slane %v1746, %v1753
    %v1755 = vrot.slane %v1718, 4
    %v1756 = vsel %vm321, %v1755, %v1706
    %v1757 = vrot.slane %v1706, 4
    %v1758 = vsel %vm321, %v1718, %v1757
    %v1760 = vunpack.c.l.s4 1934713408
    %v1761 = vunpack.c.0.s8 %v1760
    %v1762 = vperm.slane %v1756, %v1761
    %v1764 = vunpack.c.l.s4 1934713408
    %v1765 = vunpack.c.0.s8 %v1764
    %v1766 = vperm.slane %v1758, %v1765
    %v1767 = vrot.slane %v1750, 4
    %v1768 = vsel %vm321, %v1767, %v1726
    %v1769 = vrot.slane %v1726, 4
    %v1770 = vsel %vm321, %v1750, %v1769
    %v1771 = vrot.slane %v1754, 4
    %v1772 = vsel %vm321, %v1771, %v1730
    %v1773 = vrot.slane %v1730, 4
    %v1774 = vsel %vm321, %v1754, %v1773
    %v1775 = vrot.slane %v1762, 4
    %v1776 = vsel %vm321, %v1775, %v1738
    %v1777 = vrot.slane %v1738, 4
    %v1778 = vsel %vm321, %v1762, %v1777
    %v1779 = vrot.slane %v1766, 4
    %v1780 = vsel %vm321, %v1779, %v1742
    %v1781 = vrot.slane %v1742, 4
    %v1782 = vsel %vm321, %v1766, %v1781
    %v1783 = vrot.slane %v1772, 4
    %v1784 = vsel %vm321, %v1783, %v1768
    %v1785 = vrot.slane %v1768, 4
    %v1786 = vsel %vm321, %v1772, %v1785
    %v1788 = vunpack.c.l.s4 1983009808
    %v1789 = vunpack.c.0.s8 %v1788
    %v1790 = vperm.slane %v1784, %v1789
    %v1792 = vunpack.c.l.s4 1983009808
    %v1793 = vunpack.c.0.s8 %v1792
    %v1794 = vperm.slane %v1786, %v1793
    %v1795 = vrot.slane %v1774, 4
    %v1796 = vsel %vm321, %v1795, %v1770
    %v1797 = vrot.slane %v1770, 4
    %v1798 = vsel %vm321, %v1774, %v1797
    %v1800 = vunpack.c.l.s4 1983009808
    %v1801 = vunpack.c.0.s8 %v1800
    %v1802 = vperm.slane %v1796, %v1801
    %v1804 = vunpack.c.l.s4 1983009808
    %v1805 = vunpack.c.0.s8 %v1804
    %v1806 = vperm.slane %v1798, %v1805
    %v1807 = vrot.slane %v1780, 4
    %v1808 = vsel %vm321, %v1807, %v1776
    %v1809 = vrot.slane %v1776, 4
    %v1810 = vsel %vm321, %v1780, %v1809
    %v1812 = vunpack.c.l.s4 1983009808
    %v1813 = vunpack.c.0.s8 %v1812
    %v1814 = vperm.slane %v1808, %v1813
    %v1816 = vunpack.c.l.s4 1983009808
    %v1817 = vunpack.c.0.s8 %v1816
    %v1818 = vperm.slane %v1810, %v1817
    %v1819 = vrot.slane %v1782, 4
    %v1820 = vsel %vm321, %v1819, %v1778
    %v1821 = vrot.slane %v1778, 4
    %v1822 = vsel %vm321, %v1782, %v1821
    %v1824 = vunpack.c.l.s4 1983009808
    %v1825 = vunpack.c.0.s8 %v1824
    %v1826 = vperm.slane %v1820, %v1825
    %v1828 = vunpack.c.l.s4 1983009808
    %v1829 = vunpack.c.0.s8 %v1828
    %v1830 = vperm.slane %v1822, %v1829
    %v1831 = vrot.slane %v1802, 4
    %v1832 = vsel %vm321, %v1831, %v1790
    %v1833 = vrot.slane %v1790, 4
    %v1834 = vsel %vm321, %v1802, %v1833
    %v1836 = vunpack.c.l.s4 1934713408
    %v1837 = vunpack.c.0.s8 %v1836
    %v1838 = vperm.slane %v1832, %v1837
    %v1840 = vunpack.c.l.s4 1934713408
    %v1841 = vunpack.c.0.s8 %v1840
    %v1842 = vperm.slane %v1834, %v1841
    %v1843 = vrot.slane %v1806, 4
    %v1844 = vsel %vm321, %v1843, %v1794
    %v1845 = vrot.slane %v1794, 4
    %v1846 = vsel %vm321, %v1806, %v1845
    %v1848 = vunpack.c.l.s4 1934713408
    %v1849 = vunpack.c.0.s8 %v1848
    %v1850 = vperm.slane %v1844, %v1849
    %v1852 = vunpack.c.l.s4 1934713408
    %v1853 = vunpack.c.0.s8 %v1852
    %v1854 = vperm.slane %v1846, %v1853
    %v1855 = vrot.slane %v1826, 4
    %v1856 = vsel %vm321, %v1855, %v1814
    %v1857 = vrot.slane %v1814, 4
    %v1858 = vsel %vm321, %v1826, %v1857
    %v1860 = vunpack.c.l.s4 1934713408
    %v1861 = vunpack.c.0.s8 %v1860
    %v1862 = vperm.slane %v1856, %v1861
    %v1864 = vunpack.c.l.s4 1934713408
    %v1865 = vunpack.c.0.s8 %v1864
    %v1866 = vperm.slane %v1858, %v1865
    %v1867 = vrot.slane %v1830, 4
    %v1868 = vsel %vm321, %v1867, %v1818
    %v1869 = vrot.slane %v1818, 4
    %v1870 = vsel %vm321, %v1830, %v1869
    %v1872 = vunpack.c.l.s4 1934713408
    %v1873 = vunpack.c.0.s8 %v1872
    %v1874 = vperm.slane %v1868, %v1873
    %v1876 = vunpack.c.l.s4 1934713408
    %v1877 = vunpack.c.0.s8 %v1876
    %v1878 = vperm.slane %v1870, %v1877
    %v1879 = vrot.slane %v1862, 4
    %v1880 = vsel %vm321, %v1879, %v1838
    %v1881 = vrot.slane %v1838, 4
    %v1882 = vsel %vm321, %v1862, %v1881
    %v1883 = vrot.slane %v1866, 4
    %v1884 = vsel %vm321, %v1883, %v1842
    %v1885 = vrot.slane %v1842, 4
    %v1886 = vsel %vm321, %v1866, %v1885
    %v1887 = vrot.slane %v1874, 4
    %v1888 = vsel %vm321, %v1887, %v1850
    %v1889 = vrot.slane %v1850, 4
    %v1890 = vsel %vm321, %v1874, %v1889
    %v1891 = vrot.slane %v1878, 4
    %v1892 = vsel %vm321, %v1891, %v1854
    %v1893 = vrot.slane %v1854, 4
    %v1894 = vsel %vm321, %v1878, %v1893
    %1895 = vrot.lane.b32.xlu0 %v282, 64
    %v1896 = vpop.permute.xlu0 %1895
    %1897 = vrot.lane.b32.xlu0 %v1651, 64
    %v1898 = vpop.permute.xlu0 %1897
    %1899 = vrot.lane.b32.xlu0 %v1654, 64
    %v1900 = vpop.permute.xlu0 %1899
    %1901 = vrot.lane.b32.xlu0 %v1657, 64
    %v1902 = vpop.permute.xlu0 %1901
    %1903 = vrot.lane.b32.xlu0 %v1660, 64
    %v1904 = vpop.permute.xlu0 %1903
    %1905 = vrot.lane.b32.xlu0 %v1663, 64
    %v1906 = vpop.permute.xlu0 %1905
    %1907 = vrot.lane.b32.xlu0 %v1666, 64
    %v1908 = vpop.permute.xlu0 %1907
    %1909 = vrot.lane.b32.xlu0 %v1669, 64
    %v1910 = vpop.permute.xlu0 %1909
    %v1919 = vrot.slane %v1900, 4
    %v1920 = vsel %vm321, %v1919, %v1896
    %v1921 = vrot.slane %v1896, 4
    %v1922 = vsel %vm321, %v1900, %v1921
    %v1924 = vunpack.c.l.s4 1983009808
    %v1925 = vunpack.c.0.s8 %v1924
    %v1926 = vperm.slane %v1920, %v1925
    %v1928 = vunpack.c.l.s4 1983009808
    %v1929 = vunpack.c.0.s8 %v1928
    %v1930 = vperm.slane %v1922, %v1929
    %v1931 = vrot.slane %v1902, 4
    %v1932 = vsel %vm321, %v1931, %v1898
    %v1933 = vrot.slane %v1898, 4
    %v1934 = vsel %vm321, %v1902, %v1933
    %v1936 = vunpack.c.l.s4 1983009808
    %v1937 = vunpack.c.0.s8 %v1936
    %v1938 = vperm.slane %v1932, %v1937
    %v1940 = vunpack.c.l.s4 1983009808
    %v1941 = vunpack.c.0.s8 %v1940
    %v1942 = vperm.slane %v1934, %v1941
    %v1943 = vrot.slane %v1908, 4
    %v1944 = vsel %vm321, %v1943, %v1904
    %v1945 = vrot.slane %v1904, 4
    %v1946 = vsel %vm321, %v1908, %v1945
    %v1948 = vunpack.c.l.s4 1983009808
    %v1949 = vunpack.c.0.s8 %v1948
    %v1950 = vperm.slane %v1944, %v1949
    %v1952 = vunpack.c.l.s4 1983009808
    %v1953 = vunpack.c.0.s8 %v1952
    %v1954 = vperm.slane %v1946, %v1953
    %v1955 = vrot.slane %v1910, 4
    %v1956 = vsel %vm321, %v1955, %v1906
    %v1957 = vrot.slane %v1906, 4
    %v1958 = vsel %vm321, %v1910, %v1957
    %v1960 = vunpack.c.l.s4 1983009808
    %v1961 = vunpack.c.0.s8 %v1960
    %v1962 = vperm.slane %v1956, %v1961
    %v1964 = vunpack.c.l.s4 1983009808
    %v1965 = vunpack.c.0.s8 %v1964
    %v1966 = vperm.slane %v1958, %v1965
    %v1967 = vrot.slane %v1938, 4
    %v1968 = vsel %vm321, %v1967, %v1926
    %v1969 = vrot.slane %v1926, 4
    %v1970 = vsel %vm321, %v1938, %v1969
    %v1972 = vunpack.c.l.s4 1934713408
    %v1973 = vunpack.c.0.s8 %v1972
    %v1974 = vperm.slane %v1968, %v1973
    %v1976 = vunpack.c.l.s4 1934713408
    %v1977 = vunpack.c.0.s8 %v1976
    %v1978 = vperm.slane %v1970, %v1977
    %v1979 = vrot.slane %v1942, 4
    %v1980 = vsel %vm321, %v1979, %v1930
    %v1981 = vrot.slane %v1930, 4
    %v1982 = vsel %vm321, %v1942, %v1981
    %v1984 = vunpack.c.l.s4 1934713408
    %v1985 = vunpack.c.0.s8 %v1984
    %v1986 = vperm.slane %v1980, %v1985
    %v1988 = vunpack.c.l.s4 1934713408
    %v1989 = vunpack.c.0.s8 %v1988
    %v1990 = vperm.slane %v1982, %v1989
    %v1991 = vrot.slane %v1962, 4
    %v1992 = vsel %vm321, %v1991, %v1950
    %v1993 = vrot.slane %v1950, 4
    %v1994 = vsel %vm321, %v1962, %v1993
    %v1996 = vunpack.c.l.s4 1934713408
    %v1997 = vunpack.c.0.s8 %v1996
    %v1998 = vperm.slane %v1992, %v1997
    %v2000 = vunpack.c.l.s4 1934713408
    %v2001 = vunpack.c.0.s8 %v2000
    %v2002 = vperm.slane %v1994, %v2001
    %v2003 = vrot.slane %v1966, 4
    %v2004 = vsel %vm321, %v2003, %v1954
    %v2005 = vrot.slane %v1954, 4
    %v2006 = vsel %vm321, %v1966, %v2005
    %v2008 = vunpack.c.l.s4 1934713408
    %v2009 = vunpack.c.0.s8 %v2008
    %v2010 = vperm.slane %v2004, %v2009
    %v2012 = vunpack.c.l.s4 1934713408
    %v2013 = vunpack.c.0.s8 %v2012
    %v2014 = vperm.slane %v2006, %v2013
    %v2015 = vrot.slane %v1998, 4
    %v2016 = vsel %vm321, %v2015, %v1974
    %v2017 = vrot.slane %v1974, 4
    %v2018 = vsel %vm321, %v1998, %v2017
    %v2019 = vrot.slane %v2002, 4
    %v2020 = vsel %vm321, %v2019, %v1978
    %v2021 = vrot.slane %v1978, 4
    %v2022 = vsel %vm321, %v2002, %v2021
    %v2023 = vrot.slane %v2010, 4
    %v2024 = vsel %vm321, %v2023, %v1986
    %v2025 = vrot.slane %v1986, 4
    %v2026 = vsel %vm321, %v2010, %v2025
    %v2027 = vrot.slane %v2014, 4
    %v2028 = vsel %vm321, %v2027, %v1990
    %v2029 = vrot.slane %v1990, 4
    %v2030 = vsel %vm321, %v2014, %v2029
    %v2031 = vrot.slane %v2020, 4
    %v2032 = vsel %vm321, %v2031, %v2016
    %v2033 = vrot.slane %v2016, 4
    %v2034 = vsel %vm321, %v2020, %v2033
    %v2036 = vunpack.c.l.s4 1983009808
    %v2037 = vunpack.c.0.s8 %v2036
    %v2038 = vperm.slane %v2032, %v2037
    %v2040 = vunpack.c.l.s4 1983009808
    %v2041 = vunpack.c.0.s8 %v2040
    %v2042 = vperm.slane %v2034, %v2041
    %v2043 = vrot.slane %v2022, 4
    %v2044 = vsel %vm321, %v2043, %v2018
    %v2045 = vrot.slane %v2018, 4
    %v2046 = vsel %vm321, %v2022, %v2045
    %v2048 = vunpack.c.l.s4 1983009808
    %v2049 = vunpack.c.0.s8 %v2048
    %v2050 = vperm.slane %v2044, %v2049
    %v2052 = vunpack.c.l.s4 1983009808
    %v2053 = vunpack.c.0.s8 %v2052
    %v2054 = vperm.slane %v2046, %v2053
    %v2055 = vrot.slane %v2028, 4
    %v2056 = vsel %vm321, %v2055, %v2024
    %v2057 = vrot.slane %v2024, 4
    %v2058 = vsel %vm321, %v2028, %v2057
    %v2060 = vunpack.c.l.s4 1983009808
    %v2061 = vunpack.c.0.s8 %v2060
    %v2062 = vperm.slane %v2056, %v2061
    %v2064 = vunpack.c.l.s4 1983009808
    %v2065 = vunpack.c.0.s8 %v2064
    %v2066 = vperm.slane %v2058, %v2065
    %v2067 = vrot.slane %v2030, 4
    %v2068 = vsel %vm321, %v2067, %v2026
    %v2069 = vrot.slane %v2026, 4
    %v2070 = vsel %vm321, %v2030, %v2069
    %v2072 = vunpack.c.l.s4 1983009808
    %v2073 = vunpack.c.0.s8 %v2072
    %v2074 = vperm.slane %v2068, %v2073
    %v2076 = vunpack.c.l.s4 1983009808
    %v2077 = vunpack.c.0.s8 %v2076
    %v2078 = vperm.slane %v2070, %v2077
    %v2079 = vrot.slane %v2050, 4
    %v2080 = vsel %vm321, %v2079, %v2038
    %v2081 = vrot.slane %v2038, 4
    %v2082 = vsel %vm321, %v2050, %v2081
    %v2084 = vunpack.c.l.s4 1934713408
    %v2085 = vunpack.c.0.s8 %v2084
    %v2086 = vperm.slane %v2080, %v2085
    %v2088 = vunpack.c.l.s4 1934713408
    %v2089 = vunpack.c.0.s8 %v2088
    %v2090 = vperm.slane %v2082, %v2089
    %v2091 = vrot.slane %v2054, 4
    %v2092 = vsel %vm321, %v2091, %v2042
    %v2093 = vrot.slane %v2042, 4
    %v2094 = vsel %vm321, %v2054, %v2093
    %v2096 = vunpack.c.l.s4 1934713408
    %v2097 = vunpack.c.0.s8 %v2096
    %v2098 = vperm.slane %v2092, %v2097
    %v2100 = vunpack.c.l.s4 1934713408
    %v2101 = vunpack.c.0.s8 %v2100
    %v2102 = vperm.slane %v2094, %v2101
    %v2103 = vrot.slane %v2074, 4
    %v2104 = vsel %vm321, %v2103, %v2062
    %v2105 = vrot.slane %v2062, 4
    %v2106 = vsel %vm321, %v2074, %v2105
    %v2108 = vunpack.c.l.s4 1934713408
    %v2109 = vunpack.c.0.s8 %v2108
    %v2110 = vperm.slane %v2104, %v2109
    %v2112 = vunpack.c.l.s4 1934713408
    %v2113 = vunpack.c.0.s8 %v2112
    %v2114 = vperm.slane %v2106, %v2113
    %v2115 = vrot.slane %v2078, 4
    %v2116 = vsel %vm321, %v2115, %v2066
    %v2117 = vrot.slane %v2066, 4
    %v2118 = vsel %vm321, %v2078, %v2117
    %v2120 = vunpack.c.l.s4 1934713408
    %v2121 = vunpack.c.0.s8 %v2120
    %v2122 = vperm.slane %v2116, %v2121
    %v2124 = vunpack.c.l.s4 1934713408
    %v2125 = vunpack.c.0.s8 %v2124
    %v2126 = vperm.slane %v2118, %v2125
    %v2127 = vrot.slane %v2110, 4
    %v2128 = vsel %vm321, %v2127, %v2086
    %v2129 = vrot.slane %v2086, 4
    %v2130 = vsel %vm321, %v2110, %v2129
    %v2131 = vrot.slane %v2114, 4
    %v2132 = vsel %vm321, %v2131, %v2090
    %v2133 = vrot.slane %v2090, 4
    %v2134 = vsel %vm321, %v2114, %v2133
    %v2135 = vrot.slane %v2122, 4
    %v2136 = vsel %vm321, %v2135, %v2098
    %v2137 = vrot.slane %v2098, 4
    %v2138 = vsel %vm321, %v2122, %v2137
    %v2139 = vrot.slane %v2126, 4
    %v2140 = vsel %vm321, %v2139, %v2102
    %v2141 = vrot.slane %v2102, 4
    %v2142 = vsel %vm321, %v2126, %v2141
    %2144 = vrot.lane.b32.xlu0 %v296, 120
    %v2145 = vpop.permute.xlu0 %2144
    %2147 = vrot.lane.b32.xlu0 %v296, 112
    %v2148 = vpop.permute.xlu0 %2147
    %2150 = vrot.lane.b32.xlu0 %v296, 104
    %v2151 = vpop.permute.xlu0 %2150
    %2153 = vrot.lane.b32.xlu0 %v296, 96
    %v2154 = vpop.permute.xlu0 %2153
    %2156 = vrot.lane.b32.xlu0 %v296, 88
    %v2157 = vpop.permute.xlu0 %2156
    %2159 = vrot.lane.b32.xlu0 %v296, 80
    %v2160 = vpop.permute.xlu0 %2159
    %2162 = vrot.lane.b32.xlu0 %v296, 72
    %v2163 = vpop.permute.xlu0 %2162
    %v2165 = vrot.slane %v2148, 4
    %v2166 = vsel %vm321, %v2165, %v296
    %v2167 = vrot.slane %v296, 4
    %v2168 = vsel %vm321, %v2148, %v2167
    %v2170 = vunpack.c.l.s4 1983009808
    %v2171 = vunpack.c.0.s8 %v2170
    %v2172 = vperm.slane %v2166, %v2171
    %v2174 = vunpack.c.l.s4 1983009808
    %v2175 = vunpack.c.0.s8 %v2174
    %v2176 = vperm.slane %v2168, %v2175
    %v2177 = vrot.slane %v2151, 4
    %v2178 = vsel %vm321, %v2177, %v2145
    %v2179 = vrot.slane %v2145, 4
    %v2180 = vsel %vm321, %v2151, %v2179
    %v2182 = vunpack.c.l.s4 1983009808
    %v2183 = vunpack.c.0.s8 %v2182
    %v2184 = vperm.slane %v2178, %v2183
    %v2186 = vunpack.c.l.s4 1983009808
    %v2187 = vunpack.c.0.s8 %v2186
    %v2188 = vperm.slane %v2180, %v2187
    %v2189 = vrot.slane %v2160, 4
    %v2190 = vsel %vm321, %v2189, %v2154
    %v2191 = vrot.slane %v2154, 4
    %v2192 = vsel %vm321, %v2160, %v2191
    %v2194 = vunpack.c.l.s4 1983009808
    %v2195 = vunpack.c.0.s8 %v2194
    %v2196 = vperm.slane %v2190, %v2195
    %v2198 = vunpack.c.l.s4 1983009808
    %v2199 = vunpack.c.0.s8 %v2198
    %v2200 = vperm.slane %v2192, %v2199
    %v2201 = vrot.slane %v2163, 4
    %v2202 = vsel %vm321, %v2201, %v2157
    %v2203 = vrot.slane %v2157, 4
    %v2204 = vsel %vm321, %v2163, %v2203
    %v2206 = vunpack.c.l.s4 1983009808
    %v2207 = vunpack.c.0.s8 %v2206
    %v2208 = vperm.slane %v2202, %v2207
    %v2210 = vunpack.c.l.s4 1983009808
    %v2211 = vunpack.c.0.s8 %v2210
    %v2212 = vperm.slane %v2204, %v2211
    %v2213 = vrot.slane %v2184, 4
    %v2214 = vsel %vm321, %v2213, %v2172
    %v2215 = vrot.slane %v2172, 4
    %v2216 = vsel %vm321, %v2184, %v2215
    %v2218 = vunpack.c.l.s4 1934713408
    %v2219 = vunpack.c.0.s8 %v2218
    %v2220 = vperm.slane %v2214, %v2219
    %v2222 = vunpack.c.l.s4 1934713408
    %v2223 = vunpack.c.0.s8 %v2222
    %v2224 = vperm.slane %v2216, %v2223
    %v2225 = vrot.slane %v2188, 4
    %v2226 = vsel %vm321, %v2225, %v2176
    %v2227 = vrot.slane %v2176, 4
    %v2228 = vsel %vm321, %v2188, %v2227
    %v2230 = vunpack.c.l.s4 1934713408
    %v2231 = vunpack.c.0.s8 %v2230
    %v2232 = vperm.slane %v2226, %v2231
    %v2234 = vunpack.c.l.s4 1934713408
    %v2235 = vunpack.c.0.s8 %v2234
    %v2236 = vperm.slane %v2228, %v2235
    %v2237 = vrot.slane %v2208, 4
    %v2238 = vsel %vm321, %v2237, %v2196
    %v2239 = vrot.slane %v2196, 4
    %v2240 = vsel %vm321, %v2208, %v2239
    %v2242 = vunpack.c.l.s4 1934713408
    %v2243 = vunpack.c.0.s8 %v2242
    %v2244 = vperm.slane %v2238, %v2243
    %v2246 = vunpack.c.l.s4 1934713408
    %v2247 = vunpack.c.0.s8 %v2246
    %v2248 = vperm.slane %v2240, %v2247
    %v2249 = vrot.slane %v2212, 4
    %v2250 = vsel %vm321, %v2249, %v2200
    %v2251 = vrot.slane %v2200, 4
    %v2252 = vsel %vm321, %v2212, %v2251
    %v2254 = vunpack.c.l.s4 1934713408
    %v2255 = vunpack.c.0.s8 %v2254
    %v2256 = vperm.slane %v2250, %v2255
    %v2258 = vunpack.c.l.s4 1934713408
    %v2259 = vunpack.c.0.s8 %v2258
    %v2260 = vperm.slane %v2252, %v2259
    %v2261 = vrot.slane %v2244, 4
    %v2262 = vsel %vm321, %v2261, %v2220
    %v2263 = vrot.slane %v2220, 4
    %v2264 = vsel %vm321, %v2244, %v2263
    %v2265 = vrot.slane %v2248, 4
    %v2266 = vsel %vm321, %v2265, %v2224
    %v2267 = vrot.slane %v2224, 4
    %v2268 = vsel %vm321, %v2248, %v2267
    %v2269 = vrot.slane %v2256, 4
    %v2270 = vsel %vm321, %v2269, %v2232
    %v2271 = vrot.slane %v2232, 4
    %v2272 = vsel %vm321, %v2256, %v2271
    %v2273 = vrot.slane %v2260, 4
    %v2274 = vsel %vm321, %v2273, %v2236
    %v2275 = vrot.slane %v2236, 4
    %v2276 = vsel %vm321, %v2260, %v2275
    %v2277 = vrot.slane %v2266, 4
    %v2278 = vsel %vm321, %v2277, %v2262
    %v2279 = vrot.slane %v2262, 4
    %v2280 = vsel %vm321, %v2266, %v2279
    %v2282 = vunpack.c.l.s4 1983009808
    %v2283 = vunpack.c.0.s8 %v2282
    %v2284 = vperm.slane %v2278, %v2283
    %v2286 = vunpack.c.l.s4 1983009808
    %v2287 = vunpack.c.0.s8 %v2286
    %v2288 = vperm.slane %v2280, %v2287
    %v2289 = vrot.slane %v2268, 4
    %v2290 = vsel %vm321, %v2289, %v2264
    %v2291 = vrot.slane %v2264, 4
    %v2292 = vsel %vm321, %v2268, %v2291
    %v2294 = vunpack.c.l.s4 1983009808
    %v2295 = vunpack.c.0.s8 %v2294
    %v2296 = vperm.slane %v2290, %v2295
    %v2298 = vunpack.c.l.s4 1983009808
    %v2299 = vunpack.c.0.s8 %v2298
    %v2300 = vperm.slane %v2292, %v2299
    %v2301 = vrot.slane %v2274, 4
    %v2302 = vsel %vm321, %v2301, %v2270
    %v2303 = vrot.slane %v2270, 4
    %v2304 = vsel %vm321, %v2274, %v2303
    %v2306 = vunpack.c.l.s4 1983009808
    %v2307 = vunpack.c.0.s8 %v2306
    %v2308 = vperm.slane %v2302, %v2307
    %v2310 = vunpack.c.l.s4 1983009808
    %v2311 = vunpack.c.0.s8 %v2310
    %v2312 = vperm.slane %v2304, %v2311
    %v2313 = vrot.slane %v2276, 4
    %v2314 = vsel %vm321, %v2313, %v2272
    %v2315 = vrot.slane %v2272, 4
    %v2316 = vsel %vm321, %v2276, %v2315
    %v2318 = vunpack.c.l.s4 1983009808
    %v2319 = vunpack.c.0.s8 %v2318
    %v2320 = vperm.slane %v2314, %v2319
    %v2322 = vunpack.c.l.s4 1983009808
    %v2323 = vunpack.c.0.s8 %v2322
    %v2324 = vperm.slane %v2316, %v2323
    %v2325 = vrot.slane %v2296, 4
    %v2326 = vsel %vm321, %v2325, %v2284
    %v2327 = vrot.slane %v2284, 4
    %v2328 = vsel %vm321, %v2296, %v2327
    %v2330 = vunpack.c.l.s4 1934713408
    %v2331 = vunpack.c.0.s8 %v2330
    %v2332 = vperm.slane %v2326, %v2331
    %v2334 = vunpack.c.l.s4 1934713408
    %v2335 = vunpack.c.0.s8 %v2334
    %v2336 = vperm.slane %v2328, %v2335
    %v2337 = vrot.slane %v2300, 4
    %v2338 = vsel %vm321, %v2337, %v2288
    %v2339 = vrot.slane %v2288, 4
    %v2340 = vsel %vm321, %v2300, %v2339
    %v2342 = vunpack.c.l.s4 1934713408
    %v2343 = vunpack.c.0.s8 %v2342
    %v2344 = vperm.slane %v2338, %v2343
    %v2346 = vunpack.c.l.s4 1934713408
    %v2347 = vunpack.c.0.s8 %v2346
    %v2348 = vperm.slane %v2340, %v2347
    %v2349 = vrot.slane %v2320, 4
    %v2350 = vsel %vm321, %v2349, %v2308
    %v2351 = vrot.slane %v2308, 4
    %v2352 = vsel %vm321, %v2320, %v2351
    %v2354 = vunpack.c.l.s4 1934713408
    %v2355 = vunpack.c.0.s8 %v2354
    %v2356 = vperm.slane %v2350, %v2355
    %v2358 = vunpack.c.l.s4 1934713408
    %v2359 = vunpack.c.0.s8 %v2358
    %v2360 = vperm.slane %v2352, %v2359
    %v2361 = vrot.slane %v2324, 4
    %v2362 = vsel %vm321, %v2361, %v2312
    %v2363 = vrot.slane %v2312, 4
    %v2364 = vsel %vm321, %v2324, %v2363
    %v2366 = vunpack.c.l.s4 1934713408
    %v2367 = vunpack.c.0.s8 %v2366
    %v2368 = vperm.slane %v2362, %v2367
    %v2370 = vunpack.c.l.s4 1934713408
    %v2371 = vunpack.c.0.s8 %v2370
    %v2372 = vperm.slane %v2364, %v2371
    %v2373 = vrot.slane %v2356, 4
    %v2374 = vsel %vm321, %v2373, %v2332
    %v2375 = vrot.slane %v2332, 4
    %v2376 = vsel %vm321, %v2356, %v2375
    %v2377 = vrot.slane %v2360, 4
    %v2378 = vsel %vm321, %v2377, %v2336
    %v2379 = vrot.slane %v2336, 4
    %v2380 = vsel %vm321, %v2360, %v2379
    %v2381 = vrot.slane %v2368, 4
    %v2382 = vsel %vm321, %v2381, %v2344
    %v2383 = vrot.slane %v2344, 4
    %v2384 = vsel %vm321, %v2368, %v2383
    %v2385 = vrot.slane %v2372, 4
    %v2386 = vsel %vm321, %v2385, %v2348
    %v2387 = vrot.slane %v2348, 4
    %v2388 = vsel %vm321, %v2372, %v2387
    %s2389 = scalar_lea.vmem [#allocation5], 8
    %v2390 = vld [vmem:[%s2389] sm:$0xff]
    %v2391 = vpack.c.bf16 %v1880, %v1880
    %v2392 = vpack.c.bf16 %v1882, %v1882
    %v2393 = vpack.c.bf16 %v1884, %v1884
    %v2394 = vpack.c.bf16 %v1886, %v1886
    %v2395 = vpack.c.bf16 %v1888, %v1888
    %v2396 = vpack.c.bf16 %v1890, %v1890
    %v2397 = vpack.c.bf16 %v1892, %v1892
    %v2398 = vpack.c.bf16 %v1894, %v1894
    %v2399 = vpack.c.bf16 %v2128, %v2128
    %v2400 = vpack.c.bf16 %v2130, %v2130
    %v2401 = vpack.c.bf16 %v2132, %v2132
    %v2402 = vpack.c.bf16 %v2134, %v2134
    %v2403 = vpack.c.bf16 %v2136, %v2136
    %v2404 = vpack.c.bf16 %v2138, %v2138
    %v2405 = vpack.c.bf16 %v2140, %v2140
    %v2406 = vpack.c.bf16 %v2142, %v2142
    %v2408 = vsel %vm1056, %v2391, 0
    %v2411 = vsel %vm1056, %v2399, 0
    %2413 = vmatpush.bf16.xpose.msra.mxu0 0
    %2414 = vmatpush.bf16.xpose.msra.mxu0 0
    %2415 = vmatpush.bf16.xpose.msra.mxu0 0
    %2416 = vmatpush.bf16.xpose.msra.mxu0 0
    %2417 = vmatpush.bf16.xpose.msra.mxu0 0
    %2418 = vmatpush.bf16.xpose.msra.mxu0 0
    %2419 = vmatpush.bf16.xpose.msra.mxu0 0
    %2420 = vmatpush.bf16.xpose.msra.mxu0 %v2411
    %2421 = vmatmul.bf16.gmra.mxu0 %v2408
    %v2422 = vpop.f32.mrf.mxu0
    %v2423 = vadd.f32 %v2390, %v2422
    %v2424 = vpop.f32.mrf.mxu0
    %2425 = vdwg.mxu0
    %v2427 = vsel %vm1056, %v2392, 0
    %v2430 = vsel %vm1056, %v2400, 0
    %2432 = vmatpush.bf16.xpose.msra.mxu0 0
    %2433 = vmatpush.bf16.xpose.msra.mxu0 0
    %2434 = vmatpush.bf16.xpose.msra.mxu0 0
    %2435 = vmatpush.bf16.xpose.msra.mxu0 0
    %2436 = vmatpush.bf16.xpose.msra.mxu0 0
    %2437 = vmatpush.bf16.xpose.msra.mxu0 0
    %2438 = vmatpush.bf16.xpose.msra.mxu0 0
    %2439 = vmatpush.bf16.xpose.msra.mxu0 %v2430
    %2440 = vmatmul.bf16.gmra.mxu0 %v2427
    %v2441 = vpop.f32.mrf.mxu0
    %v2442 = vadd.f32 %v2390, %v2441
    %v2443 = vpop.f32.mrf.mxu0
    %2444 = vdwg.mxu0
    %v2446 = vsel %vm1056, %v2393, 0
    %v2449 = vsel %vm1056, %v2401, 0
    %2451 = vmatpush.bf16.xpose.msra.mxu0 0
    %2452 = vmatpush.bf16.xpose.msra.mxu0 0
    %2453 = vmatpush.bf16.xpose.msra.mxu0 0
    %2454 = vmatpush.bf16.xpose.msra.mxu0 0
    %2455 = vmatpush.bf16.xpose.msra.mxu0 0
    %2456 = vmatpush.bf16.xpose.msra.mxu0 0
    %2457 = vmatpush.bf16.xpose.msra.mxu0 0
    %2458 = vmatpush.bf16.xpose.msra.mxu0 %v2449
    %2459 = vmatmul.bf16.gmra.mxu0 %v2446
    %v2460 = vpop.f32.mrf.mxu0
    %v2461 = vadd.f32 %v2390, %v2460
    %v2462 = vpop.f32.mrf.mxu0
    %2463 = vdwg.mxu0
    %v2465 = vsel %vm1056, %v2394, 0
    %v2468 = vsel %vm1056, %v2402, 0
    %2470 = vmatpush.bf16.xpose.msra.mxu0 0
    %2471 = vmatpush.bf16.xpose.msra.mxu0 0
    %2472 = vmatpush.bf16.xpose.msra.mxu0 0
    %2473 = vmatpush.bf16.xpose.msra.mxu0 0
    %2474 = vmatpush.bf16.xpose.msra.mxu0 0
    %2475 = vmatpush.bf16.xpose.msra.mxu0 0
    %2476 = vmatpush.bf16.xpose.msra.mxu0 0
    %2477 = vmatpush.bf16.xpose.msra.mxu0 %v2468
    %2478 = vmatmul.bf16.gmra.mxu0 %v2465
    %v2479 = vpop.f32.mrf.mxu0
    %v2480 = vadd.f32 %v2390, %v2479
    %v2481 = vpop.f32.mrf.mxu0
    %2482 = vdwg.mxu0
    %v2484 = vsel %vm1056, %v2395, 0
    %v2487 = vsel %vm1056, %v2403, 0
    %2489 = vmatpush.bf16.xpose.msra.mxu0 0
    %2490 = vmatpush.bf16.xpose.msra.mxu0 0
    %2491 = vmatpush.bf16.xpose.msra.mxu0 0
    %2492 = vmatpush.bf16.xpose.msra.mxu0 0
    %2493 = vmatpush.bf16.xpose.msra.mxu0 0
    %2494 = vmatpush.bf16.xpose.msra.mxu0 0
    %2495 = vmatpush.bf16.xpose.msra.mxu0 0
    %2496 = vmatpush.bf16.xpose.msra.mxu0 %v2487
    %2497 = vmatmul.bf16.gmra.mxu0 %v2484
    %v2498 = vpop.f32.mrf.mxu0
    %v2499 = vadd.f32 %v2390, %v2498
    %v2500 = vpop.f32.mrf.mxu0
    %2501 = vdwg.mxu0
    %v2503 = vsel %vm1056, %v2396, 0
    %v2506 = vsel %vm1056, %v2404, 0
    %2508 = vmatpush.bf16.xpose.msra.mxu0 0
    %2509 = vmatpush.bf16.xpose.msra.mxu0 0
    %2510 = vmatpush.bf16.xpose.msra.mxu0 0
    %2511 = vmatpush.bf16.xpose.msra.mxu0 0
    %2512 = vmatpush.bf16.xpose.msra.mxu0 0
    %2513 = vmatpush.bf16.xpose.msra.mxu0 0
    %2514 = vmatpush.bf16.xpose.msra.mxu0 0
    %2515 = vmatpush.bf16.xpose.msra.mxu0 %v2506
    %2516 = vmatmul.bf16.gmra.mxu0 %v2503
    %v2517 = vpop.f32.mrf.mxu0
    %v2518 = vadd.f32 %v2390, %v2517
    %v2519 = vpop.f32.mrf.mxu0
    %2520 = vdwg.mxu0
    %v2522 = vsel %vm1056, %v2397, 0
    %v2525 = vsel %vm1056, %v2405, 0
    %2527 = vmatpush.bf16.xpose.msra.mxu0 0
    %2528 = vmatpush.bf16.xpose.msra.mxu0 0
    %2529 = vmatpush.bf16.xpose.msra.mxu0 0
    %2530 = vmatpush.bf16.xpose.msra.mxu0 0
    %2531 = vmatpush.bf16.xpose.msra.mxu0 0
    %2532 = vmatpush.bf16.xpose.msra.mxu0 0
    %2533 = vmatpush.bf16.xpose.msra.mxu0 0
    %2534 = vmatpush.bf16.xpose.msra.mxu0 %v2525
    %2535 = vmatmul.bf16.gmra.mxu0 %v2522
    %v2536 = vpop.f32.mrf.mxu0
    %v2537 = vadd.f32 %v2390, %v2536
    %v2538 = vpop.f32.mrf.mxu0
    %2539 = vdwg.mxu0
    %v2541 = vsel %vm1056, %v2398, 0
    %v2544 = vsel %vm1056, %v2406, 0
    %2546 = vmatpush.bf16.xpose.msra.mxu0 0
    %2547 = vmatpush.bf16.xpose.msra.mxu0 0
    %2548 = vmatpush.bf16.xpose.msra.mxu0 0
    %2549 = vmatpush.bf16.xpose.msra.mxu0 0
    %2550 = vmatpush.bf16.xpose.msra.mxu0 0
    %2551 = vmatpush.bf16.xpose.msra.mxu0 0
    %2552 = vmatpush.bf16.xpose.msra.mxu0 0
    %2553 = vmatpush.bf16.xpose.msra.mxu0 %v2544
    %2554 = vmatmul.bf16.gmra.mxu0 %v2541
    %v2555 = vpop.f32.mrf.mxu0
    %v2556 = vadd.f32 %v2390, %v2555
    %v2557 = vpop.f32.mrf.mxu0
    %2558 = vdwg.mxu0
    %v2559 = vsel %vm1056, %v2423, -inf
    %2560 = vmax.xlane.f32.xlu0 %v2559
    %v2561 = vpop.xlane.xlu0 %2560
    %v2562 = vsel %vm1056, %v2442, -inf
    %2563 = vmax.xlane.f32.xlu0 %v2562
    %v2564 = vpop.xlane.xlu0 %2563
    %v2565 = vsel %vm1056, %v2461, -inf
    %2566 = vmax.xlane.f32.xlu0 %v2565
    %v2567 = vpop.xlane.xlu0 %2566
    %v2568 = vsel %vm1056, %v2480, -inf
    %2569 = vmax.xlane.f32.xlu0 %v2568
    %v2570 = vpop.xlane.xlu0 %2569
    %v2571 = vsel %vm1056, %v2499, -inf
    %2572 = vmax.xlane.f32.xlu0 %v2571
    %v2573 = vpop.xlane.xlu0 %2572
    %v2574 = vsel %vm1056, %v2518, -inf
    %2575 = vmax.xlane.f32.xlu0 %v2574
    %v2576 = vpop.xlane.xlu0 %2575
    %v2577 = vsel %vm1056, %v2537, -inf
    %2578 = vmax.xlane.f32.xlu0 %v2577
    %v2579 = vpop.xlane.xlu0 %2578
    %v2580 = vsel %vm1056, %v2556, -inf
    %2581 = vmax.xlane.f32.xlu0 %v2580
    %v2582 = vpop.xlane.xlu0 %2581
    %v2583 = vsub.f32 %v2423, %v2561
    %v2584 = vsub.f32 %v2442, %v2564
    %v2585 = vsub.f32 %v2461, %v2567
    %v2586 = vsub.f32 %v2480, %v2570
    %v2587 = vsub.f32 %v2499, %v2573
    %v2588 = vsub.f32 %v2518, %v2576
    %v2589 = vsub.f32 %v2537, %v2579
    %v2590 = vsub.f32 %v2556, %v2582
    %v2591 = vmul.f32 %v2583, 1.442695
    %v2592 = vpow.pop %v2591
    %v2593 = vmul.f32 %v2584, 1.442695
    %v2594 = vpow.pop %v2593
    %v2595 = vmul.f32 %v2585, 1.442695
    %v2596 = vpow.pop %v2595
    %v2597 = vmul.f32 %v2586, 1.442695
    %v2598 = vpow.pop %v2597
    %v2599 = vmul.f32 %v2587, 1.442695
    %v2600 = vpow.pop %v2599
    %v2601 = vmul.f32 %v2588, 1.442695
    %v2602 = vpow.pop %v2601
    %v2603 = vmul.f32 %v2589, 1.442695
    %v2604 = vpow.pop %v2603
    %v2605 = vmul.f32 %v2590, 1.442695
    %v2606 = vpow.pop %v2605
    %v2607 = vsel %vm1056, %v2592, 0.0
    %2608 = vadd.xlane.f32.xlu0 %v2607
    %v2609 = vpop.xlane.xlu0 %2608
    %v2610 = vsel %vm1056, %v2594, 0.0
    %2611 = vadd.xlane.f32.xlu0 %v2610
    %v2612 = vpop.xlane.xlu0 %2611
    %v2613 = vsel %vm1056, %v2596, 0.0
    %2614 = vadd.xlane.f32.xlu0 %v2613
    %v2615 = vpop.xlane.xlu0 %2614
    %v2616 = vsel %vm1056, %v2598, 0.0
    %2617 = vadd.xlane.f32.xlu0 %v2616
    %v2618 = vpop.xlane.xlu0 %2617
    %v2619 = vsel %vm1056, %v2600, 0.0
    %2620 = vadd.xlane.f32.xlu0 %v2619
    %v2621 = vpop.xlane.xlu0 %2620
    %v2622 = vsel %vm1056, %v2602, 0.0
    %2623 = vadd.xlane.f32.xlu0 %v2622
    %v2624 = vpop.xlane.xlu0 %2623
    %v2625 = vsel %vm1056, %v2604, 0.0
    %2626 = vadd.xlane.f32.xlu0 %v2625
    %v2627 = vpop.xlane.xlu0 %2626
    %v2628 = vsel %vm1056, %v2606, 0.0
    %2629 = vadd.xlane.f32.xlu0 %v2628
    %v2630 = vpop.xlane.xlu0 %2629
    %v2631 = vrcp.pop %v2609
    %v2632 = vrcp.pop %v2612
    %v2633 = vrcp.pop %v2615
    %v2634 = vrcp.pop %v2618
    %v2635 = vrcp.pop %v2621
    %v2636 = vrcp.pop %v2624
    %v2637 = vrcp.pop %v2627
    %v2638 = vrcp.pop %v2630
    %v2639 = vmul.f32 %v2592, %v2631
    %v2640 = vmul.f32 %v2594, %v2632
    %v2641 = vmul.f32 %v2596, %v2633
    %v2642 = vmul.f32 %v2598, %v2634
    %v2643 = vmul.f32 %v2600, %v2635
    %v2644 = vmul.f32 %v2602, %v2636
    %v2645 = vmul.f32 %v2604, %v2637
    %v2646 = vmul.f32 %v2606, %v2638
    %v2647 = vpack.c.bf16 %v2639, %v2639
    %v2648 = vpack.c.bf16 %v2640, %v2640
    %v2649 = vpack.c.bf16 %v2641, %v2641
    %v2650 = vpack.c.bf16 %v2642, %v2642
    %v2651 = vpack.c.bf16 %v2643, %v2643
    %v2652 = vpack.c.bf16 %v2644, %v2644
    %v2653 = vpack.c.bf16 %v2645, %v2645
    %v2654 = vpack.c.bf16 %v2646, %v2646
    %v2655 = vpack.c.bf16 %v2374, %v2374
    %v2656 = vpack.c.bf16 %v2376, %v2376
    %v2657 = vpack.c.bf16 %v2378, %v2378
    %v2658 = vpack.c.bf16 %v2380, %v2380
    %v2659 = vpack.c.bf16 %v2382, %v2382
    %v2660 = vpack.c.bf16 %v2384, %v2384
    %v2661 = vpack.c.bf16 %v2386, %v2386
    %v2662 = vpack.c.bf16 %v2388, %v2388
    %v2664 = vsel %vm1056, %v2647, 0
    %v2667 = vsel %vm1316, %v2655, 0
    %2669 = vmatpush.bf16.msra.mxu0 0
    %2670 = vmatpush.bf16.msra.mxu0 0
    %2671 = vmatpush.bf16.msra.mxu0 0
    %2672 = vmatpush.bf16.msra.mxu0 0
    %2673 = vmatpush.bf16.msra.mxu0 0
    %2674 = vmatpush.bf16.msra.mxu0 0
    %2675 = vmatpush.bf16.msra.mxu0 0
    %2676 = vmatpush.bf16.msra.mxu0 %v2667
    %2677 = vmatmul.bf16.gmra.mxu0 %v2664
    %v2678 = vpop.f32.mrf.mxu0
    %v2679 = vadd.f32 0.0, %v2678
    %v2680 = vpop.f32.mrf.mxu0
    %2681 = vdwg.mxu0
    %v2683 = vsel %vm1056, %v2648, 0
    %v2686 = vsel %vm1316, %v2656, 0
    %2688 = vmatpush.bf16.msra.mxu0 0
    %2689 = vmatpush.bf16.msra.mxu0 0
    %2690 = vmatpush.bf16.msra.mxu0 0
    %2691 = vmatpush.bf16.msra.mxu0 0
    %2692 = vmatpush.bf16.msra.mxu0 0
    %2693 = vmatpush.bf16.msra.mxu0 0
    %2694 = vmatpush.bf16.msra.mxu0 0
    %2695 = vmatpush.bf16.msra.mxu0 %v2686
    %2696 = vmatmul.bf16.gmra.mxu0 %v2683
    %v2697 = vpop.f32.mrf.mxu0
    %v2698 = vadd.f32 0.0, %v2697
    %v2699 = vpop.f32.mrf.mxu0
    %2700 = vdwg.mxu0
    %v2702 = vsel %vm1056, %v2649, 0
    %v2705 = vsel %vm1316, %v2657, 0
    %2707 = vmatpush.bf16.msra.mxu0 0
    %2708 = vmatpush.bf16.msra.mxu0 0
    %2709 = vmatpush.bf16.msra.mxu0 0
    %2710 = vmatpush.bf16.msra.mxu0 0
    %2711 = vmatpush.bf16.msra.mxu0 0
    %2712 = vmatpush.bf16.msra.mxu0 0
    %2713 = vmatpush.bf16.msra.mxu0 0
    %2714 = vmatpush.bf16.msra.mxu0 %v2705
    %2715 = vmatmul.bf16.gmra.mxu0 %v2702
    %v2716 = vpop.f32.mrf.mxu0
    %v2717 = vadd.f32 0.0, %v2716
    %v2718 = vpop.f32.mrf.mxu0
    %2719 = vdwg.mxu0
    %v2721 = vsel %vm1056, %v2650, 0
    %v2724 = vsel %vm1316, %v2658, 0
    %2726 = vmatpush.bf16.msra.mxu0 0
    %2727 = vmatpush.bf16.msra.mxu0 0
    %2728 = vmatpush.bf16.msra.mxu0 0
    %2729 = vmatpush.bf16.msra.mxu0 0
    %2730 = vmatpush.bf16.msra.mxu0 0
    %2731 = vmatpush.bf16.msra.mxu0 0
    %2732 = vmatpush.bf16.msra.mxu0 0
    %2733 = vmatpush.bf16.msra.mxu0 %v2724
    %2734 = vmatmul.bf16.gmra.mxu0 %v2721
    %v2735 = vpop.f32.mrf.mxu0
    %v2736 = vadd.f32 0.0, %v2735
    %v2737 = vpop.f32.mrf.mxu0
    %2738 = vdwg.mxu0
    %v2740 = vsel %vm1056, %v2651, 0
    %v2743 = vsel %vm1316, %v2659, 0
    %2745 = vmatpush.bf16.msra.mxu0 0
    %2746 = vmatpush.bf16.msra.mxu0 0
    %2747 = vmatpush.bf16.msra.mxu0 0
    %2748 = vmatpush.bf16.msra.mxu0 0
    %2749 = vmatpush.bf16.msra.mxu0 0
    %2750 = vmatpush.bf16.msra.mxu0 0
    %2751 = vmatpush.bf16.msra.mxu0 0
    %2752 = vmatpush.bf16.msra.mxu0 %v2743
    %2753 = vmatmul.bf16.gmra.mxu0 %v2740
    %v2754 = vpop.f32.mrf.mxu0
    %v2755 = vadd.f32 0.0, %v2754
    %v2756 = vpop.f32.mrf.mxu0
    %2757 = vdwg.mxu0
    %v2759 = vsel %vm1056, %v2652, 0
    %v2762 = vsel %vm1316, %v2660, 0
    %2764 = vmatpush.bf16.msra.mxu0 0
    %2765 = vmatpush.bf16.msra.mxu0 0
    %2766 = vmatpush.bf16.msra.mxu0 0
    %2767 = vmatpush.bf16.msra.mxu0 0
    %2768 = vmatpush.bf16.msra.mxu0 0
    %2769 = vmatpush.bf16.msra.mxu0 0
    %2770 = vmatpush.bf16.msra.mxu0 0
    %2771 = vmatpush.bf16.msra.mxu0 %v2762
    %2772 = vmatmul.bf16.gmra.mxu0 %v2759
    %v2773 = vpop.f32.mrf.mxu0
    %v2774 = vadd.f32 0.0, %v2773
    %v2775 = vpop.f32.mrf.mxu0
    %2776 = vdwg.mxu0
    %v2778 = vsel %vm1056, %v2653, 0
    %v2781 = vsel %vm1316, %v2661, 0
    %2783 = vmatpush.bf16.msra.mxu0 0
    %2784 = vmatpush.bf16.msra.mxu0 0
    %2785 = vmatpush.bf16.msra.mxu0 0
    %2786 = vmatpush.bf16.msra.mxu0 0
    %2787 = vmatpush.bf16.msra.mxu0 0
    %2788 = vmatpush.bf16.msra.mxu0 0
    %2789 = vmatpush.bf16.msra.mxu0 0
    %2790 = vmatpush.bf16.msra.mxu0 %v2781
    %2791 = vmatmul.bf16.gmra.mxu0 %v2778
    %v2792 = vpop.f32.mrf.mxu0
    %v2793 = vadd.f32 0.0, %v2792
    %v2794 = vpop.f32.mrf.mxu0
    %2795 = vdwg.mxu0
    %v2797 = vsel %vm1056, %v2654, 0
    %v2800 = vsel %vm1316, %v2662, 0
    %2802 = vmatpush.bf16.msra.mxu0 0
    %2803 = vmatpush.bf16.msra.mxu0 0
    %2804 = vmatpush.bf16.msra.mxu0 0
    %2805 = vmatpush.bf16.msra.mxu0 0
    %2806 = vmatpush.bf16.msra.mxu0 0
    %2807 = vmatpush.bf16.msra.mxu0 0
    %2808 = vmatpush.bf16.msra.mxu0 0
    %2809 = vmatpush.bf16.msra.mxu0 %v2800
    %2810 = vmatmul.bf16.gmra.mxu0 %v2797
    %v2811 = vpop.f32.mrf.mxu0
    %v2812 = vadd.f32 0.0, %v2811
    %v2813 = vpop.f32.mrf.mxu0
    %2814 = vdwg.mxu0
    %v2815 = vpack.c.bf16 %v2679, %v2679
    %v2816 = vpack.c.bf16 %v2698, %v2698
    %v2817 = vpack.c.bf16 %v2717, %v2717
    %v2818 = vpack.c.bf16 %v2736, %v2736
    %v2819 = vpack.c.bf16 %v2755, %v2755
    %v2820 = vpack.c.bf16 %v2774, %v2774
    %v2821 = vpack.c.bf16 %v2793, %v2793
    %v2822 = vpack.c.bf16 %v2812, %v2812
    %v2823 = vld [vmem:[#allocation8] sm:$0xf]
    %v2824 = vld [vmem:[#allocation8 + $0x4] sm:$0xf]
    %v2825 = vld [vmem:[#allocation8 + $0x8] sm:$0xf]
    %v2826 = vld [vmem:[#allocation8 + $0xc] sm:$0xf]
    %v2827 = vld [vmem:[#allocation8 + $0x10] sm:$0xf]
    %v2828 = vld [vmem:[#allocation8 + $0x14] sm:$0xf]
    %v2829 = vld [vmem:[#allocation8 + $0x18] sm:$0xf]
    %v2830 = vld [vmem:[#allocation8 + $0x1c] sm:$0xf]
    %v2832 = vsel %vm1056, %v2815, 0
    %v2835 = vsel %vm1316, %v2823, 0
    %2837 = vmatpush.bf16.msra.mxu0 0
    %2838 = vmatpush.bf16.msra.mxu0 0
    %2839 = vmatpush.bf16.msra.mxu0 0
    %2840 = vmatpush.bf16.msra.mxu0 0
    %2841 = vmatpush.bf16.msra.mxu0 0
    %2842 = vmatpush.bf16.msra.mxu0 0
    %2843 = vmatpush.bf16.msra.mxu0 0
    %2844 = vmatpush.bf16.msra.mxu0 %v2835
    %2845 = vmatmul.bf16.gmra.mxu0 %v2832
    %v2846 = vpop.f32.mrf.mxu0
    %v2847 = vadd.f32 0.0, %v2846
    %v2848 = vpop.f32.mrf.mxu0
    %2849 = vdwg.mxu0
    %v2851 = vsel %vm1056, %v2816, 0
    %v2854 = vsel %vm1316, %v2824, 0
    %2856 = vmatpush.bf16.msra.mxu0 0
    %2857 = vmatpush.bf16.msra.mxu0 0
    %2858 = vmatpush.bf16.msra.mxu0 0
    %2859 = vmatpush.bf16.msra.mxu0 0
    %2860 = vmatpush.bf16.msra.mxu0 0
    %2861 = vmatpush.bf16.msra.mxu0 0
    %2862 = vmatpush.bf16.msra.mxu0 0
    %2863 = vmatpush.bf16.msra.mxu0 %v2854
    %2864 = vmatmul.bf16.gmra.mxu0 %v2851
    %v2865 = vpop.f32.mrf.mxu0
    %v2866 = vadd.f32 0.0, %v2865
    %v2867 = vpop.f32.mrf.mxu0
    %2868 = vdwg.mxu0
    %v2870 = vsel %vm1056, %v2817, 0
    %v2873 = vsel %vm1316, %v2825, 0
    %2875 = vmatpush.bf16.msra.mxu0 0
    %2876 = vmatpush.bf16.msra.mxu0 0
    %2877 = vmatpush.bf16.msra.mxu0 0
    %2878 = vmatpush.bf16.msra.mxu0 0
    %2879 = vmatpush.bf16.msra.mxu0 0
    %2880 = vmatpush.bf16.msra.mxu0 0
    %2881 = vmatpush.bf16.msra.mxu0 0
    %2882 = vmatpush.bf16.msra.mxu0 %v2873
    %2883 = vmatmul.bf16.gmra.mxu0 %v2870
    %v2884 = vpop.f32.mrf.mxu0
    %v2885 = vadd.f32 0.0, %v2884
    %v2886 = vpop.f32.mrf.mxu0
    %2887 = vdwg.mxu0
    %v2889 = vsel %vm1056, %v2818, 0
    %v2892 = vsel %vm1316, %v2826, 0
    %2894 = vmatpush.bf16.msra.mxu0 0
    %2895 = vmatpush.bf16.msra.mxu0 0
    %2896 = vmatpush.bf16.msra.mxu0 0
    %2897 = vmatpush.bf16.msra.mxu0 0
    %2898 = vmatpush.bf16.msra.mxu0 0
    %2899 = vmatpush.bf16.msra.mxu0 0
    %2900 = vmatpush.bf16.msra.mxu0 0
    %2901 = vmatpush.bf16.msra.mxu0 %v2892
    %2902 = vmatmul.bf16.gmra.mxu0 %v2889
    %v2903 = vpop.f32.mrf.mxu0
    %v2904 = vadd.f32 0.0, %v2903
    %v2905 = vpop.f32.mrf.mxu0
    %2906 = vdwg.mxu0
    %v2908 = vsel %vm1056, %v2819, 0
    %v2911 = vsel %vm1316, %v2827, 0
    %2913 = vmatpush.bf16.msra.mxu0 0
    %2914 = vmatpush.bf16.msra.mxu0 0
    %2915 = vmatpush.bf16.msra.mxu0 0
    %2916 = vmatpush.bf16.msra.mxu0 0
    %2917 = vmatpush.bf16.msra.mxu0 0
    %2918 = vmatpush.bf16.msra.mxu0 0
    %2919 = vmatpush.bf16.msra.mxu0 0
    %2920 = vmatpush.bf16.msra.mxu0 %v2911
    %2921 = vmatmul.bf16.gmra.mxu0 %v2908
    %v2922 = vpop.f32.mrf.mxu0
    %v2923 = vadd.f32 0.0, %v2922
    %v2924 = vpop.f32.mrf.mxu0
    %2925 = vdwg.mxu0
    %v2927 = vsel %vm1056, %v2820, 0
    %v2930 = vsel %vm1316, %v2828, 0
    %2932 = vmatpush.bf16.msra.mxu0 0
    %2933 = vmatpush.bf16.msra.mxu0 0
    %2934 = vmatpush.bf16.msra.mxu0 0
    %2935 = vmatpush.bf16.msra.mxu0 0
    %2936 = vmatpush.bf16.msra.mxu0 0
    %2937 = vmatpush.bf16.msra.mxu0 0
    %2938 = vmatpush.bf16.msra.mxu0 0
    %2939 = vmatpush.bf16.msra.mxu0 %v2930
    %2940 = vmatmul.bf16.gmra.mxu0 %v2927
    %v2941 = vpop.f32.mrf.mxu0
    %v2942 = vadd.f32 0.0, %v2941
    %v2943 = vpop.f32.mrf.mxu0
    %2944 = vdwg.mxu0
    %v2946 = vsel %vm1056, %v2821, 0
    %v2949 = vsel %vm1316, %v2829, 0
    %2951 = vmatpush.bf16.msra.mxu0 0
    %2952 = vmatpush.bf16.msra.mxu0 0
    %2953 = vmatpush.bf16.msra.mxu0 0
    %2954 = vmatpush.bf16.msra.mxu0 0
    %2955 = vmatpush.bf16.msra.mxu0 0
    %2956 = vmatpush.bf16.msra.mxu0 0
    %2957 = vmatpush.bf16.msra.mxu0 0
    %2958 = vmatpush.bf16.msra.mxu0 %v2949
    %2959 = vmatmul.bf16.gmra.mxu0 %v2946
    %v2960 = vpop.f32.mrf.mxu0
    %v2961 = vadd.f32 0.0, %v2960
    %v2962 = vpop.f32.mrf.mxu0
    %2963 = vdwg.mxu0
    %v2965 = vsel %vm1056, %v2822, 0
    %v2968 = vsel %vm1316, %v2830, 0
    %2970 = vmatpush.bf16.msra.mxu0 0
    %2971 = vmatpush.bf16.msra.mxu0 0
    %2972 = vmatpush.bf16.msra.mxu0 0
    %2973 = vmatpush.bf16.msra.mxu0 0
    %2974 = vmatpush.bf16.msra.mxu0 0
    %2975 = vmatpush.bf16.msra.mxu0 0
    %2976 = vmatpush.bf16.msra.mxu0 0
    %2977 = vmatpush.bf16.msra.mxu0 %v2968
    %2978 = vmatmul.bf16.gmra.mxu0 %v2965
    %v2979 = vpop.f32.mrf.mxu0
    %v2980 = vadd.f32 0.0, %v2979
    %v2981 = vpop.f32.mrf.mxu0
    %2982 = vdwg.mxu0
    %v2983 = vsel %vm266, %v2847, 0.0
    %v2984 = vsel %vm266, %v2866, 0.0
    %v2985 = vadd.f32 %v2983, %v2984
    %v2986 = vsel %vm266, %v2885, 0.0
    %v2987 = vadd.f32 %v2985, %v2986
    %v2988 = vsel %vm266, %v2904, 0.0
    %v2989 = vadd.f32 %v2987, %v2988
    %v2990 = vsel %vm266, %v2923, 0.0
    %v2991 = vadd.f32 %v2989, %v2990
    %v2992 = vsel %vm266, %v2942, 0.0
    %v2993 = vadd.f32 %v2991, %v2992
    %v2994 = vsel %vm266, %v2961, 0.0
    %v2995 = vadd.f32 %v2993, %v2994
    %v2996 = vsel %vm266, %v2980, 0.0
    %v2997 = vadd.f32 %v2995, %v2996
    %v2998 = vld [vmem:[%s7] sm:$0x1]
    %v3000 = vperm.slane %v2998, 0
    %v3002 = vadd.f32 %v1648, %v3000
    %v3003 = vadd.f32 %v2997, %v3000
    %v3004 = vsel %vm266, %v3002, 0.0
    %3005 = vadd.xlane.f32.xlu0 %v3004
    %v3006 = vpop.xlane.xlu0 %3005
    %v3007 = vsel %vm266, %v3003, 0.0
    %3008 = vadd.xlane.f32.xlu0 %v3007
    %v3009 = vpop.xlane.xlu0 %3008
    %v3010 = vrcp.pop 64.0
    %v3011 = vmul.f32 64.0, %v3010
    %v3012 = vsub.f32 1.0, %v3011
    %v3013 = vmul.f32 %v3010, %v3012
    %v3014 = vadd.f32 %v3010, %v3013
    %vm3015 = vweird.f32 %v3010
    %v3016 = vsel %vm3015, %v3010, %v3014
    %v3017 = vmul.f32 %v3006, %v3016
    %v3018 = vmul.f32 %v3009, %v3016
    %v3019 = vmul.f32 %v3002, %v3002
    %v3020 = vmul.f32 %v3003, %v3003
    %v3021 = vsel %vm266, %v3019, 0.0
    %3022 = vadd.xlane.f32.xlu0 %v3021
    %v3023 = vpop.xlane.xlu0 %3022
    %v3024 = vsel %vm266, %v3020, 0.0
    %3025 = vadd.xlane.f32.xlu0 %v3024
    %v3026 = vpop.xlane.xlu0 %3025
    %v3027 = vmul.f32 %v3023, %v3016
    %v3028 = vmul.f32 %v3026, %v3016
    %v3029 = vmul.f32 %v3017, %v3017
    %v3030 = vmul.f32 %v3018, %v3018
    %v3031 = vsub.f32 %v3027, %v3029
    %v3032 = vsub.f32 %v3028, %v3030
    %v3033 = vsub.f32 %v3002, %v3017
    %v3034 = vsub.f32 %v3003, %v3018
    %v3035 = vadd.f32 %v3031, 1e-05
    %v3036 = vadd.f32 %v3032, 1e-05
    %v3037 = vrsqrt.pop %v3035
    %v3038 = vmul.f32 %v3037, %v3035
    %v3039 = vmul.f32 %v3038, %v3037
    %v3040 = vmul.f32 0.5, %v3039
    %v3041 = vsub.f32 1.5, %v3040
    %v3042 = vmul.f32 %v3037, %v3041
    %vm3043 = vweird.f32 %v3035
    %vm3044 = vweird.f32 %v3037
    %vm3045 = vmor %vm3043, %vm3044
    %v3046 = vsel %vm3045, %v3037, %v3042
    %v3047 = vrsqrt.pop %v3036
    %v3048 = vmul.f32 %v3047, %v3036
    %v3049 = vmul.f32 %v3048, %v3047
    %v3050 = vmul.f32 0.5, %v3049
    %v3051 = vsub.f32 1.5, %v3050
    %v3052 = vmul.f32 %v3047, %v3051
    %vm3053 = vweird.f32 %v3036
    %vm3054 = vweird.f32 %v3047
    %vm3055 = vmor %vm3053, %vm3054
    %v3056 = vsel %vm3055, %v3047, %v3052
    %v3057 = vmul.f32 %v3033, %v3046
    %v3058 = vmul.f32 %v3034, %v3056
    %v3059 = vld [vmem:[%s8] sm:$0x1]
    %v3061 = vperm.slane %v3059, 0
    %v3063 = vmul.f32 %v3057, %v3061
    %v3064 = vmul.f32 %v3058, %v3061
    %v3065 = vld [vmem:[%s9] sm:$0x1]
    %v3067 = vperm.slane %v3065, 0
    %v3069 = vadd.f32 %v3063, %v3067
    %v3070 = vadd.f32 %v3064, %v3067
    %v3071 = vadd.f32 %v205, %v3069
    %v3072 = vadd.f32 %v206, %v3070
    %v3073 = vpack.c.bf16 %v3072, %v3071
    %v3074 = vld [vmem:[#allocation10] sm:$0xf]
    %v3075 = vld [vmem:[#allocation10 + $0x4] sm:$0xf]
    %v3076 = vld [vmem:[#allocation10 + $0x8] sm:$0xf]
    %v3077 = vld [vmem:[#allocation10 + $0xc] sm:$0xf]
    %v3078 = vld [vmem:[#allocation10 + $0x10] sm:$0xf]
    %v3079 = vld [vmem:[#allocation10 + $0x14] sm:$0xf]
    %v3080 = vld [vmem:[#allocation10 + $0x18] sm:$0xf]
    %v3081 = vld [vmem:[#allocation10 + $0x1c] sm:$0xf]
    %v3082 = vld [vmem:[%s11] sm:$0x1]
    %v3084 = vperm.slane %v3082, 0
    %v3094 = vunpack.c.l.b16 %v3074
    %v3095 = vunpack.c.l.b16 %v3075
    %v3096 = vunpack.c.l.b16 %v3076
    %v3097 = vunpack.c.l.b16 %v3077
    %v3098 = vunpack.c.l.b16 %v3078
    %v3099 = vunpack.c.l.b16 %v3079
    %v3100 = vunpack.c.l.b16 %v3080
    %v3101 = vunpack.c.l.b16 %v3081
    %v3102 = vpack.c.b16 %v3095, %v3094
    %v3103 = vpack.c.b16 %v3097, %v3096
    %v3104 = vpack.c.b16 %v3099, %v3098
    %v3105 = vpack.c.b16 %v3101, %v3100
    %v3111 = vsel %vm266, %v3073, 0
    %3113 = vmatpush.bf16.msra.mxu0 0
    %3114 = vmatpush.bf16.msra.mxu0 0
    %3115 = vmatpush.bf16.msra.mxu0 0
    %3116 = vmatpush.bf16.msra.mxu0 0
    %3117 = vmatpush.bf16.msra.mxu0 %v3105
    %3118 = vmatpush.bf16.msra.mxu0 %v3104
    %3119 = vmatpush.bf16.msra.mxu0 %v3103
    %3120 = vmatpush.bf16.msra.mxu0 %v3102
    %3121 = vmatmul.bf16.gmra.mxu0 %v3111
    %v3122 = vpop.f32.mrf.mxu0
    %v3123 = vadd.f32 %v3084, %v3122
    %v3124 = vpop.f32.mrf.mxu0
    %v3125 = vadd.f32 %v3084, %v3124
    %3126 = vdwg.mxu0
    %v3127 = vpack.c.bf16 %v208, %v207
    %v3128 = vpack.c.bf16 %v210, %v209
    %v3129 = vld [vmem:[#allocation11] sm:$0xf]
    %v3130 = vld [vmem:[#allocation11 + $0x4] sm:$0xf]
    %v3131 = vld [vmem:[#allocation11 + $0x8] sm:$0xf]
    %v3132 = vld [vmem:[#allocation11 + $0xc] sm:$0xf]
    %v3133 = vld [vmem:[#allocation11 + $0x10] sm:$0xf]
    %v3134 = vld [vmem:[#allocation11 + $0x14] sm:$0xf]
    %v3135 = vld [vmem:[#allocation11 + $0x18] sm:$0xf]
    %v3136 = vld [vmem:[#allocation11 + $0x1c] sm:$0xf]
    %v3137 = vld [vmem:[%s13] sm:$0x1]
    %v3139 = vperm.slane %v3137, 0
    %v3149 = vunpack.c.l.b16 %v3129
    %v3150 = vunpack.c.l.b16 %v3130
    %v3151 = vunpack.c.l.b16 %v3131
    %v3152 = vunpack.c.l.b16 %v3132
    %v3153 = vunpack.c.l.b16 %v3133
    %v3154 = vunpack.c.l.b16 %v3134
    %v3155 = vunpack.c.l.b16 %v3135
    %v3156 = vunpack.c.l.b16 %v3136
    %v3157 = vpack.c.b16 %v3150, %v3149
    %v3158 = vpack.c.b16 %v3152, %v3151
    %v3159 = vpack.c.b16 %v3154, %v3153
    %v3160 = vpack.c.b16 %v3156, %v3155
    %v3166 = vsel %vm266, %v3127, 0
    %v3169 = vsel %vm266, %v3128, 0
    %3171 = vmatpush.bf16.msra.mxu0 0
    %3172 = vmatpush.bf16.msra.mxu0 0
    %3173 = vmatpush.bf16.msra.mxu0 0
    %3174 = vmatpush.bf16.msra.mxu0 0
    %3175 = vmatpush.bf16.msra.mxu0 %v3160
    %3176 = vmatpush.bf16.msra.mxu0 %v3159
    %3177 = vmatpush.bf16.msra.mxu0 %v3158
    %3178 = vmatpush.bf16.msra.mxu0 %v3157
    %3179 = vmatmul.bf16.gmra.mxu0 %v3166
    %v3180 = vpop.f32.mrf.mxu0
    %v3181 = vadd.f32 %v3139, %v3180
    %v3182 = vpop.f32.mrf.mxu0
    %v3183 = vadd.f32 %v3139, %v3182
    %3184 = vmatmul.bf16.gmra.mxu0 %v3169
    %v3185 = vpop.f32.mrf.mxu0
    %v3186 = vadd.f32 %v3139, %v3185
    %v3187 = vpop.f32.mrf.mxu0
    %v3188 = vadd.f32 %v3139, %v3187
    %3189 = vdwg.mxu0
    %3191 = vrot.lane.b32.xlu0 %v3123, 120
    %v3192 = vpop.permute.xlu0 %3191
    %3194 = vrot.lane.b32.xlu0 %v3123, 112
    %v3195 = vpop.permute.xlu0 %3194
    %3197 = vrot.lane.b32.xlu0 %v3123, 104
    %v3198 = vpop.permute.xlu0 %3197
    %3200 = vrot.lane.b32.xlu0 %v3123, 96
    %v3201 = vpop.permute.xlu0 %3200
    %3203 = vrot.lane.b32.xlu0 %v3123, 88
    %v3204 = vpop.permute.xlu0 %3203
    %3206 = vrot.lane.b32.xlu0 %v3123, 80
    %v3207 = vpop.permute.xlu0 %3206
    %3209 = vrot.lane.b32.xlu0 %v3123, 72
    %v3210 = vpop.permute.xlu0 %3209
    %v3212 = vrot.slane %v3195, 4
    %v3213 = vsel %vm321, %v3212, %v3123
    %v3214 = vrot.slane %v3123, 4
    %v3215 = vsel %vm321, %v3195, %v3214
    %v3217 = vunpack.c.l.s4 1983009808
    %v3218 = vunpack.c.0.s8 %v3217
    %v3219 = vperm.slane %v3213, %v3218
    %v3221 = vunpack.c.l.s4 1983009808
    %v3222 = vunpack.c.0.s8 %v3221
    %v3223 = vperm.slane %v3215, %v3222
    %v3224 = vrot.slane %v3198, 4
    %v3225 = vsel %vm321, %v3224, %v3192
    %v3226 = vrot.slane %v3192, 4
    %v3227 = vsel %vm321, %v3198, %v3226
    %v3229 = vunpack.c.l.s4 1983009808
    %v3230 = vunpack.c.0.s8 %v3229
    %v3231 = vperm.slane %v3225, %v3230
    %v3233 = vunpack.c.l.s4 1983009808
    %v3234 = vunpack.c.0.s8 %v3233
    %v3235 = vperm.slane %v3227, %v3234
    %v3236 = vrot.slane %v3207, 4
    %v3237 = vsel %vm321, %v3236, %v3201
    %v3238 = vrot.slane %v3201, 4
    %v3239 = vsel %vm321, %v3207, %v3238
    %v3241 = vunpack.c.l.s4 1983009808
    %v3242 = vunpack.c.0.s8 %v3241
    %v3243 = vperm.slane %v3237, %v3242
    %v3245 = vunpack.c.l.s4 1983009808
    %v3246 = vunpack.c.0.s8 %v3245
    %v3247 = vperm.slane %v3239, %v3246
    %v3248 = vrot.slane %v3210, 4
    %v3249 = vsel %vm321, %v3248, %v3204
    %v3250 = vrot.slane %v3204, 4
    %v3251 = vsel %vm321, %v3210, %v3250
    %v3253 = vunpack.c.l.s4 1983009808
    %v3254 = vunpack.c.0.s8 %v3253
    %v3255 = vperm.slane %v3249, %v3254
    %v3257 = vunpack.c.l.s4 1983009808
    %v3258 = vunpack.c.0.s8 %v3257
    %v3259 = vperm.slane %v3251, %v3258
    %v3260 = vrot.slane %v3231, 4
    %v3261 = vsel %vm321, %v3260, %v3219
    %v3262 = vrot.slane %v3219, 4
    %v3263 = vsel %vm321, %v3231, %v3262
    %v3265 = vunpack.c.l.s4 1934713408
    %v3266 = vunpack.c.0.s8 %v3265
    %v3267 = vperm.slane %v3261, %v3266
    %v3269 = vunpack.c.l.s4 1934713408
    %v3270 = vunpack.c.0.s8 %v3269
    %v3271 = vperm.slane %v3263, %v3270
    %v3272 = vrot.slane %v3235, 4
    %v3273 = vsel %vm321, %v3272, %v3223
    %v3274 = vrot.slane %v3223, 4
    %v3275 = vsel %vm321, %v3235, %v3274
    %v3277 = vunpack.c.l.s4 1934713408
    %v3278 = vunpack.c.0.s8 %v3277
    %v3279 = vperm.slane %v3273, %v3278
    %v3281 = vunpack.c.l.s4 1934713408
    %v3282 = vunpack.c.0.s8 %v3281
    %v3283 = vperm.slane %v3275, %v3282
    %v3284 = vrot.slane %v3255, 4
    %v3285 = vsel %vm321, %v3284, %v3243
    %v3286 = vrot.slane %v3243, 4
    %v3287 = vsel %vm321, %v3255, %v3286
    %v3289 = vunpack.c.l.s4 1934713408
    %v3290 = vunpack.c.0.s8 %v3289
    %v3291 = vperm.slane %v3285, %v3290
    %v3293 = vunpack.c.l.s4 1934713408
    %v3294 = vunpack.c.0.s8 %v3293
    %v3295 = vperm.slane %v3287, %v3294
    %v3296 = vrot.slane %v3259, 4
    %v3297 = vsel %vm321, %v3296, %v3247
    %v3298 = vrot.slane %v3247, 4
    %v3299 = vsel %vm321, %v3259, %v3298
    %v3301 = vunpack.c.l.s4 1934713408
    %v3302 = vunpack.c.0.s8 %v3301
    %v3303 = vperm.slane %v3297, %v3302
    %v3305 = vunpack.c.l.s4 1934713408
    %v3306 = vunpack.c.0.s8 %v3305
    %v3307 = vperm.slane %v3299, %v3306
    %v3308 = vrot.slane %v3291, 4
    %v3309 = vsel %vm321, %v3308, %v3267
    %v3310 = vrot.slane %v3267, 4
    %v3311 = vsel %vm321, %v3291, %v3310
    %v3312 = vrot.slane %v3295, 4
    %v3313 = vsel %vm321, %v3312, %v3271
    %v3314 = vrot.slane %v3271, 4
    %v3315 = vsel %vm321, %v3295, %v3314
    %v3316 = vrot.slane %v3303, 4
    %v3317 = vsel %vm321, %v3316, %v3279
    %v3318 = vrot.slane %v3279, 4
    %v3319 = vsel %vm321, %v3303, %v3318
    %v3320 = vrot.slane %v3307, 4
    %v3321 = vsel %vm321, %v3320, %v3283
    %v3322 = vrot.slane %v3283, 4
    %v3323 = vsel %vm321, %v3307, %v3322
    %v3324 = vrot.slane %v3313, 4
    %v3325 = vsel %vm321, %v3324, %v3309
    %v3326 = vrot.slane %v3309, 4
    %v3327 = vsel %vm321, %v3313, %v3326
    %v3329 = vunpack.c.l.s4 1983009808
    %v3330 = vunpack.c.0.s8 %v3329
    %v3331 = vperm.slane %v3325, %v3330
    %v3333 = vunpack.c.l.s4 1983009808
    %v3334 = vunpack.c.0.s8 %v3333
    %v3335 = vperm.slane %v3327, %v3334
    %v3336 = vrot.slane %v3315, 4
    %v3337 = vsel %vm321, %v3336, %v3311
    %v3338 = vrot.slane %v3311, 4
    %v3339 = vsel %vm321, %v3315, %v3338
    %v3341 = vunpack.c.l.s4 1983009808
    %v3342 = vunpack.c.0.s8 %v3341
    %v3343 = vperm.slane %v3337, %v3342
    %v3345 = vunpack.c.l.s4 1983009808
    %v3346 = vunpack.c.0.s8 %v3345
    %v3347 = vperm.slane %v3339, %v3346
    %v3348 = vrot.slane %v3321, 4
    %v3349 = vsel %vm321, %v3348, %v3317
    %v3350 = vrot.slane %v3317, 4
    %v3351 = vsel %vm321, %v3321, %v3350
    %v3353 = vunpack.c.l.s4 1983009808
    %v3354 = vunpack.c.0.s8 %v3353
    %v3355 = vperm.slane %v3349, %v3354
    %v3357 = vunpack.c.l.s4 1983009808
    %v3358 = vunpack.c.0.s8 %v3357
    %v3359 = vperm.slane %v3351, %v3358
    %v3360 = vrot.slane %v3323, 4
    %v3361 = vsel %vm321, %v3360, %v3319
    %v3362 = vrot.slane %v3319, 4
    %v3363 = vsel %vm321, %v3323, %v3362
    %v3365 = vunpack.c.l.s4 1983009808
    %v3366 = vunpack.c.0.s8 %v3365
    %v3367 = vperm.slane %v3361, %v3366
    %v3369 = vunpack.c.l.s4 1983009808
    %v3370 = vunpack.c.0.s8 %v3369
    %v3371 = vperm.slane %v3363, %v3370
    %v3372 = vrot.slane %v3343, 4
    %v3373 = vsel %vm321, %v3372, %v3331
    %v3374 = vrot.slane %v3331, 4
    %v3375 = vsel %vm321, %v3343, %v3374
    %v3377 = vunpack.c.l.s4 1934713408
    %v3378 = vunpack.c.0.s8 %v3377
    %v3379 = vperm.slane %v3373, %v3378
    %v3381 = vunpack.c.l.s4 1934713408
    %v3382 = vunpack.c.0.s8 %v3381
    %v3383 = vperm.slane %v3375, %v3382
    %v3384 = vrot.slane %v3347, 4
    %v3385 = vsel %vm321, %v3384, %v3335
    %v3386 = vrot.slane %v3335, 4
    %v3387 = vsel %vm321, %v3347, %v3386
    %v3389 = vunpack.c.l.s4 1934713408
    %v3390 = vunpack.c.0.s8 %v3389
    %v3391 = vperm.slane %v3385, %v3390
    %v3393 = vunpack.c.l.s4 1934713408
    %v3394 = vunpack.c.0.s8 %v3393
    %v3395 = vperm.slane %v3387, %v3394
    %v3396 = vrot.slane %v3367, 4
    %v3397 = vsel %vm321, %v3396, %v3355
    %v3398 = vrot.slane %v3355, 4
    %v3399 = vsel %vm321, %v3367, %v3398
    %v3401 = vunpack.c.l.s4 1934713408
    %v3402 = vunpack.c.0.s8 %v3401
    %v3403 = vperm.slane %v3397, %v3402
    %v3405 = vunpack.c.l.s4 1934713408
    %v3406 = vunpack.c.0.s8 %v3405
    %v3407 = vperm.slane %v3399, %v3406
    %v3408 = vrot.slane %v3371, 4
    %v3409 = vsel %vm321, %v3408, %v3359
    %v3410 = vrot.slane %v3359, 4
    %v3411 = vsel %vm321, %v3371, %v3410
    %v3413 = vunpack.c.l.s4 1934713408
    %v3414 = vunpack.c.0.s8 %v3413
    %v3415 = vperm.slane %v3409, %v3414
    %v3417 = vunpack.c.l.s4 1934713408
    %v3418 = vunpack.c.0.s8 %v3417
    %v3419 = vperm.slane %v3411, %v3418
    %v3420 = vrot.slane %v3403, 4
    %v3421 = vsel %vm321, %v3420, %v3379
    %v3422 = vrot.slane %v3379, 4
    %v3423 = vsel %vm321, %v3403, %v3422
    %v3424 = vrot.slane %v3407, 4
    %v3425 = vsel %vm321, %v3424, %v3383
    %v3426 = vrot.slane %v3383, 4
    %v3427 = vsel %vm321, %v3407, %v3426
    %v3428 = vrot.slane %v3415, 4
    %v3429 = vsel %vm321, %v3428, %v3391
    %v3430 = vrot.slane %v3391, 4
    %v3431 = vsel %vm321, %v3415, %v3430
    %v3432 = vrot.slane %v3419, 4
    %v3433 = vsel %vm321, %v3432, %v3395
    %v3434 = vrot.slane %v3395, 4
    %v3435 = vsel %vm321, %v3419, %v3434
    %3438 = vrot.lane.b32.xlu0 %v3181, 120
    %v3439 = vpop.permute.xlu0 %3438
    %3440 = vrot.lane.b32.xlu0 %v3183, 120
    %v3441 = vpop.permute.xlu0 %3440
    %3444 = vrot.lane.b32.xlu0 %v3181, 112
    %v3445 = vpop.permute.xlu0 %3444
    %3446 = vrot.lane.b32.xlu0 %v3183, 112
    %v3447 = vpop.permute.xlu0 %3446
    %3450 = vrot.lane.b32.xlu0 %v3181, 104
    %v3451 = vpop.permute.xlu0 %3450
    %3452 = vrot.lane.b32.xlu0 %v3183, 104
    %v3453 = vpop.permute.xlu0 %3452
    %3456 = vrot.lane.b32.xlu0 %v3181, 96
    %v3457 = vpop.permute.xlu0 %3456
    %3458 = vrot.lane.b32.xlu0 %v3183, 96
    %v3459 = vpop.permute.xlu0 %3458
    %3462 = vrot.lane.b32.xlu0 %v3181, 88
    %v3463 = vpop.permute.xlu0 %3462
    %3464 = vrot.lane.b32.xlu0 %v3183, 88
    %v3465 = vpop.permute.xlu0 %3464
    %3468 = vrot.lane.b32.xlu0 %v3181, 80
    %v3469 = vpop.permute.xlu0 %3468
    %3470 = vrot.lane.b32.xlu0 %v3183, 80
    %v3471 = vpop.permute.xlu0 %3470
    %3474 = vrot.lane.b32.xlu0 %v3181, 72
    %v3475 = vpop.permute.xlu0 %3474
    %3476 = vrot.lane.b32.xlu0 %v3183, 72
    %v3477 = vpop.permute.xlu0 %3476
    %v3480 = vrot.slane %v3445, 4
    %v3481 = vsel %vm321, %v3480, %v3181
    %v3482 = vrot.slane %v3181, 4
    %v3483 = vsel %vm321, %v3445, %v3482
    %v3485 = vunpack.c.l.s4 1983009808
    %v3486 = vunpack.c.0.s8 %v3485
    %v3487 = vperm.slane %v3481, %v3486
    %v3489 = vunpack.c.l.s4 1983009808
    %v3490 = vunpack.c.0.s8 %v3489
    %v3491 = vperm.slane %v3483, %v3490
    %v3492 = vrot.slane %v3451, 4
    %v3493 = vsel %vm321, %v3492, %v3439
    %v3494 = vrot.slane %v3439, 4
    %v3495 = vsel %vm321, %v3451, %v3494
    %v3497 = vunpack.c.l.s4 1983009808
    %v3498 = vunpack.c.0.s8 %v3497
    %v3499 = vperm.slane %v3493, %v3498
    %v3501 = vunpack.c.l.s4 1983009808
    %v3502 = vunpack.c.0.s8 %v3501
    %v3503 = vperm.slane %v3495, %v3502
    %v3504 = vrot.slane %v3469, 4
    %v3505 = vsel %vm321, %v3504, %v3457
    %v3506 = vrot.slane %v3457, 4
    %v3507 = vsel %vm321, %v3469, %v3506
    %v3509 = vunpack.c.l.s4 1983009808
    %v3510 = vunpack.c.0.s8 %v3509
    %v3511 = vperm.slane %v3505, %v3510
    %v3513 = vunpack.c.l.s4 1983009808
    %v3514 = vunpack.c.0.s8 %v3513
    %v3515 = vperm.slane %v3507, %v3514
    %v3516 = vrot.slane %v3475, 4
    %v3517 = vsel %vm321, %v3516, %v3463
    %v3518 = vrot.slane %v3463, 4
    %v3519 = vsel %vm321, %v3475, %v3518
    %v3521 = vunpack.c.l.s4 1983009808
    %v3522 = vunpack.c.0.s8 %v3521
    %v3523 = vperm.slane %v3517, %v3522
    %v3525 = vunpack.c.l.s4 1983009808
    %v3526 = vunpack.c.0.s8 %v3525
    %v3527 = vperm.slane %v3519, %v3526
    %v3528 = vrot.slane %v3499, 4
    %v3529 = vsel %vm321, %v3528, %v3487
    %v3530 = vrot.slane %v3487, 4
    %v3531 = vsel %vm321, %v3499, %v3530
    %v3533 = vunpack.c.l.s4 1934713408
    %v3534 = vunpack.c.0.s8 %v3533
    %v3535 = vperm.slane %v3529, %v3534
    %v3537 = vunpack.c.l.s4 1934713408
    %v3538 = vunpack.c.0.s8 %v3537
    %v3539 = vperm.slane %v3531, %v3538
    %v3540 = vrot.slane %v3503, 4
    %v3541 = vsel %vm321, %v3540, %v3491
    %v3542 = vrot.slane %v3491, 4
    %v3543 = vsel %vm321, %v3503, %v3542
    %v3545 = vunpack.c.l.s4 1934713408
    %v3546 = vunpack.c.0.s8 %v3545
    %v3547 = vperm.slane %v3541, %v3546
    %v3549 = vunpack.c.l.s4 1934713408
    %v3550 = vunpack.c.0.s8 %v3549
    %v3551 = vperm.slane %v3543, %v3550
    %v3552 = vrot.slane %v3523, 4
    %v3553 = vsel %vm321, %v3552, %v3511
    %v3554 = vrot.slane %v3511, 4
    %v3555 = vsel %vm321, %v3523, %v3554
    %v3557 = vunpack.c.l.s4 1934713408
    %v3558 = vunpack.c.0.s8 %v3557
    %v3559 = vperm.slane %v3553, %v3558
    %v3561 = vunpack.c.l.s4 1934713408
    %v3562 = vunpack.c.0.s8 %v3561
    %v3563 = vperm.slane %v3555, %v3562
    %v3564 = vrot.slane %v3527, 4
    %v3565 = vsel %vm321, %v3564, %v3515
    %v3566 = vrot.slane %v3515, 4
    %v3567 = vsel %vm321, %v3527, %v3566
    %v3569 = vunpack.c.l.s4 1934713408
    %v3570 = vunpack.c.0.s8 %v3569
    %v3571 = vperm.slane %v3565, %v3570
    %v3573 = vunpack.c.l.s4 1934713408
    %v3574 = vunpack.c.0.s8 %v3573
    %v3575 = vperm.slane %v3567, %v3574
    %v3576 = vrot.slane %v3559, 4
    %v3577 = vsel %vm321, %v3576, %v3535
    %v3578 = vrot.slane %v3535, 4
    %v3579 = vsel %vm321, %v3559, %v3578
    %v3580 = vrot.slane %v3563, 4
    %v3581 = vsel %vm321, %v3580, %v3539
    %v3582 = vrot.slane %v3539, 4
    %v3583 = vsel %vm321, %v3563, %v3582
    %v3584 = vrot.slane %v3571, 4
    %v3585 = vsel %vm321, %v3584, %v3547
    %v3586 = vrot.slane %v3547, 4
    %v3587 = vsel %vm321, %v3571, %v3586
    %v3588 = vrot.slane %v3575, 4
    %v3589 = vsel %vm321, %v3588, %v3551
    %v3590 = vrot.slane %v3551, 4
    %v3591 = vsel %vm321, %v3575, %v3590
    %v3592 = vrot.slane %v3447, 4
    %v3593 = vsel %vm321, %v3592, %v3183
    %v3594 = vrot.slane %v3183, 4
    %v3595 = vsel %vm321, %v3447, %v3594
    %v3597 = vunpack.c.l.s4 1983009808
    %v3598 = vunpack.c.0.s8 %v3597
    %v3599 = vperm.slane %v3593, %v3598
    %v3601 = vunpack.c.l.s4 1983009808
    %v3602 = vunpack.c.0.s8 %v3601
    %v3603 = vperm.slane %v3595, %v3602
    %v3604 = vrot.slane %v3453, 4
    %v3605 = vsel %vm321, %v3604, %v3441
    %v3606 = vrot.slane %v3441, 4
    %v3607 = vsel %vm321, %v3453, %v3606
    %v3609 = vunpack.c.l.s4 1983009808
    %v3610 = vunpack.c.0.s8 %v3609
    %v3611 = vperm.slane %v3605, %v3610
    %v3613 = vunpack.c.l.s4 1983009808
    %v3614 = vunpack.c.0.s8 %v3613
    %v3615 = vperm.slane %v3607, %v3614
    %v3616 = vrot.slane %v3471, 4
    %v3617 = vsel %vm321, %v3616, %v3459
    %v3618 = vrot.slane %v3459, 4
    %v3619 = vsel %vm321, %v3471, %v3618
    %v3621 = vunpack.c.l.s4 1983009808
    %v3622 = vunpack.c.0.s8 %v3621
    %v3623 = vperm.slane %v3617, %v3622
    %v3625 = vunpack.c.l.s4 1983009808
    %v3626 = vunpack.c.0.s8 %v3625
    %v3627 = vperm.slane %v3619, %v3626
    %v3628 = vrot.slane %v3477, 4
    %v3629 = vsel %vm321, %v3628, %v3465
    %v3630 = vrot.slane %v3465, 4
    %v3631 = vsel %vm321, %v3477, %v3630
    %v3633 = vunpack.c.l.s4 1983009808
    %v3634 = vunpack.c.0.s8 %v3633
    %v3635 = vperm.slane %v3629, %v3634
    %v3637 = vunpack.c.l.s4 1983009808
    %v3638 = vunpack.c.0.s8 %v3637
    %v3639 = vperm.slane %v3631, %v3638
    %v3640 = vrot.slane %v3611, 4
    %v3641 = vsel %vm321, %v3640, %v3599
    %v3642 = vrot.slane %v3599, 4
    %v3643 = vsel %vm321, %v3611, %v3642
    %v3645 = vunpack.c.l.s4 1934713408
    %v3646 = vunpack.c.0.s8 %v3645
    %v3647 = vperm.slane %v3641, %v3646
    %v3649 = vunpack.c.l.s4 1934713408
    %v3650 = vunpack.c.0.s8 %v3649
    %v3651 = vperm.slane %v3643, %v3650
    %v3652 = vrot.slane %v3615, 4
    %v3653 = vsel %vm321, %v3652, %v3603
    %v3654 = vrot.slane %v3603, 4
    %v3655 = vsel %vm321, %v3615, %v3654
    %v3657 = vunpack.c.l.s4 1934713408
    %v3658 = vunpack.c.0.s8 %v3657
    %v3659 = vperm.slane %v3653, %v3658
    %v3661 = vunpack.c.l.s4 1934713408
    %v3662 = vunpack.c.0.s8 %v3661
    %v3663 = vperm.slane %v3655, %v3662
    %v3664 = vrot.slane %v3635, 4
    %v3665 = vsel %vm321, %v3664, %v3623
    %v3666 = vrot.slane %v3623, 4
    %v3667 = vsel %vm321, %v3635, %v3666
    %v3669 = vunpack.c.l.s4 1934713408
    %v3670 = vunpack.c.0.s8 %v3669
    %v3671 = vperm.slane %v3665, %v3670
    %v3673 = vunpack.c.l.s4 1934713408
    %v3674 = vunpack.c.0.s8 %v3673
    %v3675 = vperm.slane %v3667, %v3674
    %v3676 = vrot.slane %v3639, 4
    %v3677 = vsel %vm321, %v3676, %v3627
    %v3678 = vrot.slane %v3627, 4
    %v3679 = vsel %vm321, %v3639, %v3678
    %v3681 = vunpack.c.l.s4 1934713408
    %v3682 = vunpack.c.0.s8 %v3681
    %v3683 = vperm.slane %v3677, %v3682
    %v3685 = vunpack.c.l.s4 1934713408
    %v3686 = vunpack.c.0.s8 %v3685
    %v3687 = vperm.slane %v3679, %v3686
    %v3688 = vrot.slane %v3671, 4
    %v3689 = vsel %vm321, %v3688, %v3647
    %v3690 = vrot.slane %v3647, 4
    %v3691 = vsel %vm321, %v3671, %v3690
    %v3692 = vrot.slane %v3675, 4
    %v3693 = vsel %vm321, %v3692, %v3651
    %v3694 = vrot.slane %v3651, 4
    %v3695 = vsel %vm321, %v3675, %v3694
    %v3696 = vrot.slane %v3683, 4
    %v3697 = vsel %vm321, %v3696, %v3659
    %v3698 = vrot.slane %v3659, 4
    %v3699 = vsel %vm321, %v3683, %v3698
    %v3700 = vrot.slane %v3687, 4
    %v3701 = vsel %vm321, %v3700, %v3663
    %v3702 = vrot.slane %v3663, 4
    %v3703 = vsel %vm321, %v3687, %v3702
    %v3704 = vrot.slane %v3581, 4
    %v3705 = vsel %vm321, %v3704, %v3577
    %v3706 = vrot.slane %v3577, 4
    %v3707 = vsel %vm321, %v3581, %v3706
    %v3709 = vunpack.c.l.s4 1983009808
    %v3710 = vunpack.c.0.s8 %v3709
    %v3711 = vperm.slane %v3705, %v3710
    %v3713 = vunpack.c.l.s4 1983009808
    %v3714 = vunpack.c.0.s8 %v3713
    %v3715 = vperm.slane %v3707, %v3714
    %v3716 = vrot.slane %v3583, 4
    %v3717 = vsel %vm321, %v3716, %v3579
    %v3718 = vrot.slane %v3579, 4
    %v3719 = vsel %vm321, %v3583, %v3718
    %v3721 = vunpack.c.l.s4 1983009808
    %v3722 = vunpack.c.0.s8 %v3721
    %v3723 = vperm.slane %v3717, %v3722
    %v3725 = vunpack.c.l.s4 1983009808
    %v3726 = vunpack.c.0.s8 %v3725
    %v3727 = vperm.slane %v3719, %v3726
    %v3728 = vrot.slane %v3589, 4
    %v3729 = vsel %vm321, %v3728, %v3585
    %v3730 = vrot.slane %v3585, 4
    %v3731 = vsel %vm321, %v3589, %v3730
    %v3733 = vunpack.c.l.s4 1983009808
    %v3734 = vunpack.c.0.s8 %v3733
    %v3735 = vperm.slane %v3729, %v3734
    %v3737 = vunpack.c.l.s4 1983009808
    %v3738 = vunpack.c.0.s8 %v3737
    %v3739 = vperm.slane %v3731, %v3738
    %v3740 = vrot.slane %v3591, 4
    %v3741 = vsel %vm321, %v3740, %v3587
    %v3742 = vrot.slane %v3587, 4
    %v3743 = vsel %vm321, %v3591, %v3742
    %v3745 = vunpack.c.l.s4 1983009808
    %v3746 = vunpack.c.0.s8 %v3745
    %v3747 = vperm.slane %v3741, %v3746
    %v3749 = vunpack.c.l.s4 1983009808
    %v3750 = vunpack.c.0.s8 %v3749
    %v3751 = vperm.slane %v3743, %v3750
    %v3752 = vrot.slane %v3723, 4
    %v3753 = vsel %vm321, %v3752, %v3711
    %v3754 = vrot.slane %v3711, 4
    %v3755 = vsel %vm321, %v3723, %v3754
    %v3757 = vunpack.c.l.s4 1934713408
    %v3758 = vunpack.c.0.s8 %v3757
    %v3759 = vperm.slane %v3753, %v3758
    %v3761 = vunpack.c.l.s4 1934713408
    %v3762 = vunpack.c.0.s8 %v3761
    %v3763 = vperm.slane %v3755, %v3762
    %v3764 = vrot.slane %v3727, 4
    %v3765 = vsel %vm321, %v3764, %v3715
    %v3766 = vrot.slane %v3715, 4
    %v3767 = vsel %vm321, %v3727, %v3766
    %v3769 = vunpack.c.l.s4 1934713408
    %v3770 = vunpack.c.0.s8 %v3769
    %v3771 = vperm.slane %v3765, %v3770
    %v3773 = vunpack.c.l.s4 1934713408
    %v3774 = vunpack.c.0.s8 %v3773
    %v3775 = vperm.slane %v3767, %v3774
    %v3776 = vrot.slane %v3747, 4
    %v3777 = vsel %vm321, %v3776, %v3735
    %v3778 = vrot.slane %v3735, 4
    %v3779 = vsel %vm321, %v3747, %v3778
    %v3781 = vunpack.c.l.s4 1934713408
    %v3782 = vunpack.c.0.s8 %v3781
    %v3783 = vperm.slane %v3777, %v3782
    %v3785 = vunpack.c.l.s4 1934713408
    %v3786 = vunpack.c.0.s8 %v3785
    %v3787 = vperm.slane %v3779, %v3786
    %v3788 = vrot.slane %v3751, 4
    %v3789 = vsel %vm321, %v3788, %v3739
    %v3790 = vrot.slane %v3739, 4
    %v3791 = vsel %vm321, %v3751, %v3790
    %v3793 = vunpack.c.l.s4 1934713408
    %v3794 = vunpack.c.0.s8 %v3793
    %v3795 = vperm.slane %v3789, %v3794
    %v3797 = vunpack.c.l.s4 1934713408
    %v3798 = vunpack.c.0.s8 %v3797
    %v3799 = vperm.slane %v3791, %v3798
    %v3800 = vrot.slane %v3783, 4
    %v3801 = vsel %vm321, %v3800, %v3759
    %v3802 = vrot.slane %v3759, 4
    %v3803 = vsel %vm321, %v3783, %v3802
    %v3804 = vrot.slane %v3787, 4
    %v3805 = vsel %vm321, %v3804, %v3763
    %v3806 = vrot.slane %v3763, 4
    %v3807 = vsel %vm321, %v3787, %v3806
    %v3808 = vrot.slane %v3795, 4
    %v3809 = vsel %vm321, %v3808, %v3771
    %v3810 = vrot.slane %v3771, 4
    %v3811 = vsel %vm321, %v3795, %v3810
    %v3812 = vrot.slane %v3799, 4
    %v3813 = vsel %vm321, %v3812, %v3775
    %v3814 = vrot.slane %v3775, 4
    %v3815 = vsel %vm321, %v3799, %v3814
    %v3816 = vrot.slane %v3693, 4
    %v3817 = vsel %vm321, %v3816, %v3689
    %v3818 = vrot.slane %v3689, 4
    %v3819 = vsel %vm321, %v3693, %v3818
    %v3821 = vunpack.c.l.s4 1983009808
    %v3822 = vunpack.c.0.s8 %v3821
    %v3823 = vperm.slane %v3817, %v3822
    %v3825 = vunpack.c.l.s4 1983009808
    %v3826 = vunpack.c.0.s8 %v3825
    %v3827 = vperm.slane %v3819, %v3826
    %v3828 = vrot.slane %v3695, 4
    %v3829 = vsel %vm321, %v3828, %v3691
    %v3830 = vrot.slane %v3691, 4
    %v3831 = vsel %vm321, %v3695, %v3830
    %v3833 = vunpack.c.l.s4 1983009808
    %v3834 = vunpack.c.0.s8 %v3833
    %v3835 = vperm.slane %v3829, %v3834
    %v3837 = vunpack.c.l.s4 1983009808
    %v3838 = vunpack.c.0.s8 %v3837
    %v3839 = vperm.slane %v3831, %v3838
    %v3840 = vrot.slane %v3701, 4
    %v3841 = vsel %vm321, %v3840, %v3697
    %v3842 = vrot.slane %v3697, 4
    %v3843 = vsel %vm321, %v3701, %v3842
    %v3845 = vunpack.c.l.s4 1983009808
    %v3846 = vunpack.c.0.s8 %v3845
    %v3847 = vperm.slane %v3841, %v3846
    %v3849 = vunpack.c.l.s4 1983009808
    %v3850 = vunpack.c.0.s8 %v3849
    %v3851 = vperm.slane %v3843, %v3850
    %v3852 = vrot.slane %v3703, 4
    %v3853 = vsel %vm321, %v3852, %v3699
    %v3854 = vrot.slane %v3699, 4
    %v3855 = vsel %vm321, %v3703, %v3854
    %v3857 = vunpack.c.l.s4 1983009808
    %v3858 = vunpack.c.0.s8 %v3857
    %v3859 = vperm.slane %v3853, %v3858
    %v3861 = vunpack.c.l.s4 1983009808
    %v3862 = vunpack.c.0.s8 %v3861
    %v3863 = vperm.slane %v3855, %v3862
    %v3864 = vrot.slane %v3835, 4
    %v3865 = vsel %vm321, %v3864, %v3823
    %v3866 = vrot.slane %v3823, 4
    %v3867 = vsel %vm321, %v3835, %v3866
    %v3869 = vunpack.c.l.s4 1934713408
    %v3870 = vunpack.c.0.s8 %v3869
    %v3871 = vperm.slane %v3865, %v3870
    %v3873 = vunpack.c.l.s4 1934713408
    %v3874 = vunpack.c.0.s8 %v3873
    %v3875 = vperm.slane %v3867, %v3874
    %v3876 = vrot.slane %v3839, 4
    %v3877 = vsel %vm321, %v3876, %v3827
    %v3878 = vrot.slane %v3827, 4
    %v3879 = vsel %vm321, %v3839, %v3878
    %v3881 = vunpack.c.l.s4 1934713408
    %v3882 = vunpack.c.0.s8 %v3881
    %v3883 = vperm.slane %v3877, %v3882
    %v3885 = vunpack.c.l.s4 1934713408
    %v3886 = vunpack.c.0.s8 %v3885
    %v3887 = vperm.slane %v3879, %v3886
    %v3888 = vrot.slane %v3859, 4
    %v3889 = vsel %vm321, %v3888, %v3847
    %v3890 = vrot.slane %v3847, 4
    %v3891 = vsel %vm321, %v3859, %v3890
    %v3893 = vunpack.c.l.s4 1934713408
    %v3894 = vunpack.c.0.s8 %v3893
    %v3895 = vperm.slane %v3889, %v3894
    %v3897 = vunpack.c.l.s4 1934713408
    %v3898 = vunpack.c.0.s8 %v3897
    %v3899 = vperm.slane %v3891, %v3898
    %v3900 = vrot.slane %v3863, 4
    %v3901 = vsel %vm321, %v3900, %v3851
    %v3902 = vrot.slane %v3851, 4
    %v3903 = vsel %vm321, %v3863, %v3902
    %v3905 = vunpack.c.l.s4 1934713408
    %v3906 = vunpack.c.0.s8 %v3905
    %v3907 = vperm.slane %v3901, %v3906
    %v3909 = vunpack.c.l.s4 1934713408
    %v3910 = vunpack.c.0.s8 %v3909
    %v3911 = vperm.slane %v3903, %v3910
    %v3912 = vrot.slane %v3895, 4
    %v3913 = vsel %vm321, %v3912, %v3871
    %v3914 = vrot.slane %v3871, 4
    %v3915 = vsel %vm321, %v3895, %v3914
    %v3916 = vrot.slane %v3899, 4
    %v3917 = vsel %vm321, %v3916, %v3875
    %v3918 = vrot.slane %v3875, 4
    %v3919 = vsel %vm321, %v3899, %v3918
    %v3920 = vrot.slane %v3907, 4
    %v3921 = vsel %vm321, %v3920, %v3883
    %v3922 = vrot.slane %v3883, 4
    %v3923 = vsel %vm321, %v3907, %v3922
    %v3924 = vrot.slane %v3911, 4
    %v3925 = vsel %vm321, %v3924, %v3887
    %v3926 = vrot.slane %v3887, 4
    %v3927 = vsel %vm321, %v3911, %v3926
    %3928 = vrot.lane.b32.xlu0 %v3181, 64
    %v3929 = vpop.permute.xlu0 %3928
    %3930 = vrot.lane.b32.xlu0 %v3183, 64
    %v3931 = vpop.permute.xlu0 %3930
    %3932 = vrot.lane.b32.xlu0 %v3439, 64
    %v3933 = vpop.permute.xlu0 %3932
    %3934 = vrot.lane.b32.xlu0 %v3441, 64
    %v3935 = vpop.permute.xlu0 %3934
    %3936 = vrot.lane.b32.xlu0 %v3445, 64
    %v3937 = vpop.permute.xlu0 %3936
    %3938 = vrot.lane.b32.xlu0 %v3447, 64
    %v3939 = vpop.permute.xlu0 %3938
    %3940 = vrot.lane.b32.xlu0 %v3451, 64
    %v3941 = vpop.permute.xlu0 %3940
    %3942 = vrot.lane.b32.xlu0 %v3453, 64
    %v3943 = vpop.permute.xlu0 %3942
    %3944 = vrot.lane.b32.xlu0 %v3457, 64
    %v3945 = vpop.permute.xlu0 %3944
    %3946 = vrot.lane.b32.xlu0 %v3459, 64
    %v3947 = vpop.permute.xlu0 %3946
    %3948 = vrot.lane.b32.xlu0 %v3463, 64
    %v3949 = vpop.permute.xlu0 %3948
    %3950 = vrot.lane.b32.xlu0 %v3465, 64
    %v3951 = vpop.permute.xlu0 %3950
    %3952 = vrot.lane.b32.xlu0 %v3469, 64
    %v3953 = vpop.permute.xlu0 %3952
    %3954 = vrot.lane.b32.xlu0 %v3471, 64
    %v3955 = vpop.permute.xlu0 %3954
    %3956 = vrot.lane.b32.xlu0 %v3475, 64
    %v3957 = vpop.permute.xlu0 %3956
    %3958 = vrot.lane.b32.xlu0 %v3477, 64
    %v3959 = vpop.permute.xlu0 %3958
    %v3976 = vrot.slane %v3937, 4
    %v3977 = vsel %vm321, %v3976, %v3929
    %v3978 = vrot.slane %v3929, 4
    %v3979 = vsel %vm321, %v3937, %v3978
    %v3981 = vunpack.c.l.s4 1983009808
    %v3982 = vunpack.c.0.s8 %v3981
    %v3983 = vperm.slane %v3977, %v3982
    %v3985 = vunpack.c.l.s4 1983009808
    %v3986 = vunpack.c.0.s8 %v3985
    %v3987 = vperm.slane %v3979, %v3986
    %v3988 = vrot.slane %v3941, 4
    %v3989 = vsel %vm321, %v3988, %v3933
    %v3990 = vrot.slane %v3933, 4
    %v3991 = vsel %vm321, %v3941, %v3990
    %v3993 = vunpack.c.l.s4 1983009808
    %v3994 = vunpack.c.0.s8 %v3993
    %v3995 = vperm.slane %v3989, %v3994
    %v3997 = vunpack.c.l.s4 1983009808
    %v3998 = vunpack.c.0.s8 %v3997
    %v3999 = vperm.slane %v3991, %v3998
    %v4000 = vrot.slane %v3953, 4
    %v4001 = vsel %vm321, %v4000, %v3945
    %v4002 = vrot.slane %v3945, 4
    %v4003 = vsel %vm321, %v3953, %v4002
    %v4005 = vunpack.c.l.s4 1983009808
    %v4006 = vunpack.c.0.s8 %v4005
    %v4007 = vperm.slane %v4001, %v4006
    %v4009 = vunpack.c.l.s4 1983009808
    %v4010 = vunpack.c.0.s8 %v4009
    %v4011 = vperm.slane %v4003, %v4010
    %v4012 = vrot.slane %v3957, 4
    %v4013 = vsel %vm321, %v4012, %v3949
    %v4014 = vrot.slane %v3949, 4
    %v4015 = vsel %vm321, %v3957, %v4014
    %v4017 = vunpack.c.l.s4 1983009808
    %v4018 = vunpack.c.0.s8 %v4017
    %v4019 = vperm.slane %v4013, %v4018
    %v4021 = vunpack.c.l.s4 1983009808
    %v4022 = vunpack.c.0.s8 %v4021
    %v4023 = vperm.slane %v4015, %v4022
    %v4024 = vrot.slane %v3995, 4
    %v4025 = vsel %vm321, %v4024, %v3983
    %v4026 = vrot.slane %v3983, 4
    %v4027 = vsel %vm321, %v3995, %v4026
    %v4029 = vunpack.c.l.s4 1934713408
    %v4030 = vunpack.c.0.s8 %v4029
    %v4031 = vperm.slane %v4025, %v4030
    %v4033 = vunpack.c.l.s4 1934713408
    %v4034 = vunpack.c.0.s8 %v4033
    %v4035 = vperm.slane %v4027, %v4034
    %v4036 = vrot.slane %v3999, 4
    %v4037 = vsel %vm321, %v4036, %v3987
    %v4038 = vrot.slane %v3987, 4
    %v4039 = vsel %vm321, %v3999, %v4038
    %v4041 = vunpack.c.l.s4 1934713408
    %v4042 = vunpack.c.0.s8 %v4041
    %v4043 = vperm.slane %v4037, %v4042
    %v4045 = vunpack.c.l.s4 1934713408
    %v4046 = vunpack.c.0.s8 %v4045
    %v4047 = vperm.slane %v4039, %v4046
    %v4048 = vrot.slane %v4019, 4
    %v4049 = vsel %vm321, %v4048, %v4007
    %v4050 = vrot.slane %v4007, 4
    %v4051 = vsel %vm321, %v4019, %v4050
    %v4053 = vunpack.c.l.s4 1934713408
    %v4054 = vunpack.c.0.s8 %v4053
    %v4055 = vperm.slane %v4049, %v4054
    %v4057 = vunpack.c.l.s4 1934713408
    %v4058 = vunpack.c.0.s8 %v4057
    %v4059 = vperm.slane %v4051, %v4058
    %v4060 = vrot.slane %v4023, 4
    %v4061 = vsel %vm321, %v4060, %v4011
    %v4062 = vrot.slane %v4011, 4
    %v4063 = vsel %vm321, %v4023, %v4062
    %v4065 = vunpack.c.l.s4 1934713408
    %v4066 = vunpack.c.0.s8 %v4065
    %v4067 = vperm.slane %v4061, %v4066
    %v4069 = vunpack.c.l.s4 1934713408
    %v4070 = vunpack.c.0.s8 %v4069
    %v4071 = vperm.slane %v4063, %v4070
    %v4072 = vrot.slane %v4055, 4
    %v4073 = vsel %vm321, %v4072, %v4031
    %v4074 = vrot.slane %v4031, 4
    %v4075 = vsel %vm321, %v4055, %v4074
    %v4076 = vrot.slane %v4059, 4
    %v4077 = vsel %vm321, %v4076, %v4035
    %v4078 = vrot.slane %v4035, 4
    %v4079 = vsel %vm321, %v4059, %v4078
    %v4080 = vrot.slane %v4067, 4
    %v4081 = vsel %vm321, %v4080, %v4043
    %v4082 = vrot.slane %v4043, 4
    %v4083 = vsel %vm321, %v4067, %v4082
    %v4084 = vrot.slane %v4071, 4
    %v4085 = vsel %vm321, %v4084, %v4047
    %v4086 = vrot.slane %v4047, 4
    %v4087 = vsel %vm321, %v4071, %v4086
    %v4088 = vrot.slane %v3939, 4
    %v4089 = vsel %vm321, %v4088, %v3931
    %v4090 = vrot.slane %v3931, 4
    %v4091 = vsel %vm321, %v3939, %v4090
    %v4093 = vunpack.c.l.s4 1983009808
    %v4094 = vunpack.c.0.s8 %v4093
    %v4095 = vperm.slane %v4089, %v4094
    %v4097 = vunpack.c.l.s4 1983009808
    %v4098 = vunpack.c.0.s8 %v4097
    %v4099 = vperm.slane %v4091, %v4098
    %v4100 = vrot.slane %v3943, 4
    %v4101 = vsel %vm321, %v4100, %v3935
    %v4102 = vrot.slane %v3935, 4
    %v4103 = vsel %vm321, %v3943, %v4102
    %v4105 = vunpack.c.l.s4 1983009808
    %v4106 = vunpack.c.0.s8 %v4105
    %v4107 = vperm.slane %v4101, %v4106
    %v4109 = vunpack.c.l.s4 1983009808
    %v4110 = vunpack.c.0.s8 %v4109
    %v4111 = vperm.slane %v4103, %v4110
    %v4112 = vrot.slane %v3955, 4
    %v4113 = vsel %vm321, %v4112, %v3947
    %v4114 = vrot.slane %v3947, 4
    %v4115 = vsel %vm321, %v3955, %v4114
    %v4117 = vunpack.c.l.s4 1983009808
    %v4118 = vunpack.c.0.s8 %v4117
    %v4119 = vperm.slane %v4113, %v4118
    %v4121 = vunpack.c.l.s4 1983009808
    %v4122 = vunpack.c.0.s8 %v4121
    %v4123 = vperm.slane %v4115, %v4122
    %v4124 = vrot.slane %v3959, 4
    %v4125 = vsel %vm321, %v4124, %v3951
    %v4126 = vrot.slane %v3951, 4
    %v4127 = vsel %vm321, %v3959, %v4126
    %v4129 = vunpack.c.l.s4 1983009808
    %v4130 = vunpack.c.0.s8 %v4129
    %v4131 = vperm.slane %v4125, %v4130
    %v4133 = vunpack.c.l.s4 1983009808
    %v4134 = vunpack.c.0.s8 %v4133
    %v4135 = vperm.slane %v4127, %v4134
    %v4136 = vrot.slane %v4107, 4
    %v4137 = vsel %vm321, %v4136, %v4095
    %v4138 = vrot.slane %v4095, 4
    %v4139 = vsel %vm321, %v4107, %v4138
    %v4141 = vunpack.c.l.s4 1934713408
    %v4142 = vunpack.c.0.s8 %v4141
    %v4143 = vperm.slane %v4137, %v4142
    %v4145 = vunpack.c.l.s4 1934713408
    %v4146 = vunpack.c.0.s8 %v4145
    %v4147 = vperm.slane %v4139, %v4146
    %v4148 = vrot.slane %v4111, 4
    %v4149 = vsel %vm321, %v4148, %v4099
    %v4150 = vrot.slane %v4099, 4
    %v4151 = vsel %vm321, %v4111, %v4150
    %v4153 = vunpack.c.l.s4 1934713408
    %v4154 = vunpack.c.0.s8 %v4153
    %v4155 = vperm.slane %v4149, %v4154
    %v4157 = vunpack.c.l.s4 1934713408
    %v4158 = vunpack.c.0.s8 %v4157
    %v4159 = vperm.slane %v4151, %v4158
    %v4160 = vrot.slane %v4131, 4
    %v4161 = vsel %vm321, %v4160, %v4119
    %v4162 = vrot.slane %v4119, 4
    %v4163 = vsel %vm321, %v4131, %v4162
    %v4165 = vunpack.c.l.s4 1934713408
    %v4166 = vunpack.c.0.s8 %v4165
    %v4167 = vperm.slane %v4161, %v4166
    %v4169 = vunpack.c.l.s4 1934713408
    %v4170 = vunpack.c.0.s8 %v4169
    %v4171 = vperm.slane %v4163, %v4170
    %v4172 = vrot.slane %v4135, 4
    %v4173 = vsel %vm321, %v4172, %v4123
    %v4174 = vrot.slane %v4123, 4
    %v4175 = vsel %vm321, %v4135, %v4174
    %v4177 = vunpack.c.l.s4 1934713408
    %v4178 = vunpack.c.0.s8 %v4177
    %v4179 = vperm.slane %v4173, %v4178
    %v4181 = vunpack.c.l.s4 1934713408
    %v4182 = vunpack.c.0.s8 %v4181
    %v4183 = vperm.slane %v4175, %v4182
    %v4184 = vrot.slane %v4167, 4
    %v4185 = vsel %vm321, %v4184, %v4143
    %v4186 = vrot.slane %v4143, 4
    %v4187 = vsel %vm321, %v4167, %v4186
    %v4188 = vrot.slane %v4171, 4
    %v4189 = vsel %vm321, %v4188, %v4147
    %v4190 = vrot.slane %v4147, 4
    %v4191 = vsel %vm321, %v4171, %v4190
    %v4192 = vrot.slane %v4179, 4
    %v4193 = vsel %vm321, %v4192, %v4155
    %v4194 = vrot.slane %v4155, 4
    %v4195 = vsel %vm321, %v4179, %v4194
    %v4196 = vrot.slane %v4183, 4
    %v4197 = vsel %vm321, %v4196, %v4159
    %v4198 = vrot.slane %v4159, 4
    %v4199 = vsel %vm321, %v4183, %v4198
    %v4200 = vrot.slane %v4077, 4
    %v4201 = vsel %vm321, %v4200, %v4073
    %v4202 = vrot.slane %v4073, 4
    %v4203 = vsel %vm321, %v4077, %v4202
    %v4205 = vunpack.c.l.s4 1983009808
    %v4206 = vunpack.c.0.s8 %v4205
    %v4207 = vperm.slane %v4201, %v4206
    %v4209 = vunpack.c.l.s4 1983009808
    %v4210 = vunpack.c.0.s8 %v4209
    %v4211 = vperm.slane %v4203, %v4210
    %v4212 = vrot.slane %v4079, 4
    %v4213 = vsel %vm321, %v4212, %v4075
    %v4214 = vrot.slane %v4075, 4
    %v4215 = vsel %vm321, %v4079, %v4214
    %v4217 = vunpack.c.l.s4 1983009808
    %v4218 = vunpack.c.0.s8 %v4217
    %v4219 = vperm.slane %v4213, %v4218
    %v4221 = vunpack.c.l.s4 1983009808
    %v4222 = vunpack.c.0.s8 %v4221
    %v4223 = vperm.slane %v4215, %v4222
    %v4224 = vrot.slane %v4085, 4
    %v4225 = vsel %vm321, %v4224, %v4081
    %v4226 = vrot.slane %v4081, 4
    %v4227 = vsel %vm321, %v4085, %v4226
    %v4229 = vunpack.c.l.s4 1983009808
    %v4230 = vunpack.c.0.s8 %v4229
    %v4231 = vperm.slane %v4225, %v4230
    %v4233 = vunpack.c.l.s4 1983009808
    %v4234 = vunpack.c.0.s8 %v4233
    %v4235 = vperm.slane %v4227, %v4234
    %v4236 = vrot.slane %v4087, 4
    %v4237 = vsel %vm321, %v4236, %v4083
    %v4238 = vrot.slane %v4083, 4
    %v4239 = vsel %vm321, %v4087, %v4238
    %v4241 = vunpack.c.l.s4 1983009808
    %v4242 = vunpack.c.0.s8 %v4241
    %v4243 = vperm.slane %v4237, %v4242
    %v4245 = vunpack.c.l.s4 1983009808
    %v4246 = vunpack.c.0.s8 %v4245
    %v4247 = vperm.slane %v4239, %v4246
    %v4248 = vrot.slane %v4219, 4
    %v4249 = vsel %vm321, %v4248, %v4207
    %v4250 = vrot.slane %v4207, 4
    %v4251 = vsel %vm321, %v4219, %v4250
    %v4253 = vunpack.c.l.s4 1934713408
    %v4254 = vunpack.c.0.s8 %v4253
    %v4255 = vperm.slane %v4249, %v4254
    %v4257 = vunpack.c.l.s4 1934713408
    %v4258 = vunpack.c.0.s8 %v4257
    %v4259 = vperm.slane %v4251, %v4258
    %v4260 = vrot.slane %v4223, 4
    %v4261 = vsel %vm321, %v4260, %v4211
    %v4262 = vrot.slane %v4211, 4
    %v4263 = vsel %vm321, %v4223, %v4262
    %v4265 = vunpack.c.l.s4 1934713408
    %v4266 = vunpack.c.0.s8 %v4265
    %v4267 = vperm.slane %v4261, %v4266
    %v4269 = vunpack.c.l.s4 1934713408
    %v4270 = vunpack.c.0.s8 %v4269
    %v4271 = vperm.slane %v4263, %v4270
    %v4272 = vrot.slane %v4243, 4
    %v4273 = vsel %vm321, %v4272, %v4231
    %v4274 = vrot.slane %v4231, 4
    %v4275 = vsel %vm321, %v4243, %v4274
    %v4277 = vunpack.c.l.s4 1934713408
    %v4278 = vunpack.c.0.s8 %v4277
    %v4279 = vperm.slane %v4273, %v4278
    %v4281 = vunpack.c.l.s4 1934713408
    %v4282 = vunpack.c.0.s8 %v4281
    %v4283 = vperm.slane %v4275, %v4282
    %v4284 = vrot.slane %v4247, 4
    %v4285 = vsel %vm321, %v4284, %v4235
    %v4286 = vrot.slane %v4235, 4
    %v4287 = vsel %vm321, %v4247, %v4286
    %v4289 = vunpack.c.l.s4 1934713408
    %v4290 = vunpack.c.0.s8 %v4289
    %v4291 = vperm.slane %v4285, %v4290
    %v4293 = vunpack.c.l.s4 1934713408
    %v4294 = vunpack.c.0.s8 %v4293
    %v4295 = vperm.slane %v4287, %v4294
    %v4296 = vrot.slane %v4279, 4
    %v4297 = vsel %vm321, %v4296, %v4255
    %v4298 = vrot.slane %v4255, 4
    %v4299 = vsel %vm321, %v4279, %v4298
    %v4300 = vrot.slane %v4283, 4
    %v4301 = vsel %vm321, %v4300, %v4259
    %v4302 = vrot.slane %v4259, 4
    %v4303 = vsel %vm321, %v4283, %v4302
    %v4304 = vrot.slane %v4291, 4
    %v4305 = vsel %vm321, %v4304, %v4267
    %v4306 = vrot.slane %v4267, 4
    %v4307 = vsel %vm321, %v4291, %v4306
    %v4308 = vrot.slane %v4295, 4
    %v4309 = vsel %vm321, %v4308, %v4271
    %v4310 = vrot.slane %v4271, 4
    %v4311 = vsel %vm321, %v4295, %v4310
    %v4312 = vrot.slane %v4189, 4
    %v4313 = vsel %vm321, %v4312, %v4185
    %v4314 = vrot.slane %v4185, 4
    %v4315 = vsel %vm321, %v4189, %v4314
    %v4317 = vunpack.c.l.s4 1983009808
    %v4318 = vunpack.c.0.s8 %v4317
    %v4319 = vperm.slane %v4313, %v4318
    %v4321 = vunpack.c.l.s4 1983009808
    %v4322 = vunpack.c.0.s8 %v4321
    %v4323 = vperm.slane %v4315, %v4322
    %v4324 = vrot.slane %v4191, 4
    %v4325 = vsel %vm321, %v4324, %v4187
    %v4326 = vrot.slane %v4187, 4
    %v4327 = vsel %vm321, %v4191, %v4326
    %v4329 = vunpack.c.l.s4 1983009808
    %v4330 = vunpack.c.0.s8 %v4329
    %v4331 = vperm.slane %v4325, %v4330
    %v4333 = vunpack.c.l.s4 1983009808
    %v4334 = vunpack.c.0.s8 %v4333
    %v4335 = vperm.slane %v4327, %v4334
    %v4336 = vrot.slane %v4197, 4
    %v4337 = vsel %vm321, %v4336, %v4193
    %v4338 = vrot.slane %v4193, 4
    %v4339 = vsel %vm321, %v4197, %v4338
    %v4341 = vunpack.c.l.s4 1983009808
    %v4342 = vunpack.c.0.s8 %v4341
    %v4343 = vperm.slane %v4337, %v4342
    %v4345 = vunpack.c.l.s4 1983009808
    %v4346 = vunpack.c.0.s8 %v4345
    %v4347 = vperm.slane %v4339, %v4346
    %v4348 = vrot.slane %v4199, 4
    %v4349 = vsel %vm321, %v4348, %v4195
    %v4350 = vrot.slane %v4195, 4
    %v4351 = vsel %vm321, %v4199, %v4350
    %v4353 = vunpack.c.l.s4 1983009808
    %v4354 = vunpack.c.0.s8 %v4353
    %v4355 = vperm.slane %v4349, %v4354
    %v4357 = vunpack.c.l.s4 1983009808
    %v4358 = vunpack.c.0.s8 %v4357
    %v4359 = vperm.slane %v4351, %v4358
    %v4360 = vrot.slane %v4331, 4
    %v4361 = vsel %vm321, %v4360, %v4319
    %v4362 = vrot.slane %v4319, 4
    %v4363 = vsel %vm321, %v4331, %v4362
    %v4365 = vunpack.c.l.s4 1934713408
    %v4366 = vunpack.c.0.s8 %v4365
    %v4367 = vperm.slane %v4361, %v4366
    %v4369 = vunpack.c.l.s4 1934713408
    %v4370 = vunpack.c.0.s8 %v4369
    %v4371 = vperm.slane %v4363, %v4370
    %v4372 = vrot.slane %v4335, 4
    %v4373 = vsel %vm321, %v4372, %v4323
    %v4374 = vrot.slane %v4323, 4
    %v4375 = vsel %vm321, %v4335, %v4374
    %v4377 = vunpack.c.l.s4 1934713408
    %v4378 = vunpack.c.0.s8 %v4377
    %v4379 = vperm.slane %v4373, %v4378
    %v4381 = vunpack.c.l.s4 1934713408
    %v4382 = vunpack.c.0.s8 %v4381
    %v4383 = vperm.slane %v4375, %v4382
    %v4384 = vrot.slane %v4355, 4
    %v4385 = vsel %vm321, %v4384, %v4343
    %v4386 = vrot.slane %v4343, 4
    %v4387 = vsel %vm321, %v4355, %v4386
    %v4389 = vunpack.c.l.s4 1934713408
    %v4390 = vunpack.c.0.s8 %v4389
    %v4391 = vperm.slane %v4385, %v4390
    %v4393 = vunpack.c.l.s4 1934713408
    %v4394 = vunpack.c.0.s8 %v4393
    %v4395 = vperm.slane %v4387, %v4394
    %v4396 = vrot.slane %v4359, 4
    %v4397 = vsel %vm321, %v4396, %v4347
    %v4398 = vrot.slane %v4347, 4
    %v4399 = vsel %vm321, %v4359, %v4398
    %v4401 = vunpack.c.l.s4 1934713408
    %v4402 = vunpack.c.0.s8 %v4401
    %v4403 = vperm.slane %v4397, %v4402
    %v4405 = vunpack.c.l.s4 1934713408
    %v4406 = vunpack.c.0.s8 %v4405
    %v4407 = vperm.slane %v4399, %v4406
    %v4408 = vrot.slane %v4391, 4
    %v4409 = vsel %vm321, %v4408, %v4367
    %v4410 = vrot.slane %v4367, 4
    %v4411 = vsel %vm321, %v4391, %v4410
    %v4412 = vrot.slane %v4395, 4
    %v4413 = vsel %vm321, %v4412, %v4371
    %v4414 = vrot.slane %v4371, 4
    %v4415 = vsel %vm321, %v4395, %v4414
    %v4416 = vrot.slane %v4403, 4
    %v4417 = vsel %vm321, %v4416, %v4379
    %v4418 = vrot.slane %v4379, 4
    %v4419 = vsel %vm321, %v4403, %v4418
    %v4420 = vrot.slane %v4407, 4
    %v4421 = vsel %vm321, %v4420, %v4383
    %v4422 = vrot.slane %v4383, 4
    %v4423 = vsel %vm321, %v4407, %v4422
    %v4424 = vld [vmem:[%s3] sm:$0x1]
    %v4425 = vpack.c.bf16 %v3421, %v3421
    %v4426 = vpack.c.bf16 %v3423, %v3423
    %v4427 = vpack.c.bf16 %v3425, %v3425
    %v4428 = vpack.c.bf16 %v3427, %v3427
    %v4429 = vpack.c.bf16 %v3429, %v3429
    %v4430 = vpack.c.bf16 %v3431, %v3431
    %v4431 = vpack.c.bf16 %v3433, %v3433
    %v4432 = vpack.c.bf16 %v3435, %v3435
    %v4433 = vpack.c.bf16 %v3801, %v3801
    %v4434 = vpack.c.bf16 %v3913, %v3913
    %v4435 = vpack.c.bf16 %v3803, %v3803
    %v4436 = vpack.c.bf16 %v3915, %v3915
    %v4437 = vpack.c.bf16 %v3805, %v3805
    %v4438 = vpack.c.bf16 %v3917, %v3917
    %v4439 = vpack.c.bf16 %v3807, %v3807
    %v4440 = vpack.c.bf16 %v3919, %v3919
    %v4441 = vpack.c.bf16 %v3809, %v3809
    %v4442 = vpack.c.bf16 %v3921, %v3921
    %v4443 = vpack.c.bf16 %v3811, %v3811
    %v4444 = vpack.c.bf16 %v3923, %v3923
    %v4445 = vpack.c.bf16 %v3813, %v3813
    %v4446 = vpack.c.bf16 %v3925, %v3925
    %v4447 = vpack.c.bf16 %v3815, %v3815
    %v4448 = vpack.c.bf16 %v3927, %v3927
    %v4450 = vperm.slane %v4424, 0
    %v4454 = vunpack.c.l.b16 %v4433
    %v4455 = vunpack.c.l.b16 %v4434
    %v4456 = vpack.c.b16 %v4455, %v4454
    %v4458 = vsel %vm1056, %v4425, 0
    %v4461 = vsel %vm1056, %v4456, 0
    %4463 = vmatpush.bf16.xpose.msra.mxu0 0
    %4464 = vmatpush.bf16.xpose.msra.mxu0 0
    %4465 = vmatpush.bf16.xpose.msra.mxu0 0
    %4466 = vmatpush.bf16.xpose.msra.mxu0 0
    %4467 = vmatpush.bf16.xpose.msra.mxu0 0
    %4468 = vmatpush.bf16.xpose.msra.mxu0 0
    %4469 = vmatpush.bf16.xpose.msra.mxu0 0
    %4470 = vmatpush.bf16.xpose.msra.mxu0 %v4461
    %4471 = vmatmul.bf16.gmra.mxu0 %v4458
    %v4472 = vpop.f32.mrf.mxu0
    %v4473 = vadd.f32 %v4450, %v4472
    %v4474 = vpop.f32.mrf.mxu0
    %4475 = vdwg.mxu0
    %v4478 = vunpack.c.l.b16 %v4435
    %v4479 = vunpack.c.l.b16 %v4436
    %v4480 = vpack.c.b16 %v4479, %v4478
    %v4482 = vsel %vm1056, %v4426, 0
    %v4485 = vsel %vm1056, %v4480, 0
    %4487 = vmatpush.bf16.xpose.msra.mxu0 0
    %4488 = vmatpush.bf16.xpose.msra.mxu0 0
    %4489 = vmatpush.bf16.xpose.msra.mxu0 0
    %4490 = vmatpush.bf16.xpose.msra.mxu0 0
    %4491 = vmatpush.bf16.xpose.msra.mxu0 0
    %4492 = vmatpush.bf16.xpose.msra.mxu0 0
    %4493 = vmatpush.bf16.xpose.msra.mxu0 0
    %4494 = vmatpush.bf16.xpose.msra.mxu0 %v4485
    %4495 = vmatmul.bf16.gmra.mxu0 %v4482
    %v4496 = vpop.f32.mrf.mxu0
    %v4497 = vadd.f32 %v4450, %v4496
    %v4498 = vpop.f32.mrf.mxu0
    %4499 = vdwg.mxu0
    %v4502 = vunpack.c.l.b16 %v4437
    %v4503 = vunpack.c.l.b16 %v4438
    %v4504 = vpack.c.b16 %v4503, %v4502
    %v4506 = vsel %vm1056, %v4427, 0
    %v4509 = vsel %vm1056, %v4504, 0
    %4511 = vmatpush.bf16.xpose.msra.mxu0 0
    %4512 = vmatpush.bf16.xpose.msra.mxu0 0
    %4513 = vmatpush.bf16.xpose.msra.mxu0 0
    %4514 = vmatpush.bf16.xpose.msra.mxu0 0
    %4515 = vmatpush.bf16.xpose.msra.mxu0 0
    %4516 = vmatpush.bf16.xpose.msra.mxu0 0
    %4517 = vmatpush.bf16.xpose.msra.mxu0 0
    %4518 = vmatpush.bf16.xpose.msra.mxu0 %v4509
    %4519 = vmatmul.bf16.gmra.mxu0 %v4506
    %v4520 = vpop.f32.mrf.mxu0
    %v4521 = vadd.f32 %v4450, %v4520
    %v4522 = vpop.f32.mrf.mxu0
    %4523 = vdwg.mxu0
    %v4526 = vunpack.c.l.b16 %v4439
    %v4527 = vunpack.c.l.b16 %v4440
    %v4528 = vpack.c.b16 %v4527, %v4526
    %v4530 = vsel %vm1056, %v4428, 0
    %v4533 = vsel %vm1056, %v4528, 0
    %4535 = vmatpush.bf16.xpose.msra.mxu0 0
    %4536 = vmatpush.bf16.xpose.msra.mxu0 0
    %4537 = vmatpush.bf16.xpose.msra.mxu0 0
    %4538 = vmatpush.bf16.xpose.msra.mxu0 0
    %4539 = vmatpush.bf16.xpose.msra.mxu0 0
    %4540 = vmatpush.bf16.xpose.msra.mxu0 0
    %4541 = vmatpush.bf16.xpose.msra.mxu0 0
    %4542 = vmatpush.bf16.xpose.msra.mxu0 %v4533
    %4543 = vmatmul.bf16.gmra.mxu0 %v4530
    %v4544 = vpop.f32.mrf.mxu0
    %v4545 = vadd.f32 %v4450, %v4544
    %v4546 = vpop.f32.mrf.mxu0
    %4547 = vdwg.mxu0
    %v4550 = vunpack.c.l.b16 %v4441
    %v4551 = vunpack.c.l.b16 %v4442
    %v4552 = vpack.c.b16 %v4551, %v4550
    %v4554 = vsel %vm1056, %v4429, 0
    %v4557 = vsel %vm1056, %v4552, 0
    %4559 = vmatpush.bf16.xpose.msra.mxu0 0
    %4560 = vmatpush.bf16.xpose.msra.mxu0 0
    %4561 = vmatpush.bf16.xpose.msra.mxu0 0
    %4562 = vmatpush.bf16.xpose.msra.mxu0 0
    %4563 = vmatpush.bf16.xpose.msra.mxu0 0
    %4564 = vmatpush.bf16.xpose.msra.mxu0 0
    %4565 = vmatpush.bf16.xpose.msra.mxu0 0
    %4566 = vmatpush.bf16.xpose.msra.mxu0 %v4557
    %4567 = vmatmul.bf16.gmra.mxu0 %v4554
    %v4568 = vpop.f32.mrf.mxu0
    %v4569 = vadd.f32 %v4450, %v4568
    %v4570 = vpop.f32.mrf.mxu0
    %4571 = vdwg.mxu0
    %v4574 = vunpack.c.l.b16 %v4443
    %v4575 = vunpack.c.l.b16 %v4444
    %v4576 = vpack.c.b16 %v4575, %v4574
    %v4578 = vsel %vm1056, %v4430, 0
    %v4581 = vsel %vm1056, %v4576, 0
    %4583 = vmatpush.bf16.xpose.msra.mxu0 0
    %4584 = vmatpush.bf16.xpose.msra.mxu0 0
    %4585 = vmatpush.bf16.xpose.msra.mxu0 0
    %4586 = vmatpush.bf16.xpose.msra.mxu0 0
    %4587 = vmatpush.bf16.xpose.msra.mxu0 0
    %4588 = vmatpush.bf16.xpose.msra.mxu0 0
    %4589 = vmatpush.bf16.xpose.msra.mxu0 0
    %4590 = vmatpush.bf16.xpose.msra.mxu0 %v4581
    %4591 = vmatmul.bf16.gmra.mxu0 %v4578
    %v4592 = vpop.f32.mrf.mxu0
    %v4593 = vadd.f32 %v4450, %v4592
    %v4594 = vpop.f32.mrf.mxu0
    %4595 = vdwg.mxu0
    %v4598 = vunpack.c.l.b16 %v4445
    %v4599 = vunpack.c.l.b16 %v4446
    %v4600 = vpack.c.b16 %v4599, %v4598
    %v4602 = vsel %vm1056, %v4431, 0
    %v4605 = vsel %vm1056, %v4600, 0
    %4607 = vmatpush.bf16.xpose.msra.mxu0 0
    %4608 = vmatpush.bf16.xpose.msra.mxu0 0
    %4609 = vmatpush.bf16.xpose.msra.mxu0 0
    %4610 = vmatpush.bf16.xpose.msra.mxu0 0
    %4611 = vmatpush.bf16.xpose.msra.mxu0 0
    %4612 = vmatpush.bf16.xpose.msra.mxu0 0
    %4613 = vmatpush.bf16.xpose.msra.mxu0 0
    %4614 = vmatpush.bf16.xpose.msra.mxu0 %v4605
    %4615 = vmatmul.bf16.gmra.mxu0 %v4602
    %v4616 = vpop.f32.mrf.mxu0
    %v4617 = vadd.f32 %v4450, %v4616
    %v4618 = vpop.f32.mrf.mxu0
    %4619 = vdwg.mxu0
    %v4622 = vunpack.c.l.b16 %v4447
    %v4623 = vunpack.c.l.b16 %v4448
    %v4624 = vpack.c.b16 %v4623, %v4622
    %v4626 = vsel %vm1056, %v4432, 0
    %v4629 = vsel %vm1056, %v4624, 0
    %4631 = vmatpush.bf16.xpose.msra.mxu0 0
    %4632 = vmatpush.bf16.xpose.msra.mxu0 0
    %4633 = vmatpush.bf16.xpose.msra.mxu0 0
    %4634 = vmatpush.bf16.xpose.msra.mxu0 0
    %4635 = vmatpush.bf16.xpose.msra.mxu0 0
    %4636 = vmatpush.bf16.xpose.msra.mxu0 0
    %4637 = vmatpush.bf16.xpose.msra.mxu0 0
    %4638 = vmatpush.bf16.xpose.msra.mxu0 %v4629
    %4639 = vmatmul.bf16.gmra.mxu0 %v4626
    %v4640 = vpop.f32.mrf.mxu0
    %v4641 = vadd.f32 %v4450, %v4640
    %v4642 = vpop.f32.mrf.mxu0
    %4643 = vdwg.mxu0
    %vm4644 = vcmask 130048
    %v4645 = vsel %vm4644, %v4473, -inf
    %4646 = vmax.xlane.f32.xlu0 %v4645
    %v4647 = vpop.xlane.xlu0 %4646
    %v4648 = vsel %vm4644, %v4497, -inf
    %4649 = vmax.xlane.f32.xlu0 %v4648
    %v4650 = vpop.xlane.xlu0 %4649
    %v4651 = vsel %vm4644, %v4521, -inf
    %4652 = vmax.xlane.f32.xlu0 %v4651
    %v4653 = vpop.xlane.xlu0 %4652
    %v4654 = vsel %vm4644, %v4545, -inf
    %4655 = vmax.xlane.f32.xlu0 %v4654
    %v4656 = vpop.xlane.xlu0 %4655
    %v4657 = vsel %vm4644, %v4569, -inf
    %4658 = vmax.xlane.f32.xlu0 %v4657
    %v4659 = vpop.xlane.xlu0 %4658
    %v4660 = vsel %vm4644, %v4593, -inf
    %4661 = vmax.xlane.f32.xlu0 %v4660
    %v4662 = vpop.xlane.xlu0 %4661
    %v4663 = vsel %vm4644, %v4617, -inf
    %4664 = vmax.xlane.f32.xlu0 %v4663
    %v4665 = vpop.xlane.xlu0 %4664
    %v4666 = vsel %vm4644, %v4641, -inf
    %4667 = vmax.xlane.f32.xlu0 %v4666
    %v4668 = vpop.xlane.xlu0 %4667
    %v4669 = vsub.f32 %v4473, %v4647
    %v4670 = vsub.f32 %v4497, %v4650
    %v4671 = vsub.f32 %v4521, %v4653
    %v4672 = vsub.f32 %v4545, %v4656
    %v4673 = vsub.f32 %v4569, %v4659
    %v4674 = vsub.f32 %v4593, %v4662
    %v4675 = vsub.f32 %v4617, %v4665
    %v4676 = vsub.f32 %v4641, %v4668
    %v4677 = vmul.f32 %v4669, 1.442695
    %v4678 = vpow.pop %v4677
    %v4679 = vmul.f32 %v4670, 1.442695
    %v4680 = vpow.pop %v4679
    %v4681 = vmul.f32 %v4671, 1.442695
    %v4682 = vpow.pop %v4681
    %v4683 = vmul.f32 %v4672, 1.442695
    %v4684 = vpow.pop %v4683
    %v4685 = vmul.f32 %v4673, 1.442695
    %v4686 = vpow.pop %v4685
    %v4687 = vmul.f32 %v4674, 1.442695
    %v4688 = vpow.pop %v4687
    %v4689 = vmul.f32 %v4675, 1.442695
    %v4690 = vpow.pop %v4689
    %v4691 = vmul.f32 %v4676, 1.442695
    %v4692 = vpow.pop %v4691
    %v4693 = vsel %vm4644, %v4678, 0.0
    %4694 = vadd.xlane.f32.xlu0 %v4693
    %v4695 = vpop.xlane.xlu0 %4694
    %v4696 = vsel %vm4644, %v4680, 0.0
    %4697 = vadd.xlane.f32.xlu0 %v4696
    %v4698 = vpop.xlane.xlu0 %4697
    %v4699 = vsel %vm4644, %v4682, 0.0
    %4700 = vadd.xlane.f32.xlu0 %v4699
    %v4701 = vpop.xlane.xlu0 %4700
    %v4702 = vsel %vm4644, %v4684, 0.0
    %4703 = vadd.xlane.f32.xlu0 %v4702
    %v4704 = vpop.xlane.xlu0 %4703
    %v4705 = vsel %vm4644, %v4686, 0.0
    %4706 = vadd.xlane.f32.xlu0 %v4705
    %v4707 = vpop.xlane.xlu0 %4706
    %v4708 = vsel %vm4644, %v4688, 0.0
    %4709 = vadd.xlane.f32.xlu0 %v4708
    %v4710 = vpop.xlane.xlu0 %4709
    %v4711 = vsel %vm4644, %v4690, 0.0
    %4712 = vadd.xlane.f32.xlu0 %v4711
    %v4713 = vpop.xlane.xlu0 %4712
    %v4714 = vsel %vm4644, %v4692, 0.0
    %4715 = vadd.xlane.f32.xlu0 %v4714
    %v4716 = vpop.xlane.xlu0 %4715
    %v4717 = vrcp.pop %v4695
    %v4718 = vmul.f32 %v4695, %v4717
    %v4719 = vsub.f32 1.0, %v4718
    %v4720 = vmul.f32 %v4717, %v4719
    %v4721 = vadd.f32 %v4717, %v4720
    %vm4722 = vweird.f32 %v4695
    %vm4723 = vweird.f32 %v4717
    %vm4724 = vmor %vm4722, %vm4723
    %v4725 = vsel %vm4724, %v4717, %v4721
    %v4726 = vand.u32 2147483647, %v4695
    %vm4727 = vcmp.eq.f32.partialorder %v4726, 8.507059e+37
    %v4728 = vand.u32 %v4695, 2147483648
    %v4729 = vor.u32 1.1754944e-38, %v4728
    %v4730 = vsel %vm4727, %v4729, %v4725
    %v4731 = vmul.f32 %v4678, %v4730
    %v4732 = vrcp.pop %v4698
    %v4733 = vmul.f32 %v4698, %v4732
    %v4734 = vsub.f32 1.0, %v4733
    %v4735 = vmul.f32 %v4732, %v4734
    %v4736 = vadd.f32 %v4732, %v4735
    %vm4737 = vweird.f32 %v4698
    %vm4738 = vweird.f32 %v4732
    %vm4739 = vmor %vm4737, %vm4738
    %v4740 = vsel %vm4739, %v4732, %v4736
    %v4741 = vand.u32 2147483647, %v4698
    %vm4742 = vcmp.eq.f32.partialorder %v4741, 8.507059e+37
    %v4743 = vand.u32 %v4698, 2147483648
    %v4744 = vor.u32 1.1754944e-38, %v4743
    %v4745 = vsel %vm4742, %v4744, %v4740
    %v4746 = vmul.f32 %v4680, %v4745
    %v4747 = vrcp.pop %v4701
    %v4748 = vmul.f32 %v4701, %v4747
    %v4749 = vsub.f32 1.0, %v4748
    %v4750 = vmul.f32 %v4747, %v4749
    %v4751 = vadd.f32 %v4747, %v4750
    %vm4752 = vweird.f32 %v4701
    %vm4753 = vweird.f32 %v4747
    %vm4754 = vmor %vm4752, %vm4753
    %v4755 = vsel %vm4754, %v4747, %v4751
    %v4756 = vand.u32 2147483647, %v4701
    %vm4757 = vcmp.eq.f32.partialorder %v4756, 8.507059e+37
    %v4758 = vand.u32 %v4701, 2147483648
    %v4759 = vor.u32 1.1754944e-38, %v4758
    %v4760 = vsel %vm4757, %v4759, %v4755
    %v4761 = vmul.f32 %v4682, %v4760
    %v4762 = vrcp.pop %v4704
    %v4763 = vmul.f32 %v4704, %v4762
    %v4764 = vsub.f32 1.0, %v4763
    %v4765 = vmul.f32 %v4762, %v4764
    %v4766 = vadd.f32 %v4762, %v4765
    %vm4767 = vweird.f32 %v4704
    %vm4768 = vweird.f32 %v4762
    %vm4769 = vmor %vm4767, %vm4768
    %v4770 = vsel %vm4769, %v4762, %v4766
    %v4771 = vand.u32 2147483647, %v4704
    %vm4772 = vcmp.eq.f32.partialorder %v4771, 8.507059e+37
    %v4773 = vand.u32 %v4704, 2147483648
    %v4774 = vor.u32 1.1754944e-38, %v4773
    %v4775 = vsel %vm4772, %v4774, %v4770
    %v4776 = vmul.f32 %v4684, %v4775
    %v4777 = vrcp.pop %v4707
    %v4778 = vmul.f32 %v4707, %v4777
    %v4779 = vsub.f32 1.0, %v4778
    %v4780 = vmul.f32 %v4777, %v4779
    %v4781 = vadd.f32 %v4777, %v4780
    %vm4782 = vweird.f32 %v4707
    %vm4783 = vweird.f32 %v4777
    %vm4784 = vmor %vm4782, %vm4783
    %v4785 = vsel %vm4784, %v4777, %v4781
    %v4786 = vand.u32 2147483647, %v4707
    %vm4787 = vcmp.eq.f32.partialorder %v4786, 8.507059e+37
    %v4788 = vand.u32 %v4707, 2147483648
    %v4789 = vor.u32 1.1754944e-38, %v4788
    %v4790 = vsel %vm4787, %v4789, %v4785
    %v4791 = vmul.f32 %v4686, %v4790
    %v4792 = vrcp.pop %v4710
    %v4793 = vmul.f32 %v4710, %v4792
    %v4794 = vsub.f32 1.0, %v4793
    %v4795 = vmul.f32 %v4792, %v4794
    %v4796 = vadd.f32 %v4792, %v4795
    %vm4797 = vweird.f32 %v4710
    %vm4798 = vweird.f32 %v4792
    %vm4799 = vmor %vm4797, %vm4798
    %v4800 = vsel %vm4799, %v4792, %v4796
    %v4801 = vand.u32 2147483647, %v4710
    %vm4802 = vcmp.eq.f32.partialorder %v4801, 8.507059e+37
    %v4803 = vand.u32 %v4710, 2147483648
    %v4804 = vor.u32 1.1754944e-38, %v4803
    %v4805 = vsel %vm4802, %v4804, %v4800
    %v4806 = vmul.f32 %v4688, %v4805
    %v4807 = vrcp.pop %v4713
    %v4808 = vmul.f32 %v4713, %v4807
    %v4809 = vsub.f32 1.0, %v4808
    %v4810 = vmul.f32 %v4807, %v4809
    %v4811 = vadd.f32 %v4807, %v4810
    %vm4812 = vweird.f32 %v4713
    %vm4813 = vweird.f32 %v4807
    %vm4814 = vmor %vm4812, %vm4813
    %v4815 = vsel %vm4814, %v4807, %v4811
    %v4816 = vand.u32 2147483647, %v4713
    %vm4817 = vcmp.eq.f32.partialorder %v4816, 8.507059e+37
    %v4818 = vand.u32 %v4713, 2147483648
    %v4819 = vor.u32 1.1754944e-38, %v4818
    %v4820 = vsel %vm4817, %v4819, %v4815
    %v4821 = vmul.f32 %v4690, %v4820
    %v4822 = vrcp.pop %v4716
    %v4823 = vmul.f32 %v4716, %v4822
    %v4824 = vsub.f32 1.0, %v4823
    %v4825 = vmul.f32 %v4822, %v4824
    %v4826 = vadd.f32 %v4822, %v4825
    %vm4827 = vweird.f32 %v4716
    %vm4828 = vweird.f32 %v4822
    %vm4829 = vmor %vm4827, %vm4828
    %v4830 = vsel %vm4829, %v4822, %v4826
    %v4831 = vand.u32 2147483647, %v4716
    %vm4832 = vcmp.eq.f32.partialorder %v4831, 8.507059e+37
    %v4833 = vand.u32 %v4716, 2147483648
    %v4834 = vor.u32 1.1754944e-38, %v4833
    %v4835 = vsel %vm4832, %v4834, %v4830
    %v4836 = vmul.f32 %v4692, %v4835
    %v4837 = vpack.c.bf16 %v4731, %v4731
    %v4838 = vpack.c.bf16 %v4746, %v4746
    %v4839 = vpack.c.bf16 %v4761, %v4761
    %v4840 = vpack.c.bf16 %v4776, %v4776
    %v4841 = vpack.c.bf16 %v4791, %v4791
    %v4842 = vpack.c.bf16 %v4806, %v4806
    %v4843 = vpack.c.bf16 %v4821, %v4821
    %v4844 = vpack.c.bf16 %v4836, %v4836
    %v4845 = vpack.c.bf16 %v4297, %v4297
    %v4846 = vpack.c.bf16 %v4409, %v4409
    %v4847 = vpack.c.bf16 %v4299, %v4299
    %v4848 = vpack.c.bf16 %v4411, %v4411
    %v4849 = vpack.c.bf16 %v4301, %v4301
    %v4850 = vpack.c.bf16 %v4413, %v4413
    %v4851 = vpack.c.bf16 %v4303, %v4303
    %v4852 = vpack.c.bf16 %v4415, %v4415
    %v4853 = vpack.c.bf16 %v4305, %v4305
    %v4854 = vpack.c.bf16 %v4417, %v4417
    %v4855 = vpack.c.bf16 %v4307, %v4307
    %v4856 = vpack.c.bf16 %v4419, %v4419
    %v4857 = vpack.c.bf16 %v4309, %v4309
    %v4858 = vpack.c.bf16 %v4421, %v4421
    %v4859 = vpack.c.bf16 %v4311, %v4311
    %v4860 = vpack.c.bf16 %v4423, %v4423
    %v4863 = vunpack.c.l.b16 %v4845
    %v4864 = vunpack.c.l.b16 %v4846
    %v4865 = vpack.c.b16 %v4864, %v4863
    %v4868 = vsel %vm4644, %v4837, 0
    %4870 = vmatpush.bf16.msra.mxu0 0
    %4871 = vmatpush.bf16.msra.mxu0 0
    %4872 = vmatpush.bf16.msra.mxu0 0
    %4873 = vmatpush.bf16.msra.mxu0 0
    %4874 = vmatpush.bf16.msra.mxu0 0
    %4875 = vmatpush.bf16.msra.mxu0 0
    %4876 = vmatpush.bf16.msra.mxu0 0
    %4877 = vmatpush.bf16.msra.mxu0 %v4865
    %4878 = vmatmul.bf16.gmra.mxu0 %v4868
    %v4879 = vpop.f32.mrf.mxu0
    %v4880 = vadd.f32 0.0, %v4879
    %v4881 = vpop.f32.mrf.mxu0
    %4882 = vdwg.mxu0
    %v4885 = vunpack.c.l.b16 %v4847
    %v4886 = vunpack.c.l.b16 %v4848
    %v4887 = vpack.c.b16 %v4886, %v4885
    %v4890 = vsel %vm4644, %v4838, 0
    %4892 = vmatpush.bf16.msra.mxu0 0
    %4893 = vmatpush.bf16.msra.mxu0 0
    %4894 = vmatpush.bf16.msra.mxu0 0
    %4895 = vmatpush.bf16.msra.mxu0 0
    %4896 = vmatpush.bf16.msra.mxu0 0
    %4897 = vmatpush.bf16.msra.mxu0 0
    %4898 = vmatpush.bf16.msra.mxu0 0
    %4899 = vmatpush.bf16.msra.mxu0 %v4887
    %4900 = vmatmul.bf16.gmra.mxu0 %v4890
    %v4901 = vpop.f32.mrf.mxu0
    %v4902 = vadd.f32 0.0, %v4901
    %v4903 = vpop.f32.mrf.mxu0
    %4904 = vdwg.mxu0
    %v4907 = vunpack.c.l.b16 %v4849
    %v4908 = vunpack.c.l.b16 %v4850
    %v4909 = vpack.c.b16 %v4908, %v4907
    %v4912 = vsel %vm4644, %v4839, 0
    %4914 = vmatpush.bf16.msra.mxu0 0
    %4915 = vmatpush.bf16.msra.mxu0 0
    %4916 = vmatpush.bf16.msra.mxu0 0
    %4917 = vmatpush.bf16.msra.mxu0 0
    %4918 = vmatpush.bf16.msra.mxu0 0
    %4919 = vmatpush.bf16.msra.mxu0 0
    %4920 = vmatpush.bf16.msra.mxu0 0
    %4921 = vmatpush.bf16.msra.mxu0 %v4909
    %4922 = vmatmul.bf16.gmra.mxu0 %v4912
    %v4923 = vpop.f32.mrf.mxu0
    %v4924 = vadd.f32 0.0, %v4923
    %v4925 = vpop.f32.mrf.mxu0
    %4926 = vdwg.mxu0
    %v4929 = vunpack.c.l.b16 %v4851
    %v4930 = vunpack.c.l.b16 %v4852
    %v4931 = vpack.c.b16 %v4930, %v4929
    %v4934 = vsel %vm4644, %v4840, 0
    %4936 = vmatpush.bf16.msra.mxu0 0
    %4937 = vmatpush.bf16.msra.mxu0 0
    %4938 = vmatpush.bf16.msra.mxu0 0
    %4939 = vmatpush.bf16.msra.mxu0 0
    %4940 = vmatpush.bf16.msra.mxu0 0
    %4941 = vmatpush.bf16.msra.mxu0 0
    %4942 = vmatpush.bf16.msra.mxu0 0
    %4943 = vmatpush.bf16.msra.mxu0 %v4931
    %4944 = vmatmul.bf16.gmra.mxu0 %v4934
    %v4945 = vpop.f32.mrf.mxu0
    %v4946 = vadd.f32 0.0, %v4945
    %v4947 = vpop.f32.mrf.mxu0
    %4948 = vdwg.mxu0
    %v4951 = vunpack.c.l.b16 %v4853
    %v4952 = vunpack.c.l.b16 %v4854
    %v4953 = vpack.c.b16 %v4952, %v4951
    %v4956 = vsel %vm4644, %v4841, 0
    %4958 = vmatpush.bf16.msra.mxu0 0
    %4959 = vmatpush.bf16.msra.mxu0 0
    %4960 = vmatpush.bf16.msra.mxu0 0
    %4961 = vmatpush.bf16.msra.mxu0 0
    %4962 = vmatpush.bf16.msra.mxu0 0
    %4963 = vmatpush.bf16.msra.mxu0 0
    %4964 = vmatpush.bf16.msra.mxu0 0
    %4965 = vmatpush.bf16.msra.mxu0 %v4953
    %4966 = vmatmul.bf16.gmra.mxu0 %v4956
    %v4967 = vpop.f32.mrf.mxu0
    %v4968 = vadd.f32 0.0, %v4967
    %v4969 = vpop.f32.mrf.mxu0
    %4970 = vdwg.mxu0
    %v4973 = vunpack.c.l.b16 %v4855
    %v4974 = vunpack.c.l.b16 %v4856
    %v4975 = vpack.c.b16 %v4974, %v4973
    %v4978 = vsel %vm4644, %v4842, 0
    %4980 = vmatpush.bf16.msra.mxu0 0
    %4981 = vmatpush.bf16.msra.mxu0 0
    %4982 = vmatpush.bf16.msra.mxu0 0
    %4983 = vmatpush.bf16.msra.mxu0 0
    %4984 = vmatpush.bf16.msra.mxu0 0
    %4985 = vmatpush.bf16.msra.mxu0 0
    %4986 = vmatpush.bf16.msra.mxu0 0
    %4987 = vmatpush.bf16.msra.mxu0 %v4975
    %4988 = vmatmul.bf16.gmra.mxu0 %v4978
    %v4989 = vpop.f32.mrf.mxu0
    %v4990 = vadd.f32 0.0, %v4989
    %v4991 = vpop.f32.mrf.mxu0
    %4992 = vdwg.mxu0
    %v4995 = vunpack.c.l.b16 %v4857
    %v4996 = vunpack.c.l.b16 %v4858
    %v4997 = vpack.c.b16 %v4996, %v4995
    %v5000 = vsel %vm4644, %v4843, 0
    %5002 = vmatpush.bf16.msra.mxu0 0
    %5003 = vmatpush.bf16.msra.mxu0 0
    %5004 = vmatpush.bf16.msra.mxu0 0
    %5005 = vmatpush.bf16.msra.mxu0 0
    %5006 = vmatpush.bf16.msra.mxu0 0
    %5007 = vmatpush.bf16.msra.mxu0 0
    %5008 = vmatpush.bf16.msra.mxu0 0
    %5009 = vmatpush.bf16.msra.mxu0 %v4997
    %5010 = vmatmul.bf16.gmra.mxu0 %v5000
    %v5011 = vpop.f32.mrf.mxu0
    %v5012 = vadd.f32 0.0, %v5011
    %v5013 = vpop.f32.mrf.mxu0
    %5014 = vdwg.mxu0
    %v5017 = vunpack.c.l.b16 %v4859
    %v5018 = vunpack.c.l.b16 %v4860
    %v5019 = vpack.c.b16 %v5018, %v5017
    %v5022 = vsel %vm4644, %v4844, 0
    %5024 = vmatpush.bf16.msra.mxu0 0
    %5025 = vmatpush.bf16.msra.mxu0 0
    %5026 = vmatpush.bf16.msra.mxu0 0
    %5027 = vmatpush.bf16.msra.mxu0 0
    %5028 = vmatpush.bf16.msra.mxu0 0
    %5029 = vmatpush.bf16.msra.mxu0 0
    %5030 = vmatpush.bf16.msra.mxu0 0
    %5031 = vmatpush.bf16.msra.mxu0 %v5019
    %5032 = vmatmul.bf16.gmra.mxu0 %v5022
    %v5033 = vpop.f32.mrf.mxu0
    %v5034 = vadd.f32 0.0, %v5033
    %v5035 = vpop.f32.mrf.mxu0
    %5036 = vdwg.mxu0
    %5037 = vst.msk [vmem:[#allocation17] sm:$0xff] %vm4644, %v4731
    %5038 = vst.msk [vmem:[#allocation17 + $0x8] sm:$0xff] %vm4644, %v4746
    %5039 = vst.msk [vmem:[#allocation17 + $0x10] sm:$0xff] %vm4644, %v4761
    %5040 = vst.msk [vmem:[#allocation17 + $0x18] sm:$0xff] %vm4644, %v4776
    %5041 = vst.msk [vmem:[#allocation17 + $0x20] sm:$0xff] %vm4644, %v4791
    %5042 = vst.msk [vmem:[#allocation17 + $0x28] sm:$0xff] %vm4644, %v4806
    %5043 = vst.msk [vmem:[#allocation17 + $0x30] sm:$0xff] %vm4644, %v4821
    %5044 = vst.msk [vmem:[#allocation17 + $0x38] sm:$0xff] %vm4644, %v4836
    %v5045 = vpack.c.bf16 %v4880, %v4880
    %v5046 = vpack.c.bf16 %v4902, %v4902
    %v5047 = vpack.c.bf16 %v4924, %v4924
    %v5048 = vpack.c.bf16 %v4946, %v4946
    %v5049 = vpack.c.bf16 %v4968, %v4968
    %v5050 = vpack.c.bf16 %v4990, %v4990
    %v5051 = vpack.c.bf16 %v5012, %v5012
    %v5052 = vpack.c.bf16 %v5034, %v5034
    %v5053 = vld [vmem:[#allocation13] sm:$0xf]
    %v5054 = vld [vmem:[#allocation13 + $0x4] sm:$0xf]
    %v5055 = vld [vmem:[#allocation13 + $0x8] sm:$0xf]
    %v5056 = vld [vmem:[#allocation13 + $0xc] sm:$0xf]
    %v5057 = vld [vmem:[#allocation13 + $0x10] sm:$0xf]
    %v5058 = vld [vmem:[#allocation13 + $0x14] sm:$0xf]
    %v5059 = vld [vmem:[#allocation13 + $0x18] sm:$0xf]
    %v5060 = vld [vmem:[#allocation13 + $0x1c] sm:$0xf]
    %v5062 = vsel %vm1056, %v5045, 0
    %v5065 = vsel %vm1316, %v5053, 0
    %5067 = vmatpush.bf16.msra.mxu0 0
    %5068 = vmatpush.bf16.msra.mxu0 0
    %5069 = vmatpush.bf16.msra.mxu0 0
    %5070 = vmatpush.bf16.msra.mxu0 0
    %5071 = vmatpush.bf16.msra.mxu0 0
    %5072 = vmatpush.bf16.msra.mxu0 0
    %5073 = vmatpush.bf16.msra.mxu0 0
    %5074 = vmatpush.bf16.msra.mxu0 %v5065
    %5075 = vmatmul.bf16.gmra.mxu0 %v5062
    %v5076 = vpop.f32.mrf.mxu0
    %v5077 = vadd.f32 0.0, %v5076
    %v5078 = vpop.f32.mrf.mxu0
    %5079 = vdwg.mxu0
    %v5081 = vsel %vm1056, %v5046, 0
    %v5084 = vsel %vm1316, %v5054, 0
    %5086 = vmatpush.bf16.msra.mxu0 0
    %5087 = vmatpush.bf16.msra.mxu0 0
    %5088 = vmatpush.bf16.msra.mxu0 0
    %5089 = vmatpush.bf16.msra.mxu0 0
    %5090 = vmatpush.bf16.msra.mxu0 0
    %5091 = vmatpush.bf16.msra.mxu0 0
    %5092 = vmatpush.bf16.msra.mxu0 0
    %5093 = vmatpush.bf16.msra.mxu0 %v5084
    %5094 = vmatmul.bf16.gmra.mxu0 %v5081
    %v5095 = vpop.f32.mrf.mxu0
    %v5096 = vadd.f32 0.0, %v5095
    %v5097 = vpop.f32.mrf.mxu0
    %5098 = vdwg.mxu0
    %v5100 = vsel %vm1056, %v5047, 0
    %v5103 = vsel %vm1316, %v5055, 0
    %5105 = vmatpush.bf16.msra.mxu0 0
    %5106 = vmatpush.bf16.msra.mxu0 0
    %5107 = vmatpush.bf16.msra.mxu0 0
    %5108 = vmatpush.bf16.msra.mxu0 0
    %5109 = vmatpush.bf16.msra.mxu0 0
    %5110 = vmatpush.bf16.msra.mxu0 0
    %5111 = vmatpush.bf16.msra.mxu0 0
    %5112 = vmatpush.bf16.msra.mxu0 %v5103
    %5113 = vmatmul.bf16.gmra.mxu0 %v5100
    %v5114 = vpop.f32.mrf.mxu0
    %v5115 = vadd.f32 0.0, %v5114
    %v5116 = vpop.f32.mrf.mxu0
    %5117 = vdwg.mxu0
    %v5119 = vsel %vm1056, %v5048, 0
    %v5122 = vsel %vm1316, %v5056, 0
    %5124 = vmatpush.bf16.msra.mxu0 0
    %5125 = vmatpush.bf16.msra.mxu0 0
    %5126 = vmatpush.bf16.msra.mxu0 0
    %5127 = vmatpush.bf16.msra.mxu0 0
    %5128 = vmatpush.bf16.msra.mxu0 0
    %5129 = vmatpush.bf16.msra.mxu0 0
    %5130 = vmatpush.bf16.msra.mxu0 0
    %5131 = vmatpush.bf16.msra.mxu0 %v5122
    %5132 = vmatmul.bf16.gmra.mxu0 %v5119
    %v5133 = vpop.f32.mrf.mxu0
    %v5134 = vadd.f32 0.0, %v5133
    %v5135 = vpop.f32.mrf.mxu0
    %5136 = vdwg.mxu0
    %v5138 = vsel %vm1056, %v5049, 0
    %v5141 = vsel %vm1316, %v5057, 0
    %5143 = vmatpush.bf16.msra.mxu0 0
    %5144 = vmatpush.bf16.msra.mxu0 0
    %5145 = vmatpush.bf16.msra.mxu0 0
    %5146 = vmatpush.bf16.msra.mxu0 0
    %5147 = vmatpush.bf16.msra.mxu0 0
    %5148 = vmatpush.bf16.msra.mxu0 0
    %5149 = vmatpush.bf16.msra.mxu0 0
    %5150 = vmatpush.bf16.msra.mxu0 %v5141
    %5151 = vmatmul.bf16.gmra.mxu0 %v5138
    %v5152 = vpop.f32.mrf.mxu0
    %v5153 = vadd.f32 0.0, %v5152
    %v5154 = vpop.f32.mrf.mxu0
    %5155 = vdwg.mxu0
    %v5157 = vsel %vm1056, %v5050, 0
    %v5160 = vsel %vm1316, %v5058, 0
    %5162 = vmatpush.bf16.msra.mxu0 0
    %5163 = vmatpush.bf16.msra.mxu0 0
    %5164 = vmatpush.bf16.msra.mxu0 0
    %5165 = vmatpush.bf16.msra.mxu0 0
    %5166 = vmatpush.bf16.msra.mxu0 0
    %5167 = vmatpush.bf16.msra.mxu0 0
    %5168 = vmatpush.bf16.msra.mxu0 0
    %5169 = vmatpush.bf16.msra.mxu0 %v5160
    %5170 = vmatmul.bf16.gmra.mxu0 %v5157
    %v5171 = vpop.f32.mrf.mxu0
    %v5172 = vadd.f32 0.0, %v5171
    %v5173 = vpop.f32.mrf.mxu0
    %5174 = vdwg.mxu0
    %v5176 = vsel %vm1056, %v5051, 0
    %v5179 = vsel %vm1316, %v5059, 0
    %5181 = vmatpush.bf16.msra.mxu0 0
    %5182 = vmatpush.bf16.msra.mxu0 0
    %5183 = vmatpush.bf16.msra.mxu0 0
    %5184 = vmatpush.bf16.msra.mxu0 0
    %5185 = vmatpush.bf16.msra.mxu0 0
    %5186 = vmatpush.bf16.msra.mxu0 0
    %5187 = vmatpush.bf16.msra.mxu0 0
    %5188 = vmatpush.bf16.msra.mxu0 %v5179
    %5189 = vmatmul.bf16.gmra.mxu0 %v5176
    %v5190 = vpop.f32.mrf.mxu0
    %v5191 = vadd.f32 0.0, %v5190
    %v5192 = vpop.f32.mrf.mxu0
    %5193 = vdwg.mxu0
    %v5195 = vsel %vm1056, %v5052, 0
    %v5198 = vsel %vm1316, %v5060, 0
    %5200 = vmatpush.bf16.msra.mxu0 0
    %5201 = vmatpush.bf16.msra.mxu0 0
    %5202 = vmatpush.bf16.msra.mxu0 0
    %5203 = vmatpush.bf16.msra.mxu0 0
    %5204 = vmatpush.bf16.msra.mxu0 0
    %5205 = vmatpush.bf16.msra.mxu0 0
    %5206 = vmatpush.bf16.msra.mxu0 0
    %5207 = vmatpush.bf16.msra.mxu0 %v5198
    %5208 = vmatmul.bf16.gmra.mxu0 %v5195
    %v5209 = vpop.f32.mrf.mxu0
    %v5210 = vadd.f32 0.0, %v5209
    %v5211 = vpop.f32.mrf.mxu0
    %5212 = vdwg.mxu0
    %v5213 = vsel %vm266, %v5077, 0.0
    %v5214 = vsel %vm266, %v5096, 0.0
    %v5215 = vadd.f32 %v5213, %v5214
    %v5216 = vsel %vm266, %v5115, 0.0
    %v5217 = vadd.f32 %v5215, %v5216
    %v5218 = vsel %vm266, %v5134, 0.0
    %v5219 = vadd.f32 %v5217, %v5218
    %v5220 = vsel %vm266, %v5153, 0.0
    %v5221 = vadd.f32 %v5219, %v5220
    %v5222 = vsel %vm266, %v5172, 0.0
    %v5223 = vadd.f32 %v5221, %v5222
    %v5224 = vsel %vm266, %v5191, 0.0
    %v5225 = vadd.f32 %v5223, %v5224
    %v5226 = vsel %vm266, %v5210, 0.0
    %v5227 = vadd.f32 %v5225, %v5226
    %5229 = vrot.lane.b32.xlu0 %v3125, 120
    %v5230 = vpop.permute.xlu0 %5229
    %5232 = vrot.lane.b32.xlu0 %v3125, 112
    %v5233 = vpop.permute.xlu0 %5232
    %5235 = vrot.lane.b32.xlu0 %v3125, 104
    %v5236 = vpop.permute.xlu0 %5235
    %5238 = vrot.lane.b32.xlu0 %v3125, 96
    %v5239 = vpop.permute.xlu0 %5238
    %5241 = vrot.lane.b32.xlu0 %v3125, 88
    %v5242 = vpop.permute.xlu0 %5241
    %5244 = vrot.lane.b32.xlu0 %v3125, 80
    %v5245 = vpop.permute.xlu0 %5244
    %5247 = vrot.lane.b32.xlu0 %v3125, 72
    %v5248 = vpop.permute.xlu0 %5247
    %v5250 = vrot.slane %v5233, 4
    %v5251 = vsel %vm321, %v5250, %v3125
    %v5252 = vrot.slane %v3125, 4
    %v5253 = vsel %vm321, %v5233, %v5252
    %v5255 = vunpack.c.l.s4 1983009808
    %v5256 = vunpack.c.0.s8 %v5255
    %v5257 = vperm.slane %v5251, %v5256
    %v5259 = vunpack.c.l.s4 1983009808
    %v5260 = vunpack.c.0.s8 %v5259
    %v5261 = vperm.slane %v5253, %v5260
    %v5262 = vrot.slane %v5236, 4
    %v5263 = vsel %vm321, %v5262, %v5230
    %v5264 = vrot.slane %v5230, 4
    %v5265 = vsel %vm321, %v5236, %v5264
    %v5267 = vunpack.c.l.s4 1983009808
    %v5268 = vunpack.c.0.s8 %v5267
    %v5269 = vperm.slane %v5263, %v5268
    %v5271 = vunpack.c.l.s4 1983009808
    %v5272 = vunpack.c.0.s8 %v5271
    %v5273 = vperm.slane %v5265, %v5272
    %v5274 = vrot.slane %v5245, 4
    %v5275 = vsel %vm321, %v5274, %v5239
    %v5276 = vrot.slane %v5239, 4
    %v5277 = vsel %vm321, %v5245, %v5276
    %v5279 = vunpack.c.l.s4 1983009808
    %v5280 = vunpack.c.0.s8 %v5279
    %v5281 = vperm.slane %v5275, %v5280
    %v5283 = vunpack.c.l.s4 1983009808
    %v5284 = vunpack.c.0.s8 %v5283
    %v5285 = vperm.slane %v5277, %v5284
    %v5286 = vrot.slane %v5248, 4
    %v5287 = vsel %vm321, %v5286, %v5242
    %v5288 = vrot.slane %v5242, 4
    %v5289 = vsel %vm321, %v5248, %v5288
    %v5291 = vunpack.c.l.s4 1983009808
    %v5292 = vunpack.c.0.s8 %v5291
    %v5293 = vperm.slane %v5287, %v5292
    %v5295 = vunpack.c.l.s4 1983009808
    %v5296 = vunpack.c.0.s8 %v5295
    %v5297 = vperm.slane %v5289, %v5296
    %v5298 = vrot.slane %v5269, 4
    %v5299 = vsel %vm321, %v5298, %v5257
    %v5300 = vrot.slane %v5257, 4
    %v5301 = vsel %vm321, %v5269, %v5300
    %v5303 = vunpack.c.l.s4 1934713408
    %v5304 = vunpack.c.0.s8 %v5303
    %v5305 = vperm.slane %v5299, %v5304
    %v5307 = vunpack.c.l.s4 1934713408
    %v5308 = vunpack.c.0.s8 %v5307
    %v5309 = vperm.slane %v5301, %v5308
    %v5310 = vrot.slane %v5273, 4
    %v5311 = vsel %vm321, %v5310, %v5261
    %v5312 = vrot.slane %v5261, 4
    %v5313 = vsel %vm321, %v5273, %v5312
    %v5315 = vunpack.c.l.s4 1934713408
    %v5316 = vunpack.c.0.s8 %v5315
    %v5317 = vperm.slane %v5311, %v5316
    %v5319 = vunpack.c.l.s4 1934713408
    %v5320 = vunpack.c.0.s8 %v5319
    %v5321 = vperm.slane %v5313, %v5320
    %v5322 = vrot.slane %v5293, 4
    %v5323 = vsel %vm321, %v5322, %v5281
    %v5324 = vrot.slane %v5281, 4
    %v5325 = vsel %vm321, %v5293, %v5324
    %v5327 = vunpack.c.l.s4 1934713408
    %v5328 = vunpack.c.0.s8 %v5327
    %v5329 = vperm.slane %v5323, %v5328
    %v5331 = vunpack.c.l.s4 1934713408
    %v5332 = vunpack.c.0.s8 %v5331
    %v5333 = vperm.slane %v5325, %v5332
    %v5334 = vrot.slane %v5297, 4
    %v5335 = vsel %vm321, %v5334, %v5285
    %v5336 = vrot.slane %v5285, 4
    %v5337 = vsel %vm321, %v5297, %v5336
    %v5339 = vunpack.c.l.s4 1934713408
    %v5340 = vunpack.c.0.s8 %v5339
    %v5341 = vperm.slane %v5335, %v5340
    %v5343 = vunpack.c.l.s4 1934713408
    %v5344 = vunpack.c.0.s8 %v5343
    %v5345 = vperm.slane %v5337, %v5344
    %v5346 = vrot.slane %v5329, 4
    %v5347 = vsel %vm321, %v5346, %v5305
    %v5348 = vrot.slane %v5305, 4
    %v5349 = vsel %vm321, %v5329, %v5348
    %v5350 = vrot.slane %v5333, 4
    %v5351 = vsel %vm321, %v5350, %v5309
    %v5352 = vrot.slane %v5309, 4
    %v5353 = vsel %vm321, %v5333, %v5352
    %v5354 = vrot.slane %v5341, 4
    %v5355 = vsel %vm321, %v5354, %v5317
    %v5356 = vrot.slane %v5317, 4
    %v5357 = vsel %vm321, %v5341, %v5356
    %v5358 = vrot.slane %v5345, 4
    %v5359 = vsel %vm321, %v5358, %v5321
    %v5360 = vrot.slane %v5321, 4
    %v5361 = vsel %vm321, %v5345, %v5360
    %v5362 = vrot.slane %v5351, 4
    %v5363 = vsel %vm321, %v5362, %v5347
    %v5364 = vrot.slane %v5347, 4
    %v5365 = vsel %vm321, %v5351, %v5364
    %v5367 = vunpack.c.l.s4 1983009808
    %v5368 = vunpack.c.0.s8 %v5367
    %v5369 = vperm.slane %v5363, %v5368
    %v5371 = vunpack.c.l.s4 1983009808
    %v5372 = vunpack.c.0.s8 %v5371
    %v5373 = vperm.slane %v5365, %v5372
    %v5374 = vrot.slane %v5353, 4
    %v5375 = vsel %vm321, %v5374, %v5349
    %v5376 = vrot.slane %v5349, 4
    %v5377 = vsel %vm321, %v5353, %v5376
    %v5379 = vunpack.c.l.s4 1983009808
    %v5380 = vunpack.c.0.s8 %v5379
    %v5381 = vperm.slane %v5375, %v5380
    %v5383 = vunpack.c.l.s4 1983009808
    %v5384 = vunpack.c.0.s8 %v5383
    %v5385 = vperm.slane %v5377, %v5384
    %v5386 = vrot.slane %v5359, 4
    %v5387 = vsel %vm321, %v5386, %v5355
    %v5388 = vrot.slane %v5355, 4
    %v5389 = vsel %vm321, %v5359, %v5388
    %v5391 = vunpack.c.l.s4 1983009808
    %v5392 = vunpack.c.0.s8 %v5391
    %v5393 = vperm.slane %v5387, %v5392
    %v5395 = vunpack.c.l.s4 1983009808
    %v5396 = vunpack.c.0.s8 %v5395
    %v5397 = vperm.slane %v5389, %v5396
    %v5398 = vrot.slane %v5361, 4
    %v5399 = vsel %vm321, %v5398, %v5357
    %v5400 = vrot.slane %v5357, 4
    %v5401 = vsel %vm321, %v5361, %v5400
    %v5403 = vunpack.c.l.s4 1983009808
    %v5404 = vunpack.c.0.s8 %v5403
    %v5405 = vperm.slane %v5399, %v5404
    %v5407 = vunpack.c.l.s4 1983009808
    %v5408 = vunpack.c.0.s8 %v5407
    %v5409 = vperm.slane %v5401, %v5408
    %v5410 = vrot.slane %v5381, 4
    %v5411 = vsel %vm321, %v5410, %v5369
    %v5412 = vrot.slane %v5369, 4
    %v5413 = vsel %vm321, %v5381, %v5412
    %v5415 = vunpack.c.l.s4 1934713408
    %v5416 = vunpack.c.0.s8 %v5415
    %v5417 = vperm.slane %v5411, %v5416
    %v5419 = vunpack.c.l.s4 1934713408
    %v5420 = vunpack.c.0.s8 %v5419
    %v5421 = vperm.slane %v5413, %v5420
    %v5422 = vrot.slane %v5385, 4
    %v5423 = vsel %vm321, %v5422, %v5373
    %v5424 = vrot.slane %v5373, 4
    %v5425 = vsel %vm321, %v5385, %v5424
    %v5427 = vunpack.c.l.s4 1934713408
    %v5428 = vunpack.c.0.s8 %v5427
    %v5429 = vperm.slane %v5423, %v5428
    %v5431 = vunpack.c.l.s4 1934713408
    %v5432 = vunpack.c.0.s8 %v5431
    %v5433 = vperm.slane %v5425, %v5432
    %v5434 = vrot.slane %v5405, 4
    %v5435 = vsel %vm321, %v5434, %v5393
    %v5436 = vrot.slane %v5393, 4
    %v5437 = vsel %vm321, %v5405, %v5436
    %v5439 = vunpack.c.l.s4 1934713408
    %v5440 = vunpack.c.0.s8 %v5439
    %v5441 = vperm.slane %v5435, %v5440
    %v5443 = vunpack.c.l.s4 1934713408
    %v5444 = vunpack.c.0.s8 %v5443
    %v5445 = vperm.slane %v5437, %v5444
    %v5446 = vrot.slane %v5409, 4
    %v5447 = vsel %vm321, %v5446, %v5397
    %v5448 = vrot.slane %v5397, 4
    %v5449 = vsel %vm321, %v5409, %v5448
    %v5451 = vunpack.c.l.s4 1934713408
    %v5452 = vunpack.c.0.s8 %v5451
    %v5453 = vperm.slane %v5447, %v5452
    %v5455 = vunpack.c.l.s4 1934713408
    %v5456 = vunpack.c.0.s8 %v5455
    %v5457 = vperm.slane %v5449, %v5456
    %v5458 = vrot.slane %v5441, 4
    %v5459 = vsel %vm321, %v5458, %v5417
    %v5460 = vrot.slane %v5417, 4
    %v5461 = vsel %vm321, %v5441, %v5460
    %v5462 = vrot.slane %v5445, 4
    %v5463 = vsel %vm321, %v5462, %v5421
    %v5464 = vrot.slane %v5421, 4
    %v5465 = vsel %vm321, %v5445, %v5464
    %v5466 = vrot.slane %v5453, 4
    %v5467 = vsel %vm321, %v5466, %v5429
    %v5468 = vrot.slane %v5429, 4
    %v5469 = vsel %vm321, %v5453, %v5468
    %v5470 = vrot.slane %v5457, 4
    %v5471 = vsel %vm321, %v5470, %v5433
    %v5472 = vrot.slane %v5433, 4
    %v5473 = vsel %vm321, %v5457, %v5472
    %5476 = vrot.lane.b32.xlu0 %v3186, 120
    %v5477 = vpop.permute.xlu0 %5476
    %5478 = vrot.lane.b32.xlu0 %v3188, 120
    %v5479 = vpop.permute.xlu0 %5478
    %5482 = vrot.lane.b32.xlu0 %v3186, 112
    %v5483 = vpop.permute.xlu0 %5482
    %5484 = vrot.lane.b32.xlu0 %v3188, 112
    %v5485 = vpop.permute.xlu0 %5484
    %5488 = vrot.lane.b32.xlu0 %v3186, 104
    %v5489 = vpop.permute.xlu0 %5488
    %5490 = vrot.lane.b32.xlu0 %v3188, 104
    %v5491 = vpop.permute.xlu0 %5490
    %5494 = vrot.lane.b32.xlu0 %v3186, 96
    %v5495 = vpop.permute.xlu0 %5494
    %5496 = vrot.lane.b32.xlu0 %v3188, 96
    %v5497 = vpop.permute.xlu0 %5496
    %5500 = vrot.lane.b32.xlu0 %v3186, 88
    %v5501 = vpop.permute.xlu0 %5500
    %5502 = vrot.lane.b32.xlu0 %v3188, 88
    %v5503 = vpop.permute.xlu0 %5502
    %5506 = vrot.lane.b32.xlu0 %v3186, 80
    %v5507 = vpop.permute.xlu0 %5506
    %5508 = vrot.lane.b32.xlu0 %v3188, 80
    %v5509 = vpop.permute.xlu0 %5508
    %5512 = vrot.lane.b32.xlu0 %v3186, 72
    %v5513 = vpop.permute.xlu0 %5512
    %5514 = vrot.lane.b32.xlu0 %v3188, 72
    %v5515 = vpop.permute.xlu0 %5514
    %v5518 = vrot.slane %v5483, 4
    %v5519 = vsel %vm321, %v5518, %v3186
    %v5520 = vrot.slane %v3186, 4
    %v5521 = vsel %vm321, %v5483, %v5520
    %v5523 = vunpack.c.l.s4 1983009808
    %v5524 = vunpack.c.0.s8 %v5523
    %v5525 = vperm.slane %v5519, %v5524
    %v5527 = vunpack.c.l.s4 1983009808
    %v5528 = vunpack.c.0.s8 %v5527
    %v5529 = vperm.slane %v5521, %v5528
    %v5530 = vrot.slane %v5489, 4
    %v5531 = vsel %vm321, %v5530, %v5477
    %v5532 = vrot.slane %v5477, 4
    %v5533 = vsel %vm321, %v5489, %v5532
    %v5535 = vunpack.c.l.s4 1983009808
    %v5536 = vunpack.c.0.s8 %v5535
    %v5537 = vperm.slane %v5531, %v5536
    %v5539 = vunpack.c.l.s4 1983009808
    %v5540 = vunpack.c.0.s8 %v5539
    %v5541 = vperm.slane %v5533, %v5540
    %v5542 = vrot.slane %v5507, 4
    %v5543 = vsel %vm321, %v5542, %v5495
    %v5544 = vrot.slane %v5495, 4
    %v5545 = vsel %vm321, %v5507, %v5544
    %v5547 = vunpack.c.l.s4 1983009808
    %v5548 = vunpack.c.0.s8 %v5547
    %v5549 = vperm.slane %v5543, %v5548
    %v5551 = vunpack.c.l.s4 1983009808
    %v5552 = vunpack.c.0.s8 %v5551
    %v5553 = vperm.slane %v5545, %v5552
    %v5554 = vrot.slane %v5513, 4
    %v5555 = vsel %vm321, %v5554, %v5501
    %v5556 = vrot.slane %v5501, 4
    %v5557 = vsel %vm321, %v5513, %v5556
    %v5559 = vunpack.c.l.s4 1983009808
    %v5560 = vunpack.c.0.s8 %v5559
    %v5561 = vperm.slane %v5555, %v5560
    %v5563 = vunpack.c.l.s4 1983009808
    %v5564 = vunpack.c.0.s8 %v5563
    %v5565 = vperm.slane %v5557, %v5564
    %v5566 = vrot.slane %v5537, 4
    %v5567 = vsel %vm321, %v5566, %v5525
    %v5568 = vrot.slane %v5525, 4
    %v5569 = vsel %vm321, %v5537, %v5568
    %v5571 = vunpack.c.l.s4 1934713408
    %v5572 = vunpack.c.0.s8 %v5571
    %v5573 = vperm.slane %v5567, %v5572
    %v5575 = vunpack.c.l.s4 1934713408
    %v5576 = vunpack.c.0.s8 %v5575
    %v5577 = vperm.slane %v5569, %v5576
    %v5578 = vrot.slane %v5541, 4
    %v5579 = vsel %vm321, %v5578, %v5529
    %v5580 = vrot.slane %v5529, 4
    %v5581 = vsel %vm321, %v5541, %v5580
    %v5583 = vunpack.c.l.s4 1934713408
    %v5584 = vunpack.c.0.s8 %v5583
    %v5585 = vperm.slane %v5579, %v5584
    %v5587 = vunpack.c.l.s4 1934713408
    %v5588 = vunpack.c.0.s8 %v5587
    %v5589 = vperm.slane %v5581, %v5588
    %v5590 = vrot.slane %v5561, 4
    %v5591 = vsel %vm321, %v5590, %v5549
    %v5592 = vrot.slane %v5549, 4
    %v5593 = vsel %vm321, %v5561, %v5592
    %v5595 = vunpack.c.l.s4 1934713408
    %v5596 = vunpack.c.0.s8 %v5595
    %v5597 = vperm.slane %v5591, %v5596
    %v5599 = vunpack.c.l.s4 1934713408
    %v5600 = vunpack.c.0.s8 %v5599
    %v5601 = vperm.slane %v5593, %v5600
    %v5602 = vrot.slane %v5565, 4
    %v5603 = vsel %vm321, %v5602, %v5553
    %v5604 = vrot.slane %v5553, 4
    %v5605 = vsel %vm321, %v5565, %v5604
    %v5607 = vunpack.c.l.s4 1934713408
    %v5608 = vunpack.c.0.s8 %v5607
    %v5609 = vperm.slane %v5603, %v5608
    %v5611 = vunpack.c.l.s4 1934713408
    %v5612 = vunpack.c.0.s8 %v5611
    %v5613 = vperm.slane %v5605, %v5612
    %v5614 = vrot.slane %v5597, 4
    %v5615 = vsel %vm321, %v5614, %v5573
    %v5616 = vrot.slane %v5573, 4
    %v5617 = vsel %vm321, %v5597, %v5616
    %v5618 = vrot.slane %v5601, 4
    %v5619 = vsel %vm321, %v5618, %v5577
    %v5620 = vrot.slane %v5577, 4
    %v5621 = vsel %vm321, %v5601, %v5620
    %v5622 = vrot.slane %v5609, 4
    %v5623 = vsel %vm321, %v5622, %v5585
    %v5624 = vrot.slane %v5585, 4
    %v5625 = vsel %vm321, %v5609, %v5624
    %v5626 = vrot.slane %v5613, 4
    %v5627 = vsel %vm321, %v5626, %v5589
    %v5628 = vrot.slane %v5589, 4
    %v5629 = vsel %vm321, %v5613, %v5628
    %v5630 = vrot.slane %v5485, 4
    %v5631 = vsel %vm321, %v5630, %v3188
    %v5632 = vrot.slane %v3188, 4
    %v5633 = vsel %vm321, %v5485, %v5632
    %v5635 = vunpack.c.l.s4 1983009808
    %v5636 = vunpack.c.0.s8 %v5635
    %v5637 = vperm.slane %v5631, %v5636
    %v5639 = vunpack.c.l.s4 1983009808
    %v5640 = vunpack.c.0.s8 %v5639
    %v5641 = vperm.slane %v5633, %v5640
    %v5642 = vrot.slane %v5491, 4
    %v5643 = vsel %vm321, %v5642, %v5479
    %v5644 = vrot.slane %v5479, 4
    %v5645 = vsel %vm321, %v5491, %v5644
    %v5647 = vunpack.c.l.s4 1983009808
    %v5648 = vunpack.c.0.s8 %v5647
    %v5649 = vperm.slane %v5643, %v5648
    %v5651 = vunpack.c.l.s4 1983009808
    %v5652 = vunpack.c.0.s8 %v5651
    %v5653 = vperm.slane %v5645, %v5652
    %v5654 = vrot.slane %v5509, 4
    %v5655 = vsel %vm321, %v5654, %v5497
    %v5656 = vrot.slane %v5497, 4
    %v5657 = vsel %vm321, %v5509, %v5656
    %v5659 = vunpack.c.l.s4 1983009808
    %v5660 = vunpack.c.0.s8 %v5659
    %v5661 = vperm.slane %v5655, %v5660
    %v5663 = vunpack.c.l.s4 1983009808
    %v5664 = vunpack.c.0.s8 %v5663
    %v5665 = vperm.slane %v5657, %v5664
    %v5666 = vrot.slane %v5515, 4
    %v5667 = vsel %vm321, %v5666, %v5503
    %v5668 = vrot.slane %v5503, 4
    %v5669 = vsel %vm321, %v5515, %v5668
    %v5671 = vunpack.c.l.s4 1983009808
    %v5672 = vunpack.c.0.s8 %v5671
    %v5673 = vperm.slane %v5667, %v5672
    %v5675 = vunpack.c.l.s4 1983009808
    %v5676 = vunpack.c.0.s8 %v5675
    %v5677 = vperm.slane %v5669, %v5676
    %v5678 = vrot.slane %v5649, 4
    %v5679 = vsel %vm321, %v5678, %v5637
    %v5680 = vrot.slane %v5637, 4
    %v5681 = vsel %vm321, %v5649, %v5680
    %v5683 = vunpack.c.l.s4 1934713408
    %v5684 = vunpack.c.0.s8 %v5683
    %v5685 = vperm.slane %v5679, %v5684
    %v5687 = vunpack.c.l.s4 1934713408
    %v5688 = vunpack.c.0.s8 %v5687
    %v5689 = vperm.slane %v5681, %v5688
    %v5690 = vrot.slane %v5653, 4
    %v5691 = vsel %vm321, %v5690, %v5641
    %v5692 = vrot.slane %v5641, 4
    %v5693 = vsel %vm321, %v5653, %v5692
    %v5695 = vunpack.c.l.s4 1934713408
    %v5696 = vunpack.c.0.s8 %v5695
    %v5697 = vperm.slane %v5691, %v5696
    %v5699 = vunpack.c.l.s4 1934713408
    %v5700 = vunpack.c.0.s8 %v5699
    %v5701 = vperm.slane %v5693, %v5700
    %v5702 = vrot.slane %v5673, 4
    %v5703 = vsel %vm321, %v5702, %v5661
    %v5704 = vrot.slane %v5661, 4
    %v5705 = vsel %vm321, %v5673, %v5704
    %v5707 = vunpack.c.l.s4 1934713408
    %v5708 = vunpack.c.0.s8 %v5707
    %v5709 = vperm.slane %v5703, %v5708
    %v5711 = vunpack.c.l.s4 1934713408
    %v5712 = vunpack.c.0.s8 %v5711
    %v5713 = vperm.slane %v5705, %v5712
    %v5714 = vrot.slane %v5677, 4
    %v5715 = vsel %vm321, %v5714, %v5665
    %v5716 = vrot.slane %v5665, 4
    %v5717 = vsel %vm321, %v5677, %v5716
    %v5719 = vunpack.c.l.s4 1934713408
    %v5720 = vunpack.c.0.s8 %v5719
    %v5721 = vperm.slane %v5715, %v5720
    %v5723 = vunpack.c.l.s4 1934713408
    %v5724 = vunpack.c.0.s8 %v5723
    %v5725 = vperm.slane %v5717, %v5724
    %v5726 = vrot.slane %v5709, 4
    %v5727 = vsel %vm321, %v5726, %v5685
    %v5728 = vrot.slane %v5685, 4
    %v5729 = vsel %vm321, %v5709, %v5728
    %v5730 = vrot.slane %v5713, 4
    %v5731 = vsel %vm321, %v5730, %v5689
    %v5732 = vrot.slane %v5689, 4
    %v5733 = vsel %vm321, %v5713, %v5732
    %v5734 = vrot.slane %v5721, 4
    %v5735 = vsel %vm321, %v5734, %v5697
    %v5736 = vrot.slane %v5697, 4
    %v5737 = vsel %vm321, %v5721, %v5736
    %v5738 = vrot.slane %v5725, 4
    %v5739 = vsel %vm321, %v5738, %v5701
    %v5740 = vrot.slane %v5701, 4
    %v5741 = vsel %vm321, %v5725, %v5740
    %v5742 = vrot.slane %v5619, 4
    %v5743 = vsel %vm321, %v5742, %v5615
    %v5744 = vrot.slane %v5615, 4
    %v5745 = vsel %vm321, %v5619, %v5744
    %v5747 = vunpack.c.l.s4 1983009808
    %v5748 = vunpack.c.0.s8 %v5747
    %v5749 = vperm.slane %v5743, %v5748
    %v5751 = vunpack.c.l.s4 1983009808
    %v5752 = vunpack.c.0.s8 %v5751
    %v5753 = vperm.slane %v5745, %v5752
    %v5754 = vrot.slane %v5621, 4
    %v5755 = vsel %vm321, %v5754, %v5617
    %v5756 = vrot.slane %v5617, 4
    %v5757 = vsel %vm321, %v5621, %v5756
    %v5759 = vunpack.c.l.s4 1983009808
    %v5760 = vunpack.c.0.s8 %v5759
    %v5761 = vperm.slane %v5755, %v5760
    %v5763 = vunpack.c.l.s4 1983009808
    %v5764 = vunpack.c.0.s8 %v5763
    %v5765 = vperm.slane %v5757, %v5764
    %v5766 = vrot.slane %v5627, 4
    %v5767 = vsel %vm321, %v5766, %v5623
    %v5768 = vrot.slane %v5623, 4
    %v5769 = vsel %vm321, %v5627, %v5768
    %v5771 = vunpack.c.l.s4 1983009808
    %v5772 = vunpack.c.0.s8 %v5771
    %v5773 = vperm.slane %v5767, %v5772
    %v5775 = vunpack.c.l.s4 1983009808
    %v5776 = vunpack.c.0.s8 %v5775
    %v5777 = vperm.slane %v5769, %v5776
    %v5778 = vrot.slane %v5629, 4
    %v5779 = vsel %vm321, %v5778, %v5625
    %v5780 = vrot.slane %v5625, 4
    %v5781 = vsel %vm321, %v5629, %v5780
    %v5783 = vunpack.c.l.s4 1983009808
    %v5784 = vunpack.c.0.s8 %v5783
    %v5785 = vperm.slane %v5779, %v5784
    %v5787 = vunpack.c.l.s4 1983009808
    %v5788 = vunpack.c.0.s8 %v5787
    %v5789 = vperm.slane %v5781, %v5788
    %v5790 = vrot.slane %v5761, 4
    %v5791 = vsel %vm321, %v5790, %v5749
    %v5792 = vrot.slane %v5749, 4
    %v5793 = vsel %vm321, %v5761, %v5792
    %v5795 = vunpack.c.l.s4 1934713408
    %v5796 = vunpack.c.0.s8 %v5795
    %v5797 = vperm.slane %v5791, %v5796
    %v5799 = vunpack.c.l.s4 1934713408
    %v5800 = vunpack.c.0.s8 %v5799
    %v5801 = vperm.slane %v5793, %v5800
    %v5802 = vrot.slane %v5765, 4
    %v5803 = vsel %vm321, %v5802, %v5753
    %v5804 = vrot.slane %v5753, 4
    %v5805 = vsel %vm321, %v5765, %v5804
    %v5807 = vunpack.c.l.s4 1934713408
    %v5808 = vunpack.c.0.s8 %v5807
    %v5809 = vperm.slane %v5803, %v5808
    %v5811 = vunpack.c.l.s4 1934713408
    %v5812 = vunpack.c.0.s8 %v5811
    %v5813 = vperm.slane %v5805, %v5812
    %v5814 = vrot.slane %v5785, 4
    %v5815 = vsel %vm321, %v5814, %v5773
    %v5816 = vrot.slane %v5773, 4
    %v5817 = vsel %vm321, %v5785, %v5816
    %v5819 = vunpack.c.l.s4 1934713408
    %v5820 = vunpack.c.0.s8 %v5819
    %v5821 = vperm.slane %v5815, %v5820
    %v5823 = vunpack.c.l.s4 1934713408
    %v5824 = vunpack.c.0.s8 %v5823
    %v5825 = vperm.slane %v5817, %v5824
    %v5826 = vrot.slane %v5789, 4
    %v5827 = vsel %vm321, %v5826, %v5777
    %v5828 = vrot.slane %v5777, 4
    %v5829 = vsel %vm321, %v5789, %v5828
    %v5831 = vunpack.c.l.s4 1934713408
    %v5832 = vunpack.c.0.s8 %v5831
    %v5833 = vperm.slane %v5827, %v5832
    %v5835 = vunpack.c.l.s4 1934713408
    %v5836 = vunpack.c.0.s8 %v5835
    %v5837 = vperm.slane %v5829, %v5836
    %v5838 = vrot.slane %v5821, 4
    %v5839 = vsel %vm321, %v5838, %v5797
    %v5840 = vrot.slane %v5797, 4
    %v5841 = vsel %vm321, %v5821, %v5840
    %v5842 = vrot.slane %v5825, 4
    %v5843 = vsel %vm321, %v5842, %v5801
    %v5844 = vrot.slane %v5801, 4
    %v5845 = vsel %vm321, %v5825, %v5844
    %v5846 = vrot.slane %v5833, 4
    %v5847 = vsel %vm321, %v5846, %v5809
    %v5848 = vrot.slane %v5809, 4
    %v5849 = vsel %vm321, %v5833, %v5848
    %v5850 = vrot.slane %v5837, 4
    %v5851 = vsel %vm321, %v5850, %v5813
    %v5852 = vrot.slane %v5813, 4
    %v5853 = vsel %vm321, %v5837, %v5852
    %v5854 = vrot.slane %v5731, 4
    %v5855 = vsel %vm321, %v5854, %v5727
    %v5856 = vrot.slane %v5727, 4
    %v5857 = vsel %vm321, %v5731, %v5856
    %v5859 = vunpack.c.l.s4 1983009808
    %v5860 = vunpack.c.0.s8 %v5859
    %v5861 = vperm.slane %v5855, %v5860
    %v5863 = vunpack.c.l.s4 1983009808
    %v5864 = vunpack.c.0.s8 %v5863
    %v5865 = vperm.slane %v5857, %v5864
    %v5866 = vrot.slane %v5733, 4
    %v5867 = vsel %vm321, %v5866, %v5729
    %v5868 = vrot.slane %v5729, 4
    %v5869 = vsel %vm321, %v5733, %v5868
    %v5871 = vunpack.c.l.s4 1983009808
    %v5872 = vunpack.c.0.s8 %v5871
    %v5873 = vperm.slane %v5867, %v5872
    %v5875 = vunpack.c.l.s4 1983009808
    %v5876 = vunpack.c.0.s8 %v5875
    %v5877 = vperm.slane %v5869, %v5876
    %v5878 = vrot.slane %v5739, 4
    %v5879 = vsel %vm321, %v5878, %v5735
    %v5880 = vrot.slane %v5735, 4
    %v5881 = vsel %vm321, %v5739, %v5880
    %v5883 = vunpack.c.l.s4 1983009808
    %v5884 = vunpack.c.0.s8 %v5883
    %v5885 = vperm.slane %v5879, %v5884
    %v5887 = vunpack.c.l.s4 1983009808
    %v5888 = vunpack.c.0.s8 %v5887
    %v5889 = vperm.slane %v5881, %v5888
    %v5890 = vrot.slane %v5741, 4
    %v5891 = vsel %vm321, %v5890, %v5737
    %v5892 = vrot.slane %v5737, 4
    %v5893 = vsel %vm321, %v5741, %v5892
    %v5895 = vunpack.c.l.s4 1983009808
    %v5896 = vunpack.c.0.s8 %v5895
    %v5897 = vperm.slane %v5891, %v5896
    %v5899 = vunpack.c.l.s4 1983009808
    %v5900 = vunpack.c.0.s8 %v5899
    %v5901 = vperm.slane %v5893, %v5900
    %v5902 = vrot.slane %v5873, 4
    %v5903 = vsel %vm321, %v5902, %v5861
    %v5904 = vrot.slane %v5861, 4
    %v5905 = vsel %vm321, %v5873, %v5904
    %v5907 = vunpack.c.l.s4 1934713408
    %v5908 = vunpack.c.0.s8 %v5907
    %v5909 = vperm.slane %v5903, %v5908
    %v5911 = vunpack.c.l.s4 1934713408
    %v5912 = vunpack.c.0.s8 %v5911
    %v5913 = vperm.slane %v5905, %v5912
    %v5914 = vrot.slane %v5877, 4
    %v5915 = vsel %vm321, %v5914, %v5865
    %v5916 = vrot.slane %v5865, 4
    %v5917 = vsel %vm321, %v5877, %v5916
    %v5919 = vunpack.c.l.s4 1934713408
    %v5920 = vunpack.c.0.s8 %v5919
    %v5921 = vperm.slane %v5915, %v5920
    %v5923 = vunpack.c.l.s4 1934713408
    %v5924 = vunpack.c.0.s8 %v5923
    %v5925 = vperm.slane %v5917, %v5924
    %v5926 = vrot.slane %v5897, 4
    %v5927 = vsel %vm321, %v5926, %v5885
    %v5928 = vrot.slane %v5885, 4
    %v5929 = vsel %vm321, %v5897, %v5928
    %v5931 = vunpack.c.l.s4 1934713408
    %v5932 = vunpack.c.0.s8 %v5931
    %v5933 = vperm.slane %v5927, %v5932
    %v5935 = vunpack.c.l.s4 1934713408
    %v5936 = vunpack.c.0.s8 %v5935
    %v5937 = vperm.slane %v5929, %v5936
    %v5938 = vrot.slane %v5901, 4
    %v5939 = vsel %vm321, %v5938, %v5889
    %v5940 = vrot.slane %v5889, 4
    %v5941 = vsel %vm321, %v5901, %v5940
    %v5943 = vunpack.c.l.s4 1934713408
    %v5944 = vunpack.c.0.s8 %v5943
    %v5945 = vperm.slane %v5939, %v5944
    %v5947 = vunpack.c.l.s4 1934713408
    %v5948 = vunpack.c.0.s8 %v5947
    %v5949 = vperm.slane %v5941, %v5948
    %v5950 = vrot.slane %v5933, 4
    %v5951 = vsel %vm321, %v5950, %v5909
    %v5952 = vrot.slane %v5909, 4
    %v5953 = vsel %vm321, %v5933, %v5952
    %v5954 = vrot.slane %v5937, 4
    %v5955 = vsel %vm321, %v5954, %v5913
    %v5956 = vrot.slane %v5913, 4
    %v5957 = vsel %vm321, %v5937, %v5956
    %v5958 = vrot.slane %v5945, 4
    %v5959 = vsel %vm321, %v5958, %v5921
    %v5960 = vrot.slane %v5921, 4
    %v5961 = vsel %vm321, %v5945, %v5960
    %v5962 = vrot.slane %v5949, 4
    %v5963 = vsel %vm321, %v5962, %v5925
    %v5964 = vrot.slane %v5925, 4
    %v5965 = vsel %vm321, %v5949, %v5964
    %5966 = vrot.lane.b32.xlu0 %v3186, 64
    %v5967 = vpop.permute.xlu0 %5966
    %5968 = vrot.lane.b32.xlu0 %v3188, 64
    %v5969 = vpop.permute.xlu0 %5968
    %5970 = vrot.lane.b32.xlu0 %v5477, 64
    %v5971 = vpop.permute.xlu0 %5970
    %5972 = vrot.lane.b32.xlu0 %v5479, 64
    %v5973 = vpop.permute.xlu0 %5972
    %5974 = vrot.lane.b32.xlu0 %v5483, 64
    %v5975 = vpop.permute.xlu0 %5974
    %5976 = vrot.lane.b32.xlu0 %v5485, 64
    %v5977 = vpop.permute.xlu0 %5976
    %5978 = vrot.lane.b32.xlu0 %v5489, 64
    %v5979 = vpop.permute.xlu0 %5978
    %5980 = vrot.lane.b32.xlu0 %v5491, 64
    %v5981 = vpop.permute.xlu0 %5980
    %5982 = vrot.lane.b32.xlu0 %v5495, 64
    %v5983 = vpop.permute.xlu0 %5982
    %5984 = vrot.lane.b32.xlu0 %v5497, 64
    %v5985 = vpop.permute.xlu0 %5984
    %5986 = vrot.lane.b32.xlu0 %v5501, 64
    %v5987 = vpop.permute.xlu0 %5986
    %5988 = vrot.lane.b32.xlu0 %v5503, 64
    %v5989 = vpop.permute.xlu0 %5988
    %5990 = vrot.lane.b32.xlu0 %v5507, 64
    %v5991 = vpop.permute.xlu0 %5990
    %5992 = vrot.lane.b32.xlu0 %v5509, 64
    %v5993 = vpop.permute.xlu0 %5992
    %5994 = vrot.lane.b32.xlu0 %v5513, 64
    %v5995 = vpop.permute.xlu0 %5994
    %5996 = vrot.lane.b32.xlu0 %v5515, 64
    %v5997 = vpop.permute.xlu0 %5996
    %v6014 = vrot.slane %v5975, 4
    %v6015 = vsel %vm321, %v6014, %v5967
    %v6016 = vrot.slane %v5967, 4
    %v6017 = vsel %vm321, %v5975, %v6016
    %v6019 = vunpack.c.l.s4 1983009808
    %v6020 = vunpack.c.0.s8 %v6019
    %v6021 = vperm.slane %v6015, %v6020
    %v6023 = vunpack.c.l.s4 1983009808
    %v6024 = vunpack.c.0.s8 %v6023
    %v6025 = vperm.slane %v6017, %v6024
    %v6026 = vrot.slane %v5979, 4
    %v6027 = vsel %vm321, %v6026, %v5971
    %v6028 = vrot.slane %v5971, 4
    %v6029 = vsel %vm321, %v5979, %v6028
    %v6031 = vunpack.c.l.s4 1983009808
    %v6032 = vunpack.c.0.s8 %v6031
    %v6033 = vperm.slane %v6027, %v6032
    %v6035 = vunpack.c.l.s4 1983009808
    %v6036 = vunpack.c.0.s8 %v6035
    %v6037 = vperm.slane %v6029, %v6036
    %v6038 = vrot.slane %v5991, 4
    %v6039 = vsel %vm321, %v6038, %v5983
    %v6040 = vrot.slane %v5983, 4
    %v6041 = vsel %vm321, %v5991, %v6040
    %v6043 = vunpack.c.l.s4 1983009808
    %v6044 = vunpack.c.0.s8 %v6043
    %v6045 = vperm.slane %v6039, %v6044
    %v6047 = vunpack.c.l.s4 1983009808
    %v6048 = vunpack.c.0.s8 %v6047
    %v6049 = vperm.slane %v6041, %v6048
    %v6050 = vrot.slane %v5995, 4
    %v6051 = vsel %vm321, %v6050, %v5987
    %v6052 = vrot.slane %v5987, 4
    %v6053 = vsel %vm321, %v5995, %v6052
    %v6055 = vunpack.c.l.s4 1983009808
    %v6056 = vunpack.c.0.s8 %v6055
    %v6057 = vperm.slane %v6051, %v6056
    %v6059 = vunpack.c.l.s4 1983009808
    %v6060 = vunpack.c.0.s8 %v6059
    %v6061 = vperm.slane %v6053, %v6060
    %v6062 = vrot.slane %v6033, 4
    %v6063 = vsel %vm321, %v6062, %v6021
    %v6064 = vrot.slane %v6021, 4
    %v6065 = vsel %vm321, %v6033, %v6064
    %v6067 = vunpack.c.l.s4 1934713408
    %v6068 = vunpack.c.0.s8 %v6067
    %v6069 = vperm.slane %v6063, %v6068
    %v6071 = vunpack.c.l.s4 1934713408
    %v6072 = vunpack.c.0.s8 %v6071
    %v6073 = vperm.slane %v6065, %v6072
    %v6074 = vrot.slane %v6037, 4
    %v6075 = vsel %vm321, %v6074, %v6025
    %v6076 = vrot.slane %v6025, 4
    %v6077 = vsel %vm321, %v6037, %v6076
    %v6079 = vunpack.c.l.s4 1934713408
    %v6080 = vunpack.c.0.s8 %v6079
    %v6081 = vperm.slane %v6075, %v6080
    %v6083 = vunpack.c.l.s4 1934713408
    %v6084 = vunpack.c.0.s8 %v6083
    %v6085 = vperm.slane %v6077, %v6084
    %v6086 = vrot.slane %v6057, 4
    %v6087 = vsel %vm321, %v6086, %v6045
    %v6088 = vrot.slane %v6045, 4
    %v6089 = vsel %vm321, %v6057, %v6088
    %v6091 = vunpack.c.l.s4 1934713408
    %v6092 = vunpack.c.0.s8 %v6091
    %v6093 = vperm.slane %v6087, %v6092
    %v6095 = vunpack.c.l.s4 1934713408
    %v6096 = vunpack.c.0.s8 %v6095
    %v6097 = vperm.slane %v6089, %v6096
    %v6098 = vrot.slane %v6061, 4
    %v6099 = vsel %vm321, %v6098, %v6049
    %v6100 = vrot.slane %v6049, 4
    %v6101 = vsel %vm321, %v6061, %v6100
    %v6103 = vunpack.c.l.s4 1934713408
    %v6104 = vunpack.c.0.s8 %v6103
    %v6105 = vperm.slane %v6099, %v6104
    %v6107 = vunpack.c.l.s4 1934713408
    %v6108 = vunpack.c.0.s8 %v6107
    %v6109 = vperm.slane %v6101, %v6108
    %v6110 = vrot.slane %v6093, 4
    %v6111 = vsel %vm321, %v6110, %v6069
    %v6112 = vrot.slane %v6069, 4
    %v6113 = vsel %vm321, %v6093, %v6112
    %v6114 = vrot.slane %v6097, 4
    %v6115 = vsel %vm321, %v6114, %v6073
    %v6116 = vrot.slane %v6073, 4
    %v6117 = vsel %vm321, %v6097, %v6116
    %v6118 = vrot.slane %v6105, 4
    %v6119 = vsel %vm321, %v6118, %v6081
    %v6120 = vrot.slane %v6081, 4
    %v6121 = vsel %vm321, %v6105, %v6120
    %v6122 = vrot.slane %v6109, 4
    %v6123 = vsel %vm321, %v6122, %v6085
    %v6124 = vrot.slane %v6085, 4
    %v6125 = vsel %vm321, %v6109, %v6124
    %v6126 = vrot.slane %v5977, 4
    %v6127 = vsel %vm321, %v6126, %v5969
    %v6128 = vrot.slane %v5969, 4
    %v6129 = vsel %vm321, %v5977, %v6128
    %v6131 = vunpack.c.l.s4 1983009808
    %v6132 = vunpack.c.0.s8 %v6131
    %v6133 = vperm.slane %v6127, %v6132
    %v6135 = vunpack.c.l.s4 1983009808
    %v6136 = vunpack.c.0.s8 %v6135
    %v6137 = vperm.slane %v6129, %v6136
    %v6138 = vrot.slane %v5981, 4
    %v6139 = vsel %vm321, %v6138, %v5973
    %v6140 = vrot.slane %v5973, 4
    %v6141 = vsel %vm321, %v5981, %v6140
    %v6143 = vunpack.c.l.s4 1983009808
    %v6144 = vunpack.c.0.s8 %v6143
    %v6145 = vperm.slane %v6139, %v6144
    %v6147 = vunpack.c.l.s4 1983009808
    %v6148 = vunpack.c.0.s8 %v6147
    %v6149 = vperm.slane %v6141, %v6148
    %v6150 = vrot.slane %v5993, 4
    %v6151 = vsel %vm321, %v6150, %v5985
    %v6152 = vrot.slane %v5985, 4
    %v6153 = vsel %vm321, %v5993, %v6152
    %v6155 = vunpack.c.l.s4 1983009808
    %v6156 = vunpack.c.0.s8 %v6155
    %v6157 = vperm.slane %v6151, %v6156
    %v6159 = vunpack.c.l.s4 1983009808
    %v6160 = vunpack.c.0.s8 %v6159
    %v6161 = vperm.slane %v6153, %v6160
    %v6162 = vrot.slane %v5997, 4
    %v6163 = vsel %vm321, %v6162, %v5989
    %v6164 = vrot.slane %v5989, 4
    %v6165 = vsel %vm321, %v5997, %v6164
    %v6167 = vunpack.c.l.s4 1983009808
    %v6168 = vunpack.c.0.s8 %v6167
    %v6169 = vperm.slane %v6163, %v6168
    %v6171 = vunpack.c.l.s4 1983009808
    %v6172 = vunpack.c.0.s8 %v6171
    %v6173 = vperm.slane %v6165, %v6172
    %v6174 = vrot.slane %v6145, 4
    %v6175 = vsel %vm321, %v6174, %v6133
    %v6176 = vrot.slane %v6133, 4
    %v6177 = vsel %vm321, %v6145, %v6176
    %v6179 = vunpack.c.l.s4 1934713408
    %v6180 = vunpack.c.0.s8 %v6179
    %v6181 = vperm.slane %v6175, %v6180
    %v6183 = vunpack.c.l.s4 1934713408
    %v6184 = vunpack.c.0.s8 %v6183
    %v6185 = vperm.slane %v6177, %v6184
    %v6186 = vrot.slane %v6149, 4
    %v6187 = vsel %vm321, %v6186, %v6137
    %v6188 = vrot.slane %v6137, 4
    %v6189 = vsel %vm321, %v6149, %v6188
    %v6191 = vunpack.c.l.s4 1934713408
    %v6192 = vunpack.c.0.s8 %v6191
    %v6193 = vperm.slane %v6187, %v6192
    %v6195 = vunpack.c.l.s4 1934713408
    %v6196 = vunpack.c.0.s8 %v6195
    %v6197 = vperm.slane %v6189, %v6196
    %v6198 = vrot.slane %v6169, 4
    %v6199 = vsel %vm321, %v6198, %v6157
    %v6200 = vrot.slane %v6157, 4
    %v6201 = vsel %vm321, %v6169, %v6200
    %v6203 = vunpack.c.l.s4 1934713408
    %v6204 = vunpack.c.0.s8 %v6203
    %v6205 = vperm.slane %v6199, %v6204
    %v6207 = vunpack.c.l.s4 1934713408
    %v6208 = vunpack.c.0.s8 %v6207
    %v6209 = vperm.slane %v6201, %v6208
    %v6210 = vrot.slane %v6173, 4
    %v6211 = vsel %vm321, %v6210, %v6161
    %v6212 = vrot.slane %v6161, 4
    %v6213 = vsel %vm321, %v6173, %v6212
    %v6215 = vunpack.c.l.s4 1934713408
    %v6216 = vunpack.c.0.s8 %v6215
    %v6217 = vperm.slane %v6211, %v6216
    %v6219 = vunpack.c.l.s4 1934713408
    %v6220 = vunpack.c.0.s8 %v6219
    %v6221 = vperm.slane %v6213, %v6220
    %v6222 = vrot.slane %v6205, 4
    %v6223 = vsel %vm321, %v6222, %v6181
    %v6224 = vrot.slane %v6181, 4
    %v6225 = vsel %vm321, %v6205, %v6224
    %v6226 = vrot.slane %v6209, 4
    %v6227 = vsel %vm321, %v6226, %v6185
    %v6228 = vrot.slane %v6185, 4
    %v6229 = vsel %vm321, %v6209, %v6228
    %v6230 = vrot.slane %v6217, 4
    %v6231 = vsel %vm321, %v6230, %v6193
    %v6232 = vrot.slane %v6193, 4
    %v6233 = vsel %vm321, %v6217, %v6232
    %v6234 = vrot.slane %v6221, 4
    %v6235 = vsel %vm321, %v6234, %v6197
    %v6236 = vrot.slane %v6197, 4
    %v6237 = vsel %vm321, %v6221, %v6236
    %v6238 = vrot.slane %v6115, 4
    %v6239 = vsel %vm321, %v6238, %v6111
    %v6240 = vrot.slane %v6111, 4
    %v6241 = vsel %vm321, %v6115, %v6240
    %v6243 = vunpack.c.l.s4 1983009808
    %v6244 = vunpack.c.0.s8 %v6243
    %v6245 = vperm.slane %v6239, %v6244
    %v6247 = vunpack.c.l.s4 1983009808
    %v6248 = vunpack.c.0.s8 %v6247
    %v6249 = vperm.slane %v6241, %v6248
    %v6250 = vrot.slane %v6117, 4
    %v6251 = vsel %vm321, %v6250, %v6113
    %v6252 = vrot.slane %v6113, 4
    %v6253 = vsel %vm321, %v6117, %v6252
    %v6255 = vunpack.c.l.s4 1983009808
    %v6256 = vunpack.c.0.s8 %v6255
    %v6257 = vperm.slane %v6251, %v6256
    %v6259 = vunpack.c.l.s4 1983009808
    %v6260 = vunpack.c.0.s8 %v6259
    %v6261 = vperm.slane %v6253, %v6260
    %v6262 = vrot.slane %v6123, 4
    %v6263 = vsel %vm321, %v6262, %v6119
    %v6264 = vrot.slane %v6119, 4
    %v6265 = vsel %vm321, %v6123, %v6264
    %v6267 = vunpack.c.l.s4 1983009808
    %v6268 = vunpack.c.0.s8 %v6267
    %v6269 = vperm.slane %v6263, %v6268
    %v6271 = vunpack.c.l.s4 1983009808
    %v6272 = vunpack.c.0.s8 %v6271
    %v6273 = vperm.slane %v6265, %v6272
    %v6274 = vrot.slane %v6125, 4
    %v6275 = vsel %vm321, %v6274, %v6121
    %v6276 = vrot.slane %v6121, 4
    %v6277 = vsel %vm321, %v6125, %v6276
    %v6279 = vunpack.c.l.s4 1983009808
    %v6280 = vunpack.c.0.s8 %v6279
    %v6281 = vperm.slane %v6275, %v6280
    %v6283 = vunpack.c.l.s4 1983009808
    %v6284 = vunpack.c.0.s8 %v6283
    %v6285 = vperm.slane %v6277, %v6284
    %v6286 = vrot.slane %v6257, 4
    %v6287 = vsel %vm321, %v6286, %v6245
    %v6288 = vrot.slane %v6245, 4
    %v6289 = vsel %vm321, %v6257, %v6288
    %v6291 = vunpack.c.l.s4 1934713408
    %v6292 = vunpack.c.0.s8 %v6291
    %v6293 = vperm.slane %v6287, %v6292
    %v6295 = vunpack.c.l.s4 1934713408
    %v6296 = vunpack.c.0.s8 %v6295
    %v6297 = vperm.slane %v6289, %v6296
    %v6298 = vrot.slane %v6261, 4
    %v6299 = vsel %vm321, %v6298, %v6249
    %v6300 = vrot.slane %v6249, 4
    %v6301 = vsel %vm321, %v6261, %v6300
    %v6303 = vunpack.c.l.s4 1934713408
    %v6304 = vunpack.c.0.s8 %v6303
    %v6305 = vperm.slane %v6299, %v6304
    %v6307 = vunpack.c.l.s4 1934713408
    %v6308 = vunpack.c.0.s8 %v6307
    %v6309 = vperm.slane %v6301, %v6308
    %v6310 = vrot.slane %v6281, 4
    %v6311 = vsel %vm321, %v6310, %v6269
    %v6312 = vrot.slane %v6269, 4
    %v6313 = vsel %vm321, %v6281, %v6312
    %v6315 = vunpack.c.l.s4 1934713408
    %v6316 = vunpack.c.0.s8 %v6315
    %v6317 = vperm.slane %v6311, %v6316
    %v6319 = vunpack.c.l.s4 1934713408
    %v6320 = vunpack.c.0.s8 %v6319
    %v6321 = vperm.slane %v6313, %v6320
    %v6322 = vrot.slane %v6285, 4
    %v6323 = vsel %vm321, %v6322, %v6273
    %v6324 = vrot.slane %v6273, 4
    %v6325 = vsel %vm321, %v6285, %v6324
    %v6327 = vunpack.c.l.s4 1934713408
    %v6328 = vunpack.c.0.s8 %v6327
    %v6329 = vperm.slane %v6323, %v6328
    %v6331 = vunpack.c.l.s4 1934713408
    %v6332 = vunpack.c.0.s8 %v6331
    %v6333 = vperm.slane %v6325, %v6332
    %v6334 = vrot.slane %v6317, 4
    %v6335 = vsel %vm321, %v6334, %v6293
    %v6336 = vrot.slane %v6293, 4
    %v6337 = vsel %vm321, %v6317, %v6336
    %v6338 = vrot.slane %v6321, 4
    %v6339 = vsel %vm321, %v6338, %v6297
    %v6340 = vrot.slane %v6297, 4
    %v6341 = vsel %vm321, %v6321, %v6340
    %v6342 = vrot.slane %v6329, 4
    %v6343 = vsel %vm321, %v6342, %v6305
    %v6344 = vrot.slane %v6305, 4
    %v6345 = vsel %vm321, %v6329, %v6344
    %v6346 = vrot.slane %v6333, 4
    %v6347 = vsel %vm321, %v6346, %v6309
    %v6348 = vrot.slane %v6309, 4
    %v6349 = vsel %vm321, %v6333, %v6348
    %v6350 = vrot.slane %v6227, 4
    %v6351 = vsel %vm321, %v6350, %v6223
    %v6352 = vrot.slane %v6223, 4
    %v6353 = vsel %vm321, %v6227, %v6352
    %v6355 = vunpack.c.l.s4 1983009808
    %v6356 = vunpack.c.0.s8 %v6355
    %v6357 = vperm.slane %v6351, %v6356
    %v6359 = vunpack.c.l.s4 1983009808
    %v6360 = vunpack.c.0.s8 %v6359
    %v6361 = vperm.slane %v6353, %v6360
    %v6362 = vrot.slane %v6229, 4
    %v6363 = vsel %vm321, %v6362, %v6225
    %v6364 = vrot.slane %v6225, 4
    %v6365 = vsel %vm321, %v6229, %v6364
    %v6367 = vunpack.c.l.s4 1983009808
    %v6368 = vunpack.c.0.s8 %v6367
    %v6369 = vperm.slane %v6363, %v6368
    %v6371 = vunpack.c.l.s4 1983009808
    %v6372 = vunpack.c.0.s8 %v6371
    %v6373 = vperm.slane %v6365, %v6372
    %v6374 = vrot.slane %v6235, 4
    %v6375 = vsel %vm321, %v6374, %v6231
    %v6376 = vrot.slane %v6231, 4
    %v6377 = vsel %vm321, %v6235, %v6376
    %v6379 = vunpack.c.l.s4 1983009808
    %v6380 = vunpack.c.0.s8 %v6379
    %v6381 = vperm.slane %v6375, %v6380
    %v6383 = vunpack.c.l.s4 1983009808
    %v6384 = vunpack.c.0.s8 %v6383
    %v6385 = vperm.slane %v6377, %v6384
    %v6386 = vrot.slane %v6237, 4
    %v6387 = vsel %vm321, %v6386, %v6233
    %v6388 = vrot.slane %v6233, 4
    %v6389 = vsel %vm321, %v6237, %v6388
    %v6391 = vunpack.c.l.s4 1983009808
    %v6392 = vunpack.c.0.s8 %v6391
    %v6393 = vperm.slane %v6387, %v6392
    %v6395 = vunpack.c.l.s4 1983009808
    %v6396 = vunpack.c.0.s8 %v6395
    %v6397 = vperm.slane %v6389, %v6396
    %v6398 = vrot.slane %v6369, 4
    %v6399 = vsel %vm321, %v6398, %v6357
    %v6400 = vrot.slane %v6357, 4
    %v6401 = vsel %vm321, %v6369, %v6400
    %v6403 = vunpack.c.l.s4 1934713408
    %v6404 = vunpack.c.0.s8 %v6403
    %v6405 = vperm.slane %v6399, %v6404
    %v6407 = vunpack.c.l.s4 1934713408
    %v6408 = vunpack.c.0.s8 %v6407
    %v6409 = vperm.slane %v6401, %v6408
    %v6410 = vrot.slane %v6373, 4
    %v6411 = vsel %vm321, %v6410, %v6361
    %v6412 = vrot.slane %v6361, 4
    %v6413 = vsel %vm321, %v6373, %v6412
    %v6415 = vunpack.c.l.s4 1934713408
    %v6416 = vunpack.c.0.s8 %v6415
    %v6417 = vperm.slane %v6411, %v6416
    %v6419 = vunpack.c.l.s4 1934713408
    %v6420 = vunpack.c.0.s8 %v6419
    %v6421 = vperm.slane %v6413, %v6420
    %v6422 = vrot.slane %v6393, 4
    %v6423 = vsel %vm321, %v6422, %v6381
    %v6424 = vrot.slane %v6381, 4
    %v6425 = vsel %vm321, %v6393, %v6424
    %v6427 = vunpack.c.l.s4 1934713408
    %v6428 = vunpack.c.0.s8 %v6427
    %v6429 = vperm.slane %v6423, %v6428
    %v6431 = vunpack.c.l.s4 1934713408
    %v6432 = vunpack.c.0.s8 %v6431
    %v6433 = vperm.slane %v6425, %v6432
    %v6434 = vrot.slane %v6397, 4
    %v6435 = vsel %vm321, %v6434, %v6385
    %v6436 = vrot.slane %v6385, 4
    %v6437 = vsel %vm321, %v6397, %v6436
    %v6439 = vunpack.c.l.s4 1934713408
    %v6440 = vunpack.c.0.s8 %v6439
    %v6441 = vperm.slane %v6435, %v6440
    %v6443 = vunpack.c.l.s4 1934713408
    %v6444 = vunpack.c.0.s8 %v6443
    %v6445 = vperm.slane %v6437, %v6444
    %v6446 = vrot.slane %v6429, 4
    %v6447 = vsel %vm321, %v6446, %v6405
    %v6448 = vrot.slane %v6405, 4
    %v6449 = vsel %vm321, %v6429, %v6448
    %v6450 = vrot.slane %v6433, 4
    %v6451 = vsel %vm321, %v6450, %v6409
    %v6452 = vrot.slane %v6409, 4
    %v6453 = vsel %vm321, %v6433, %v6452
    %v6454 = vrot.slane %v6441, 4
    %v6455 = vsel %vm321, %v6454, %v6417
    %v6456 = vrot.slane %v6417, 4
    %v6457 = vsel %vm321, %v6441, %v6456
    %v6458 = vrot.slane %v6445, 4
    %v6459 = vsel %vm321, %v6458, %v6421
    %v6460 = vrot.slane %v6421, 4
    %v6461 = vsel %vm321, %v6445, %v6460
    %s6462 = scalar_lea.vmem %s3, 1
    %v6463 = vld [vmem:[%s6462] sm:$0x1]
    %v6464 = vpack.c.bf16 %v5459, %v5459
    %v6465 = vpack.c.bf16 %v5461, %v5461
    %v6466 = vpack.c.bf16 %v5463, %v5463
    %v6467 = vpack.c.bf16 %v5465, %v5465
    %v6468 = vpack.c.bf16 %v5467, %v5467
    %v6469 = vpack.c.bf16 %v5469, %v5469
    %v6470 = vpack.c.bf16 %v5471, %v5471
    %v6471 = vpack.c.bf16 %v5473, %v5473
    %v6472 = vpack.c.bf16 %v5839, %v5839
    %v6473 = vpack.c.bf16 %v5951, %v5951
    %v6474 = vpack.c.bf16 %v5841, %v5841
    %v6475 = vpack.c.bf16 %v5953, %v5953
    %v6476 = vpack.c.bf16 %v5843, %v5843
    %v6477 = vpack.c.bf16 %v5955, %v5955
    %v6478 = vpack.c.bf16 %v5845, %v5845
    %v6479 = vpack.c.bf16 %v5957, %v5957
    %v6480 = vpack.c.bf16 %v5847, %v5847
    %v6481 = vpack.c.bf16 %v5959, %v5959
    %v6482 = vpack.c.bf16 %v5849, %v5849
    %v6483 = vpack.c.bf16 %v5961, %v5961
    %v6484 = vpack.c.bf16 %v5851, %v5851
    %v6485 = vpack.c.bf16 %v5963, %v5963
    %v6486 = vpack.c.bf16 %v5853, %v5853
    %v6487 = vpack.c.bf16 %v5965, %v5965
    %v6489 = vperm.slane %v6463, 0
    %v6493 = vunpack.c.l.b16 %v6472
    %v6494 = vunpack.c.l.b16 %v6473
    %v6495 = vpack.c.b16 %v6494, %v6493
    %v6497 = vsel %vm1056, %v6464, 0
    %v6500 = vsel %vm1056, %v6495, 0
    %6502 = vmatpush.bf16.xpose.msra.mxu0 0
    %6503 = vmatpush.bf16.xpose.msra.mxu0 0
    %6504 = vmatpush.bf16.xpose.msra.mxu0 0
    %6505 = vmatpush.bf16.xpose.msra.mxu0 0
    %6506 = vmatpush.bf16.xpose.msra.mxu0 0
    %6507 = vmatpush.bf16.xpose.msra.mxu0 0
    %6508 = vmatpush.bf16.xpose.msra.mxu0 0
    %6509 = vmatpush.bf16.xpose.msra.mxu0 %v6500
    %6510 = vmatmul.bf16.gmra.mxu0 %v6497
    %v6511 = vpop.f32.mrf.mxu0
    %v6512 = vadd.f32 %v6489, %v6511
    %v6513 = vpop.f32.mrf.mxu0
    %6514 = vdwg.mxu0
    %v6517 = vunpack.c.l.b16 %v6474
    %v6518 = vunpack.c.l.b16 %v6475
    %v6519 = vpack.c.b16 %v6518, %v6517
    %v6521 = vsel %vm1056, %v6465, 0
    %v6524 = vsel %vm1056, %v6519, 0
    %6526 = vmatpush.bf16.xpose.msra.mxu0 0
    %6527 = vmatpush.bf16.xpose.msra.mxu0 0
    %6528 = vmatpush.bf16.xpose.msra.mxu0 0
    %6529 = vmatpush.bf16.xpose.msra.mxu0 0
    %6530 = vmatpush.bf16.xpose.msra.mxu0 0
    %6531 = vmatpush.bf16.xpose.msra.mxu0 0
    %6532 = vmatpush.bf16.xpose.msra.mxu0 0
    %6533 = vmatpush.bf16.xpose.msra.mxu0 %v6524
    %6534 = vmatmul.bf16.gmra.mxu0 %v6521
    %v6535 = vpop.f32.mrf.mxu0
    %v6536 = vadd.f32 %v6489, %v6535
    %v6537 = vpop.f32.mrf.mxu0
    %6538 = vdwg.mxu0
    %v6541 = vunpack.c.l.b16 %v6476
    %v6542 = vunpack.c.l.b16 %v6477
    %v6543 = vpack.c.b16 %v6542, %v6541
    %v6545 = vsel %vm1056, %v6466, 0
    %v6548 = vsel %vm1056, %v6543, 0
    %6550 = vmatpush.bf16.xpose.msra.mxu0 0
    %6551 = vmatpush.bf16.xpose.msra.mxu0 0
    %6552 = vmatpush.bf16.xpose.msra.mxu0 0
    %6553 = vmatpush.bf16.xpose.msra.mxu0 0
    %6554 = vmatpush.bf16.xpose.msra.mxu0 0
    %6555 = vmatpush.bf16.xpose.msra.mxu0 0
    %6556 = vmatpush.bf16.xpose.msra.mxu0 0
    %6557 = vmatpush.bf16.xpose.msra.mxu0 %v6548
    %6558 = vmatmul.bf16.gmra.mxu0 %v6545
    %v6559 = vpop.f32.mrf.mxu0
    %v6560 = vadd.f32 %v6489, %v6559
    %v6561 = vpop.f32.mrf.mxu0
    %6562 = vdwg.mxu0
    %v6565 = vunpack.c.l.b16 %v6478
    %v6566 = vunpack.c.l.b16 %v6479
    %v6567 = vpack.c.b16 %v6566, %v6565
    %v6569 = vsel %vm1056, %v6467, 0
    %v6572 = vsel %vm1056, %v6567, 0
    %6574 = vmatpush.bf16.xpose.msra.mxu0 0
    %6575 = vmatpush.bf16.xpose.msra.mxu0 0
    %6576 = vmatpush.bf16.xpose.msra.mxu0 0
    %6577 = vmatpush.bf16.xpose.msra.mxu0 0
    %6578 = vmatpush.bf16.xpose.msra.mxu0 0
    %6579 = vmatpush.bf16.xpose.msra.mxu0 0
    %6580 = vmatpush.bf16.xpose.msra.mxu0 0
    %6581 = vmatpush.bf16.xpose.msra.mxu0 %v6572
    %6582 = vmatmul.bf16.gmra.mxu0 %v6569
    %v6583 = vpop.f32.mrf.mxu0
    %v6584 = vadd.f32 %v6489, %v6583
    %v6585 = vpop.f32.mrf.mxu0
    %6586 = vdwg.mxu0
    %v6589 = vunpack.c.l.b16 %v6480
    %v6590 = vunpack.c.l.b16 %v6481
    %v6591 = vpack.c.b16 %v6590, %v6589
    %v6593 = vsel %vm1056, %v6468, 0
    %v6596 = vsel %vm1056, %v6591, 0
    %6598 = vmatpush.bf16.xpose.msra.mxu0 0
    %6599 = vmatpush.bf16.xpose.msra.mxu0 0
    %6600 = vmatpush.bf16.xpose.msra.mxu0 0
    %6601 = vmatpush.bf16.xpose.msra.mxu0 0
    %6602 = vmatpush.bf16.xpose.msra.mxu0 0
    %6603 = vmatpush.bf16.xpose.msra.mxu0 0
    %6604 = vmatpush.bf16.xpose.msra.mxu0 0
    %6605 = vmatpush.bf16.xpose.msra.mxu0 %v6596
    %6606 = vmatmul.bf16.gmra.mxu0 %v6593
    %v6607 = vpop.f32.mrf.mxu0
    %v6608 = vadd.f32 %v6489, %v6607
    %v6609 = vpop.f32.mrf.mxu0
    %6610 = vdwg.mxu0
    %v6613 = vunpack.c.l.b16 %v6482
    %v6614 = vunpack.c.l.b16 %v6483
    %v6615 = vpack.c.b16 %v6614, %v6613
    %v6617 = vsel %vm1056, %v6469, 0
    %v6620 = vsel %vm1056, %v6615, 0
    %6622 = vmatpush.bf16.xpose.msra.mxu0 0
    %6623 = vmatpush.bf16.xpose.msra.mxu0 0
    %6624 = vmatpush.bf16.xpose.msra.mxu0 0
    %6625 = vmatpush.bf16.xpose.msra.mxu0 0
    %6626 = vmatpush.bf16.xpose.msra.mxu0 0
    %6627 = vmatpush.bf16.xpose.msra.mxu0 0
    %6628 = vmatpush.bf16.xpose.msra.mxu0 0
    %6629 = vmatpush.bf16.xpose.msra.mxu0 %v6620
    %6630 = vmatmul.bf16.gmra.mxu0 %v6617
    %v6631 = vpop.f32.mrf.mxu0
    %v6632 = vadd.f32 %v6489, %v6631
    %v6633 = vpop.f32.mrf.mxu0
    %6634 = vdwg.mxu0
    %v6637 = vunpack.c.l.b16 %v6484
    %v6638 = vunpack.c.l.b16 %v6485
    %v6639 = vpack.c.b16 %v6638, %v6637
    %v6641 = vsel %vm1056, %v6470, 0
    %v6644 = vsel %vm1056, %v6639, 0
    %6646 = vmatpush.bf16.xpose.msra.mxu0 0
    %6647 = vmatpush.bf16.xpose.msra.mxu0 0
    %6648 = vmatpush.bf16.xpose.msra.mxu0 0
    %6649 = vmatpush.bf16.xpose.msra.mxu0 0
    %6650 = vmatpush.bf16.xpose.msra.mxu0 0
    %6651 = vmatpush.bf16.xpose.msra.mxu0 0
    %6652 = vmatpush.bf16.xpose.msra.mxu0 0
    %6653 = vmatpush.bf16.xpose.msra.mxu0 %v6644
    %6654 = vmatmul.bf16.gmra.mxu0 %v6641
    %v6655 = vpop.f32.mrf.mxu0
    %v6656 = vadd.f32 %v6489, %v6655
    %v6657 = vpop.f32.mrf.mxu0
    %6658 = vdwg.mxu0
    %v6661 = vunpack.c.l.b16 %v6486
    %v6662 = vunpack.c.l.b16 %v6487
    %v6663 = vpack.c.b16 %v6662, %v6661
    %v6665 = vsel %vm1056, %v6471, 0
    %v6668 = vsel %vm1056, %v6663, 0
    %6670 = vmatpush.bf16.xpose.msra.mxu0 0
    %6671 = vmatpush.bf16.xpose.msra.mxu0 0
    %6672 = vmatpush.bf16.xpose.msra.mxu0 0
    %6673 = vmatpush.bf16.xpose.msra.mxu0 0
    %6674 = vmatpush.bf16.xpose.msra.mxu0 0
    %6675 = vmatpush.bf16.xpose.msra.mxu0 0
    %6676 = vmatpush.bf16.xpose.msra.mxu0 0
    %6677 = vmatpush.bf16.xpose.msra.mxu0 %v6668
    %6678 = vmatmul.bf16.gmra.mxu0 %v6665
    %v6679 = vpop.f32.mrf.mxu0
    %v6680 = vadd.f32 %v6489, %v6679
    %v6681 = vpop.f32.mrf.mxu0
    %6682 = vdwg.mxu0
    %v6683 = vsel %vm4644, %v6512, -inf
    %6684 = vmax.xlane.f32.xlu0 %v6683
    %v6685 = vpop.xlane.xlu0 %6684
    %v6686 = vsel %vm4644, %v6536, -inf
    %6687 = vmax.xlane.f32.xlu0 %v6686
    %v6688 = vpop.xlane.xlu0 %6687
    %v6689 = vsel %vm4644, %v6560, -inf
    %6690 = vmax.xlane.f32.xlu0 %v6689
    %v6691 = vpop.xlane.xlu0 %6690
    %v6692 = vsel %vm4644, %v6584, -inf
    %6693 = vmax.xlane.f32.xlu0 %v6692
    %v6694 = vpop.xlane.xlu0 %6693
    %v6695 = vsel %vm4644, %v6608, -inf
    %6696 = vmax.xlane.f32.xlu0 %v6695
    %v6697 = vpop.xlane.xlu0 %6696
    %v6698 = vsel %vm4644, %v6632, -inf
    %6699 = vmax.xlane.f32.xlu0 %v6698
    %v6700 = vpop.xlane.xlu0 %6699
    %v6701 = vsel %vm4644, %v6656, -inf
    %6702 = vmax.xlane.f32.xlu0 %v6701
    %v6703 = vpop.xlane.xlu0 %6702
    %v6704 = vsel %vm4644, %v6680, -inf
    %6705 = vmax.xlane.f32.xlu0 %v6704
    %v6706 = vpop.xlane.xlu0 %6705
    %v6707 = vsub.f32 %v6512, %v6685
    %v6708 = vsub.f32 %v6536, %v6688
    %v6709 = vsub.f32 %v6560, %v6691
    %v6710 = vsub.f32 %v6584, %v6694
    %v6711 = vsub.f32 %v6608, %v6697
    %v6712 = vsub.f32 %v6632, %v6700
    %v6713 = vsub.f32 %v6656, %v6703
    %v6714 = vsub.f32 %v6680, %v6706
    %v6715 = vmul.f32 %v6707, 1.442695
    %v6716 = vpow.pop %v6715
    %v6717 = vmul.f32 %v6708, 1.442695
    %v6718 = vpow.pop %v6717
    %v6719 = vmul.f32 %v6709, 1.442695
    %v6720 = vpow.pop %v6719
    %v6721 = vmul.f32 %v6710, 1.442695
    %v6722 = vpow.pop %v6721
    %v6723 = vmul.f32 %v6711, 1.442695
    %v6724 = vpow.pop %v6723
    %v6725 = vmul.f32 %v6712, 1.442695
    %v6726 = vpow.pop %v6725
    %v6727 = vmul.f32 %v6713, 1.442695
    %v6728 = vpow.pop %v6727
    %v6729 = vmul.f32 %v6714, 1.442695
    %v6730 = vpow.pop %v6729
    %v6731 = vsel %vm4644, %v6716, 0.0
    %6732 = vadd.xlane.f32.xlu0 %v6731
    %v6733 = vpop.xlane.xlu0 %6732
    %v6734 = vsel %vm4644, %v6718, 0.0
    %6735 = vadd.xlane.f32.xlu0 %v6734
    %v6736 = vpop.xlane.xlu0 %6735
    %v6737 = vsel %vm4644, %v6720, 0.0
    %6738 = vadd.xlane.f32.xlu0 %v6737
    %v6739 = vpop.xlane.xlu0 %6738
    %v6740 = vsel %vm4644, %v6722, 0.0
    %6741 = vadd.xlane.f32.xlu0 %v6740
    %v6742 = vpop.xlane.xlu0 %6741
    %v6743 = vsel %vm4644, %v6724, 0.0
    %6744 = vadd.xlane.f32.xlu0 %v6743
    %v6745 = vpop.xlane.xlu0 %6744
    %v6746 = vsel %vm4644, %v6726, 0.0
    %6747 = vadd.xlane.f32.xlu0 %v6746
    %v6748 = vpop.xlane.xlu0 %6747
    %v6749 = vsel %vm4644, %v6728, 0.0
    %6750 = vadd.xlane.f32.xlu0 %v6749
    %v6751 = vpop.xlane.xlu0 %6750
    %v6752 = vsel %vm4644, %v6730, 0.0
    %6753 = vadd.xlane.f32.xlu0 %v6752
    %v6754 = vpop.xlane.xlu0 %6753
    %v6755 = vrcp.pop %v6733
    %v6756 = vmul.f32 %v6733, %v6755
    %v6757 = vsub.f32 1.0, %v6756
    %v6758 = vmul.f32 %v6755, %v6757
    %v6759 = vadd.f32 %v6755, %v6758
    %vm6760 = vweird.f32 %v6733
    %vm6761 = vweird.f32 %v6755
    %vm6762 = vmor %vm6760, %vm6761
    %v6763 = vsel %vm6762, %v6755, %v6759
    %v6764 = vand.u32 2147483647, %v6733
    %vm6765 = vcmp.eq.f32.partialorder %v6764, 8.507059e+37
    %v6766 = vand.u32 %v6733, 2147483648
    %v6767 = vor.u32 1.1754944e-38, %v6766
    %v6768 = vsel %vm6765, %v6767, %v6763
    %v6769 = vmul.f32 %v6716, %v6768
    %v6770 = vrcp.pop %v6736
    %v6771 = vmul.f32 %v6736, %v6770
    %v6772 = vsub.f32 1.0, %v6771
    %v6773 = vmul.f32 %v6770, %v6772
    %v6774 = vadd.f32 %v6770, %v6773
    %vm6775 = vweird.f32 %v6736
    %vm6776 = vweird.f32 %v6770
    %vm6777 = vmor %vm6775, %vm6776
    %v6778 = vsel %vm6777, %v6770, %v6774
    %v6779 = vand.u32 2147483647, %v6736
    %vm6780 = vcmp.eq.f32.partialorder %v6779, 8.507059e+37
    %v6781 = vand.u32 %v6736, 2147483648
    %v6782 = vor.u32 1.1754944e-38, %v6781
    %v6783 = vsel %vm6780, %v6782, %v6778
    %v6784 = vmul.f32 %v6718, %v6783
    %v6785 = vrcp.pop %v6739
    %v6786 = vmul.f32 %v6739, %v6785
    %v6787 = vsub.f32 1.0, %v6786
    %v6788 = vmul.f32 %v6785, %v6787
    %v6789 = vadd.f32 %v6785, %v6788
    %vm6790 = vweird.f32 %v6739
    %vm6791 = vweird.f32 %v6785
    %vm6792 = vmor %vm6790, %vm6791
    %v6793 = vsel %vm6792, %v6785, %v6789
    %v6794 = vand.u32 2147483647, %v6739
    %vm6795 = vcmp.eq.f32.partialorder %v6794, 8.507059e+37
    %v6796 = vand.u32 %v6739, 2147483648
    %v6797 = vor.u32 1.1754944e-38, %v6796
    %v6798 = vsel %vm6795, %v6797, %v6793
    %v6799 = vmul.f32 %v6720, %v6798
    %v6800 = vrcp.pop %v6742
    %v6801 = vmul.f32 %v6742, %v6800
    %v6802 = vsub.f32 1.0, %v6801
    %v6803 = vmul.f32 %v6800, %v6802
    %v6804 = vadd.f32 %v6800, %v6803
    %vm6805 = vweird.f32 %v6742
    %vm6806 = vweird.f32 %v6800
    %vm6807 = vmor %vm6805, %vm6806
    %v6808 = vsel %vm6807, %v6800, %v6804
    %v6809 = vand.u32 2147483647, %v6742
    %vm6810 = vcmp.eq.f32.partialorder %v6809, 8.507059e+37
    %v6811 = vand.u32 %v6742, 2147483648
    %v6812 = vor.u32 1.1754944e-38, %v6811
    %v6813 = vsel %vm6810, %v6812, %v6808
    %v6814 = vmul.f32 %v6722, %v6813
    %v6815 = vrcp.pop %v6745
    %v6816 = vmul.f32 %v6745, %v6815
    %v6817 = vsub.f32 1.0, %v6816
    %v6818 = vmul.f32 %v6815, %v6817
    %v6819 = vadd.f32 %v6815, %v6818
    %vm6820 = vweird.f32 %v6745
    %vm6821 = vweird.f32 %v6815
    %vm6822 = vmor %vm6820, %vm6821
    %v6823 = vsel %vm6822, %v6815, %v6819
    %v6824 = vand.u32 2147483647, %v6745
    %vm6825 = vcmp.eq.f32.partialorder %v6824, 8.507059e+37
    %v6826 = vand.u32 %v6745, 2147483648
    %v6827 = vor.u32 1.1754944e-38, %v6826
    %v6828 = vsel %vm6825, %v6827, %v6823
    %v6829 = vmul.f32 %v6724, %v6828
    %v6830 = vrcp.pop %v6748
    %v6831 = vmul.f32 %v6748, %v6830
    %v6832 = vsub.f32 1.0, %v6831
    %v6833 = vmul.f32 %v6830, %v6832
    %v6834 = vadd.f32 %v6830, %v6833
    %vm6835 = vweird.f32 %v6748
    %vm6836 = vweird.f32 %v6830
    %vm6837 = vmor %vm6835, %vm6836
    %v6838 = vsel %vm6837, %v6830, %v6834
    %v6839 = vand.u32 2147483647, %v6748
    %vm6840 = vcmp.eq.f32.partialorder %v6839, 8.507059e+37
    %v6841 = vand.u32 %v6748, 2147483648
    %v6842 = vor.u32 1.1754944e-38, %v6841
    %v6843 = vsel %vm6840, %v6842, %v6838
    %v6844 = vmul.f32 %v6726, %v6843
    %v6845 = vrcp.pop %v6751
    %v6846 = vmul.f32 %v6751, %v6845
    %v6847 = vsub.f32 1.0, %v6846
    %v6848 = vmul.f32 %v6845, %v6847
    %v6849 = vadd.f32 %v6845, %v6848
    %vm6850 = vweird.f32 %v6751
    %vm6851 = vweird.f32 %v6845
    %vm6852 = vmor %vm6850, %vm6851
    %v6853 = vsel %vm6852, %v6845, %v6849
    %v6854 = vand.u32 2147483647, %v6751
    %vm6855 = vcmp.eq.f32.partialorder %v6854, 8.507059e+37
    %v6856 = vand.u32 %v6751, 2147483648
    %v6857 = vor.u32 1.1754944e-38, %v6856
    %v6858 = vsel %vm6855, %v6857, %v6853
    %v6859 = vmul.f32 %v6728, %v6858
    %v6860 = vrcp.pop %v6754
    %v6861 = vmul.f32 %v6754, %v6860
    %v6862 = vsub.f32 1.0, %v6861
    %v6863 = vmul.f32 %v6860, %v6862
    %v6864 = vadd.f32 %v6860, %v6863
    %vm6865 = vweird.f32 %v6754
    %vm6866 = vweird.f32 %v6860
    %vm6867 = vmor %vm6865, %vm6866
    %v6868 = vsel %vm6867, %v6860, %v6864
    %v6869 = vand.u32 2147483647, %v6754
    %vm6870 = vcmp.eq.f32.partialorder %v6869, 8.507059e+37
    %v6871 = vand.u32 %v6754, 2147483648
    %v6872 = vor.u32 1.1754944e-38, %v6871
    %v6873 = vsel %vm6870, %v6872, %v6868
    %v6874 = vmul.f32 %v6730, %v6873
    %v6875 = vpack.c.bf16 %v6769, %v6769
    %v6876 = vpack.c.bf16 %v6784, %v6784
    %v6877 = vpack.c.bf16 %v6799, %v6799
    %v6878 = vpack.c.bf16 %v6814, %v6814
    %v6879 = vpack.c.bf16 %v6829, %v6829
    %v6880 = vpack.c.bf16 %v6844, %v6844
    %v6881 = vpack.c.bf16 %v6859, %v6859
    %v6882 = vpack.c.bf16 %v6874, %v6874
    %v6883 = vpack.c.bf16 %v6335, %v6335
    %v6884 = vpack.c.bf16 %v6447, %v6447
    %v6885 = vpack.c.bf16 %v6337, %v6337
    %v6886 = vpack.c.bf16 %v6449, %v6449
    %v6887 = vpack.c.bf16 %v6339, %v6339
    %v6888 = vpack.c.bf16 %v6451, %v6451
    %v6889 = vpack.c.bf16 %v6341, %v6341
    %v6890 = vpack.c.bf16 %v6453, %v6453
    %v6891 = vpack.c.bf16 %v6343, %v6343
    %v6892 = vpack.c.bf16 %v6455, %v6455
    %v6893 = vpack.c.bf16 %v6345, %v6345
    %v6894 = vpack.c.bf16 %v6457, %v6457
    %v6895 = vpack.c.bf16 %v6347, %v6347
    %v6896 = vpack.c.bf16 %v6459, %v6459
    %v6897 = vpack.c.bf16 %v6349, %v6349
    %v6898 = vpack.c.bf16 %v6461, %v6461
    %v6901 = vunpack.c.l.b16 %v6883
    %v6902 = vunpack.c.l.b16 %v6884
    %v6903 = vpack.c.b16 %v6902, %v6901
    %v6906 = vsel %vm4644, %v6875, 0
    %6908 = vmatpush.bf16.msra.mxu0 0
    %6909 = vmatpush.bf16.msra.mxu0 0
    %6910 = vmatpush.bf16.msra.mxu0 0
    %6911 = vmatpush.bf16.msra.mxu0 0
    %6912 = vmatpush.bf16.msra.mxu0 0
    %6913 = vmatpush.bf16.msra.mxu0 0
    %6914 = vmatpush.bf16.msra.mxu0 0
    %6915 = vmatpush.bf16.msra.mxu0 %v6903
    %6916 = vmatmul.bf16.gmra.mxu0 %v6906
    %v6917 = vpop.f32.mrf.mxu0
    %v6918 = vadd.f32 0.0, %v6917
    %v6919 = vpop.f32.mrf.mxu0
    %6920 = vdwg.mxu0
    %v6923 = vunpack.c.l.b16 %v6885
    %v6924 = vunpack.c.l.b16 %v6886
    %v6925 = vpack.c.b16 %v6924, %v6923
    %v6928 = vsel %vm4644, %v6876, 0
    %6930 = vmatpush.bf16.msra.mxu0 0
    %6931 = vmatpush.bf16.msra.mxu0 0
    %6932 = vmatpush.bf16.msra.mxu0 0
    %6933 = vmatpush.bf16.msra.mxu0 0
    %6934 = vmatpush.bf16.msra.mxu0 0
    %6935 = vmatpush.bf16.msra.mxu0 0
    %6936 = vmatpush.bf16.msra.mxu0 0
    %6937 = vmatpush.bf16.msra.mxu0 %v6925
    %6938 = vmatmul.bf16.gmra.mxu0 %v6928
    %v6939 = vpop.f32.mrf.mxu0
    %v6940 = vadd.f32 0.0, %v6939
    %v6941 = vpop.f32.mrf.mxu0
    %6942 = vdwg.mxu0
    %v6945 = vunpack.c.l.b16 %v6887
    %v6946 = vunpack.c.l.b16 %v6888
    %v6947 = vpack.c.b16 %v6946, %v6945
    %v6950 = vsel %vm4644, %v6877, 0
    %6952 = vmatpush.bf16.msra.mxu0 0
    %6953 = vmatpush.bf16.msra.mxu0 0
    %6954 = vmatpush.bf16.msra.mxu0 0
    %6955 = vmatpush.bf16.msra.mxu0 0
    %6956 = vmatpush.bf16.msra.mxu0 0
    %6957 = vmatpush.bf16.msra.mxu0 0
    %6958 = vmatpush.bf16.msra.mxu0 0
    %6959 = vmatpush.bf16.msra.mxu0 %v6947
    %6960 = vmatmul.bf16.gmra.mxu0 %v6950
    %v6961 = vpop.f32.mrf.mxu0
    %v6962 = vadd.f32 0.0, %v6961
    %v6963 = vpop.f32.mrf.mxu0
    %6964 = vdwg.mxu0
    %v6967 = vunpack.c.l.b16 %v6889
    %v6968 = vunpack.c.l.b16 %v6890
    %v6969 = vpack.c.b16 %v6968, %v6967
    %v6972 = vsel %vm4644, %v6878, 0
    %6974 = vmatpush.bf16.msra.mxu0 0
    %6975 = vmatpush.bf16.msra.mxu0 0
    %6976 = vmatpush.bf16.msra.mxu0 0
    %6977 = vmatpush.bf16.msra.mxu0 0
    %6978 = vmatpush.bf16.msra.mxu0 0
    %6979 = vmatpush.bf16.msra.mxu0 0
    %6980 = vmatpush.bf16.msra.mxu0 0
    %6981 = vmatpush.bf16.msra.mxu0 %v6969
    %6982 = vmatmul.bf16.gmra.mxu0 %v6972
    %v6983 = vpop.f32.mrf.mxu0
    %v6984 = vadd.f32 0.0, %v6983
    %v6985 = vpop.f32.mrf.mxu0
    %6986 = vdwg.mxu0
    %v6989 = vunpack.c.l.b16 %v6891
    %v6990 = vunpack.c.l.b16 %v6892
    %v6991 = vpack.c.b16 %v6990, %v6989
    %v6994 = vsel %vm4644, %v6879, 0
    %6996 = vmatpush.bf16.msra.mxu0 0
    %6997 = vmatpush.bf16.msra.mxu0 0
    %6998 = vmatpush.bf16.msra.mxu0 0
    %6999 = vmatpush.bf16.msra.mxu0 0
    %7000 = vmatpush.bf16.msra.mxu0 0
    %7001 = vmatpush.bf16.msra.mxu0 0
    %7002 = vmatpush.bf16.msra.mxu0 0
    %7003 = vmatpush.bf16.msra.mxu0 %v6991
    %7004 = vmatmul.bf16.gmra.mxu0 %v6994
    %v7005 = vpop.f32.mrf.mxu0
    %v7006 = vadd.f32 0.0, %v7005
    %v7007 = vpop.f32.mrf.mxu0
    %7008 = vdwg.mxu0
    %v7011 = vunpack.c.l.b16 %v6893
    %v7012 = vunpack.c.l.b16 %v6894
    %v7013 = vpack.c.b16 %v7012, %v7011
    %v7016 = vsel %vm4644, %v6880, 0
    %7018 = vmatpush.bf16.msra.mxu0 0
    %7019 = vmatpush.bf16.msra.mxu0 0
    %7020 = vmatpush.bf16.msra.mxu0 0
    %7021 = vmatpush.bf16.msra.mxu0 0
    %7022 = vmatpush.bf16.msra.mxu0 0
    %7023 = vmatpush.bf16.msra.mxu0 0
    %7024 = vmatpush.bf16.msra.mxu0 0
    %7025 = vmatpush.bf16.msra.mxu0 %v7013
    %7026 = vmatmul.bf16.gmra.mxu0 %v7016
    %v7027 = vpop.f32.mrf.mxu0
    %v7028 = vadd.f32 0.0, %v7027
    %v7029 = vpop.f32.mrf.mxu0
    %7030 = vdwg.mxu0
    %v7033 = vunpack.c.l.b16 %v6895
    %v7034 = vunpack.c.l.b16 %v6896
    %v7035 = vpack.c.b16 %v7034, %v7033
    %v7038 = vsel %vm4644, %v6881, 0
    %7040 = vmatpush.bf16.msra.mxu0 0
    %7041 = vmatpush.bf16.msra.mxu0 0
    %7042 = vmatpush.bf16.msra.mxu0 0
    %7043 = vmatpush.bf16.msra.mxu0 0
    %7044 = vmatpush.bf16.msra.mxu0 0
    %7045 = vmatpush.bf16.msra.mxu0 0
    %7046 = vmatpush.bf16.msra.mxu0 0
    %7047 = vmatpush.bf16.msra.mxu0 %v7035
    %7048 = vmatmul.bf16.gmra.mxu0 %v7038
    %v7049 = vpop.f32.mrf.mxu0
    %v7050 = vadd.f32 0.0, %v7049
    %v7051 = vpop.f32.mrf.mxu0
    %7052 = vdwg.mxu0
    %v7055 = vunpack.c.l.b16 %v6897
    %v7056 = vunpack.c.l.b16 %v6898
    %v7057 = vpack.c.b16 %v7056, %v7055
    %v7060 = vsel %vm4644, %v6882, 0
    %7062 = vmatpush.bf16.msra.mxu0 0
    %7063 = vmatpush.bf16.msra.mxu0 0
    %7064 = vmatpush.bf16.msra.mxu0 0
    %7065 = vmatpush.bf16.msra.mxu0 0
    %7066 = vmatpush.bf16.msra.mxu0 0
    %7067 = vmatpush.bf16.msra.mxu0 0
    %7068 = vmatpush.bf16.msra.mxu0 0
    %7069 = vmatpush.bf16.msra.mxu0 %v7057
    %7070 = vmatmul.bf16.gmra.mxu0 %v7060
    %v7071 = vpop.f32.mrf.mxu0
    %v7072 = vadd.f32 0.0, %v7071
    %v7073 = vpop.f32.mrf.mxu0
    %7074 = vdwg.mxu0
    %s7075 = scalar_lea.vmem [#allocation17], 64
    %7076 = vst.msk [vmem:[%s7075] sm:$0xff] %vm4644, %v6769
    %7077 = vst.msk [vmem:[%s7075 + $0x8] sm:$0xff] %vm4644, %v6784
    %7078 = vst.msk [vmem:[%s7075 + $0x10] sm:$0xff] %vm4644, %v6799
    %7079 = vst.msk [vmem:[%s7075 + $0x18] sm:$0xff] %vm4644, %v6814
    %7080 = vst.msk [vmem:[%s7075 + $0x20] sm:$0xff] %vm4644, %v6829
    %7081 = vst.msk [vmem:[%s7075 + $0x28] sm:$0xff] %vm4644, %v6844
    %7082 = vst.msk [vmem:[%s7075 + $0x30] sm:$0xff] %vm4644, %v6859
    %7083 = vst.msk [vmem:[%s7075 + $0x38] sm:$0xff] %vm4644, %v6874
    %v7084 = vpack.c.bf16 %v6918, %v6918
    %v7085 = vpack.c.bf16 %v6940, %v6940
    %v7086 = vpack.c.bf16 %v6962, %v6962
    %v7087 = vpack.c.bf16 %v6984, %v6984
    %v7088 = vpack.c.bf16 %v7006, %v7006
    %v7089 = vpack.c.bf16 %v7028, %v7028
    %v7090 = vpack.c.bf16 %v7050, %v7050
    %v7091 = vpack.c.bf16 %v7072, %v7072
    %v7092 = vld [vmem:[#allocation13] sm:$0xf]
    %v7093 = vld [vmem:[#allocation13 + $0x4] sm:$0xf]
    %v7094 = vld [vmem:[#allocation13 + $0x8] sm:$0xf]
    %v7095 = vld [vmem:[#allocation13 + $0xc] sm:$0xf]
    %v7096 = vld [vmem:[#allocation13 + $0x10] sm:$0xf]
    %v7097 = vld [vmem:[#allocation13 + $0x14] sm:$0xf]
    %v7098 = vld [vmem:[#allocation13 + $0x18] sm:$0xf]
    %v7099 = vld [vmem:[#allocation13 + $0x1c] sm:$0xf]
    %v7101 = vsel %vm1056, %v7084, 0
    %v7104 = vsel %vm1316, %v7092, 0
    %7106 = vmatpush.bf16.msra.mxu0 0
    %7107 = vmatpush.bf16.msra.mxu0 0
    %7108 = vmatpush.bf16.msra.mxu0 0
    %7109 = vmatpush.bf16.msra.mxu0 0
    %7110 = vmatpush.bf16.msra.mxu0 0
    %7111 = vmatpush.bf16.msra.mxu0 0
    %7112 = vmatpush.bf16.msra.mxu0 0
    %7113 = vmatpush.bf16.msra.mxu0 %v7104
    %7114 = vmatmul.bf16.gmra.mxu0 %v7101
    %v7115 = vpop.f32.mrf.mxu0
    %v7116 = vadd.f32 0.0, %v7115
    %v7117 = vpop.f32.mrf.mxu0
    %7118 = vdwg.mxu0
    %v7120 = vsel %vm1056, %v7085, 0
    %v7123 = vsel %vm1316, %v7093, 0
    %7125 = vmatpush.bf16.msra.mxu0 0
    %7126 = vmatpush.bf16.msra.mxu0 0
    %7127 = vmatpush.bf16.msra.mxu0 0
    %7128 = vmatpush.bf16.msra.mxu0 0
    %7129 = vmatpush.bf16.msra.mxu0 0
    %7130 = vmatpush.bf16.msra.mxu0 0
    %7131 = vmatpush.bf16.msra.mxu0 0
    %7132 = vmatpush.bf16.msra.mxu0 %v7123
    %7133 = vmatmul.bf16.gmra.mxu0 %v7120
    %v7134 = vpop.f32.mrf.mxu0
    %v7135 = vadd.f32 0.0, %v7134
    %v7136 = vpop.f32.mrf.mxu0
    %7137 = vdwg.mxu0
    %v7139 = vsel %vm1056, %v7086, 0
    %v7142 = vsel %vm1316, %v7094, 0
    %7144 = vmatpush.bf16.msra.mxu0 0
    %7145 = vmatpush.bf16.msra.mxu0 0
    %7146 = vmatpush.bf16.msra.mxu0 0
    %7147 = vmatpush.bf16.msra.mxu0 0
    %7148 = vmatpush.bf16.msra.mxu0 0
    %7149 = vmatpush.bf16.msra.mxu0 0
    %7150 = vmatpush.bf16.msra.mxu0 0
    %7151 = vmatpush.bf16.msra.mxu0 %v7142
    %7152 = vmatmul.bf16.gmra.mxu0 %v7139
    %v7153 = vpop.f32.mrf.mxu0
    %v7154 = vadd.f32 0.0, %v7153
    %v7155 = vpop.f32.mrf.mxu0
    %7156 = vdwg.mxu0
    %v7158 = vsel %vm1056, %v7087, 0
    %v7161 = vsel %vm1316, %v7095, 0
    %7163 = vmatpush.bf16.msra.mxu0 0
    %7164 = vmatpush.bf16.msra.mxu0 0
    %7165 = vmatpush.bf16.msra.mxu0 0
    %7166 = vmatpush.bf16.msra.mxu0 0
    %7167 = vmatpush.bf16.msra.mxu0 0
    %7168 = vmatpush.bf16.msra.mxu0 0
    %7169 = vmatpush.bf16.msra.mxu0 0
    %7170 = vmatpush.bf16.msra.mxu0 %v7161
    %7171 = vmatmul.bf16.gmra.mxu0 %v7158
    %v7172 = vpop.f32.mrf.mxu0
    %v7173 = vadd.f32 0.0, %v7172
    %v7174 = vpop.f32.mrf.mxu0
    %7175 = vdwg.mxu0
    %v7177 = vsel %vm1056, %v7088, 0
    %v7180 = vsel %vm1316, %v7096, 0
    %7182 = vmatpush.bf16.msra.mxu0 0
    %7183 = vmatpush.bf16.msra.mxu0 0
    %7184 = vmatpush.bf16.msra.mxu0 0
    %7185 = vmatpush.bf16.msra.mxu0 0
    %7186 = vmatpush.bf16.msra.mxu0 0
    %7187 = vmatpush.bf16.msra.mxu0 0
    %7188 = vmatpush.bf16.msra.mxu0 0
    %7189 = vmatpush.bf16.msra.mxu0 %v7180
    %7190 = vmatmul.bf16.gmra.mxu0 %v7177
    %v7191 = vpop.f32.mrf.mxu0
    %v7192 = vadd.f32 0.0, %v7191
    %v7193 = vpop.f32.mrf.mxu0
    %7194 = vdwg.mxu0
    %v7196 = vsel %vm1056, %v7089, 0
    %v7199 = vsel %vm1316, %v7097, 0
    %7201 = vmatpush.bf16.msra.mxu0 0
    %7202 = vmatpush.bf16.msra.mxu0 0
    %7203 = vmatpush.bf16.msra.mxu0 0
    %7204 = vmatpush.bf16.msra.mxu0 0
    %7205 = vmatpush.bf16.msra.mxu0 0
    %7206 = vmatpush.bf16.msra.mxu0 0
    %7207 = vmatpush.bf16.msra.mxu0 0
    %7208 = vmatpush.bf16.msra.mxu0 %v7199
    %7209 = vmatmul.bf16.gmra.mxu0 %v7196
    %v7210 = vpop.f32.mrf.mxu0
    %v7211 = vadd.f32 0.0, %v7210
    %v7212 = vpop.f32.mrf.mxu0
    %7213 = vdwg.mxu0
    %v7215 = vsel %vm1056, %v7090, 0
    %v7218 = vsel %vm1316, %v7098, 0
    %7220 = vmatpush.bf16.msra.mxu0 0
    %7221 = vmatpush.bf16.msra.mxu0 0
    %7222 = vmatpush.bf16.msra.mxu0 0
    %7223 = vmatpush.bf16.msra.mxu0 0
    %7224 = vmatpush.bf16.msra.mxu0 0
    %7225 = vmatpush.bf16.msra.mxu0 0
    %7226 = vmatpush.bf16.msra.mxu0 0
    %7227 = vmatpush.bf16.msra.mxu0 %v7218
    %7228 = vmatmul.bf16.gmra.mxu0 %v7215
    %v7229 = vpop.f32.mrf.mxu0
    %v7230 = vadd.f32 0.0, %v7229
    %v7231 = vpop.f32.mrf.mxu0
    %7232 = vdwg.mxu0
    %v7234 = vsel %vm1056, %v7091, 0
    %v7237 = vsel %vm1316, %v7099, 0
    %7239 = vmatpush.bf16.msra.mxu0 0
    %7240 = vmatpush.bf16.msra.mxu0 0
    %7241 = vmatpush.bf16.msra.mxu0 0
    %7242 = vmatpush.bf16.msra.mxu0 0
    %7243 = vmatpush.bf16.msra.mxu0 0
    %7244 = vmatpush.bf16.msra.mxu0 0
    %7245 = vmatpush.bf16.msra.mxu0 0
    %7246 = vmatpush.bf16.msra.mxu0 %v7237
    %7247 = vmatmul.bf16.gmra.mxu0 %v7234
    %v7248 = vpop.f32.mrf.mxu0
    %v7249 = vadd.f32 0.0, %v7248
    %v7250 = vpop.f32.mrf.mxu0
    %7251 = vdwg.mxu0
    %v7252 = vsel %vm266, %v7116, 0.0
    %v7253 = vsel %vm266, %v7135, 0.0
    %v7254 = vadd.f32 %v7252, %v7253
    %v7255 = vsel %vm266, %v7154, 0.0
    %v7256 = vadd.f32 %v7254, %v7255
    %v7257 = vsel %vm266, %v7173, 0.0
    %v7258 = vadd.f32 %v7256, %v7257
    %v7259 = vsel %vm266, %v7192, 0.0
    %v7260 = vadd.f32 %v7258, %v7259
    %v7261 = vsel %vm266, %v7211, 0.0
    %v7262 = vadd.f32 %v7260, %v7261
    %v7263 = vsel %vm266, %v7230, 0.0
    %v7264 = vadd.f32 %v7262, %v7263
    %v7265 = vsel %vm266, %v7249, 0.0
    %v7266 = vadd.f32 %v7264, %v7265
    %v7267 = vld [vmem:[%s15] sm:$0x1]
    %v7269 = vperm.slane %v7267, 0
    %v7271 = vadd.f32 %v5227, %v7269
    %v7272 = vadd.f32 %v7266, %v7269
    %v7273 = vsel %vm266, %v7271, 0.0
    %7274 = vadd.xlane.f32.xlu0 %v7273
    %v7275 = vpop.xlane.xlu0 %7274
    %v7276 = vsel %vm266, %v7272, 0.0
    %7277 = vadd.xlane.f32.xlu0 %v7276
    %v7278 = vpop.xlane.xlu0 %7277
    %v7279 = vmul.f32 %v7275, %v3016
    %v7280 = vmul.f32 %v7278, %v3016
    %v7281 = vmul.f32 %v7271, %v7271
    %v7282 = vmul.f32 %v7272, %v7272
    %v7283 = vsel %vm266, %v7281, 0.0
    %7284 = vadd.xlane.f32.xlu0 %v7283
    %v7285 = vpop.xlane.xlu0 %7284
    %v7286 = vsel %vm266, %v7282, 0.0
    %7287 = vadd.xlane.f32.xlu0 %v7286
    %v7288 = vpop.xlane.xlu0 %7287
    %v7289 = vmul.f32 %v7285, %v3016
    %v7290 = vmul.f32 %v7288, %v3016
    %v7291 = vmul.f32 %v7279, %v7279
    %v7292 = vmul.f32 %v7280, %v7280
    %v7293 = vsub.f32 %v7289, %v7291
    %v7294 = vsub.f32 %v7290, %v7292
    %v7295 = vsub.f32 %v7271, %v7279
    %v7296 = vsub.f32 %v7272, %v7280
    %v7297 = vadd.f32 %v7293, 1e-05
    %v7298 = vadd.f32 %v7294, 1e-05
    %v7299 = vrsqrt.pop %v7297
    %v7300 = vmul.f32 %v7299, %v7297
    %v7301 = vmul.f32 %v7300, %v7299
    %v7302 = vmul.f32 0.5, %v7301
    %v7303 = vsub.f32 1.5, %v7302
    %v7304 = vmul.f32 %v7299, %v7303
    %vm7305 = vweird.f32 %v7297
    %vm7306 = vweird.f32 %v7299
    %vm7307 = vmor %vm7305, %vm7306
    %v7308 = vsel %vm7307, %v7299, %v7304
    %v7309 = vrsqrt.pop %v7298
    %v7310 = vmul.f32 %v7309, %v7298
    %v7311 = vmul.f32 %v7310, %v7309
    %v7312 = vmul.f32 0.5, %v7311
    %v7313 = vsub.f32 1.5, %v7312
    %v7314 = vmul.f32 %v7309, %v7313
    %vm7315 = vweird.f32 %v7298
    %vm7316 = vweird.f32 %v7309
    %vm7317 = vmor %vm7315, %vm7316
    %v7318 = vsel %vm7317, %v7309, %v7314
    %v7319 = vmul.f32 %v7295, %v7308
    %v7320 = vmul.f32 %v7296, %v7318
    %v7321 = vld [vmem:[%s16] sm:$0x1]
    %v7323 = vperm.slane %v7321, 0
    %v7325 = vmul.f32 %v7319, %v7323
    %v7326 = vmul.f32 %v7320, %v7323
    %v7327 = vld [vmem:[%s17] sm:$0x1]
    %v7329 = vperm.slane %v7327, 0
    %v7331 = vadd.f32 %v7325, %v7329
    %v7332 = vadd.f32 %v7326, %v7329
    %v7333 = vadd.f32 %v3071, %v7331
    %v7334 = vadd.f32 %v3072, %v7332
    %v7335 = vsel %vm266, %v7333, 0.0
    %7336 = vadd.xlane.f32.xlu0 %v7335
    %v7337 = vpop.xlane.xlu0 %7336
    %v7338 = vsel %vm266, %v7334, 0.0
    %7339 = vadd.xlane.f32.xlu0 %v7338
    %v7340 = vpop.xlane.xlu0 %7339
    %v7341 = vmul.f32 %v7337, %v3016
    %v7342 = vmul.f32 %v7340, %v3016
    %v7343 = vmul.f32 %v7333, %v7333
    %v7344 = vmul.f32 %v7334, %v7334
    %v7345 = vsel %vm266, %v7343, 0.0
    %7346 = vadd.xlane.f32.xlu0 %v7345
    %v7347 = vpop.xlane.xlu0 %7346
    %v7348 = vsel %vm266, %v7344, 0.0
    %7349 = vadd.xlane.f32.xlu0 %v7348
    %v7350 = vpop.xlane.xlu0 %7349
    %v7351 = vmul.f32 %v7347, %v3016
    %v7352 = vmul.f32 %v7350, %v3016
    %v7353 = vmul.f32 %v7341, %v7341
    %v7354 = vmul.f32 %v7342, %v7342
    %v7355 = vsub.f32 %v7351, %v7353
    %v7356 = vsub.f32 %v7352, %v7354
    %v7357 = vsub.f32 %v7333, %v7341
    %v7358 = vsub.f32 %v7334, %v7342
    %v7359 = vadd.f32 %v7355, 1e-05
    %v7360 = vadd.f32 %v7356, 1e-05
    %v7361 = vrsqrt.pop %v7359
    %v7362 = vmul.f32 %v7361, %v7359
    %v7363 = vmul.f32 %v7362, %v7361
    %v7364 = vmul.f32 0.5, %v7363
    %v7365 = vsub.f32 1.5, %v7364
    %v7366 = vmul.f32 %v7361, %v7365
    %vm7367 = vweird.f32 %v7359
    %vm7368 = vweird.f32 %v7361
    %vm7369 = vmor %vm7367, %vm7368
    %v7370 = vsel %vm7369, %v7361, %v7366
    %v7371 = vrsqrt.pop %v7360
    %v7372 = vmul.f32 %v7371, %v7360
    %v7373 = vmul.f32 %v7372, %v7371
    %v7374 = vmul.f32 0.5, %v7373
    %v7375 = vsub.f32 1.5, %v7374
    %v7376 = vmul.f32 %v7371, %v7375
    %vm7377 = vweird.f32 %v7360
    %vm7378 = vweird.f32 %v7371
    %vm7379 = vmor %vm7377, %vm7378
    %v7380 = vsel %vm7379, %v7371, %v7376
    %v7381 = vmul.f32 %v7357, %v7370
    %v7382 = vmul.f32 %v7358, %v7380
    %v7383 = vld [vmem:[%s18] sm:$0x1]
    %v7385 = vperm.slane %v7383, 0
    %v7387 = vmul.f32 %v7381, %v7385
    %v7388 = vmul.f32 %v7382, %v7385
    %v7389 = vld [vmem:[%s19] sm:$0x1]
    %v7391 = vperm.slane %v7389, 0
    %v7393 = vadd.f32 %v7387, %v7391
    %v7394 = vadd.f32 %v7388, %v7391
    %v7395 = vpack.c.bf16 %v7394, %v7393
    %v7396 = vld [vmem:[#allocation14] sm:$0xf]
    %v7397 = vld [vmem:[#allocation14 + $0x4] sm:$0xf]
    %v7398 = vld [vmem:[#allocation14 + $0x8] sm:$0xf]
    %v7399 = vld [vmem:[#allocation14 + $0xc] sm:$0xf]
    %v7400 = vld [vmem:[#allocation14 + $0x10] sm:$0xf]
    %v7401 = vld [vmem:[#allocation14 + $0x14] sm:$0xf]
    %v7402 = vld [vmem:[#allocation14 + $0x18] sm:$0xf]
    %v7403 = vld [vmem:[#allocation14 + $0x1c] sm:$0xf]
    %v7404 = vld [vmem:[%s21] sm:$0x1]
    %v7406 = vperm.slane %v7404, 0
    %v7416 = vunpack.c.l.b16 %v7396
    %v7417 = vunpack.c.l.b16 %v7397
    %v7418 = vunpack.c.l.b16 %v7398
    %v7419 = vunpack.c.l.b16 %v7399
    %v7420 = vunpack.c.l.b16 %v7400
    %v7421 = vunpack.c.l.b16 %v7401
    %v7422 = vunpack.c.l.b16 %v7402
    %v7423 = vunpack.c.l.b16 %v7403
    %v7424 = vpack.c.b16 %v7417, %v7416
    %v7425 = vpack.c.b16 %v7419, %v7418
    %v7426 = vpack.c.b16 %v7421, %v7420
    %v7427 = vpack.c.b16 %v7423, %v7422
    %v7433 = vsel %vm266, %v7395, 0
    %7435 = vmatpush.bf16.msra.mxu0 0
    %7436 = vmatpush.bf16.msra.mxu0 0
    %7437 = vmatpush.bf16.msra.mxu0 0
    %7438 = vmatpush.bf16.msra.mxu0 0
    %7439 = vmatpush.bf16.msra.mxu0 %v7427
    %7440 = vmatpush.bf16.msra.mxu0 %v7426
    %7441 = vmatpush.bf16.msra.mxu0 %v7425
    %7442 = vmatpush.bf16.msra.mxu0 %v7424
    %7443 = vmatmul.bf16.gmra.mxu0 %v7433
    %v7444 = vpop.f32.mrf.mxu0
    %v7445 = vadd.f32 %v7406, %v7444
    %v7446 = vpop.f32.mrf.mxu0
    %v7447 = vadd.f32 %v7406, %v7446
    %7448 = vdwg.mxu0
    %v7449 = vmax.f32 %v7445, 0.0
    %v7450 = vmax.f32 %v7447, 0.0
    %v7451 = vpack.c.bf16 %v7450, %v7449
    %v7452 = vld [vmem:[%s22] sm:$0xf]
    %v7453 = vld [vmem:[%s22 + $0x4] sm:$0xf]
    %v7454 = vld [vmem:[%s22 + $0x8] sm:$0xf]
    %v7455 = vld [vmem:[%s22 + $0xc] sm:$0xf]
    %v7456 = vld [vmem:[%s22 + $0x10] sm:$0xf]
    %v7457 = vld [vmem:[%s22 + $0x14] sm:$0xf]
    %v7458 = vld [vmem:[%s22 + $0x18] sm:$0xf]
    %v7459 = vld [vmem:[%s22 + $0x1c] sm:$0xf]
    %v7460 = vld [vmem:[%s22 + $0x20] sm:$0xf]
    %v7461 = vld [vmem:[%s22 + $0x24] sm:$0xf]
    %v7462 = vld [vmem:[%s22 + $0x28] sm:$0xf]
    %v7463 = vld [vmem:[%s22 + $0x2c] sm:$0xf]
    %v7464 = vld [vmem:[%s22 + $0x30] sm:$0xf]
    %v7465 = vld [vmem:[%s22 + $0x34] sm:$0xf]
    %v7466 = vld [vmem:[%s22 + $0x38] sm:$0xf]
    %v7467 = vld [vmem:[%s22 + $0x3c] sm:$0xf]
    %v7468 = vld [vmem:[%s23] sm:$0x1]
    %v7470 = vperm.slane %v7468, 0
    %v7488 = vunpack.c.l.b16 %v7452
    %v7489 = vunpack.c.l.b16 %v7453
    %v7490 = vunpack.c.l.b16 %v7454
    %v7491 = vunpack.c.l.b16 %v7455
    %v7492 = vunpack.c.l.b16 %v7456
    %v7493 = vunpack.c.l.b16 %v7457
    %v7494 = vunpack.c.l.b16 %v7458
    %v7495 = vunpack.c.l.b16 %v7459
    %v7496 = vunpack.c.l.b16 %v7460
    %v7497 = vunpack.c.l.b16 %v7461
    %v7498 = vunpack.c.l.b16 %v7462
    %v7499 = vunpack.c.l.b16 %v7463
    %v7500 = vunpack.c.l.b16 %v7464
    %v7501 = vunpack.c.l.b16 %v7465
    %v7502 = vunpack.c.l.b16 %v7466
    %v7503 = vunpack.c.l.b16 %v7467
    %v7504 = vpack.c.b16 %v7489, %v7488
    %v7505 = vpack.c.b16 %v7491, %v7490
    %v7506 = vpack.c.b16 %v7493, %v7492
    %v7507 = vpack.c.b16 %v7495, %v7494
    %v7508 = vpack.c.b16 %v7497, %v7496
    %v7509 = vpack.c.b16 %v7499, %v7498
    %v7510 = vpack.c.b16 %v7501, %v7500
    %v7511 = vpack.c.b16 %v7503, %v7502
    %7520 = vmatpush.bf16.msra.mxu0 %v7511
    %7521 = vmatpush.bf16.msra.mxu0 %v7510
    %7522 = vmatpush.bf16.msra.mxu0 %v7509
    %7523 = vmatpush.bf16.msra.mxu0 %v7508
    %7524 = vmatpush.bf16.msra.mxu0 %v7507
    %7525 = vmatpush.bf16.msra.mxu0 %v7506
    %7526 = vmatpush.bf16.msra.mxu0 %v7505
    %7527 = vmatpush.bf16.msra.mxu0 %v7504
    %7528 = vmatmul.bf16.gmra.mxu0 %v7451
    %v7529 = vpop.f32.mrf.mxu0
    %v7530 = vadd.f32 %v7470, %v7529
    %v7531 = vpop.f32.mrf.mxu0
    %v7532 = vadd.f32 %v7470, %v7531
    %7533 = vdwg.mxu0
    %v7534 = vadd.f32 %v7333, %v7530
    %v7535 = vadd.f32 %v7334, %v7532
    %7536 = vst.msk [vmem:[#allocation16] sm:$0xff] %vm266, %v7534
    %7537 = vst.msk [vmem:[#allocation16 + $0x8] sm:$0xff] %vm266, %v7535
    // Predicated region
    $region130: #{tpu_custom_call.1} parent=1 // pred_check
      _
    $region131: #{tpu_custom_call.1} parent=1 // pred_check_branch
      %7539 = sbr.rel (0) target = $region133
    $region132: #{tpu_custom_call.1} parent=1 // pred_region
      %7541 = vsyncadd [#allocation4], 0
      %s7542 = sshll.u32 [#allocation16], 4
      %s7543 = int_to_ptr.vmem [resolvable:$true] %s7542
      %s7544 = sshll.u32 %s24, 4
      %s7545 = int_to_ptr.hbm [resolvable:$true] %s7544
      %7550 = dma.vmem_to_hbm [thread:$0]  %s7543, 256, %s7545, [#allocation4], 128, 128, 8
    $region133: #{tpu_custom_call.1} parent=1 // pred_fallthru
      _
    // Predicated region
    $region134: #{tpu_custom_call.1} parent=1 // pred_check
      _
    $region135: #{tpu_custom_call.1} parent=1 // pred_check_branch
      %7552 = sbr.rel (0) target = $region137
    $region136: #{tpu_custom_call.1} parent=1 // pred_region
      %7554 = vsyncadd [#allocation18], 0
      %s7555 = sshll.u32 [#allocation17], 4
      %s7556 = int_to_ptr.vmem [resolvable:$true] %s7555
      %s7557 = sshll.u32 %s25, 4
      %s7558 = int_to_ptr.hbm [resolvable:$true] %s7557
      %7563 = dma.vmem_to_hbm [thread:$0]  %s7556, 2048, %s7558, [#allocation18], 128, 128, 8
    $region137: #{tpu_custom_call.1} parent=1 // pred_fallthru
      _
    // Predicated region
    $region138: #{tpu_custom_call.1} parent=1 // pred_check
      _
    $region139: #{tpu_custom_call.1} parent=1 // pred_check_branch
      %7565 = sbr.rel (0) target = $region141
    $region140: #{tpu_custom_call.1} parent=1 // pred_region
      %7567 = dma.done [#allocation4], 256
    $region141: #{tpu_custom_call.1} parent=1 // pred_fallthru
      _
    // Predicated region
    $region142: #{tpu_custom_call.1} parent=1 // pred_check
      _
    $region143: #{tpu_custom_call.1} parent=1 // pred_check_branch
      %7569 = sbr.rel (0) target = $region145
    $region144: #{tpu_custom_call.1} parent=1 // pred_region
      %7571 = dma.done [#allocation18], 2048
    $region145: #{tpu_custom_call.1} parent=1 // pred_fallthru
      _
    %7572 = vsyncpa [#allocation3], 1
    %7573 = vsyncpa [#allocation6], 1
    %7574 = vsyncpa [#allocation9], 1
    %7575 = vsyncpa [#allocation12], 1
    %7576 = vsyncpa [#allocation15], 1
    %7577 = vsyncpa [#allocation4], 1
    %7578 = vsyncpa [#allocation18], 1

</llo_original>
